<compile_context>
chip_gen: v7x
topology: tpu7x:2x2x1
jax: 0.10.0
libtpu: 0.0.40
codegen_flags: <defaults>
</compile_context>

<pallas_src>
import jax
import jax.numpy as jnp
from jax import lax
from jax.experimental import pallas as pl
from jax.experimental.pallas import tpu as pltpu
import numpy as np


def _round_up(x, m):
    return (x + m - 1) // m * m


def _nbytes(shape, dtype):
    return int(np.prod(shape)) * jnp.dtype(dtype).itemsize


# ----------------------------- Pallas kernel --------------------------------
def gru_classifier_kernel(emb_ref,                       # (T, Bt, Ep)   bf16
                          wih_f_ref,                     # (Ep, 3*Hp)    bf16
                          whh_f_ref,                     # (Hp, 3*Hp)    bf16
                          bx_f_ref,                      # (1, 3*Hp)     f32 (b_ih, r/z pre-summed with b_hh)
                          bhn_f_ref,                     # (1, Hp)       f32 (b_hn)
                          wih_b_ref,                     # (Ep, 3*Hp)    bf16 (reverse dir)
                          bx_b_ref,                      # (1, 3*Hp)     f32
                          bhn_b_ref,                     # (1, Hp)       f32
                          wfc_f_ref, wfc_b_ref,          # (Hp, Cp)      bf16
                          bfc_ref,                       # (1, Cp)       f32
                          out_ref,                       # (Bt, Cp)      f32
                          xproj_ref):                    # (T, Bt, 3*Hp) bf16 scratch
    T, Bt, Ep = emb_ref.shape
    Hp = bhn_f_ref.shape[-1]

    # ---- (1) hoisted input projection, per time step (no (T*Bt,Ep) reshape copy),
    #          stored bf16 to halve scratch VMEM and vst traffic (v5e: 1 vst slot). ----
    wih_f = wih_f_ref[...]                                   # (Ep, 3*Hp) bf16
    bx_f = bx_f_ref[...]                                     # (1, 3*Hp)  f32

    def xproj_step(t, carry):
        xproj_ref[t] = (jnp.dot(emb_ref[t], wih_f,
                                preferred_element_type=jnp.float32)
                        + bx_f).astype(jnp.bfloat16)
        return carry

    lax.fori_loop(0, T, xproj_step, 0, unroll=True if T <= 32 else 8)

    # ---- loop-invariant weight/bias reads & broadcasts hoisted out of the loop ----
    # TODO(synk): confirm in the bundle dump that Mosaic hoists the W_hh push out of
    # the unrolled steps; if not, drive the MXU explicitly with matmul_push_rhs.
    whh_f = whh_f_ref[...]                                   # (Hp, 3*Hp) bf16
    bhn_f = jnp.broadcast_to(bhn_f_ref[...], (Bt, Hp))       # (Bt, Hp)   f32

    def step(t, h):
        xp = xproj_ref[t].astype(jnp.float32)                # (Bt, 3*Hp)
        gh = jnp.dot(h.astype(jnp.bfloat16), whh_f,          # single fused gate matmul
                     preferred_element_type=jnp.float32)     # (Bt, 3*Hp) f32
        r = jax.nn.sigmoid(xp[:, :Hp] + gh[:, :Hp])
        z = jax.nn.sigmoid(xp[:, Hp:2 * Hp] + gh[:, Hp:2 * Hp])
        n = jnp.tanh(xp[:, 2 * Hp:] + r * (gh[:, 2 * Hp:] + bhn_f))
        return n + z * (h - n)                               # == (1-z)*n + z*h

    h0 = jnp.zeros((Bt, Hp), jnp.float32)
    h_fwd = lax.fori_loop(0, T, step, h0, unroll=True if T <= 64 else 16)

    # ---- backward direction at the last time index: one reverse step from h0=0,
    #      so h @ W_hh_reverse == 0 and only its biases contribute. ----
    xb = jnp.dot(emb_ref[T - 1], wih_b_ref[...],
                 preferred_element_type=jnp.float32) + bx_b_ref[...]
    r_b = jax.nn.sigmoid(xb[:, :Hp])
    z_b = jax.nn.sigmoid(xb[:, Hp:2 * Hp])
    n_b = jnp.tanh(xb[:, 2 * Hp:]
                   + r_b * jnp.broadcast_to(bhn_b_ref[...], (Bt, Hp)))
    h_bwd = (1.0 - z_b) * n_b                                # + z_b * 0

    # ---- dropout = identity (eval); fc fused per direction, lane-dense output ----
    out_ref[...] = (jnp.dot(h_fwd.astype(jnp.bfloat16), wfc_f_ref[...],
                            preferred_element_type=jnp.float32)
                    + jnp.dot(h_bwd.astype(jnp.bfloat16), wfc_b_ref[...],
                              preferred_element_type=jnp.float32)
                    + bfc_ref[...])


# ------------------------- parameter preparation ------------------------------
def prepare_kernel_params(p):
    """PyTorch-layout params -> padded, gate-stacked, bf16 kernel operands."""
    E = p["embedding"].shape[1]
    H = p["weight_hh_l0"].shape[1]
    C = p["fc_weight"].shape[0]
    Ep, Hp, Cp = _round_up(E, 128), _round_up(H, 128), _round_up(C, 128)

    def stack_w(w, in_dim, in_pad):
        # (3H, in_dim) -> (in_pad, 3*Hp); columns [g*Hp:(g+1)*Hp] hold gate g.
        w = w.reshape(3, H, in_dim)
        out = jnp.zeros((3, in_pad, Hp), jnp.float32)
        out = out.at[:, :in_dim, :H].set(jnp.transpose(w, (0, 2, 1)))
        return jnp.transpose(out, (1, 0, 2)).reshape(in_pad, 3 * Hp).astype(jnp.bfloat16)

    def stack_bias_x(b_ih, b_hh):
        # pre-sum b_ih+b_hh for r,z gates; n gate keeps only b_in here (b_hn stays
        # inside the r*(.) term).
        bi = b_ih.reshape(3, H)
        bh = b_hh.reshape(3, H)
        bx = jnp.stack([bi[0] + bh[0], bi[1] + bh[1], bi[2]], axis=0)
        out = jnp.zeros((3, Hp), jnp.float32).at[:, :H].set(bx)
        return out.reshape(1, 3 * Hp)

    def bias_hn(b_hh):
        return jnp.zeros((1, Hp), jnp.float32).at[0, :H].set(b_hh.reshape(3, H)[2])

    def fc_dir(w, lo):
        out = jnp.zeros((Hp, Cp), jnp.float32)
        return out.at[:H, :C].set(w[:, lo:lo + H].T).astype(jnp.bfloat16)

    emb_p = jnp.zeros((p["embedding"].shape[0], Ep), jnp.float32)
    emb_p = emb_p.at[:, :E].set(p["embedding"]).astype(jnp.bfloat16)

    # NOTE: weight_hh_l0_reverse is intentionally not needed: the backward direction
    # only contributes gru_out[:, -1, H:] (one step from h0=0), so 0 @ W_hh == 0.
    return {
        "dims": (E, H, C, Ep, Hp, Cp),
        "embedding_p": emb_p,
        "wih_f": stack_w(p["weight_ih_l0"], E, Ep),
        "whh_f": stack_w(p["weight_hh_l0"], H, Hp),
        "bx_f": stack_bias_x(p["bias_ih_l0"], p["bias_hh_l0"]),
        "bhn_f": bias_hn(p["bias_hh_l0"]),
        "wih_b": stack_w(p["weight_ih_l0_reverse"], E, Ep),
        "bx_b": stack_bias_x(p["bias_ih_l0_reverse"], p["bias_hh_l0_reverse"]),
        "bhn_b": bias_hn(p["bias_hh_l0_reverse"]),
        "wfc_f": fc_dir(p["fc_weight"], 0),
        "wfc_b": fc_dir(p["fc_weight"], H),
        "bfc": jnp.zeros((1, Cp), jnp.float32).at[0, :C].set(p["fc_bias"]),
    }


# --------------------------- VMEM / tiling helpers -----------------------------
def _vmem_capacity_bytes():
    try:
        return int(pltpu.get_tpu_info().vmem_capacity_bytes)
    except Exception:
        return 64 << 20   # most restrictive per-core capacity (v7x)


def _vmem_footprint(T, Bt, Ep, Hp, Cp, single_buffer_weights):
    """Real pipelined footprint, counted once (no double counting)."""
    wfac = 1 if single_buffer_weights else 2
    weights = wfac * (2 * _nbytes((Ep, 3 * Hp), jnp.bfloat16)     # wih_f, wih_b
                      + _nbytes((Hp, 3 * Hp), jnp.bfloat16)        # whh_f
                      + 2 * _nbytes((Hp, Cp), jnp.bfloat16)        # wfc_f, wfc_b
                      + 2 * _nbytes((1, 3 * Hp), jnp.float32)
                      + 2 * _nbytes((1, Hp), jnp.float32)
                      + _nbytes((1, Cp), jnp.float32))
    io = (2 * _nbytes((T, Bt, Ep), jnp.bfloat16)                   # emb, double-buffered
          + 2 * _nbytes((Bt, Cp), jnp.float32))                    # out, double-buffered
    scratch = _nbytes((T, Bt, 3 * Hp), jnp.bfloat16)               # bf16 xproj scratch
    return weights + io + scratch


def _choose_batch_tile(B, T, Ep, Hp, Cp, vmem_cap, single_buffer_weights):
    """Largest 16-aligned batch tile that fits comfortably in VMEM; >=2 tiles when
    possible so v7x's second TensorCore is not idle."""
    budget = int(0.6 * vmem_cap)
    tile = 16
    for cand in (256, 128, 64, 32, 16):
        if _vmem_footprint(T, cand, Ep, Hp, Cp, single_buffer_weights) <= budget:
            tile = cand
            break
    # TODO(synk): if even Bt=16 overflows (very long T), keep emb in HBM
    # (memory_space=pl.ANY) and chunk xproj over time with double-buffered DMA.
    Bp = _round_up(B, 16)
    if Bp <= tile:
        if Bp >= 32:                      # split one tile into two (each >=16 rows)
            Bp = _round_up(Bp, 32)
            tile = Bp // 2
        else:
            tile = Bp
    else:
        Bp = _round_up(Bp, tile)
    return Bp, tile


# ------------------------------ wrapper --------------------------------------
def _run_pallas(emb_tm, kp, Bp, B_TILE, single_buffer_weights, vmem_limit):
    E, H, C, Ep, Hp, Cp = kp["dims"]
    T = emb_tm.shape[0]
    const2 = lambda b: (0, 0)

    if single_buffer_weights:
        # Constant-index-map operands never change block index across the batch grid:
        # single-buffer them to reclaim ~half the weight VMEM.
        wspec = lambda shape: pl.BlockSpec(shape, const2, pipeline_mode=pl.Buffered(1))
    else:
        wspec = lambda shape: pl.BlockSpec(shape, const2)

    in_specs = [
        pl.BlockSpec((T, B_TILE, Ep), lambda b: (0, b, 0)),
        wspec((Ep, 3 * Hp)),
        wspec((Hp, 3 * Hp)),
        wspec((1, 3 * Hp)),
        wspec((1, Hp)),
        wspec((Ep, 3 * Hp)),
        wspec((1, 3 * Hp)),
        wspec((1, Hp)),
        wspec((Hp, Cp)),
        wspec((Hp, Cp)),
        wspec((1, Cp)),
    ]
    out_specs = pl.BlockSpec((B_TILE, Cp), lambda b: (b, 0))

    return pl.pallas_call(
        gru_classifier_kernel,
        out_shape=jax.ShapeDtypeStruct((Bp, Cp), jnp.float32),
        grid_spec=pltpu.PrefetchScalarGridSpec(
            num_scalar_prefetch=0,
            grid=(Bp // B_TILE,),
            in_specs=in_specs,
            out_specs=out_specs,
            scratch_shapes=[pltpu.VMEM((T, B_TILE, 3 * Hp), jnp.bfloat16)]),
        compiler_params=pltpu.CompilerParams(
            dimension_semantics=("parallel",),
            vmem_limit_bytes=vmem_limit),
    )(emb_tm, kp["wih_f"], kp["whh_f"], kp["bx_f"], kp["bhn_f"],
      kp["wih_b"], kp["bx_b"], kp["bhn_b"],
      kp["wfc_f"], kp["wfc_b"], kp["bfc"])


def gru_emotion_classifier(x_tokens, params, kp=None):
    """x_tokens: (B, T) int32 token ids. Returns logits (B, num_classes)."""
    if kp is None:
        kp = prepare_kernel_params(params)
    E, H, C, Ep, Hp, Cp = kp["dims"]
    B, T = x_tokens.shape

    vmem_cap = _vmem_capacity_bytes()
    Bp, B_TILE = _choose_batch_tile(B, T, Ep, Hp, Cp, vmem_cap, True)

    def limit(single_buf):
        fp = _vmem_footprint(T, B_TILE, Ep, Hp, Cp, single_buf)
        return int(min(max(fp + (16 << 20), 32 << 20), int(0.85 * vmem_cap)))

    # TODO(synk): embedding gather stays in plain JAX (data-dependent row gather).
    x_pad = jnp.zeros((Bp, T), x_tokens.dtype).at[:B, :].set(x_tokens)
    emb = jnp.take(kp["embedding_p"], x_pad, axis=0)                 # (Bp, T, Ep) bf16
    emb_tm = jnp.transpose(emb, (1, 0, 2))                           # (T, Bp, Ep)

    try:
        logits_p = _run_pallas(emb_tm, kp, Bp, B_TILE, True, limit(True))
    except Exception:
        # Fallback for Pallas versions where Buffered(1) weight specs are rejected:
        # default double-buffered constant operands (identical math).
        logits_p = _run_pallas(emb_tm, kp, Bp, B_TILE, False, limit(False))

    return logits_p[:B, :C]


# --------------------------- parameter setup ---------------------------------
def init_params(key, vocab_size, embedding_dim, hidden_dim, num_classes):
    keys = jax.random.split(key, 12)
    k = 1.0 / np.sqrt(hidden_dim)

    def u(kk, shape):
        return jax.random.uniform(kk, shape, jnp.float32, -k, k)

    emb = jax.random.normal(keys[0], (vocab_size, embedding_dim), jnp.float32)
    emb = emb.at[0].set(0.0)  # padding_idx = 0
    H, E, C = hidden_dim, embedding_dim, num_classes
    return {
        "embedding": emb,
        # PyTorch nn.GRU layout, gate order [r, z, n]
        "weight_ih_l0": u(keys[1], (3 * H, E)),
        "weight_hh_l0": u(keys[2], (3 * H, H)),
        "bias_ih_l0": u(keys[3], (3 * H,)),
        "bias_hh_l0": u(keys[4], (3 * H,)),
        "weight_ih_l0_reverse": u(keys[5], (3 * H, E)),
        "weight_hh_l0_reverse": u(keys[6], (3 * H, H)),
        "bias_ih_l0_reverse": u(keys[7], (3 * H,)),
        "bias_hh_l0_reverse": u(keys[8], (3 * H,)),
        "fc_weight": u(keys[9], (C, 2 * H)),
        "fc_bias": u(keys[10], (C,)),
    }


# ---------------------------- pure-JAX reference ------------------------------
def reference_forward(x_tokens, p):
    """Faithful f32 re-implementation of the PyTorch module (eval mode)."""
    emb = jnp.take(p["embedding"], x_tokens, axis=0)   # (B, T, E)
    B, T, _ = emb.shape
    H = p["weight_hh_l0"].shape[1]

    def cell(x_t, h, w_ih, w_hh, b_ih, b_hh):
        gi = x_t @ w_ih.T + b_ih
        gh = h @ w_hh.T + b_hh
        r = jax.nn.sigmoid(gi[:, :H] + gh[:, :H])
        z = jax.nn.sigmoid(gi[:, H:2 * H] + gh[:, H:2 * H])
        n = jnp.tanh(gi[:, 2 * H:] + r * gh[:, 2 * H:])
        return (1.0 - z) * n + z * h

    # forward direction
    h = jnp.zeros((B, H), jnp.float32)
    for t in range(T):
        h = cell(emb[:, t], h, p["weight_ih_l0"], p["weight_hh_l0"],
                 p["bias_ih_l0"], p["bias_hh_l0"])
    # backward direction: gru_out[:, t, H:] is the state after processing T-1..t
    hb = jnp.zeros((B, H), jnp.float32)
    out_bwd = [None] * T
    for t in range(T - 1, -1, -1):
        hb = cell(emb[:, t], hb, p["weight_ih_l0_reverse"], p["weight_hh_l0_reverse"],
                  p["bias_ih_l0_reverse"], p["bias_hh_l0_reverse"])
        out_bwd[t] = hb
    last = jnp.concatenate([h, out_bwd[T - 1]], axis=-1)   # gru_out[:, -1, :]
    return last @ p["fc_weight"].T + p["fc_bias"]          # dropout = identity (eval)


# --------------------------------- main ---------------------------------------
if __name__ == "__main__":
    VOCAB, EMB, HID, CLS = 50, 32, 32, 4
    B, T = 2, 8

    key = jax.random.PRNGKey(0)
    k_param, k_tok = jax.random.split(key)
    params = init_params(k_param, VOCAB, EMB, HID, CLS)
    x = jax.random.randint(k_tok, (B, T), 0, VOCAB, dtype=jnp.int32)

    logits = gru_emotion_classifier(x, params)
    logits = jax.block_until_ready(logits)

    ref = reference_forward(x, params)
    # bf16 MXU operands / bf16 xproj staging (f32 accumulation & gate math) vs
    # pure-f32 reference -> loose tolerance.
    np.testing.assert_allclose(np.asarray(logits), np.asarray(ref),
                               rtol=5e-2, atol=5e-2)
    print("KERNEL_OK")
</pallas_src>

<mosaic_0001>
module attributes {stable_mosaic.version = 11 : i64} {
  func.func @gru_classifier_kernel(%arg0: i32, %arg1: memref<8x16x128xbf16, #tpu.memory_space<vmem>>, %arg2: memref<128x384xbf16, #tpu.memory_space<vmem>>, %arg3: memref<128x384xbf16, #tpu.memory_space<vmem>>, %arg4: memref<1x384xf32, #tpu.memory_space<vmem>>, %arg5: memref<1x128xf32, #tpu.memory_space<vmem>>, %arg6: memref<128x384xbf16, #tpu.memory_space<vmem>>, %arg7: memref<1x384xf32, #tpu.memory_space<vmem>>, %arg8: memref<1x128xf32, #tpu.memory_space<vmem>>, %arg9: memref<128x128xbf16, #tpu.memory_space<vmem>>, %arg10: memref<128x128xbf16, #tpu.memory_space<vmem>>, %arg11: memref<1x128xf32, #tpu.memory_space<vmem>>, %arg12: memref<16x128xf32, #tpu.memory_space<vmem>>, %arg13: memref<8x16x384xbf16, #tpu.memory_space<vmem>>) attributes {dimension_semantics = [#tpu.dimension_semantics<parallel>], iteration_bounds = array<i64: 1>, scalar_prefetch = 0 : i64, scratch_operands = 1 : i64, tpu.core_type = #tpu.core_type<tc>, window_params = [{transform_indices = @transform_0, window_bounds = array<i64: 8, 16, 128>}, {pipeline_mode = #tpu.pipeline_mode<synchronous>, transform_indices = @transform_1, window_bounds = array<i64: 128, 384>}, {pipeline_mode = #tpu.pipeline_mode<synchronous>, transform_indices = @transform_2, window_bounds = array<i64: 128, 384>}, {pipeline_mode = #tpu.pipeline_mode<synchronous>, transform_indices = @transform_3, window_bounds = array<i64: 1, 384>}, {pipeline_mode = #tpu.pipeline_mode<synchronous>, transform_indices = @transform_4, window_bounds = array<i64: 1, 128>}, {pipeline_mode = #tpu.pipeline_mode<synchronous>, transform_indices = @transform_5, window_bounds = array<i64: 128, 384>}, {pipeline_mode = #tpu.pipeline_mode<synchronous>, transform_indices = @transform_6, window_bounds = array<i64: 1, 384>}, {pipeline_mode = #tpu.pipeline_mode<synchronous>, transform_indices = @transform_7, window_bounds = array<i64: 1, 128>}, {pipeline_mode = #tpu.pipeline_mode<synchronous>, transform_indices = @transform_8, window_bounds = array<i64: 128, 128>}, {pipeline_mode = #tpu.pipeline_mode<synchronous>, transform_indices = @transform_9, window_bounds = array<i64: 128, 128>}, {pipeline_mode = #tpu.pipeline_mode<synchronous>, transform_indices = @transform_10, window_bounds = array<i64: 1, 128>}, {transform_indices = @transform_11, window_bounds = array<i64: 16, 128>}]} {
    %c0 = arith.constant 0 : index
    %c0_0 = arith.constant 0 : index
    %0 = vector.load %arg2[%c0, %c0_0] : memref<128x384xbf16, #tpu.memory_space<vmem>>, vector<128x384xbf16>
    %c0_1 = arith.constant 0 : index
    %c0_2 = arith.constant 0 : index
    %1 = vector.load %arg4[%c0_1, %c0_2] : memref<1x384xf32, #tpu.memory_space<vmem>>, vector<1x384xf32>
    %c0_i32 = arith.constant 0 : i32
    %2 = arith.index_cast %c0_i32 : i32 to index
    %c0_3 = arith.constant 0 : index
    %c0_4 = arith.constant 0 : index
    %3 = vector.load %arg1[%2, %c0_3, %c0_4] : memref<8x16x128xbf16, #tpu.memory_space<vmem>>, vector<1x16x128xbf16>
    %4 = vector.shape_cast %3 : vector<1x16x128xbf16> to vector<16x128xbf16>
    %cst = arith.constant dense<0.000000e+00> : vector<16x384xf32>
    %5 = tpu.matmul %4, %0, %cst {dimension_numbers = #tpu.dot_dimension_numbers<[1], [0], [0], [1], [0, 0, 1, 1], [], []>} : vector<16x128xbf16>, vector<128x384xbf16>, vector<16x384xf32> -> vector<16x384xf32>
    %6 = vector.broadcast %1 : vector<1x384xf32> to vector<16x384xf32>
    %7 = arith.addf %5, %6 : vector<16x384xf32>
    %8 = arith.truncf %7 : vector<16x384xf32> to vector<16x384xbf16>
    %9 = arith.index_cast %c0_i32 : i32 to index
    %c0_5 = arith.constant 0 : index
    %c0_6 = arith.constant 0 : index
    %10 = vector.load %arg13[%9, %c0_5, %c0_6] : memref<8x16x384xbf16, #tpu.memory_space<vmem>>, vector<1x16x384xbf16>
    %11 = vector.shape_cast %10 : vector<1x16x384xbf16> to vector<16x384xbf16>
    %12 = vector.shape_cast %8 : vector<16x384xbf16> to vector<1x16x384xbf16>
    tpu.vector_store %arg13[%9, %c0_5, %c0_6], %12 {strides = array<i32>} : memref<8x16x384xbf16, #tpu.memory_space<vmem>>, vector<1x16x384xbf16>,
    %c1_i32 = arith.constant 1 : i32
    %13 = arith.index_cast %c1_i32 : i32 to index
    %c0_7 = arith.constant 0 : index
    %c0_8 = arith.constant 0 : index
    %14 = vector.load %arg1[%13, %c0_7, %c0_8] : memref<8x16x128xbf16, #tpu.memory_space<vmem>>, vector<1x16x128xbf16>
    %15 = vector.shape_cast %14 : vector<1x16x128xbf16> to vector<16x128xbf16>
    %cst_9 = arith.constant dense<0.000000e+00> : vector<16x384xf32>
    %16 = tpu.matmul %15, %0, %cst_9 {dimension_numbers = #tpu.dot_dimension_numbers<[1], [0], [0], [1], [0, 0, 1, 1], [], []>} : vector<16x128xbf16>, vector<128x384xbf16>, vector<16x384xf32> -> vector<16x384xf32>
    %17 = vector.broadcast %1 : vector<1x384xf32> to vector<16x384xf32>
    %18 = arith.addf %16, %17 : vector<16x384xf32>
    %19 = arith.truncf %18 : vector<16x384xf32> to vector<16x384xbf16>
    %20 = arith.index_cast %c1_i32 : i32 to index
    %c0_10 = arith.constant 0 : index
    %c0_11 = arith.constant 0 : index
    %21 = vector.load %arg13[%20, %c0_10, %c0_11] : memref<8x16x384xbf16, #tpu.memory_space<vmem>>, vector<1x16x384xbf16>
    %22 = vector.shape_cast %21 : vector<1x16x384xbf16> to vector<16x384xbf16>
    %23 = vector.shape_cast %19 : vector<16x384xbf16> to vector<1x16x384xbf16>
    tpu.vector_store %arg13[%20, %c0_10, %c0_11], %23 {strides = array<i32>} : memref<8x16x384xbf16, #tpu.memory_space<vmem>>, vector<1x16x384xbf16>,
    %c2_i32 = arith.constant 2 : i32
    %24 = arith.index_cast %c2_i32 : i32 to index
    %c0_12 = arith.constant 0 : index
    %c0_13 = arith.constant 0 : index
    %25 = vector.load %arg1[%24, %c0_12, %c0_13] : memref<8x16x128xbf16, #tpu.memory_space<vmem>>, vector<1x16x128xbf16>
    %26 = vector.shape_cast %25 : vector<1x16x128xbf16> to vector<16x128xbf16>
    %cst_14 = arith.constant dense<0.000000e+00> : vector<16x384xf32>
    %27 = tpu.matmul %26, %0, %cst_14 {dimension_numbers = #tpu.dot_dimension_numbers<[1], [0], [0], [1], [0, 0, 1, 1], [], []>} : vector<16x128xbf16>, vector<128x384xbf16>, vector<16x384xf32> -> vector<16x384xf32>
    %28 = vector.broadcast %1 : vector<1x384xf32> to vector<16x384xf32>
    %29 = arith.addf %27, %28 : vector<16x384xf32>
    %30 = arith.truncf %29 : vector<16x384xf32> to vector<16x384xbf16>
    %31 = arith.index_cast %c2_i32 : i32 to index
    %c0_15 = arith.constant 0 : index
    %c0_16 = arith.constant 0 : index
    %32 = vector.load %arg13[%31, %c0_15, %c0_16] : memref<8x16x384xbf16, #tpu.memory_space<vmem>>, vector<1x16x384xbf16>
    %33 = vector.shape_cast %32 : vector<1x16x384xbf16> to vector<16x384xbf16>
    %34 = vector.shape_cast %30 : vector<16x384xbf16> to vector<1x16x384xbf16>
    tpu.vector_store %arg13[%31, %c0_15, %c0_16], %34 {strides = array<i32>} : memref<8x16x384xbf16, #tpu.memory_space<vmem>>, vector<1x16x384xbf16>,
    %c3_i32 = arith.constant 3 : i32
    %35 = arith.index_cast %c3_i32 : i32 to index
    %c0_17 = arith.constant 0 : index
    %c0_18 = arith.constant 0 : index
    %36 = vector.load %arg1[%35, %c0_17, %c0_18] : memref<8x16x128xbf16, #tpu.memory_space<vmem>>, vector<1x16x128xbf16>
    %37 = vector.shape_cast %36 : vector<1x16x128xbf16> to vector<16x128xbf16>
    %cst_19 = arith.constant dense<0.000000e+00> : vector<16x384xf32>
    %38 = tpu.matmul %37, %0, %cst_19 {dimension_numbers = #tpu.dot_dimension_numbers<[1], [0], [0], [1], [0, 0, 1, 1], [], []>} : vector<16x128xbf16>, vector<128x384xbf16>, vector<16x384xf32> -> vector<16x384xf32>
    %39 = vector.broadcast %1 : vector<1x384xf32> to vector<16x384xf32>
    %40 = arith.addf %38, %39 : vector<16x384xf32>
    %41 = arith.truncf %40 : vector<16x384xf32> to vector<16x384xbf16>
    %42 = arith.index_cast %c3_i32 : i32 to index
    %c0_20 = arith.constant 0 : index
    %c0_21 = arith.constant 0 : index
    %43 = vector.load %arg13[%42, %c0_20, %c0_21] : memref<8x16x384xbf16, #tpu.memory_space<vmem>>, vector<1x16x384xbf16>
    %44 = vector.shape_cast %43 : vector<1x16x384xbf16> to vector<16x384xbf16>
    %45 = vector.shape_cast %41 : vector<16x384xbf16> to vector<1x16x384xbf16>
    tpu.vector_store %arg13[%42, %c0_20, %c0_21], %45 {strides = array<i32>} : memref<8x16x384xbf16, #tpu.memory_space<vmem>>, vector<1x16x384xbf16>,
    %c4_i32 = arith.constant 4 : i32
    %46 = arith.index_cast %c4_i32 : i32 to index
    %c0_22 = arith.constant 0 : index
    %c0_23 = arith.constant 0 : index
    %47 = vector.load %arg1[%46, %c0_22, %c0_23] : memref<8x16x128xbf16, #tpu.memory_space<vmem>>, vector<1x16x128xbf16>
    %48 = vector.shape_cast %47 : vector<1x16x128xbf16> to vector<16x128xbf16>
    %cst_24 = arith.constant dense<0.000000e+00> : vector<16x384xf32>
    %49 = tpu.matmul %48, %0, %cst_24 {dimension_numbers = #tpu.dot_dimension_numbers<[1], [0], [0], [1], [0, 0, 1, 1], [], []>} : vector<16x128xbf16>, vector<128x384xbf16>, vector<16x384xf32> -> vector<16x384xf32>
    %50 = vector.broadcast %1 : vector<1x384xf32> to vector<16x384xf32>
    %51 = arith.addf %49, %50 : vector<16x384xf32>
    %52 = arith.truncf %51 : vector<16x384xf32> to vector<16x384xbf16>
    %53 = arith.index_cast %c4_i32 : i32 to index
    %c0_25 = arith.constant 0 : index
    %c0_26 = arith.constant 0 : index
    %54 = vector.load %arg13[%53, %c0_25, %c0_26] : memref<8x16x384xbf16, #tpu.memory_space<vmem>>, vector<1x16x384xbf16>
    %55 = vector.shape_cast %54 : vector<1x16x384xbf16> to vector<16x384xbf16>
    %56 = vector.shape_cast %52 : vector<16x384xbf16> to vector<1x16x384xbf16>
    tpu.vector_store %arg13[%53, %c0_25, %c0_26], %56 {strides = array<i32>} : memref<8x16x384xbf16, #tpu.memory_space<vmem>>, vector<1x16x384xbf16>,
    %c5_i32 = arith.constant 5 : i32
    %57 = arith.index_cast %c5_i32 : i32 to index
    %c0_27 = arith.constant 0 : index
    %c0_28 = arith.constant 0 : index
    %58 = vector.load %arg1[%57, %c0_27, %c0_28] : memref<8x16x128xbf16, #tpu.memory_space<vmem>>, vector<1x16x128xbf16>
    %59 = vector.shape_cast %58 : vector<1x16x128xbf16> to vector<16x128xbf16>
    %cst_29 = arith.constant dense<0.000000e+00> : vector<16x384xf32>
    %60 = tpu.matmul %59, %0, %cst_29 {dimension_numbers = #tpu.dot_dimension_numbers<[1], [0], [0], [1], [0, 0, 1, 1], [], []>} : vector<16x128xbf16>, vector<128x384xbf16>, vector<16x384xf32> -> vector<16x384xf32>
    %61 = vector.broadcast %1 : vector<1x384xf32> to vector<16x384xf32>
    %62 = arith.addf %60, %61 : vector<16x384xf32>
    %63 = arith.truncf %62 : vector<16x384xf32> to vector<16x384xbf16>
    %64 = arith.index_cast %c5_i32 : i32 to index
    %c0_30 = arith.constant 0 : index
    %c0_31 = arith.constant 0 : index
    %65 = vector.load %arg13[%64, %c0_30, %c0_31] : memref<8x16x384xbf16, #tpu.memory_space<vmem>>, vector<1x16x384xbf16>
    %66 = vector.shape_cast %65 : vector<1x16x384xbf16> to vector<16x384xbf16>
    %67 = vector.shape_cast %63 : vector<16x384xbf16> to vector<1x16x384xbf16>
    tpu.vector_store %arg13[%64, %c0_30, %c0_31], %67 {strides = array<i32>} : memref<8x16x384xbf16, #tpu.memory_space<vmem>>, vector<1x16x384xbf16>,
    %c6_i32 = arith.constant 6 : i32
    %68 = arith.index_cast %c6_i32 : i32 to index
    %c0_32 = arith.constant 0 : index
    %c0_33 = arith.constant 0 : index
    %69 = vector.load %arg1[%68, %c0_32, %c0_33] : memref<8x16x128xbf16, #tpu.memory_space<vmem>>, vector<1x16x128xbf16>
    %70 = vector.shape_cast %69 : vector<1x16x128xbf16> to vector<16x128xbf16>
    %cst_34 = arith.constant dense<0.000000e+00> : vector<16x384xf32>
    %71 = tpu.matmul %70, %0, %cst_34 {dimension_numbers = #tpu.dot_dimension_numbers<[1], [0], [0], [1], [0, 0, 1, 1], [], []>} : vector<16x128xbf16>, vector<128x384xbf16>, vector<16x384xf32> -> vector<16x384xf32>
    %72 = vector.broadcast %1 : vector<1x384xf32> to vector<16x384xf32>
    %73 = arith.addf %71, %72 : vector<16x384xf32>
    %74 = arith.truncf %73 : vector<16x384xf32> to vector<16x384xbf16>
    %75 = arith.index_cast %c6_i32 : i32 to index
    %c0_35 = arith.constant 0 : index
    %c0_36 = arith.constant 0 : index
    %76 = vector.load %arg13[%75, %c0_35, %c0_36] : memref<8x16x384xbf16, #tpu.memory_space<vmem>>, vector<1x16x384xbf16>
    %77 = vector.shape_cast %76 : vector<1x16x384xbf16> to vector<16x384xbf16>
    %78 = vector.shape_cast %74 : vector<16x384xbf16> to vector<1x16x384xbf16>
    tpu.vector_store %arg13[%75, %c0_35, %c0_36], %78 {strides = array<i32>} : memref<8x16x384xbf16, #tpu.memory_space<vmem>>, vector<1x16x384xbf16>,
    %c7_i32 = arith.constant 7 : i32
    %79 = arith.index_cast %c7_i32 : i32 to index
    %c0_37 = arith.constant 0 : index
    %c0_38 = arith.constant 0 : index
    %80 = vector.load %arg1[%79, %c0_37, %c0_38] : memref<8x16x128xbf16, #tpu.memory_space<vmem>>, vector<1x16x128xbf16>
    %81 = vector.shape_cast %80 : vector<1x16x128xbf16> to vector<16x128xbf16>
    %cst_39 = arith.constant dense<0.000000e+00> : vector<16x384xf32>
    %82 = tpu.matmul %81, %0, %cst_39 {dimension_numbers = #tpu.dot_dimension_numbers<[1], [0], [0], [1], [0, 0, 1, 1], [], []>} : vector<16x128xbf16>, vector<128x384xbf16>, vector<16x384xf32> -> vector<16x384xf32>
    %83 = vector.broadcast %1 : vector<1x384xf32> to vector<16x384xf32>
    %84 = arith.addf %82, %83 : vector<16x384xf32>
    %85 = arith.truncf %84 : vector<16x384xf32> to vector<16x384xbf16>
    %86 = arith.index_cast %c7_i32 : i32 to index
    %c0_40 = arith.constant 0 : index
    %c0_41 = arith.constant 0 : index
    %87 = vector.load %arg13[%86, %c0_40, %c0_41] : memref<8x16x384xbf16, #tpu.memory_space<vmem>>, vector<1x16x384xbf16>
    %88 = vector.shape_cast %87 : vector<1x16x384xbf16> to vector<16x384xbf16>
    %89 = vector.shape_cast %85 : vector<16x384xbf16> to vector<1x16x384xbf16>
    tpu.vector_store %arg13[%86, %c0_40, %c0_41], %89 {strides = array<i32>} : memref<8x16x384xbf16, #tpu.memory_space<vmem>>, vector<1x16x384xbf16>,
    %c8_i32 = arith.constant 8 : i32
    %c0_42 = arith.constant 0 : index
    %c0_43 = arith.constant 0 : index
    %90 = vector.load %arg3[%c0_42, %c0_43] : memref<128x384xbf16, #tpu.memory_space<vmem>>, vector<128x384xbf16>
    %c0_44 = arith.constant 0 : index
    %c0_45 = arith.constant 0 : index
    %91 = vector.load %arg5[%c0_44, %c0_45] : memref<1x128xf32, #tpu.memory_space<vmem>>, vector<1x128xf32>
    %92 = vector.shape_cast %91 : vector<1x128xf32> to vector<1x128xf32>
    %93 = vector.broadcast %92 : vector<1x128xf32> to vector<16x128xf32>
    %cst_46 = arith.constant 0.000000e+00 : f32
    %94 = vector.broadcast %cst_46 : f32 to vector<16x128xf32>
    %c0_i32_47 = arith.constant 0 : i32
    %95 = arith.index_cast %c0_i32_47 : i32 to index
    %c0_48 = arith.constant 0 : index
    %c0_49 = arith.constant 0 : index
    %96 = vector.load %arg13[%95, %c0_48, %c0_49] : memref<8x16x384xbf16, #tpu.memory_space<vmem>>, vector<1x16x384xbf16>
    %97 = vector.shape_cast %96 : vector<1x16x384xbf16> to vector<16x384xbf16>
    %98 = arith.extf %97 : vector<16x384xbf16> to vector<16x384xf32>
    %99 = arith.truncf %94 : vector<16x128xf32> to vector<16x128xbf16>
    %cst_50 = arith.constant dense<0.000000e+00> : vector<16x384xf32>
    %100 = tpu.matmul %99, %90, %cst_50 {dimension_numbers = #tpu.dot_dimension_numbers<[1], [0], [0], [1], [0, 0, 1, 1], [], []>} : vector<16x128xbf16>, vector<128x384xbf16>, vector<16x384xf32> -> vector<16x384xf32>
    %101 = vector.extract_strided_slice %98 {offsets = [0, 0], sizes = [16, 128], strides = [1, 1]} : vector<16x384xf32> to vector<16x128xf32>
    %102 = vector.extract_strided_slice %100 {offsets = [0, 0], sizes = [16, 128], strides = [1, 1]} : vector<16x384xf32> to vector<16x128xf32>
    %103 = arith.addf %101, %102 : vector<16x128xf32>
    %104 = arith.negf %103 : vector<16x128xf32>
    %105 = math.exp %104 : vector<16x128xf32>
    %cst_51 = arith.constant 1.000000e+00 : f32
    %106 = vector.broadcast %cst_51 : f32 to vector<16x128xf32>
    %107 = arith.addf %106, %105 : vector<16x128xf32>
    %108 = arith.divf %106, %107 : vector<16x128xf32>
    %109 = vector.extract_strided_slice %98 {offsets = [0, 128], sizes = [16, 128], strides = [1, 1]} : vector<16x384xf32> to vector<16x128xf32>
    %110 = vector.extract_strided_slice %100 {offsets = [0, 128], sizes = [16, 128], strides = [1, 1]} : vector<16x384xf32> to vector<16x128xf32>
    %111 = arith.addf %109, %110 : vector<16x128xf32>
    %112 = arith.negf %111 : vector<16x128xf32>
    %113 = math.exp %112 : vector<16x128xf32>
    %cst_52 = arith.constant 1.000000e+00 : f32
    %114 = vector.broadcast %cst_52 : f32 to vector<16x128xf32>
    %115 = arith.addf %114, %113 : vector<16x128xf32>
    %116 = arith.divf %114, %115 : vector<16x128xf32>
    %117 = vector.extract_strided_slice %98 {offsets = [0, 256], sizes = [16, 128], strides = [1, 1]} : vector<16x384xf32> to vector<16x128xf32>
    %118 = vector.extract_strided_slice %100 {offsets = [0, 256], sizes = [16, 128], strides = [1, 1]} : vector<16x384xf32> to vector<16x128xf32>
    %119 = arith.addf %118, %93 : vector<16x128xf32>
    %120 = arith.mulf %108, %119 : vector<16x128xf32>
    %121 = arith.addf %117, %120 : vector<16x128xf32>
    %122 = math.tanh %121 : vector<16x128xf32>
    %123 = arith.subf %94, %122 : vector<16x128xf32>
    %124 = arith.mulf %116, %123 : vector<16x128xf32>
    %125 = arith.addf %122, %124 : vector<16x128xf32>
    %c1_i32_53 = arith.constant 1 : i32
    %126 = arith.index_cast %c1_i32_53 : i32 to index
    %c0_54 = arith.constant 0 : index
    %c0_55 = arith.constant 0 : index
    %127 = vector.load %arg13[%126, %c0_54, %c0_55] : memref<8x16x384xbf16, #tpu.memory_space<vmem>>, vector<1x16x384xbf16>
    %128 = vector.shape_cast %127 : vector<1x16x384xbf16> to vector<16x384xbf16>
    %129 = arith.extf %128 : vector<16x384xbf16> to vector<16x384xf32>
    %130 = arith.truncf %125 : vector<16x128xf32> to vector<16x128xbf16>
    %cst_56 = arith.constant dense<0.000000e+00> : vector<16x384xf32>
    %131 = tpu.matmul %130, %90, %cst_56 {dimension_numbers = #tpu.dot_dimension_numbers<[1], [0], [0], [1], [0, 0, 1, 1], [], []>} : vector<16x128xbf16>, vector<128x384xbf16>, vector<16x384xf32> -> vector<16x384xf32>
    %132 = vector.extract_strided_slice %129 {offsets = [0, 0], sizes = [16, 128], strides = [1, 1]} : vector<16x384xf32> to vector<16x128xf32>
    %133 = vector.extract_strided_slice %131 {offsets = [0, 0], sizes = [16, 128], strides = [1, 1]} : vector<16x384xf32> to vector<16x128xf32>
    %134 = arith.addf %132, %133 : vector<16x128xf32>
    %135 = arith.negf %134 : vector<16x128xf32>
    %136 = math.exp %135 : vector<16x128xf32>
    %cst_57 = arith.constant 1.000000e+00 : f32
    %137 = vector.broadcast %cst_57 : f32 to vector<16x128xf32>
    %138 = arith.addf %137, %136 : vector<16x128xf32>
    %139 = arith.divf %137, %138 : vector<16x128xf32>
    %140 = vector.extract_strided_slice %129 {offsets = [0, 128], sizes = [16, 128], strides = [1, 1]} : vector<16x384xf32> to vector<16x128xf32>
    %141 = vector.extract_strided_slice %131 {offsets = [0, 128], sizes = [16, 128], strides = [1, 1]} : vector<16x384xf32> to vector<16x128xf32>
    %142 = arith.addf %140, %141 : vector<16x128xf32>
    %143 = arith.negf %142 : vector<16x128xf32>
    %144 = math.exp %143 : vector<16x128xf32>
    %cst_58 = arith.constant 1.000000e+00 : f32
    %145 = vector.broadcast %cst_58 : f32 to vector<16x128xf32>
    %146 = arith.addf %145, %144 : vector<16x128xf32>
    %147 = arith.divf %145, %146 : vector<16x128xf32>
    %148 = vector.extract_strided_slice %129 {offsets = [0, 256], sizes = [16, 128], strides = [1, 1]} : vector<16x384xf32> to vector<16x128xf32>
    %149 = vector.extract_strided_slice %131 {offsets = [0, 256], sizes = [16, 128], strides = [1, 1]} : vector<16x384xf32> to vector<16x128xf32>
    %150 = arith.addf %149, %93 : vector<16x128xf32>
    %151 = arith.mulf %139, %150 : vector<16x128xf32>
    %152 = arith.addf %148, %151 : vector<16x128xf32>
    %153 = math.tanh %152 : vector<16x128xf32>
    %154 = arith.subf %125, %153 : vector<16x128xf32>
    %155 = arith.mulf %147, %154 : vector<16x128xf32>
    %156 = arith.addf %153, %155 : vector<16x128xf32>
    %c2_i32_59 = arith.constant 2 : i32
    %157 = arith.index_cast %c2_i32_59 : i32 to index
    %c0_60 = arith.constant 0 : index
    %c0_61 = arith.constant 0 : index
    %158 = vector.load %arg13[%157, %c0_60, %c0_61] : memref<8x16x384xbf16, #tpu.memory_space<vmem>>, vector<1x16x384xbf16>
    %159 = vector.shape_cast %158 : vector<1x16x384xbf16> to vector<16x384xbf16>
    %160 = arith.extf %159 : vector<16x384xbf16> to vector<16x384xf32>
    %161 = arith.truncf %156 : vector<16x128xf32> to vector<16x128xbf16>
    %cst_62 = arith.constant dense<0.000000e+00> : vector<16x384xf32>
    %162 = tpu.matmul %161, %90, %cst_62 {dimension_numbers = #tpu.dot_dimension_numbers<[1], [0], [0], [1], [0, 0, 1, 1], [], []>} : vector<16x128xbf16>, vector<128x384xbf16>, vector<16x384xf32> -> vector<16x384xf32>
    %163 = vector.extract_strided_slice %160 {offsets = [0, 0], sizes = [16, 128], strides = [1, 1]} : vector<16x384xf32> to vector<16x128xf32>
    %164 = vector.extract_strided_slice %162 {offsets = [0, 0], sizes = [16, 128], strides = [1, 1]} : vector<16x384xf32> to vector<16x128xf32>
    %165 = arith.addf %163, %164 : vector<16x128xf32>
    %166 = arith.negf %165 : vector<16x128xf32>
    %167 = math.exp %166 : vector<16x128xf32>
    %cst_63 = arith.constant 1.000000e+00 : f32
    %168 = vector.broadcast %cst_63 : f32 to vector<16x128xf32>
    %169 = arith.addf %168, %167 : vector<16x128xf32>
    %170 = arith.divf %168, %169 : vector<16x128xf32>
    %171 = vector.extract_strided_slice %160 {offsets = [0, 128], sizes = [16, 128], strides = [1, 1]} : vector<16x384xf32> to vector<16x128xf32>
    %172 = vector.extract_strided_slice %162 {offsets = [0, 128], sizes = [16, 128], strides = [1, 1]} : vector<16x384xf32> to vector<16x128xf32>
    %173 = arith.addf %171, %172 : vector<16x128xf32>
    %174 = arith.negf %173 : vector<16x128xf32>
    %175 = math.exp %174 : vector<16x128xf32>
    %cst_64 = arith.constant 1.000000e+00 : f32
    %176 = vector.broadcast %cst_64 : f32 to vector<16x128xf32>
    %177 = arith.addf %176, %175 : vector<16x128xf32>
    %178 = arith.divf %176, %177 : vector<16x128xf32>
    %179 = vector.extract_strided_slice %160 {offsets = [0, 256], sizes = [16, 128], strides = [1, 1]} : vector<16x384xf32> to vector<16x128xf32>
    %180 = vector.extract_strided_slice %162 {offsets = [0, 256], sizes = [16, 128], strides = [1, 1]} : vector<16x384xf32> to vector<16x128xf32>
    %181 = arith.addf %180, %93 : vector<16x128xf32>
    %182 = arith.mulf %170, %181 : vector<16x128xf32>
    %183 = arith.addf %179, %182 : vector<16x128xf32>
    %184 = math.tanh %183 : vector<16x128xf32>
    %185 = arith.subf %156, %184 : vector<16x128xf32>
    %186 = arith.mulf %178, %185 : vector<16x128xf32>
    %187 = arith.addf %184, %186 : vector<16x128xf32>
    %c3_i32_65 = arith.constant 3 : i32
    %188 = arith.index_cast %c3_i32_65 : i32 to index
    %c0_66 = arith.constant 0 : index
    %c0_67 = arith.constant 0 : index
    %189 = vector.load %arg13[%188, %c0_66, %c0_67] : memref<8x16x384xbf16, #tpu.memory_space<vmem>>, vector<1x16x384xbf16>
    %190 = vector.shape_cast %189 : vector<1x16x384xbf16> to vector<16x384xbf16>
    %191 = arith.extf %190 : vector<16x384xbf16> to vector<16x384xf32>
    %192 = arith.truncf %187 : vector<16x128xf32> to vector<16x128xbf16>
    %cst_68 = arith.constant dense<0.000000e+00> : vector<16x384xf32>
    %193 = tpu.matmul %192, %90, %cst_68 {dimension_numbers = #tpu.dot_dimension_numbers<[1], [0], [0], [1], [0, 0, 1, 1], [], []>} : vector<16x128xbf16>, vector<128x384xbf16>, vector<16x384xf32> -> vector<16x384xf32>
    %194 = vector.extract_strided_slice %191 {offsets = [0, 0], sizes = [16, 128], strides = [1, 1]} : vector<16x384xf32> to vector<16x128xf32>
    %195 = vector.extract_strided_slice %193 {offsets = [0, 0], sizes = [16, 128], strides = [1, 1]} : vector<16x384xf32> to vector<16x128xf32>
    %196 = arith.addf %194, %195 : vector<16x128xf32>
    %197 = arith.negf %196 : vector<16x128xf32>
    %198 = math.exp %197 : vector<16x128xf32>
    %cst_69 = arith.constant 1.000000e+00 : f32
    %199 = vector.broadcast %cst_69 : f32 to vector<16x128xf32>
    %200 = arith.addf %199, %198 : vector<16x128xf32>
    %201 = arith.divf %199, %200 : vector<16x128xf32>
    %202 = vector.extract_strided_slice %191 {offsets = [0, 128], sizes = [16, 128], strides = [1, 1]} : vector<16x384xf32> to vector<16x128xf32>
    %203 = vector.extract_strided_slice %193 {offsets = [0, 128], sizes = [16, 128], strides = [1, 1]} : vector<16x384xf32> to vector<16x128xf32>
    %204 = arith.addf %202, %203 : vector<16x128xf32>
    %205 = arith.negf %204 : vector<16x128xf32>
    %206 = math.exp %205 : vector<16x128xf32>
    %cst_70 = arith.constant 1.000000e+00 : f32
    %207 = vector.broadcast %cst_70 : f32 to vector<16x128xf32>
    %208 = arith.addf %207, %206 : vector<16x128xf32>
    %209 = arith.divf %207, %208 : vector<16x128xf32>
    %210 = vector.extract_strided_slice %191 {offsets = [0, 256], sizes = [16, 128], strides = [1, 1]} : vector<16x384xf32> to vector<16x128xf32>
    %211 = vector.extract_strided_slice %193 {offsets = [0, 256], sizes = [16, 128], strides = [1, 1]} : vector<16x384xf32> to vector<16x128xf32>
    %212 = arith.addf %211, %93 : vector<16x128xf32>
    %213 = arith.mulf %201, %212 : vector<16x128xf32>
    %214 = arith.addf %210, %213 : vector<16x128xf32>
    %215 = math.tanh %214 : vector<16x128xf32>
    %216 = arith.subf %187, %215 : vector<16x128xf32>
    %217 = arith.mulf %209, %216 : vector<16x128xf32>
    %218 = arith.addf %215, %217 : vector<16x128xf32>
    %c4_i32_71 = arith.constant 4 : i32
    %219 = arith.index_cast %c4_i32_71 : i32 to index
    %c0_72 = arith.constant 0 : index
    %c0_73 = arith.constant 0 : index
    %220 = vector.load %arg13[%219, %c0_72, %c0_73] : memref<8x16x384xbf16, #tpu.memory_space<vmem>>, vector<1x16x384xbf16>
    %221 = vector.shape_cast %220 : vector<1x16x384xbf16> to vector<16x384xbf16>
    %222 = arith.extf %221 : vector<16x384xbf16> to vector<16x384xf32>
    %223 = arith.truncf %218 : vector<16x128xf32> to vector<16x128xbf16>
    %cst_74 = arith.constant dense<0.000000e+00> : vector<16x384xf32>
    %224 = tpu.matmul %223, %90, %cst_74 {dimension_numbers = #tpu.dot_dimension_numbers<[1], [0], [0], [1], [0, 0, 1, 1], [], []>} : vector<16x128xbf16>, vector<128x384xbf16>, vector<16x384xf32> -> vector<16x384xf32>
    %225 = vector.extract_strided_slice %222 {offsets = [0, 0], sizes = [16, 128], strides = [1, 1]} : vector<16x384xf32> to vector<16x128xf32>
    %226 = vector.extract_strided_slice %224 {offsets = [0, 0], sizes = [16, 128], strides = [1, 1]} : vector<16x384xf32> to vector<16x128xf32>
    %227 = arith.addf %225, %226 : vector<16x128xf32>
    %228 = arith.negf %227 : vector<16x128xf32>
    %229 = math.exp %228 : vector<16x128xf32>
    %cst_75 = arith.constant 1.000000e+00 : f32
    %230 = vector.broadcast %cst_75 : f32 to vector<16x128xf32>
    %231 = arith.addf %230, %229 : vector<16x128xf32>
    %232 = arith.divf %230, %231 : vector<16x128xf32>
    %233 = vector.extract_strided_slice %222 {offsets = [0, 128], sizes = [16, 128], strides = [1, 1]} : vector<16x384xf32> to vector<16x128xf32>
    %234 = vector.extract_strided_slice %224 {offsets = [0, 128], sizes = [16, 128], strides = [1, 1]} : vector<16x384xf32> to vector<16x128xf32>
    %235 = arith.addf %233, %234 : vector<16x128xf32>
    %236 = arith.negf %235 : vector<16x128xf32>
    %237 = math.exp %236 : vector<16x128xf32>
    %cst_76 = arith.constant 1.000000e+00 : f32
    %238 = vector.broadcast %cst_76 : f32 to vector<16x128xf32>
    %239 = arith.addf %238, %237 : vector<16x128xf32>
    %240 = arith.divf %238, %239 : vector<16x128xf32>
    %241 = vector.extract_strided_slice %222 {offsets = [0, 256], sizes = [16, 128], strides = [1, 1]} : vector<16x384xf32> to vector<16x128xf32>
    %242 = vector.extract_strided_slice %224 {offsets = [0, 256], sizes = [16, 128], strides = [1, 1]} : vector<16x384xf32> to vector<16x128xf32>
    %243 = arith.addf %242, %93 : vector<16x128xf32>
    %244 = arith.mulf %232, %243 : vector<16x128xf32>
    %245 = arith.addf %241, %244 : vector<16x128xf32>
    %246 = math.tanh %245 : vector<16x128xf32>
    %247 = arith.subf %218, %246 : vector<16x128xf32>
    %248 = arith.mulf %240, %247 : vector<16x128xf32>
    %249 = arith.addf %246, %248 : vector<16x128xf32>
    %c5_i32_77 = arith.constant 5 : i32
    %250 = arith.index_cast %c5_i32_77 : i32 to index
    %c0_78 = arith.constant 0 : index
    %c0_79 = arith.constant 0 : index
    %251 = vector.load %arg13[%250, %c0_78, %c0_79] : memref<8x16x384xbf16, #tpu.memory_space<vmem>>, vector<1x16x384xbf16>
    %252 = vector.shape_cast %251 : vector<1x16x384xbf16> to vector<16x384xbf16>
    %253 = arith.extf %252 : vector<16x384xbf16> to vector<16x384xf32>
    %254 = arith.truncf %249 : vector<16x128xf32> to vector<16x128xbf16>
    %cst_80 = arith.constant dense<0.000000e+00> : vector<16x384xf32>
    %255 = tpu.matmul %254, %90, %cst_80 {dimension_numbers = #tpu.dot_dimension_numbers<[1], [0], [0], [1], [0, 0, 1, 1], [], []>} : vector<16x128xbf16>, vector<128x384xbf16>, vector<16x384xf32> -> vector<16x384xf32>
    %256 = vector.extract_strided_slice %253 {offsets = [0, 0], sizes = [16, 128], strides = [1, 1]} : vector<16x384xf32> to vector<16x128xf32>
    %257 = vector.extract_strided_slice %255 {offsets = [0, 0], sizes = [16, 128], strides = [1, 1]} : vector<16x384xf32> to vector<16x128xf32>
    %258 = arith.addf %256, %257 : vector<16x128xf32>
    %259 = arith.negf %258 : vector<16x128xf32>
    %260 = math.exp %259 : vector<16x128xf32>
    %cst_81 = arith.constant 1.000000e+00 : f32
    %261 = vector.broadcast %cst_81 : f32 to vector<16x128xf32>
    %262 = arith.addf %261, %260 : vector<16x128xf32>
    %263 = arith.divf %261, %262 : vector<16x128xf32>
    %264 = vector.extract_strided_slice %253 {offsets = [0, 128], sizes = [16, 128], strides = [1, 1]} : vector<16x384xf32> to vector<16x128xf32>
    %265 = vector.extract_strided_slice %255 {offsets = [0, 128], sizes = [16, 128], strides = [1, 1]} : vector<16x384xf32> to vector<16x128xf32>
    %266 = arith.addf %264, %265 : vector<16x128xf32>
    %267 = arith.negf %266 : vector<16x128xf32>
    %268 = math.exp %267 : vector<16x128xf32>
    %cst_82 = arith.constant 1.000000e+00 : f32
    %269 = vector.broadcast %cst_82 : f32 to vector<16x128xf32>
    %270 = arith.addf %269, %268 : vector<16x128xf32>
    %271 = arith.divf %269, %270 : vector<16x128xf32>
    %272 = vector.extract_strided_slice %253 {offsets = [0, 256], sizes = [16, 128], strides = [1, 1]} : vector<16x384xf32> to vector<16x128xf32>
    %273 = vector.extract_strided_slice %255 {offsets = [0, 256], sizes = [16, 128], strides = [1, 1]} : vector<16x384xf32> to vector<16x128xf32>
    %274 = arith.addf %273, %93 : vector<16x128xf32>
    %275 = arith.mulf %263, %274 : vector<16x128xf32>
    %276 = arith.addf %272, %275 : vector<16x128xf32>
    %277 = math.tanh %276 : vector<16x128xf32>
    %278 = arith.subf %249, %277 : vector<16x128xf32>
    %279 = arith.mulf %271, %278 : vector<16x128xf32>
    %280 = arith.addf %277, %279 : vector<16x128xf32>
    %c6_i32_83 = arith.constant 6 : i32
    %281 = arith.index_cast %c6_i32_83 : i32 to index
    %c0_84 = arith.constant 0 : index
    %c0_85 = arith.constant 0 : index
    %282 = vector.load %arg13[%281, %c0_84, %c0_85] : memref<8x16x384xbf16, #tpu.memory_space<vmem>>, vector<1x16x384xbf16>
    %283 = vector.shape_cast %282 : vector<1x16x384xbf16> to vector<16x384xbf16>
    %284 = arith.extf %283 : vector<16x384xbf16> to vector<16x384xf32>
    %285 = arith.truncf %280 : vector<16x128xf32> to vector<16x128xbf16>
    %cst_86 = arith.constant dense<0.000000e+00> : vector<16x384xf32>
    %286 = tpu.matmul %285, %90, %cst_86 {dimension_numbers = #tpu.dot_dimension_numbers<[1], [0], [0], [1], [0, 0, 1, 1], [], []>} : vector<16x128xbf16>, vector<128x384xbf16>, vector<16x384xf32> -> vector<16x384xf32>
    %287 = vector.extract_strided_slice %284 {offsets = [0, 0], sizes = [16, 128], strides = [1, 1]} : vector<16x384xf32> to vector<16x128xf32>
    %288 = vector.extract_strided_slice %286 {offsets = [0, 0], sizes = [16, 128], strides = [1, 1]} : vector<16x384xf32> to vector<16x128xf32>
    %289 = arith.addf %287, %288 : vector<16x128xf32>
    %290 = arith.negf %289 : vector<16x128xf32>
    %291 = math.exp %290 : vector<16x128xf32>
    %cst_87 = arith.constant 1.000000e+00 : f32
    %292 = vector.broadcast %cst_87 : f32 to vector<16x128xf32>
    %293 = arith.addf %292, %291 : vector<16x128xf32>
    %294 = arith.divf %292, %293 : vector<16x128xf32>
    %295 = vector.extract_strided_slice %284 {offsets = [0, 128], sizes = [16, 128], strides = [1, 1]} : vector<16x384xf32> to vector<16x128xf32>
    %296 = vector.extract_strided_slice %286 {offsets = [0, 128], sizes = [16, 128], strides = [1, 1]} : vector<16x384xf32> to vector<16x128xf32>
    %297 = arith.addf %295, %296 : vector<16x128xf32>
    %298 = arith.negf %297 : vector<16x128xf32>
    %299 = math.exp %298 : vector<16x128xf32>
    %cst_88 = arith.constant 1.000000e+00 : f32
    %300 = vector.broadcast %cst_88 : f32 to vector<16x128xf32>
    %301 = arith.addf %300, %299 : vector<16x128xf32>
    %302 = arith.divf %300, %301 : vector<16x128xf32>
    %303 = vector.extract_strided_slice %284 {offsets = [0, 256], sizes = [16, 128], strides = [1, 1]} : vector<16x384xf32> to vector<16x128xf32>
    %304 = vector.extract_strided_slice %286 {offsets = [0, 256], sizes = [16, 128], strides = [1, 1]} : vector<16x384xf32> to vector<16x128xf32>
    %305 = arith.addf %304, %93 : vector<16x128xf32>
    %306 = arith.mulf %294, %305 : vector<16x128xf32>
    %307 = arith.addf %303, %306 : vector<16x128xf32>
    %308 = math.tanh %307 : vector<16x128xf32>
    %309 = arith.subf %280, %308 : vector<16x128xf32>
    %310 = arith.mulf %302, %309 : vector<16x128xf32>
    %311 = arith.addf %308, %310 : vector<16x128xf32>
    %c7_i32_89 = arith.constant 7 : i32
    %312 = arith.index_cast %c7_i32_89 : i32 to index
    %c0_90 = arith.constant 0 : index
    %c0_91 = arith.constant 0 : index
    %313 = vector.load %arg13[%312, %c0_90, %c0_91] : memref<8x16x384xbf16, #tpu.memory_space<vmem>>, vector<1x16x384xbf16>
    %314 = vector.shape_cast %313 : vector<1x16x384xbf16> to vector<16x384xbf16>
    %315 = arith.extf %314 : vector<16x384xbf16> to vector<16x384xf32>
    %316 = arith.truncf %311 : vector<16x128xf32> to vector<16x128xbf16>
    %cst_92 = arith.constant dense<0.000000e+00> : vector<16x384xf32>
    %317 = tpu.matmul %316, %90, %cst_92 {dimension_numbers = #tpu.dot_dimension_numbers<[1], [0], [0], [1], [0, 0, 1, 1], [], []>} : vector<16x128xbf16>, vector<128x384xbf16>, vector<16x384xf32> -> vector<16x384xf32>
    %318 = vector.extract_strided_slice %315 {offsets = [0, 0], sizes = [16, 128], strides = [1, 1]} : vector<16x384xf32> to vector<16x128xf32>
    %319 = vector.extract_strided_slice %317 {offsets = [0, 0], sizes = [16, 128], strides = [1, 1]} : vector<16x384xf32> to vector<16x128xf32>
    %320 = arith.addf %318, %319 : vector<16x128xf32>
    %321 = arith.negf %320 : vector<16x128xf32>
    %322 = math.exp %321 : vector<16x128xf32>
    %cst_93 = arith.constant 1.000000e+00 : f32
    %323 = vector.broadcast %cst_93 : f32 to vector<16x128xf32>
    %324 = arith.addf %323, %322 : vector<16x128xf32>
    %325 = arith.divf %323, %324 : vector<16x128xf32>
    %326 = vector.extract_strided_slice %315 {offsets = [0, 128], sizes = [16, 128], strides = [1, 1]} : vector<16x384xf32> to vector<16x128xf32>
    %327 = vector.extract_strided_slice %317 {offsets = [0, 128], sizes = [16, 128], strides = [1, 1]} : vector<16x384xf32> to vector<16x128xf32>
    %328 = arith.addf %326, %327 : vector<16x128xf32>
    %329 = arith.negf %328 : vector<16x128xf32>
    %330 = math.exp %329 : vector<16x128xf32>
    %cst_94 = arith.constant 1.000000e+00 : f32
    %331 = vector.broadcast %cst_94 : f32 to vector<16x128xf32>
    %332 = arith.addf %331, %330 : vector<16x128xf32>
    %333 = arith.divf %331, %332 : vector<16x128xf32>
    %334 = vector.extract_strided_slice %315 {offsets = [0, 256], sizes = [16, 128], strides = [1, 1]} : vector<16x384xf32> to vector<16x128xf32>
    %335 = vector.extract_strided_slice %317 {offsets = [0, 256], sizes = [16, 128], strides = [1, 1]} : vector<16x384xf32> to vector<16x128xf32>
    %336 = arith.addf %335, %93 : vector<16x128xf32>
    %337 = arith.mulf %325, %336 : vector<16x128xf32>
    %338 = arith.addf %334, %337 : vector<16x128xf32>
    %339 = math.tanh %338 : vector<16x128xf32>
    %340 = arith.subf %311, %339 : vector<16x128xf32>
    %341 = arith.mulf %333, %340 : vector<16x128xf32>
    %342 = arith.addf %339, %341 : vector<16x128xf32>
    %c8_i32_95 = arith.constant 8 : i32
    %c7 = arith.constant 7 : index
    %c0_96 = arith.constant 0 : index
    %c0_97 = arith.constant 0 : index
    %343 = vector.load %arg1[%c7, %c0_96, %c0_97] : memref<8x16x128xbf16, #tpu.memory_space<vmem>>, vector<1x16x128xbf16>
    %344 = vector.shape_cast %343 : vector<1x16x128xbf16> to vector<16x128xbf16>
    %c0_98 = arith.constant 0 : index
    %c0_99 = arith.constant 0 : index
    %345 = vector.load %arg6[%c0_98, %c0_99] : memref<128x384xbf16, #tpu.memory_space<vmem>>, vector<128x384xbf16>
    %cst_100 = arith.constant dense<0.000000e+00> : vector<16x384xf32>
    %346 = tpu.matmul %344, %345, %cst_100 {dimension_numbers = #tpu.dot_dimension_numbers<[1], [0], [0], [1], [0, 0, 1, 1], [], []>} : vector<16x128xbf16>, vector<128x384xbf16>, vector<16x384xf32> -> vector<16x384xf32>
    %c0_101 = arith.constant 0 : index
    %c0_102 = arith.constant 0 : index
    %347 = vector.load %arg7[%c0_101, %c0_102] : memref<1x384xf32, #tpu.memory_space<vmem>>, vector<1x384xf32>
    %348 = vector.broadcast %347 : vector<1x384xf32> to vector<16x384xf32>
    %349 = arith.addf %346, %348 : vector<16x384xf32>
    %350 = vector.extract_strided_slice %349 {offsets = [0, 0], sizes = [16, 128], strides = [1, 1]} : vector<16x384xf32> to vector<16x128xf32>
    %351 = arith.negf %350 : vector<16x128xf32>
    %352 = math.exp %351 : vector<16x128xf32>
    %cst_103 = arith.constant 1.000000e+00 : f32
    %353 = vector.broadcast %cst_103 : f32 to vector<16x128xf32>
    %354 = arith.addf %353, %352 : vector<16x128xf32>
    %355 = arith.divf %353, %354 : vector<16x128xf32>
    %356 = vector.extract_strided_slice %349 {offsets = [0, 128], sizes = [16, 128], strides = [1, 1]} : vector<16x384xf32> to vector<16x128xf32>
    %357 = arith.negf %356 : vector<16x128xf32>
    %358 = math.exp %357 : vector<16x128xf32>
    %cst_104 = arith.constant 1.000000e+00 : f32
    %359 = vector.broadcast %cst_104 : f32 to vector<16x128xf32>
    %360 = arith.addf %359, %358 : vector<16x128xf32>
    %361 = arith.divf %359, %360 : vector<16x128xf32>
    %362 = vector.extract_strided_slice %349 {offsets = [0, 256], sizes = [16, 128], strides = [1, 1]} : vector<16x384xf32> to vector<16x128xf32>
    %c0_105 = arith.constant 0 : index
    %c0_106 = arith.constant 0 : index
    %363 = vector.load %arg8[%c0_105, %c0_106] : memref<1x128xf32, #tpu.memory_space<vmem>>, vector<1x128xf32>
    %364 = vector.shape_cast %363 : vector<1x128xf32> to vector<1x128xf32>
    %365 = vector.broadcast %364 : vector<1x128xf32> to vector<16x128xf32>
    %366 = arith.mulf %355, %365 : vector<16x128xf32>
    %367 = arith.addf %362, %366 : vector<16x128xf32>
    %368 = math.tanh %367 : vector<16x128xf32>
    %cst_107 = arith.constant 1.000000e+00 : f32
    %369 = vector.broadcast %cst_107 : f32 to vector<16x128xf32>
    %370 = arith.subf %369, %361 : vector<16x128xf32>
    %371 = arith.mulf %370, %368 : vector<16x128xf32>
    %372 = arith.truncf %342 : vector<16x128xf32> to vector<16x128xbf16>
    %c0_108 = arith.constant 0 : index
    %c0_109 = arith.constant 0 : index
    %373 = vector.load %arg9[%c0_108, %c0_109] : memref<128x128xbf16, #tpu.memory_space<vmem>>, vector<128x128xbf16>
    %cst_110 = arith.constant dense<0.000000e+00> : vector<16x128xf32>
    %374 = tpu.matmul %372, %373, %cst_110 {dimension_numbers = #tpu.dot_dimension_numbers<[1], [0], [0], [1], [0, 0, 1, 1], [], []>} : vector<16x128xbf16>, vector<128x128xbf16>, vector<16x128xf32> -> vector<16x128xf32>
    %375 = arith.truncf %371 : vector<16x128xf32> to vector<16x128xbf16>
    %c0_111 = arith.constant 0 : index
    %c0_112 = arith.constant 0 : index
    %376 = vector.load %arg10[%c0_111, %c0_112] : memref<128x128xbf16, #tpu.memory_space<vmem>>, vector<128x128xbf16>
    %cst_113 = arith.constant dense<0.000000e+00> : vector<16x128xf32>
    %377 = tpu.matmul %375, %376, %cst_113 {dimension_numbers = #tpu.dot_dimension_numbers<[1], [0], [0], [1], [0, 0, 1, 1], [], []>} : vector<16x128xbf16>, vector<128x128xbf16>, vector<16x128xf32> -> vector<16x128xf32>
    %378 = arith.addf %374, %377 : vector<16x128xf32>
    %c0_114 = arith.constant 0 : index
    %c0_115 = arith.constant 0 : index
    %379 = vector.load %arg11[%c0_114, %c0_115] : memref<1x128xf32, #tpu.memory_space<vmem>>, vector<1x128xf32>
    %380 = vector.broadcast %379 : vector<1x128xf32> to vector<16x128xf32>
    %381 = arith.addf %378, %380 : vector<16x128xf32>
    %c0_116 = arith.constant 0 : index
    %c0_117 = arith.constant 0 : index
    %382 = vector.load %arg12[%c0_116, %c0_117] : memref<16x128xf32, #tpu.memory_space<vmem>>, vector<16x128xf32>
    tpu.vector_store %arg12[%c0_116, %c0_117], %381 {strides = array<i32>} : memref<16x128xf32, #tpu.memory_space<vmem>>, vector<16x128xf32>,
    return
  }
  func.func @transform_0(%arg0: i32) -> (i32, i32, i32) {
    %c0_i32 = arith.constant 0 : i32
    %c0_i32_0 = arith.constant 0 : i32
    %c0_i32_1 = arith.constant 0 : i32
    return %c0_i32, %arg0, %c0_i32_0 : i32, i32, i32
  }
  func.func @transform_1(%arg0: i32) -> (i32, i32) {
    %c0_i32 = arith.constant 0 : i32
    %c0_i32_0 = arith.constant 0 : i32
    %c0_i32_1 = arith.constant 0 : i32
    return %c0_i32, %c0_i32_0 : i32, i32
  }
  func.func @transform_2(%arg0: i32) -> (i32, i32) {
    %c0_i32 = arith.constant 0 : i32
    %c0_i32_0 = arith.constant 0 : i32
    %c0_i32_1 = arith.constant 0 : i32
    return %c0_i32, %c0_i32_0 : i32, i32
  }
  func.func @transform_3(%arg0: i32) -> (i32, i32) {
    %c0_i32 = arith.constant 0 : i32
    %c0_i32_0 = arith.constant 0 : i32
    %c0_i32_1 = arith.constant 0 : i32
    return %c0_i32, %c0_i32_0 : i32, i32
  }
  func.func @transform_4(%arg0: i32) -> (i32, i32) {
    %c0_i32 = arith.constant 0 : i32
    %c0_i32_0 = arith.constant 0 : i32
    %c0_i32_1 = arith.constant 0 : i32
    return %c0_i32, %c0_i32_0 : i32, i32
  }
  func.func @transform_5(%arg0: i32) -> (i32, i32) {
    %c0_i32 = arith.constant 0 : i32
    %c0_i32_0 = arith.constant 0 : i32
    %c0_i32_1 = arith.constant 0 : i32
    return %c0_i32, %c0_i32_0 : i32, i32
  }
  func.func @transform_6(%arg0: i32) -> (i32, i32) {
    %c0_i32 = arith.constant 0 : i32
    %c0_i32_0 = arith.constant 0 : i32
    %c0_i32_1 = arith.constant 0 : i32
    return %c0_i32, %c0_i32_0 : i32, i32
  }
  func.func @transform_7(%arg0: i32) -> (i32, i32) {
    %c0_i32 = arith.constant 0 : i32
    %c0_i32_0 = arith.constant 0 : i32
    %c0_i32_1 = arith.constant 0 : i32
    return %c0_i32, %c0_i32_0 : i32, i32
  }
  func.func @transform_8(%arg0: i32) -> (i32, i32) {
    %c0_i32 = arith.constant 0 : i32
    %c0_i32_0 = arith.constant 0 : i32
    %c0_i32_1 = arith.constant 0 : i32
    return %c0_i32, %c0_i32_0 : i32, i32
  }
  func.func @transform_9(%arg0: i32) -> (i32, i32) {
    %c0_i32 = arith.constant 0 : i32
    %c0_i32_0 = arith.constant 0 : i32
    %c0_i32_1 = arith.constant 0 : i32
    return %c0_i32, %c0_i32_0 : i32, i32
  }
  func.func @transform_10(%arg0: i32) -> (i32, i32) {
    %c0_i32 = arith.constant 0 : i32
    %c0_i32_0 = arith.constant 0 : i32
    %c0_i32_1 = arith.constant 0 : i32
    return %c0_i32, %c0_i32_0 : i32, i32
  }
  func.func @transform_11(%arg0: i32) -> (i32, i32) {
    %c0_i32 = arith.constant 0 : i32
    %c0_i32_0 = arith.constant 0 : i32
    return %arg0, %c0_i32 : i32, i32
  }
}

module attributes {stable_mosaic.version = 11 : i64} {
  func.func @gru_classifier_kernel(%arg0: i32, %arg1: memref<8x16x128xbf16, #tpu.memory_space<vmem>>, %arg2: memref<128x384xbf16, #tpu.memory_space<vmem>>, %arg3: memref<128x384xbf16, #tpu.memory_space<vmem>>, %arg4: memref<1x384xf32, #tpu.memory_space<vmem>>, %arg5: memref<1x128xf32, #tpu.memory_space<vmem>>, %arg6: memref<128x384xbf16, #tpu.memory_space<vmem>>, %arg7: memref<1x384xf32, #tpu.memory_space<vmem>>, %arg8: memref<1x128xf32, #tpu.memory_space<vmem>>, %arg9: memref<128x128xbf16, #tpu.memory_space<vmem>>, %arg10: memref<128x128xbf16, #tpu.memory_space<vmem>>, %arg11: memref<1x128xf32, #tpu.memory_space<vmem>>, %arg12: memref<16x128xf32, #tpu.memory_space<vmem>>, %arg13: memref<8x16x384xbf16, #tpu.memory_space<vmem>>) attributes {dimension_semantics = [#tpu.dimension_semantics<parallel>], iteration_bounds = array<i64: 1>, scalar_prefetch = 0 : i64, scratch_operands = 1 : i64, tpu.core_type = #tpu.core_type<tc>, window_params = [{transform_indices = @transform_0, window_bounds = array<i64: 8, 16, 128>}, {pipeline_mode = #tpu.pipeline_mode<synchronous>, transform_indices = @transform_1, window_bounds = array<i64: 128, 384>}, {pipeline_mode = #tpu.pipeline_mode<synchronous>, transform_indices = @transform_2, window_bounds = array<i64: 128, 384>}, {pipeline_mode = #tpu.pipeline_mode<synchronous>, transform_indices = @transform_3, window_bounds = array<i64: 1, 384>}, {pipeline_mode = #tpu.pipeline_mode<synchronous>, transform_indices = @transform_4, window_bounds = array<i64: 1, 128>}, {pipeline_mode = #tpu.pipeline_mode<synchronous>, transform_indices = @transform_5, window_bounds = array<i64: 128, 384>}, {pipeline_mode = #tpu.pipeline_mode<synchronous>, transform_indices = @transform_6, window_bounds = array<i64: 1, 384>}, {pipeline_mode = #tpu.pipeline_mode<synchronous>, transform_indices = @transform_7, window_bounds = array<i64: 1, 128>}, {pipeline_mode = #tpu.pipeline_mode<synchronous>, transform_indices = @transform_8, window_bounds = array<i64: 128, 128>}, {pipeline_mode = #tpu.pipeline_mode<synchronous>, transform_indices = @transform_9, window_bounds = array<i64: 128, 128>}, {pipeline_mode = #tpu.pipeline_mode<synchronous>, transform_indices = @transform_10, window_bounds = array<i64: 1, 128>}, {transform_indices = @transform_11, window_bounds = array<i64: 16, 128>}]} {
    %c0 = arith.constant 0 : index
    %c0_0 = arith.constant 0 : index
    %0 = vector.load %arg2[%c0, %c0_0] : memref<128x384xbf16, #tpu.memory_space<vmem>>, vector<128x384xbf16>
    %c0_1 = arith.constant 0 : index
    %c0_2 = arith.constant 0 : index
    %1 = vector.load %arg4[%c0_1, %c0_2] : memref<1x384xf32, #tpu.memory_space<vmem>>, vector<1x384xf32>
    %c0_i32 = arith.constant 0 : i32
    %2 = arith.index_cast %c0_i32 : i32 to index
    %c0_3 = arith.constant 0 : index
    %c0_4 = arith.constant 0 : index
    %3 = vector.load %arg1[%2, %c0_3, %c0_4] : memref<8x16x128xbf16, #tpu.memory_space<vmem>>, vector<1x16x128xbf16>
    %4 = vector.shape_cast %3 : vector<1x16x128xbf16> to vector<16x128xbf16>
    %cst = arith.constant dense<0.000000e+00> : vector<16x384xf32>
    %5 = tpu.matmul %4, %0, %cst {dimension_numbers = #tpu.dot_dimension_numbers<[1], [0], [0], [1], [0, 0, 1, 1], [], []>} : vector<16x128xbf16>, vector<128x384xbf16>, vector<16x384xf32> -> vector<16x384xf32>
    %6 = vector.broadcast %1 : vector<1x384xf32> to vector<16x384xf32>
    %7 = arith.addf %5, %6 : vector<16x384xf32>
    %8 = arith.truncf %7 : vector<16x384xf32> to vector<16x384xbf16>
    %9 = arith.index_cast %c0_i32 : i32 to index
    %c0_5 = arith.constant 0 : index
    %c0_6 = arith.constant 0 : index
    %10 = vector.load %arg13[%9, %c0_5, %c0_6] : memref<8x16x384xbf16, #tpu.memory_space<vmem>>, vector<1x16x384xbf16>
    %11 = vector.shape_cast %10 : vector<1x16x384xbf16> to vector<16x384xbf16>
    %12 = vector.shape_cast %8 : vector<16x384xbf16> to vector<1x16x384xbf16>
    tpu.vector_store %arg13[%9, %c0_5, %c0_6], %12 {strides = array<i32>} : memref<8x16x384xbf16, #tpu.memory_space<vmem>>, vector<1x16x384xbf16>,
    %c1_i32 = arith.constant 1 : i32
    %13 = arith.index_cast %c1_i32 : i32 to index
    %c0_7 = arith.constant 0 : index
    %c0_8 = arith.constant 0 : index
    %14 = vector.load %arg1[%13, %c0_7, %c0_8] : memref<8x16x128xbf16, #tpu.memory_space<vmem>>, vector<1x16x128xbf16>
    %15 = vector.shape_cast %14 : vector<1x16x128xbf16> to vector<16x128xbf16>
    %cst_9 = arith.constant dense<0.000000e+00> : vector<16x384xf32>
    %16 = tpu.matmul %15, %0, %cst_9 {dimension_numbers = #tpu.dot_dimension_numbers<[1], [0], [0], [1], [0, 0, 1, 1], [], []>} : vector<16x128xbf16>, vector<128x384xbf16>, vector<16x384xf32> -> vector<16x384xf32>
    %17 = vector.broadcast %1 : vector<1x384xf32> to vector<16x384xf32>
    %18 = arith.addf %16, %17 : vector<16x384xf32>
    %19 = arith.truncf %18 : vector<16x384xf32> to vector<16x384xbf16>
    %20 = arith.index_cast %c1_i32 : i32 to index
    %c0_10 = arith.constant 0 : index
    %c0_11 = arith.constant 0 : index
    %21 = vector.load %arg13[%20, %c0_10, %c0_11] : memref<8x16x384xbf16, #tpu.memory_space<vmem>>, vector<1x16x384xbf16>
    %22 = vector.shape_cast %21 : vector<1x16x384xbf16> to vector<16x384xbf16>
    %23 = vector.shape_cast %19 : vector<16x384xbf16> to vector<1x16x384xbf16>
    tpu.vector_store %arg13[%20, %c0_10, %c0_11], %23 {strides = array<i32>} : memref<8x16x384xbf16, #tpu.memory_space<vmem>>, vector<1x16x384xbf16>,
    %c2_i32 = arith.constant 2 : i32
    %24 = arith.index_cast %c2_i32 : i32 to index
    %c0_12 = arith.constant 0 : index
    %c0_13 = arith.constant 0 : index
    %25 = vector.load %arg1[%24, %c0_12, %c0_13] : memref<8x16x128xbf16, #tpu.memory_space<vmem>>, vector<1x16x128xbf16>
    %26 = vector.shape_cast %25 : vector<1x16x128xbf16> to vector<16x128xbf16>
    %cst_14 = arith.constant dense<0.000000e+00> : vector<16x384xf32>
    %27 = tpu.matmul %26, %0, %cst_14 {dimension_numbers = #tpu.dot_dimension_numbers<[1], [0], [0], [1], [0, 0, 1, 1], [], []>} : vector<16x128xbf16>, vector<128x384xbf16>, vector<16x384xf32> -> vector<16x384xf32>
    %28 = vector.broadcast %1 : vector<1x384xf32> to vector<16x384xf32>
    %29 = arith.addf %27, %28 : vector<16x384xf32>
    %30 = arith.truncf %29 : vector<16x384xf32> to vector<16x384xbf16>
    %31 = arith.index_cast %c2_i32 : i32 to index
    %c0_15 = arith.constant 0 : index
    %c0_16 = arith.constant 0 : index
    %32 = vector.load %arg13[%31, %c0_15, %c0_16] : memref<8x16x384xbf16, #tpu.memory_space<vmem>>, vector<1x16x384xbf16>
    %33 = vector.shape_cast %32 : vector<1x16x384xbf16> to vector<16x384xbf16>
    %34 = vector.shape_cast %30 : vector<16x384xbf16> to vector<1x16x384xbf16>
    tpu.vector_store %arg13[%31, %c0_15, %c0_16], %34 {strides = array<i32>} : memref<8x16x384xbf16, #tpu.memory_space<vmem>>, vector<1x16x384xbf16>,
    %c3_i32 = arith.constant 3 : i32
    %35 = arith.index_cast %c3_i32 : i32 to index
    %c0_17 = arith.constant 0 : index
    %c0_18 = arith.constant 0 : index
    %36 = vector.load %arg1[%35, %c0_17, %c0_18] : memref<8x16x128xbf16, #tpu.memory_space<vmem>>, vector<1x16x128xbf16>
    %37 = vector.shape_cast %36 : vector<1x16x128xbf16> to vector<16x128xbf16>
    %cst_19 = arith.constant dense<0.000000e+00> : vector<16x384xf32>
    %38 = tpu.matmul %37, %0, %cst_19 {dimension_numbers = #tpu.dot_dimension_numbers<[1], [0], [0], [1], [0, 0, 1, 1], [], []>} : vector<16x128xbf16>, vector<128x384xbf16>, vector<16x384xf32> -> vector<16x384xf32>
    %39 = vector.broadcast %1 : vector<1x384xf32> to vector<16x384xf32>
    %40 = arith.addf %38, %39 : vector<16x384xf32>
    %41 = arith.truncf %40 : vector<16x384xf32> to vector<16x384xbf16>
    %42 = arith.index_cast %c3_i32 : i32 to index
    %c0_20 = arith.constant 0 : index
    %c0_21 = arith.constant 0 : index
    %43 = vector.load %arg13[%42, %c0_20, %c0_21] : memref<8x16x384xbf16, #tpu.memory_space<vmem>>, vector<1x16x384xbf16>
    %44 = vector.shape_cast %43 : vector<1x16x384xbf16> to vector<16x384xbf16>
    %45 = vector.shape_cast %41 : vector<16x384xbf16> to vector<1x16x384xbf16>
    tpu.vector_store %arg13[%42, %c0_20, %c0_21], %45 {strides = array<i32>} : memref<8x16x384xbf16, #tpu.memory_space<vmem>>, vector<1x16x384xbf16>,
    %c4_i32 = arith.constant 4 : i32
    %46 = arith.index_cast %c4_i32 : i32 to index
    %c0_22 = arith.constant 0 : index
    %c0_23 = arith.constant 0 : index
    %47 = vector.load %arg1[%46, %c0_22, %c0_23] : memref<8x16x128xbf16, #tpu.memory_space<vmem>>, vector<1x16x128xbf16>
    %48 = vector.shape_cast %47 : vector<1x16x128xbf16> to vector<16x128xbf16>
    %cst_24 = arith.constant dense<0.000000e+00> : vector<16x384xf32>
    %49 = tpu.matmul %48, %0, %cst_24 {dimension_numbers = #tpu.dot_dimension_numbers<[1], [0], [0], [1], [0, 0, 1, 1], [], []>} : vector<16x128xbf16>, vector<128x384xbf16>, vector<16x384xf32> -> vector<16x384xf32>
    %50 = vector.broadcast %1 : vector<1x384xf32> to vector<16x384xf32>
    %51 = arith.addf %49, %50 : vector<16x384xf32>
    %52 = arith.truncf %51 : vector<16x384xf32> to vector<16x384xbf16>
    %53 = arith.index_cast %c4_i32 : i32 to index
    %c0_25 = arith.constant 0 : index
    %c0_26 = arith.constant 0 : index
    %54 = vector.load %arg13[%53, %c0_25, %c0_26] : memref<8x16x384xbf16, #tpu.memory_space<vmem>>, vector<1x16x384xbf16>
    %55 = vector.shape_cast %54 : vector<1x16x384xbf16> to vector<16x384xbf16>
    %56 = vector.shape_cast %52 : vector<16x384xbf16> to vector<1x16x384xbf16>
    tpu.vector_store %arg13[%53, %c0_25, %c0_26], %56 {strides = array<i32>} : memref<8x16x384xbf16, #tpu.memory_space<vmem>>, vector<1x16x384xbf16>,
    %c5_i32 = arith.constant 5 : i32
    %57 = arith.index_cast %c5_i32 : i32 to index
    %c0_27 = arith.constant 0 : index
    %c0_28 = arith.constant 0 : index
    %58 = vector.load %arg1[%57, %c0_27, %c0_28] : memref<8x16x128xbf16, #tpu.memory_space<vmem>>, vector<1x16x128xbf16>
    %59 = vector.shape_cast %58 : vector<1x16x128xbf16> to vector<16x128xbf16>
    %cst_29 = arith.constant dense<0.000000e+00> : vector<16x384xf32>
    %60 = tpu.matmul %59, %0, %cst_29 {dimension_numbers = #tpu.dot_dimension_numbers<[1], [0], [0], [1], [0, 0, 1, 1], [], []>} : vector<16x128xbf16>, vector<128x384xbf16>, vector<16x384xf32> -> vector<16x384xf32>
    %61 = vector.broadcast %1 : vector<1x384xf32> to vector<16x384xf32>
    %62 = arith.addf %60, %61 : vector<16x384xf32>
    %63 = arith.truncf %62 : vector<16x384xf32> to vector<16x384xbf16>
    %64 = arith.index_cast %c5_i32 : i32 to index
    %c0_30 = arith.constant 0 : index
    %c0_31 = arith.constant 0 : index
    %65 = vector.load %arg13[%64, %c0_30, %c0_31] : memref<8x16x384xbf16, #tpu.memory_space<vmem>>, vector<1x16x384xbf16>
    %66 = vector.shape_cast %65 : vector<1x16x384xbf16> to vector<16x384xbf16>
    %67 = vector.shape_cast %63 : vector<16x384xbf16> to vector<1x16x384xbf16>
    tpu.vector_store %arg13[%64, %c0_30, %c0_31], %67 {strides = array<i32>} : memref<8x16x384xbf16, #tpu.memory_space<vmem>>, vector<1x16x384xbf16>,
    %c6_i32 = arith.constant 6 : i32
    %68 = arith.index_cast %c6_i32 : i32 to index
    %c0_32 = arith.constant 0 : index
    %c0_33 = arith.constant 0 : index
    %69 = vector.load %arg1[%68, %c0_32, %c0_33] : memref<8x16x128xbf16, #tpu.memory_space<vmem>>, vector<1x16x128xbf16>
    %70 = vector.shape_cast %69 : vector<1x16x128xbf16> to vector<16x128xbf16>
    %cst_34 = arith.constant dense<0.000000e+00> : vector<16x384xf32>
    %71 = tpu.matmul %70, %0, %cst_34 {dimension_numbers = #tpu.dot_dimension_numbers<[1], [0], [0], [1], [0, 0, 1, 1], [], []>} : vector<16x128xbf16>, vector<128x384xbf16>, vector<16x384xf32> -> vector<16x384xf32>
    %72 = vector.broadcast %1 : vector<1x384xf32> to vector<16x384xf32>
    %73 = arith.addf %71, %72 : vector<16x384xf32>
    %74 = arith.truncf %73 : vector<16x384xf32> to vector<16x384xbf16>
    %75 = arith.index_cast %c6_i32 : i32 to index
    %c0_35 = arith.constant 0 : index
    %c0_36 = arith.constant 0 : index
    %76 = vector.load %arg13[%75, %c0_35, %c0_36] : memref<8x16x384xbf16, #tpu.memory_space<vmem>>, vector<1x16x384xbf16>
    %77 = vector.shape_cast %76 : vector<1x16x384xbf16> to vector<16x384xbf16>
    %78 = vector.shape_cast %74 : vector<16x384xbf16> to vector<1x16x384xbf16>
    tpu.vector_store %arg13[%75, %c0_35, %c0_36], %78 {strides = array<i32>} : memref<8x16x384xbf16, #tpu.memory_space<vmem>>, vector<1x16x384xbf16>,
    %c7_i32 = arith.constant 7 : i32
    %79 = arith.index_cast %c7_i32 : i32 to index
    %c0_37 = arith.constant 0 : index
    %c0_38 = arith.constant 0 : index
    %80 = vector.load %arg1[%79, %c0_37, %c0_38] : memref<8x16x128xbf16, #tpu.memory_space<vmem>>, vector<1x16x128xbf16>
    %81 = vector.shape_cast %80 : vector<1x16x128xbf16> to vector<16x128xbf16>
    %cst_39 = arith.constant dense<0.000000e+00> : vector<16x384xf32>
    %82 = tpu.matmul %81, %0, %cst_39 {dimension_numbers = #tpu.dot_dimension_numbers<[1], [0], [0], [1], [0, 0, 1, 1], [], []>} : vector<16x128xbf16>, vector<128x384xbf16>, vector<16x384xf32> -> vector<16x384xf32>
    %83 = vector.broadcast %1 : vector<1x384xf32> to vector<16x384xf32>
    %84 = arith.addf %82, %83 : vector<16x384xf32>
    %85 = arith.truncf %84 : vector<16x384xf32> to vector<16x384xbf16>
    %86 = arith.index_cast %c7_i32 : i32 to index
    %c0_40 = arith.constant 0 : index
    %c0_41 = arith.constant 0 : index
    %87 = vector.load %arg13[%86, %c0_40, %c0_41] : memref<8x16x384xbf16, #tpu.memory_space<vmem>>, vector<1x16x384xbf16>
    %88 = vector.shape_cast %87 : vector<1x16x384xbf16> to vector<16x384xbf16>
    %89 = vector.shape_cast %85 : vector<16x384xbf16> to vector<1x16x384xbf16>
    tpu.vector_store %arg13[%86, %c0_40, %c0_41], %89 {strides = array<i32>} : memref<8x16x384xbf16, #tpu.memory_space<vmem>>, vector<1x16x384xbf16>,
    %c8_i32 = arith.constant 8 : i32
    %c0_42 = arith.constant 0 : index
    %c0_43 = arith.constant 0 : index
    %90 = vector.load %arg3[%c0_42, %c0_43] : memref<128x384xbf16, #tpu.memory_space<vmem>>, vector<128x384xbf16>
    %c0_44 = arith.constant 0 : index
    %c0_45 = arith.constant 0 : index
    %91 = vector.load %arg5[%c0_44, %c0_45] : memref<1x128xf32, #tpu.memory_space<vmem>>, vector<1x128xf32>
    %92 = vector.shape_cast %91 : vector<1x128xf32> to vector<1x128xf32>
    %93 = vector.broadcast %92 : vector<1x128xf32> to vector<16x128xf32>
    %cst_46 = arith.constant 0.000000e+00 : f32
    %94 = vector.broadcast %cst_46 : f32 to vector<16x128xf32>
    %c0_i32_47 = arith.constant 0 : i32
    %95 = arith.index_cast %c0_i32_47 : i32 to index
    %c0_48 = arith.constant 0 : index
    %c0_49 = arith.constant 0 : index
    %96 = vector.load %arg13[%95, %c0_48, %c0_49] : memref<8x16x384xbf16, #tpu.memory_space<vmem>>, vector<1x16x384xbf16>
    %97 = vector.shape_cast %96 : vector<1x16x384xbf16> to vector<16x384xbf16>
    %98 = arith.extf %97 : vector<16x384xbf16> to vector<16x384xf32>
    %99 = arith.truncf %94 : vector<16x128xf32> to vector<16x128xbf16>
    %cst_50 = arith.constant dense<0.000000e+00> : vector<16x384xf32>
    %100 = tpu.matmul %99, %90, %cst_50 {dimension_numbers = #tpu.dot_dimension_numbers<[1], [0], [0], [1], [0, 0, 1, 1], [], []>} : vector<16x128xbf16>, vector<128x384xbf16>, vector<16x384xf32> -> vector<16x384xf32>
    %101 = vector.extract_strided_slice %98 {offsets = [0, 0], sizes = [16, 128], strides = [1, 1]} : vector<16x384xf32> to vector<16x128xf32>
    %102 = vector.extract_strided_slice %100 {offsets = [0, 0], sizes = [16, 128], strides = [1, 1]} : vector<16x384xf32> to vector<16x128xf32>
    %103 = arith.addf %101, %102 : vector<16x128xf32>
    %104 = arith.negf %103 : vector<16x128xf32>
    %105 = math.exp %104 : vector<16x128xf32>
    %cst_51 = arith.constant 1.000000e+00 : f32
    %106 = vector.broadcast %cst_51 : f32 to vector<16x128xf32>
    %107 = arith.addf %106, %105 : vector<16x128xf32>
    %108 = arith.divf %106, %107 : vector<16x128xf32>
    %109 = vector.extract_strided_slice %98 {offsets = [0, 128], sizes = [16, 128], strides = [1, 1]} : vector<16x384xf32> to vector<16x128xf32>
    %110 = vector.extract_strided_slice %100 {offsets = [0, 128], sizes = [16, 128], strides = [1, 1]} : vector<16x384xf32> to vector<16x128xf32>
    %111 = arith.addf %109, %110 : vector<16x128xf32>
    %112 = arith.negf %111 : vector<16x128xf32>
    %113 = math.exp %112 : vector<16x128xf32>
    %cst_52 = arith.constant 1.000000e+00 : f32
    %114 = vector.broadcast %cst_52 : f32 to vector<16x128xf32>
    %115 = arith.addf %114, %113 : vector<16x128xf32>
    %116 = arith.divf %114, %115 : vector<16x128xf32>
    %117 = vector.extract_strided_slice %98 {offsets = [0, 256], sizes = [16, 128], strides = [1, 1]} : vector<16x384xf32> to vector<16x128xf32>
    %118 = vector.extract_strided_slice %100 {offsets = [0, 256], sizes = [16, 128], strides = [1, 1]} : vector<16x384xf32> to vector<16x128xf32>
    %119 = arith.addf %118, %93 : vector<16x128xf32>
    %120 = arith.mulf %108, %119 : vector<16x128xf32>
    %121 = arith.addf %117, %120 : vector<16x128xf32>
    %122 = math.tanh %121 : vector<16x128xf32>
    %123 = arith.subf %94, %122 : vector<16x128xf32>
    %124 = arith.mulf %116, %123 : vector<16x128xf32>
    %125 = arith.addf %122, %124 : vector<16x128xf32>
    %c1_i32_53 = arith.constant 1 : i32
    %126 = arith.index_cast %c1_i32_53 : i32 to index
    %c0_54 = arith.constant 0 : index
    %c0_55 = arith.constant 0 : index
    %127 = vector.load %arg13[%126, %c0_54, %c0_55] : memref<8x16x384xbf16, #tpu.memory_space<vmem>>, vector<1x16x384xbf16>
    %128 = vector.shape_cast %127 : vector<1x16x384xbf16> to vector<16x384xbf16>
    %129 = arith.extf %128 : vector<16x384xbf16> to vector<16x384xf32>
    %130 = arith.truncf %125 : vector<16x128xf32> to vector<16x128xbf16>
    %cst_56 = arith.constant dense<0.000000e+00> : vector<16x384xf32>
    %131 = tpu.matmul %130, %90, %cst_56 {dimension_numbers = #tpu.dot_dimension_numbers<[1], [0], [0], [1], [0, 0, 1, 1], [], []>} : vector<16x128xbf16>, vector<128x384xbf16>, vector<16x384xf32> -> vector<16x384xf32>
    %132 = vector.extract_strided_slice %129 {offsets = [0, 0], sizes = [16, 128], strides = [1, 1]} : vector<16x384xf32> to vector<16x128xf32>
    %133 = vector.extract_strided_slice %131 {offsets = [0, 0], sizes = [16, 128], strides = [1, 1]} : vector<16x384xf32> to vector<16x128xf32>
    %134 = arith.addf %132, %133 : vector<16x128xf32>
    %135 = arith.negf %134 : vector<16x128xf32>
    %136 = math.exp %135 : vector<16x128xf32>
    %cst_57 = arith.constant 1.000000e+00 : f32
    %137 = vector.broadcast %cst_57 : f32 to vector<16x128xf32>
    %138 = arith.addf %137, %136 : vector<16x128xf32>
    %139 = arith.divf %137, %138 : vector<16x128xf32>
    %140 = vector.extract_strided_slice %129 {offsets = [0, 128], sizes = [16, 128], strides = [1, 1]} : vector<16x384xf32> to vector<16x128xf32>
    %141 = vector.extract_strided_slice %131 {offsets = [0, 128], sizes = [16, 128], strides = [1, 1]} : vector<16x384xf32> to vector<16x128xf32>
    %142 = arith.addf %140, %141 : vector<16x128xf32>
    %143 = arith.negf %142 : vector<16x128xf32>
    %144 = math.exp %143 : vector<16x128xf32>
    %cst_58 = arith.constant 1.000000e+00 : f32
    %145 = vector.broadcast %cst_58 : f32 to vector<16x128xf32>
    %146 = arith.addf %145, %144 : vector<16x128xf32>
    %147 = arith.divf %145, %146 : vector<16x128xf32>
    %148 = vector.extract_strided_slice %129 {offsets = [0, 256], sizes = [16, 128], strides = [1, 1]} : vector<16x384xf32> to vector<16x128xf32>
    %149 = vector.extract_strided_slice %131 {offsets = [0, 256], sizes = [16, 128], strides = [1, 1]} : vector<16x384xf32> to vector<16x128xf32>
    %150 = arith.addf %149, %93 : vector<16x128xf32>
    %151 = arith.mulf %139, %150 : vector<16x128xf32>
    %152 = arith.addf %148, %151 : vector<16x128xf32>
    %153 = math.tanh %152 : vector<16x128xf32>
    %154 = arith.subf %125, %153 : vector<16x128xf32>
    %155 = arith.mulf %147, %154 : vector<16x128xf32>
    %156 = arith.addf %153, %155 : vector<16x128xf32>
    %c2_i32_59 = arith.constant 2 : i32
    %157 = arith.index_cast %c2_i32_59 : i32 to index
    %c0_60 = arith.constant 0 : index
    %c0_61 = arith.constant 0 : index
    %158 = vector.load %arg13[%157, %c0_60, %c0_61] : memref<8x16x384xbf16, #tpu.memory_space<vmem>>, vector<1x16x384xbf16>
    %159 = vector.shape_cast %158 : vector<1x16x384xbf16> to vector<16x384xbf16>
    %160 = arith.extf %159 : vector<16x384xbf16> to vector<16x384xf32>
    %161 = arith.truncf %156 : vector<16x128xf32> to vector<16x128xbf16>
    %cst_62 = arith.constant dense<0.000000e+00> : vector<16x384xf32>
    %162 = tpu.matmul %161, %90, %cst_62 {dimension_numbers = #tpu.dot_dimension_numbers<[1], [0], [0], [1], [0, 0, 1, 1], [], []>} : vector<16x128xbf16>, vector<128x384xbf16>, vector<16x384xf32> -> vector<16x384xf32>
    %163 = vector.extract_strided_slice %160 {offsets = [0, 0], sizes = [16, 128], strides = [1, 1]} : vector<16x384xf32> to vector<16x128xf32>
    %164 = vector.extract_strided_slice %162 {offsets = [0, 0], sizes = [16, 128], strides = [1, 1]} : vector<16x384xf32> to vector<16x128xf32>
    %165 = arith.addf %163, %164 : vector<16x128xf32>
    %166 = arith.negf %165 : vector<16x128xf32>
    %167 = math.exp %166 : vector<16x128xf32>
    %cst_63 = arith.constant 1.000000e+00 : f32
    %168 = vector.broadcast %cst_63 : f32 to vector<16x128xf32>
    %169 = arith.addf %168, %167 : vector<16x128xf32>
    %170 = arith.divf %168, %169 : vector<16x128xf32>
    %171 = vector.extract_strided_slice %160 {offsets = [0, 128], sizes = [16, 128], strides = [1, 1]} : vector<16x384xf32> to vector<16x128xf32>
    %172 = vector.extract_strided_slice %162 {offsets = [0, 128], sizes = [16, 128], strides = [1, 1]} : vector<16x384xf32> to vector<16x128xf32>
    %173 = arith.addf %171, %172 : vector<16x128xf32>
    %174 = arith.negf %173 : vector<16x128xf32>
    %175 = math.exp %174 : vector<16x128xf32>
    %cst_64 = arith.constant 1.000000e+00 : f32
    %176 = vector.broadcast %cst_64 : f32 to vector<16x128xf32>
    %177 = arith.addf %176, %175 : vector<16x128xf32>
    %178 = arith.divf %176, %177 : vector<16x128xf32>
    %179 = vector.extract_strided_slice %160 {offsets = [0, 256], sizes = [16, 128], strides = [1, 1]} : vector<16x384xf32> to vector<16x128xf32>
    %180 = vector.extract_strided_slice %162 {offsets = [0, 256], sizes = [16, 128], strides = [1, 1]} : vector<16x384xf32> to vector<16x128xf32>
    %181 = arith.addf %180, %93 : vector<16x128xf32>
    %182 = arith.mulf %170, %181 : vector<16x128xf32>
    %183 = arith.addf %179, %182 : vector<16x128xf32>
    %184 = math.tanh %183 : vector<16x128xf32>
    %185 = arith.subf %156, %184 : vector<16x128xf32>
    %186 = arith.mulf %178, %185 : vector<16x128xf32>
    %187 = arith.addf %184, %186 : vector<16x128xf32>
    %c3_i32_65 = arith.constant 3 : i32
    %188 = arith.index_cast %c3_i32_65 : i32 to index
    %c0_66 = arith.constant 0 : index
    %c0_67 = arith.constant 0 : index
    %189 = vector.load %arg13[%188, %c0_66, %c0_67] : memref<8x16x384xbf16, #tpu.memory_space<vmem>>, vector<1x16x384xbf16>
    %190 = vector.shape_cast %189 : vector<1x16x384xbf16> to vector<16x384xbf16>
    %191 = arith.extf %190 : vector<16x384xbf16> to vector<16x384xf32>
    %192 = arith.truncf %187 : vector<16x128xf32> to vector<16x128xbf16>
    %cst_68 = arith.constant dense<0.000000e+00> : vector<16x384xf32>
    %193 = tpu.matmul %192, %90, %cst_68 {dimension_numbers = #tpu.dot_dimension_numbers<[1], [0], [0], [1], [0, 0, 1, 1], [], []>} : vector<16x128xbf16>, vector<128x384xbf16>, vector<16x384xf32> -> vector<16x384xf32>
    %194 = vector.extract_strided_slice %191 {offsets = [0, 0], sizes = [16, 128], strides = [1, 1]} : vector<16x384xf32> to vector<16x128xf32>
    %195 = vector.extract_strided_slice %193 {offsets = [0, 0], sizes = [16, 128], strides = [1, 1]} : vector<16x384xf32> to vector<16x128xf32>
    %196 = arith.addf %194, %195 : vector<16x128xf32>
    %197 = arith.negf %196 : vector<16x128xf32>
    %198 = math.exp %197 : vector<16x128xf32>
    %cst_69 = arith.constant 1.000000e+00 : f32
    %199 = vector.broadcast %cst_69 : f32 to vector<16x128xf32>
    %200 = arith.addf %199, %198 : vector<16x128xf32>
    %201 = arith.divf %199, %200 : vector<16x128xf32>
    %202 = vector.extract_strided_slice %191 {offsets = [0, 128], sizes = [16, 128], strides = [1, 1]} : vector<16x384xf32> to vector<16x128xf32>
    %203 = vector.extract_strided_slice %193 {offsets = [0, 128], sizes = [16, 128], strides = [1, 1]} : vector<16x384xf32> to vector<16x128xf32>
    %204 = arith.addf %202, %203 : vector<16x128xf32>
    %205 = arith.negf %204 : vector<16x128xf32>
    %206 = math.exp %205 : vector<16x128xf32>
    %cst_70 = arith.constant 1.000000e+00 : f32
    %207 = vector.broadcast %cst_70 : f32 to vector<16x128xf32>
    %208 = arith.addf %207, %206 : vector<16x128xf32>
    %209 = arith.divf %207, %208 : vector<16x128xf32>
    %210 = vector.extract_strided_slice %191 {offsets = [0, 256], sizes = [16, 128], strides = [1, 1]} : vector<16x384xf32> to vector<16x128xf32>
    %211 = vector.extract_strided_slice %193 {offsets = [0, 256], sizes = [16, 128], strides = [1, 1]} : vector<16x384xf32> to vector<16x128xf32>
    %212 = arith.addf %211, %93 : vector<16x128xf32>
    %213 = arith.mulf %201, %212 : vector<16x128xf32>
    %214 = arith.addf %210, %213 : vector<16x128xf32>
    %215 = math.tanh %214 : vector<16x128xf32>
    %216 = arith.subf %187, %215 : vector<16x128xf32>
    %217 = arith.mulf %209, %216 : vector<16x128xf32>
    %218 = arith.addf %215, %217 : vector<16x128xf32>
    %c4_i32_71 = arith.constant 4 : i32
    %219 = arith.index_cast %c4_i32_71 : i32 to index
    %c0_72 = arith.constant 0 : index
    %c0_73 = arith.constant 0 : index
    %220 = vector.load %arg13[%219, %c0_72, %c0_73] : memref<8x16x384xbf16, #tpu.memory_space<vmem>>, vector<1x16x384xbf16>
    %221 = vector.shape_cast %220 : vector<1x16x384xbf16> to vector<16x384xbf16>
    %222 = arith.extf %221 : vector<16x384xbf16> to vector<16x384xf32>
    %223 = arith.truncf %218 : vector<16x128xf32> to vector<16x128xbf16>
    %cst_74 = arith.constant dense<0.000000e+00> : vector<16x384xf32>
    %224 = tpu.matmul %223, %90, %cst_74 {dimension_numbers = #tpu.dot_dimension_numbers<[1], [0], [0], [1], [0, 0, 1, 1], [], []>} : vector<16x128xbf16>, vector<128x384xbf16>, vector<16x384xf32> -> vector<16x384xf32>
    %225 = vector.extract_strided_slice %222 {offsets = [0, 0], sizes = [16, 128], strides = [1, 1]} : vector<16x384xf32> to vector<16x128xf32>
    %226 = vector.extract_strided_slice %224 {offsets = [0, 0], sizes = [16, 128], strides = [1, 1]} : vector<16x384xf32> to vector<16x128xf32>
    %227 = arith.addf %225, %226 : vector<16x128xf32>
    %228 = arith.negf %227 : vector<16x128xf32>
    %229 = math.exp %228 : vector<16x128xf32>
    %cst_75 = arith.constant 1.000000e+00 : f32
    %230 = vector.broadcast %cst_75 : f32 to vector<16x128xf32>
    %231 = arith.addf %230, %229 : vector<16x128xf32>
    %232 = arith.divf %230, %231 : vector<16x128xf32>
    %233 = vector.extract_strided_slice %222 {offsets = [0, 128], sizes = [16, 128], strides = [1, 1]} : vector<16x384xf32> to vector<16x128xf32>
    %234 = vector.extract_strided_slice %224 {offsets = [0, 128], sizes = [16, 128], strides = [1, 1]} : vector<16x384xf32> to vector<16x128xf32>
    %235 = arith.addf %233, %234 : vector<16x128xf32>
    %236 = arith.negf %235 : vector<16x128xf32>
    %237 = math.exp %236 : vector<16x128xf32>
    %cst_76 = arith.constant 1.000000e+00 : f32
    %238 = vector.broadcast %cst_76 : f32 to vector<16x128xf32>
    %239 = arith.addf %238, %237 : vector<16x128xf32>
    %240 = arith.divf %238, %239 : vector<16x128xf32>
    %241 = vector.extract_strided_slice %222 {offsets = [0, 256], sizes = [16, 128], strides = [1, 1]} : vector<16x384xf32> to vector<16x128xf32>
    %242 = vector.extract_strided_slice %224 {offsets = [0, 256], sizes = [16, 128], strides = [1, 1]} : vector<16x384xf32> to vector<16x128xf32>
    %243 = arith.addf %242, %93 : vector<16x128xf32>
    %244 = arith.mulf %232, %243 : vector<16x128xf32>
    %245 = arith.addf %241, %244 : vector<16x128xf32>
    %246 = math.tanh %245 : vector<16x128xf32>
    %247 = arith.subf %218, %246 : vector<16x128xf32>
    %248 = arith.mulf %240, %247 : vector<16x128xf32>
    %249 = arith.addf %246, %248 : vector<16x128xf32>
    %c5_i32_77 = arith.constant 5 : i32
    %250 = arith.index_cast %c5_i32_77 : i32 to index
    %c0_78 = arith.constant 0 : index
    %c0_79 = arith.constant 0 : index
    %251 = vector.load %arg13[%250, %c0_78, %c0_79] : memref<8x16x384xbf16, #tpu.memory_space<vmem>>, vector<1x16x384xbf16>
    %252 = vector.shape_cast %251 : vector<1x16x384xbf16> to vector<16x384xbf16>
    %253 = arith.extf %252 : vector<16x384xbf16> to vector<16x384xf32>
    %254 = arith.truncf %249 : vector<16x128xf32> to vector<16x128xbf16>
    %cst_80 = arith.constant dense<0.000000e+00> : vector<16x384xf32>
    %255 = tpu.matmul %254, %90, %cst_80 {dimension_numbers = #tpu.dot_dimension_numbers<[1], [0], [0], [1], [0, 0, 1, 1], [], []>} : vector<16x128xbf16>, vector<128x384xbf16>, vector<16x384xf32> -> vector<16x384xf32>
    %256 = vector.extract_strided_slice %253 {offsets = [0, 0], sizes = [16, 128], strides = [1, 1]} : vector<16x384xf32> to vector<16x128xf32>
    %257 = vector.extract_strided_slice %255 {offsets = [0, 0], sizes = [16, 128], strides = [1, 1]} : vector<16x384xf32> to vector<16x128xf32>
    %258 = arith.addf %256, %257 : vector<16x128xf32>
    %259 = arith.negf %258 : vector<16x128xf32>
    %260 = math.exp %259 : vector<16x128xf32>
    %cst_81 = arith.constant 1.000000e+00 : f32
    %261 = vector.broadcast %cst_81 : f32 to vector<16x128xf32>
    %262 = arith.addf %261, %260 : vector<16x128xf32>
    %263 = arith.divf %261, %262 : vector<16x128xf32>
    %264 = vector.extract_strided_slice %253 {offsets = [0, 128], sizes = [16, 128], strides = [1, 1]} : vector<16x384xf32> to vector<16x128xf32>
    %265 = vector.extract_strided_slice %255 {offsets = [0, 128], sizes = [16, 128], strides = [1, 1]} : vector<16x384xf32> to vector<16x128xf32>
    %266 = arith.addf %264, %265 : vector<16x128xf32>
    %267 = arith.negf %266 : vector<16x128xf32>
    %268 = math.exp %267 : vector<16x128xf32>
    %cst_82 = arith.constant 1.000000e+00 : f32
    %269 = vector.broadcast %cst_82 : f32 to vector<16x128xf32>
    %270 = arith.addf %269, %268 : vector<16x128xf32>
    %271 = arith.divf %269, %270 : vector<16x128xf32>
    %272 = vector.extract_strided_slice %253 {offsets = [0, 256], sizes = [16, 128], strides = [1, 1]} : vector<16x384xf32> to vector<16x128xf32>
    %273 = vector.extract_strided_slice %255 {offsets = [0, 256], sizes = [16, 128], strides = [1, 1]} : vector<16x384xf32> to vector<16x128xf32>
    %274 = arith.addf %273, %93 : vector<16x128xf32>
    %275 = arith.mulf %263, %274 : vector<16x128xf32>
    %276 = arith.addf %272, %275 : vector<16x128xf32>
    %277 = math.tanh %276 : vector<16x128xf32>
    %278 = arith.subf %249, %277 : vector<16x128xf32>
    %279 = arith.mulf %271, %278 : vector<16x128xf32>
    %280 = arith.addf %277, %279 : vector<16x128xf32>
    %c6_i32_83 = arith.constant 6 : i32
    %281 = arith.index_cast %c6_i32_83 : i32 to index
    %c0_84 = arith.constant 0 : index
    %c0_85 = arith.constant 0 : index
    %282 = vector.load %arg13[%281, %c0_84, %c0_85] : memref<8x16x384xbf16, #tpu.memory_space<vmem>>, vector<1x16x384xbf16>
    %283 = vector.shape_cast %282 : vector<1x16x384xbf16> to vector<16x384xbf16>
    %284 = arith.extf %283 : vector<16x384xbf16> to vector<16x384xf32>
    %285 = arith.truncf %280 : vector<16x128xf32> to vector<16x128xbf16>
    %cst_86 = arith.constant dense<0.000000e+00> : vector<16x384xf32>
    %286 = tpu.matmul %285, %90, %cst_86 {dimension_numbers = #tpu.dot_dimension_numbers<[1], [0], [0], [1], [0, 0, 1, 1], [], []>} : vector<16x128xbf16>, vector<128x384xbf16>, vector<16x384xf32> -> vector<16x384xf32>
    %287 = vector.extract_strided_slice %284 {offsets = [0, 0], sizes = [16, 128], strides = [1, 1]} : vector<16x384xf32> to vector<16x128xf32>
    %288 = vector.extract_strided_slice %286 {offsets = [0, 0], sizes = [16, 128], strides = [1, 1]} : vector<16x384xf32> to vector<16x128xf32>
    %289 = arith.addf %287, %288 : vector<16x128xf32>
    %290 = arith.negf %289 : vector<16x128xf32>
    %291 = math.exp %290 : vector<16x128xf32>
    %cst_87 = arith.constant 1.000000e+00 : f32
    %292 = vector.broadcast %cst_87 : f32 to vector<16x128xf32>
    %293 = arith.addf %292, %291 : vector<16x128xf32>
    %294 = arith.divf %292, %293 : vector<16x128xf32>
    %295 = vector.extract_strided_slice %284 {offsets = [0, 128], sizes = [16, 128], strides = [1, 1]} : vector<16x384xf32> to vector<16x128xf32>
    %296 = vector.extract_strided_slice %286 {offsets = [0, 128], sizes = [16, 128], strides = [1, 1]} : vector<16x384xf32> to vector<16x128xf32>
    %297 = arith.addf %295, %296 : vector<16x128xf32>
    %298 = arith.negf %297 : vector<16x128xf32>
    %299 = math.exp %298 : vector<16x128xf32>
    %cst_88 = arith.constant 1.000000e+00 : f32
    %300 = vector.broadcast %cst_88 : f32 to vector<16x128xf32>
    %301 = arith.addf %300, %299 : vector<16x128xf32>
    %302 = arith.divf %300, %301 : vector<16x128xf32>
    %303 = vector.extract_strided_slice %284 {offsets = [0, 256], sizes = [16, 128], strides = [1, 1]} : vector<16x384xf32> to vector<16x128xf32>
    %304 = vector.extract_strided_slice %286 {offsets = [0, 256], sizes = [16, 128], strides = [1, 1]} : vector<16x384xf32> to vector<16x128xf32>
    %305 = arith.addf %304, %93 : vector<16x128xf32>
    %306 = arith.mulf %294, %305 : vector<16x128xf32>
    %307 = arith.addf %303, %306 : vector<16x128xf32>
    %308 = math.tanh %307 : vector<16x128xf32>
    %309 = arith.subf %280, %308 : vector<16x128xf32>
    %310 = arith.mulf %302, %309 : vector<16x128xf32>
    %311 = arith.addf %308, %310 : vector<16x128xf32>
    %c7_i32_89 = arith.constant 7 : i32
    %312 = arith.index_cast %c7_i32_89 : i32 to index
    %c0_90 = arith.constant 0 : index
    %c0_91 = arith.constant 0 : index
    %313 = vector.load %arg13[%312, %c0_90, %c0_91] : memref<8x16x384xbf16, #tpu.memory_space<vmem>>, vector<1x16x384xbf16>
    %314 = vector.shape_cast %313 : vector<1x16x384xbf16> to vector<16x384xbf16>
    %315 = arith.extf %314 : vector<16x384xbf16> to vector<16x384xf32>
    %316 = arith.truncf %311 : vector<16x128xf32> to vector<16x128xbf16>
    %cst_92 = arith.constant dense<0.000000e+00> : vector<16x384xf32>
    %317 = tpu.matmul %316, %90, %cst_92 {dimension_numbers = #tpu.dot_dimension_numbers<[1], [0], [0], [1], [0, 0, 1, 1], [], []>} : vector<16x128xbf16>, vector<128x384xbf16>, vector<16x384xf32> -> vector<16x384xf32>
    %318 = vector.extract_strided_slice %315 {offsets = [0, 0], sizes = [16, 128], strides = [1, 1]} : vector<16x384xf32> to vector<16x128xf32>
    %319 = vector.extract_strided_slice %317 {offsets = [0, 0], sizes = [16, 128], strides = [1, 1]} : vector<16x384xf32> to vector<16x128xf32>
    %320 = arith.addf %318, %319 : vector<16x128xf32>
    %321 = arith.negf %320 : vector<16x128xf32>
    %322 = math.exp %321 : vector<16x128xf32>
    %cst_93 = arith.constant 1.000000e+00 : f32
    %323 = vector.broadcast %cst_93 : f32 to vector<16x128xf32>
    %324 = arith.addf %323, %322 : vector<16x128xf32>
    %325 = arith.divf %323, %324 : vector<16x128xf32>
    %326 = vector.extract_strided_slice %315 {offsets = [0, 128], sizes = [16, 128], strides = [1, 1]} : vector<16x384xf32> to vector<16x128xf32>
    %327 = vector.extract_strided_slice %317 {offsets = [0, 128], sizes = [16, 128], strides = [1, 1]} : vector<16x384xf32> to vector<16x128xf32>
    %328 = arith.addf %326, %327 : vector<16x128xf32>
    %329 = arith.negf %328 : vector<16x128xf32>
    %330 = math.exp %329 : vector<16x128xf32>
    %cst_94 = arith.constant 1.000000e+00 : f32
    %331 = vector.broadcast %cst_94 : f32 to vector<16x128xf32>
    %332 = arith.addf %331, %330 : vector<16x128xf32>
    %333 = arith.divf %331, %332 : vector<16x128xf32>
    %334 = vector.extract_strided_slice %315 {offsets = [0, 256], sizes = [16, 128], strides = [1, 1]} : vector<16x384xf32> to vector<16x128xf32>
    %335 = vector.extract_strided_slice %317 {offsets = [0, 256], sizes = [16, 128], strides = [1, 1]} : vector<16x384xf32> to vector<16x128xf32>
    %336 = arith.addf %335, %93 : vector<16x128xf32>
    %337 = arith.mulf %325, %336 : vector<16x128xf32>
    %338 = arith.addf %334, %337 : vector<16x128xf32>
    %339 = math.tanh %338 : vector<16x128xf32>
    %340 = arith.subf %311, %339 : vector<16x128xf32>
    %341 = arith.mulf %333, %340 : vector<16x128xf32>
    %342 = arith.addf %339, %341 : vector<16x128xf32>
    %c8_i32_95 = arith.constant 8 : i32
    %c7 = arith.constant 7 : index
    %c0_96 = arith.constant 0 : index
    %c0_97 = arith.constant 0 : index
    %343 = vector.load %arg1[%c7, %c0_96, %c0_97] : memref<8x16x128xbf16, #tpu.memory_space<vmem>>, vector<1x16x128xbf16>
    %344 = vector.shape_cast %343 : vector<1x16x128xbf16> to vector<16x128xbf16>
    %c0_98 = arith.constant 0 : index
    %c0_99 = arith.constant 0 : index
    %345 = vector.load %arg6[%c0_98, %c0_99] : memref<128x384xbf16, #tpu.memory_space<vmem>>, vector<128x384xbf16>
    %cst_100 = arith.constant dense<0.000000e+00> : vector<16x384xf32>
    %346 = tpu.matmul %344, %345, %cst_100 {dimension_numbers = #tpu.dot_dimension_numbers<[1], [0], [0], [1], [0, 0, 1, 1], [], []>} : vector<16x128xbf16>, vector<128x384xbf16>, vector<16x384xf32> -> vector<16x384xf32>
    %c0_101 = arith.constant 0 : index
    %c0_102 = arith.constant 0 : index
    %347 = vector.load %arg7[%c0_101, %c0_102] : memref<1x384xf32, #tpu.memory_space<vmem>>, vector<1x384xf32>
    %348 = vector.broadcast %347 : vector<1x384xf32> to vector<16x384xf32>
    %349 = arith.addf %346, %348 : vector<16x384xf32>
    %350 = vector.extract_strided_slice %349 {offsets = [0, 0], sizes = [16, 128], strides = [1, 1]} : vector<16x384xf32> to vector<16x128xf32>
    %351 = arith.negf %350 : vector<16x128xf32>
    %352 = math.exp %351 : vector<16x128xf32>
    %cst_103 = arith.constant 1.000000e+00 : f32
    %353 = vector.broadcast %cst_103 : f32 to vector<16x128xf32>
    %354 = arith.addf %353, %352 : vector<16x128xf32>
    %355 = arith.divf %353, %354 : vector<16x128xf32>
    %356 = vector.extract_strided_slice %349 {offsets = [0, 128], sizes = [16, 128], strides = [1, 1]} : vector<16x384xf32> to vector<16x128xf32>
    %357 = arith.negf %356 : vector<16x128xf32>
    %358 = math.exp %357 : vector<16x128xf32>
    %cst_104 = arith.constant 1.000000e+00 : f32
    %359 = vector.broadcast %cst_104 : f32 to vector<16x128xf32>
    %360 = arith.addf %359, %358 : vector<16x128xf32>
    %361 = arith.divf %359, %360 : vector<16x128xf32>
    %362 = vector.extract_strided_slice %349 {offsets = [0, 256], sizes = [16, 128], strides = [1, 1]} : vector<16x384xf32> to vector<16x128xf32>
    %c0_105 = arith.constant 0 : index
    %c0_106 = arith.constant 0 : index
    %363 = vector.load %arg8[%c0_105, %c0_106] : memref<1x128xf32, #tpu.memory_space<vmem>>, vector<1x128xf32>
    %364 = vector.shape_cast %363 : vector<1x128xf32> to vector<1x128xf32>
    %365 = vector.broadcast %364 : vector<1x128xf32> to vector<16x128xf32>
    %366 = arith.mulf %355, %365 : vector<16x128xf32>
    %367 = arith.addf %362, %366 : vector<16x128xf32>
    %368 = math.tanh %367 : vector<16x128xf32>
    %cst_107 = arith.constant 1.000000e+00 : f32
    %369 = vector.broadcast %cst_107 : f32 to vector<16x128xf32>
    %370 = arith.subf %369, %361 : vector<16x128xf32>
    %371 = arith.mulf %370, %368 : vector<16x128xf32>
    %372 = arith.truncf %342 : vector<16x128xf32> to vector<16x128xbf16>
    %c0_108 = arith.constant 0 : index
    %c0_109 = arith.constant 0 : index
    %373 = vector.load %arg9[%c0_108, %c0_109] : memref<128x128xbf16, #tpu.memory_space<vmem>>, vector<128x128xbf16>
    %cst_110 = arith.constant dense<0.000000e+00> : vector<16x128xf32>
    %374 = tpu.matmul %372, %373, %cst_110 {dimension_numbers = #tpu.dot_dimension_numbers<[1], [0], [0], [1], [0, 0, 1, 1], [], []>} : vector<16x128xbf16>, vector<128x128xbf16>, vector<16x128xf32> -> vector<16x128xf32>
    %375 = arith.truncf %371 : vector<16x128xf32> to vector<16x128xbf16>
    %c0_111 = arith.constant 0 : index
    %c0_112 = arith.constant 0 : index
    %376 = vector.load %arg10[%c0_111, %c0_112] : memref<128x128xbf16, #tpu.memory_space<vmem>>, vector<128x128xbf16>
    %cst_113 = arith.constant dense<0.000000e+00> : vector<16x128xf32>
    %377 = tpu.matmul %375, %376, %cst_113 {dimension_numbers = #tpu.dot_dimension_numbers<[1], [0], [0], [1], [0, 0, 1, 1], [], []>} : vector<16x128xbf16>, vector<128x128xbf16>, vector<16x128xf32> -> vector<16x128xf32>
    %378 = arith.addf %374, %377 : vector<16x128xf32>
    %c0_114 = arith.constant 0 : index
    %c0_115 = arith.constant 0 : index
    %379 = vector.load %arg11[%c0_114, %c0_115] : memref<1x128xf32, #tpu.memory_space<vmem>>, vector<1x128xf32>
    %380 = vector.broadcast %379 : vector<1x128xf32> to vector<16x128xf32>
    %381 = arith.addf %378, %380 : vector<16x128xf32>
    %c0_116 = arith.constant 0 : index
    %c0_117 = arith.constant 0 : index
    %382 = vector.load %arg12[%c0_116, %c0_117] : memref<16x128xf32, #tpu.memory_space<vmem>>, vector<16x128xf32>
    tpu.vector_store %arg12[%c0_116, %c0_117], %381 {strides = array<i32>} : memref<16x128xf32, #tpu.memory_space<vmem>>, vector<16x128xf32>,
    return
  }
  func.func @transform_0(%arg0: i32) -> (i32, i32, i32) {
    %c0_i32 = arith.constant 0 : i32
    %c0_i32_0 = arith.constant 0 : i32
    %c0_i32_1 = arith.constant 0 : i32
    return %c0_i32, %arg0, %c0_i32_0 : i32, i32, i32
  }
  func.func @transform_1(%arg0: i32) -> (i32, i32) {
    %c0_i32 = arith.constant 0 : i32
    %c0_i32_0 = arith.constant 0 : i32
    %c0_i32_1 = arith.constant 0 : i32
    return %c0_i32, %c0_i32_0 : i32, i32
  }
  func.func @transform_2(%arg0: i32) -> (i32, i32) {
    %c0_i32 = arith.constant 0 : i32
    %c0_i32_0 = arith.constant 0 : i32
    %c0_i32_1 = arith.constant 0 : i32
    return %c0_i32, %c0_i32_0 : i32, i32
  }
  func.func @transform_3(%arg0: i32) -> (i32, i32) {
    %c0_i32 = arith.constant 0 : i32
    %c0_i32_0 = arith.constant 0 : i32
    %c0_i32_1 = arith.constant 0 : i32
    return %c0_i32, %c0_i32_0 : i32, i32
  }
  func.func @transform_4(%arg0: i32) -> (i32, i32) {
    %c0_i32 = arith.constant 0 : i32
    %c0_i32_0 = arith.constant 0 : i32
    %c0_i32_1 = arith.constant 0 : i32
    return %c0_i32, %c0_i32_0 : i32, i32
  }
  func.func @transform_5(%arg0: i32) -> (i32, i32) {
    %c0_i32 = arith.constant 0 : i32
    %c0_i32_0 = arith.constant 0 : i32
    %c0_i32_1 = arith.constant 0 : i32
    return %c0_i32, %c0_i32_0 : i32, i32
  }
  func.func @transform_6(%arg0: i32) -> (i32, i32) {
    %c0_i32 = arith.constant 0 : i32
    %c0_i32_0 = arith.constant 0 : i32
    %c0_i32_1 = arith.constant 0 : i32
    return %c0_i32, %c0_i32_0 : i32, i32
  }
  func.func @transform_7(%arg0: i32) -> (i32, i32) {
    %c0_i32 = arith.constant 0 : i32
    %c0_i32_0 = arith.constant 0 : i32
    %c0_i32_1 = arith.constant 0 : i32
    return %c0_i32, %c0_i32_0 : i32, i32
  }
  func.func @transform_8(%arg0: i32) -> (i32, i32) {
    %c0_i32 = arith.constant 0 : i32
    %c0_i32_0 = arith.constant 0 : i32
    %c0_i32_1 = arith.constant 0 : i32
    return %c0_i32, %c0_i32_0 : i32, i32
  }
  func.func @transform_9(%arg0: i32) -> (i32, i32) {
    %c0_i32 = arith.constant 0 : i32
    %c0_i32_0 = arith.constant 0 : i32
    %c0_i32_1 = arith.constant 0 : i32
    return %c0_i32, %c0_i32_0 : i32, i32
  }
  func.func @transform_10(%arg0: i32) -> (i32, i32) {
    %c0_i32 = arith.constant 0 : i32
    %c0_i32_0 = arith.constant 0 : i32
    %c0_i32_1 = arith.constant 0 : i32
    return %c0_i32, %c0_i32_0 : i32, i32
  }
  func.func @transform_11(%arg0: i32) -> (i32, i32) {
    %c0_i32 = arith.constant 0 : i32
    %c0_i32_0 = arith.constant 0 : i32
    return %arg0, %c0_i32 : i32, i32
  }
}

</mosaic_0001>

<llo_original>
// kernel: tpu_custom_call.1
$region0: #{tpu_custom_call.1}
  #allocation0 [shape = 'u32[]', space=smem, size = 0x4, offset = 0x4, fixed_abs, tag = 'smem constant byte address 0x4 - core index']
  #allocation1 [shape = 'u32[144,128]{1,0:T(1,128)}', space=vmem, size = 0x12000, scoped, tag = 'internal scratch']
  #allocation2 [shape = 'bf16[8,16,384]{2,1,0:T(16,128)(2,1)}', space=vmem, size = 0x18000, scoped, tag = 'scratch operand']
  %s0 = inlined_call_operand.hbm [shape: bf16[8,16,128], index: 0, kind: input, shape index: {}]
  %s1 = inlined_call_operand.hbm [shape: bf16[128,384], index: 1, kind: input, shape index: {}]
  %s2 = inlined_call_operand.hbm [shape: bf16[128,384], index: 2, kind: input, shape index: {}]
  %s3 = inlined_call_operand.vmem [shape: f32[1,384], index: 3, kind: input, shape index: {}]
  %s4 = inlined_call_operand.vmem [shape: f32[1,128], index: 4, kind: input, shape index: {}]
  %s5 = inlined_call_operand.hbm [shape: bf16[128,384], index: 5, kind: input, shape index: {}]
  %s6 = inlined_call_operand.vmem [shape: f32[1,384], index: 6, kind: input, shape index: {}]
  %s7 = inlined_call_operand.vmem [shape: f32[1,128], index: 7, kind: input, shape index: {}]
  %s8 = inlined_call_operand.hbm [shape: bf16[128,128], index: 8, kind: input, shape index: {}]
  %s9 = inlined_call_operand.hbm [shape: bf16[128,128], index: 9, kind: input, shape index: {}]
  %s10 = inlined_call_operand.vmem [shape: f32[1,128], index: 10, kind: input, shape index: {}]
  %s11 = inlined_call_operand.hbm [shape: f32[16,128], index: 11, kind: output, shape index: {}]
  %s12 = sld [smem:[#allocation0]]
  $region78: #{tpu_custom_call.1} parent=0
    _
  %s14 = ssub.s32 1, %s12
  %s15 = scalar_select 0, %s14, %s12
  $region1: #{tpu_custom_call.1} parent=0
    #allocation3 [shape = 'u8[32768]{0}', space=vmem, size = 0x8000, scoped, tag = 'input window, operand 0, single buffered']
    #allocation4 [shape = 's32[1]{0}', space=sflag, size = 0x4, scoped, tag = 'scoped memory for tpu_custom_call.1']
    #allocation5 [shape = 's32[1]{0}', space=sflag, size = 0x4, scoped, tag = 'scoped memory for tpu_custom_call.1']
    #allocation6 [shape = 'u8[98304]{0}', space=vmem, size = 0x18000, scoped, tag = 'input window, operand 1, single buffered']
    #allocation7 [shape = 's32[1]{0}', space=sflag, size = 0x4, scoped, tag = 'scoped memory for tpu_custom_call.1']
    #allocation8 [shape = 'u8[98304]{0}', space=vmem, size = 0x18000, scoped, tag = 'input window, operand 2, single buffered']
    #allocation9 [shape = 'u8[98304]{0}', space=vmem, size = 0x18000, scoped, tag = 'input window, operand 5, single buffered']
    #allocation10 [shape = 's32[1]{0}', space=sflag, size = 0x4, scoped, tag = 'scoped memory for tpu_custom_call.1']
    #allocation11 [shape = 'u8[32768]{0}', space=vmem, size = 0x8000, scoped, tag = 'input window, operand 8, single buffered']
    #allocation12 [shape = 'u8[32768]{0}', space=vmem, size = 0x8000, scoped, tag = 'input window, operand 9, single buffered']
    #allocation13 [shape = 's32[1]{0}', space=sflag, size = 0x4, scoped, tag = 'scoped memory for tpu_custom_call.1']
    #allocation14 [shape = 'u8[8192]{0}', space=vmem, size = 0x2000, scoped, tag = 'output window, operand 0, single buffered']
    %16 = vsyncpa [#allocation4], 0
    %17 = vsyncpa [#allocation7], 0
    %18 = vsyncpa [#allocation10], 0
    %19 = vsyncpa [#allocation13], 0
    %20 = vsyncpa [#allocation5], 0
    // Predicated region
    $region2: #{tpu_custom_call.1} parent=1 // pred_check
      _
    $region3: #{tpu_custom_call.1} parent=1 // pred_check_branch
      %22 = sbr.rel (0) target = $region5
    $region4: #{tpu_custom_call.1} parent=1 // pred_region
      %s24 = ssub.s32 1024, 1024
      %25 = vsyncadd [#allocation4], %s24
      %s26 = sshll.u32 [#allocation3], 4
      %s27 = int_to_ptr.vmem [resolvable:$true] %s26
      %32 = dma.hbm_to_vmem [thread:$0]  %s0, 1024, %s27, [#allocation4], 64, 64, 4
    $region5: #{tpu_custom_call.1} parent=1 // pred_fallthru
      _
    // Predicated region
    $region6: #{tpu_custom_call.1} parent=1 // pred_check
      _
    $region7: #{tpu_custom_call.1} parent=1 // pred_check_branch
      %34 = sbr.rel (0) target = $region9
    $region8: #{tpu_custom_call.1} parent=1 // pred_region
      %s36 = ssub.s32 3072, 3072
      %37 = vsyncadd [#allocation7], %s36
      %s38 = sshll.u32 [#allocation6], 4
      %s39 = int_to_ptr.vmem [resolvable:$true] %s38
      %44 = dma.hbm_to_vmem [thread:$0]  %s1, 3072, %s39, [#allocation7], 192, 192, 12
    $region9: #{tpu_custom_call.1} parent=1 // pred_fallthru
      _
    // Predicated region
    $region10: #{tpu_custom_call.1} parent=1 // pred_check
      _
    $region11: #{tpu_custom_call.1} parent=1 // pred_check_branch
      %46 = sbr.rel (0) target = $region13
    $region12: #{tpu_custom_call.1} parent=1 // pred_region
      %s48 = ssub.s32 3072, 3072
      %49 = vsyncadd [#allocation7], %s48
      %s50 = sshll.u32 [#allocation8], 4
      %s51 = int_to_ptr.vmem [resolvable:$true] %s50
      %56 = dma.hbm_to_vmem [thread:$0]  %s2, 3072, %s51, [#allocation7], 192, 192, 12
    $region13: #{tpu_custom_call.1} parent=1 // pred_fallthru
      _
    // Predicated region
    $region14: #{tpu_custom_call.1} parent=1 // pred_check
      _
    $region15: #{tpu_custom_call.1} parent=1 // pred_check_branch
      %58 = sbr.rel (0) target = $region17
    $region16: #{tpu_custom_call.1} parent=1 // pred_region
      _
    $region17: #{tpu_custom_call.1} parent=1 // pred_fallthru
      _
    // Predicated region
    $region18: #{tpu_custom_call.1} parent=1 // pred_check
      _
    $region19: #{tpu_custom_call.1} parent=1 // pred_check_branch
      %60 = sbr.rel (0) target = $region21
    $region20: #{tpu_custom_call.1} parent=1 // pred_region
      _
    $region21: #{tpu_custom_call.1} parent=1 // pred_fallthru
      _
    // Predicated region
    $region22: #{tpu_custom_call.1} parent=1 // pred_check
      _
    $region23: #{tpu_custom_call.1} parent=1 // pred_check_branch
      %62 = sbr.rel (0) target = $region25
    $region24: #{tpu_custom_call.1} parent=1 // pred_region
      %s64 = ssub.s32 3072, 3072
      %65 = vsyncadd [#allocation10], %s64
      %s66 = sshll.u32 [#allocation9], 4
      %s67 = int_to_ptr.vmem [resolvable:$true] %s66
      %72 = dma.hbm_to_vmem [thread:$0]  %s5, 3072, %s67, [#allocation10], 192, 192, 12
    $region25: #{tpu_custom_call.1} parent=1 // pred_fallthru
      _
    // Predicated region
    $region26: #{tpu_custom_call.1} parent=1 // pred_check
      _
    $region27: #{tpu_custom_call.1} parent=1 // pred_check_branch
      %74 = sbr.rel (0) target = $region29
    $region28: #{tpu_custom_call.1} parent=1 // pred_region
      _
    $region29: #{tpu_custom_call.1} parent=1 // pred_fallthru
      _
    // Predicated region
    $region30: #{tpu_custom_call.1} parent=1 // pred_check
      _
    $region31: #{tpu_custom_call.1} parent=1 // pred_check_branch
      %76 = sbr.rel (0) target = $region33
    $region32: #{tpu_custom_call.1} parent=1 // pred_region
      _
    $region33: #{tpu_custom_call.1} parent=1 // pred_fallthru
      _
    // Predicated region
    $region34: #{tpu_custom_call.1} parent=1 // pred_check
      _
    $region35: #{tpu_custom_call.1} parent=1 // pred_check_branch
      %78 = sbr.rel (0) target = $region37
    $region36: #{tpu_custom_call.1} parent=1 // pred_region
      %s80 = ssub.s32 1024, 1024
      %81 = vsyncadd [#allocation10], %s80
      %s82 = sshll.u32 [#allocation11], 4
      %s83 = int_to_ptr.vmem [resolvable:$true] %s82
      %88 = dma.hbm_to_vmem [thread:$0]  %s8, 1024, %s83, [#allocation10], 64, 64, 4
    $region37: #{tpu_custom_call.1} parent=1 // pred_fallthru
      _
    // Predicated region
    $region38: #{tpu_custom_call.1} parent=1 // pred_check
      _
    $region39: #{tpu_custom_call.1} parent=1 // pred_check_branch
      %90 = sbr.rel (0) target = $region41
    $region40: #{tpu_custom_call.1} parent=1 // pred_region
      %s92 = ssub.s32 1024, 1024
      %93 = vsyncadd [#allocation13], %s92
      %s94 = sshll.u32 [#allocation12], 4
      %s95 = int_to_ptr.vmem [resolvable:$true] %s94
      %100 = dma.hbm_to_vmem [thread:$0]  %s9, 1024, %s95, [#allocation13], 64, 64, 4
    $region41: #{tpu_custom_call.1} parent=1 // pred_fallthru
      _
    // Predicated region
    $region42: #{tpu_custom_call.1} parent=1 // pred_check
      _
    $region43: #{tpu_custom_call.1} parent=1 // pred_check_branch
      %102 = sbr.rel (0) target = $region45
    $region44: #{tpu_custom_call.1} parent=1 // pred_region
      _
    $region45: #{tpu_custom_call.1} parent=1 // pred_fallthru
      _
    // Predicated region
    $region46: #{tpu_custom_call.1} parent=1 // pred_check
      _
    $region47: #{tpu_custom_call.1} parent=1 // pred_check_branch
      %104 = sbr.rel (0) target = $region49
    $region48: #{tpu_custom_call.1} parent=1 // pred_region
      %105 = dma.done [#allocation4], 1024
    $region49: #{tpu_custom_call.1} parent=1 // pred_fallthru
      _
    // Predicated region
    $region50: #{tpu_custom_call.1} parent=1 // pred_check
      _
    $region51: #{tpu_custom_call.1} parent=1 // pred_check_branch
      %107 = sbr.rel (0) target = $region53
    $region52: #{tpu_custom_call.1} parent=1 // pred_region
      %108 = dma.done [#allocation7], 3072
    $region53: #{tpu_custom_call.1} parent=1 // pred_fallthru
      _
    // Predicated region
    $region54: #{tpu_custom_call.1} parent=1 // pred_check
      _
    $region55: #{tpu_custom_call.1} parent=1 // pred_check_branch
      %110 = sbr.rel (0) target = $region57
    $region56: #{tpu_custom_call.1} parent=1 // pred_region
      %111 = dma.done [#allocation7], 3072
    $region57: #{tpu_custom_call.1} parent=1 // pred_fallthru
      _
    // Predicated region
    $region58: #{tpu_custom_call.1} parent=1 // pred_check
      _
    $region59: #{tpu_custom_call.1} parent=1 // pred_check_branch
      %113 = sbr.rel (0) target = $region61
    $region60: #{tpu_custom_call.1} parent=1 // pred_region
      %114 = dma.done [#allocation10], 3072
    $region61: #{tpu_custom_call.1} parent=1 // pred_fallthru
      _
    // Predicated region
    $region62: #{tpu_custom_call.1} parent=1 // pred_check
      _
    $region63: #{tpu_custom_call.1} parent=1 // pred_check_branch
      %116 = sbr.rel (0) target = $region65
    $region64: #{tpu_custom_call.1} parent=1 // pred_region
      %117 = dma.done [#allocation10], 1024
    $region65: #{tpu_custom_call.1} parent=1 // pred_fallthru
      _
    // Predicated region
    $region66: #{tpu_custom_call.1} parent=1 // pred_check
      _
    $region67: #{tpu_custom_call.1} parent=1 // pred_check_branch
      %119 = sbr.rel (0) target = $region69
    $region68: #{tpu_custom_call.1} parent=1 // pred_region
      %120 = dma.done [#allocation13], 1024
    $region69: #{tpu_custom_call.1} parent=1 // pred_fallthru
      _
    %v122 = vld [vmem:[#allocation6] sm:$0xff]
    %v123 = vld [vmem:[#allocation6 + $0x8] sm:$0xf]
    %v124 = vld [vmem:[#allocation6 + $0xc] sm:$0xff]
    %v125 = vld [vmem:[#allocation6 + $0x14] sm:$0xf]
    %v126 = vld [vmem:[#allocation6 + $0x18] sm:$0xff]
    %v127 = vld [vmem:[#allocation6 + $0x20] sm:$0xf]
    %v128 = vld [vmem:[#allocation6 + $0x24] sm:$0xff]
    %v129 = vld [vmem:[#allocation6 + $0x2c] sm:$0xf]
    %v130 = vld [vmem:[#allocation6 + $0x30] sm:$0xff]
    %v131 = vld [vmem:[#allocation6 + $0x38] sm:$0xf]
    %v132 = vld [vmem:[#allocation6 + $0x3c] sm:$0xff]
    %v133 = vld [vmem:[#allocation6 + $0x44] sm:$0xf]
    %v134 = vld [vmem:[#allocation6 + $0x48] sm:$0xff]
    %v135 = vld [vmem:[#allocation6 + $0x50] sm:$0xf]
    %v136 = vld [vmem:[#allocation6 + $0x54] sm:$0xff]
    %v137 = vld [vmem:[#allocation6 + $0x5c] sm:$0xf]
    %v138 = vld [vmem:[#allocation6 + $0x60] sm:$0xff]
    %v139 = vld [vmem:[#allocation6 + $0x68] sm:$0xf]
    %v140 = vld [vmem:[#allocation6 + $0x6c] sm:$0xff]
    %v141 = vld [vmem:[#allocation6 + $0x74] sm:$0xf]
    %v142 = vld [vmem:[#allocation6 + $0x78] sm:$0xff]
    %v143 = vld [vmem:[#allocation6 + $0x80] sm:$0xf]
    %v144 = vld [vmem:[#allocation6 + $0x84] sm:$0xff]
    %v145 = vld [vmem:[#allocation6 + $0x8c] sm:$0xf]
    %v146 = vld [vmem:[#allocation6 + $0x90] sm:$0xff]
    %v147 = vld [vmem:[#allocation6 + $0x98] sm:$0xf]
    %v148 = vld [vmem:[#allocation6 + $0x9c] sm:$0xff]
    %v149 = vld [vmem:[#allocation6 + $0xa4] sm:$0xf]
    %v150 = vld [vmem:[#allocation6 + $0xa8] sm:$0xff]
    %v151 = vld [vmem:[#allocation6 + $0xb0] sm:$0xf]
    %v152 = vld [vmem:[#allocation6 + $0xb4] sm:$0xff]
    %v153 = vld [vmem:[#allocation6 + $0xbc] sm:$0xf]
    %v154 = vld [vmem:[%s3] sm:$0x7]
    %v155 = vld [vmem:[#allocation3] sm:$0xf]
    %v156 = vld [vmem:[#allocation3 + $0x4] sm:$0xf]
    %v158 = vlaneseq
    %v159 = vshrl.u32 %v158, 7
    %v160 = vsub.s32 0, %v159
    %v161 = vrot.slane %v154, %v160
    %v162 = vlaneseq
    %v163 = vshrl.u32 %v162, 7
    %v164 = vsub.s32 1, %v163
    %v165 = vrot.slane %v154, %v164
    %v166 = vlaneseq
    %v167 = vshrl.u32 %v166, 7
    %v168 = vsub.s32 2, %v167
    %v169 = vrot.slane %v154, %v168
    %v175 = vunpack.c.l.b16 %v155
    %v176 = vunpack.c.l.b16 %v156
    %v177 = vpack.c.b16 %v176, %v175
    %v211 = vunpack.c.l.b16 %v122
    %v212 = vunpack.c.h.b16 %v122
    %v213 = vunpack.c.l.b16 %v123
    %v214 = vunpack.c.l.b16 %v124
    %v215 = vunpack.c.h.b16 %v124
    %v216 = vunpack.c.l.b16 %v125
    %v217 = vunpack.c.l.b16 %v126
    %v218 = vunpack.c.h.b16 %v126
    %v219 = vunpack.c.l.b16 %v127
    %v220 = vunpack.c.l.b16 %v128
    %v221 = vunpack.c.h.b16 %v128
    %v222 = vunpack.c.l.b16 %v129
    %v223 = vunpack.c.l.b16 %v130
    %v224 = vunpack.c.h.b16 %v130
    %v225 = vunpack.c.l.b16 %v131
    %v226 = vunpack.c.l.b16 %v132
    %v227 = vunpack.c.h.b16 %v132
    %v228 = vunpack.c.l.b16 %v133
    %v229 = vunpack.c.l.b16 %v134
    %v230 = vunpack.c.h.b16 %v134
    %v231 = vunpack.c.l.b16 %v135
    %v232 = vunpack.c.l.b16 %v136
    %v233 = vunpack.c.h.b16 %v136
    %v234 = vunpack.c.l.b16 %v137
    %v235 = vunpack.c.l.b16 %v138
    %v236 = vunpack.c.h.b16 %v138
    %v237 = vunpack.c.l.b16 %v139
    %v238 = vunpack.c.l.b16 %v140
    %v239 = vunpack.c.h.b16 %v140
    %v240 = vunpack.c.l.b16 %v141
    %v241 = vunpack.c.l.b16 %v142
    %v242 = vunpack.c.h.b16 %v142
    %v243 = vunpack.c.l.b16 %v143
    %v244 = vunpack.c.l.b16 %v144
    %v245 = vunpack.c.h.b16 %v144
    %v246 = vunpack.c.l.b16 %v145
    %v247 = vunpack.c.l.b16 %v146
    %v248 = vunpack.c.h.b16 %v146
    %v249 = vunpack.c.l.b16 %v147
    %v250 = vunpack.c.l.b16 %v148
    %v251 = vunpack.c.h.b16 %v148
    %v252 = vunpack.c.l.b16 %v149
    %v253 = vunpack.c.l.b16 %v150
    %v254 = vunpack.c.h.b16 %v150
    %v255 = vunpack.c.l.b16 %v151
    %v256 = vunpack.c.l.b16 %v152
    %v257 = vunpack.c.h.b16 %v152
    %v258 = vunpack.c.l.b16 %v153
    %v259 = vpack.c.b16 %v214, %v211
    %v260 = vpack.c.b16 %v215, %v212
    %v261 = vpack.c.b16 %v216, %v213
    %v262 = vpack.c.b16 %v220, %v217
    %v263 = vpack.c.b16 %v221, %v218
    %v264 = vpack.c.b16 %v222, %v219
    %v265 = vpack.c.b16 %v226, %v223
    %v266 = vpack.c.b16 %v227, %v224
    %v267 = vpack.c.b16 %v228, %v225
    %v268 = vpack.c.b16 %v232, %v229
    %v269 = vpack.c.b16 %v233, %v230
    %v270 = vpack.c.b16 %v234, %v231
    %v271 = vpack.c.b16 %v238, %v235
    %v272 = vpack.c.b16 %v239, %v236
    %v273 = vpack.c.b16 %v240, %v237
    %v274 = vpack.c.b16 %v244, %v241
    %v275 = vpack.c.b16 %v245, %v242
    %v276 = vpack.c.b16 %v246, %v243
    %v277 = vpack.c.b16 %v250, %v247
    %v278 = vpack.c.b16 %v251, %v248
    %v279 = vpack.c.b16 %v252, %v249
    %v280 = vpack.c.b16 %v256, %v253
    %v281 = vpack.c.b16 %v257, %v254
    %v282 = vpack.c.b16 %v258, %v255
    %307 = vmatprep.subr.bf16.mxu0 %v260
    %308 = vmatpush1.bf16.msra.mxu0 %v259
    %309 = vmatprep.subr.bf16.mxu0 %v263
    %310 = vmatpush1.bf16.msra.mxu0 %v262
    %311 = vmatprep.subr.bf16.mxu0 %v266
    %312 = vmatpush1.bf16.msra.mxu0 %v265
    %313 = vmatprep.subr.bf16.mxu0 %v269
    %314 = vmatpush1.bf16.msra.mxu0 %v268
    %315 = vmatprep.subr.bf16.mxu0 %v272
    %316 = vmatpush1.bf16.msra.mxu0 %v271
    %317 = vmatprep.subr.bf16.mxu0 %v275
    %318 = vmatpush1.bf16.msra.mxu0 %v274
    %319 = vmatprep.subr.bf16.mxu0 %v278
    %320 = vmatpush1.bf16.msra.mxu0 %v277
    %321 = vmatprep.subr.bf16.mxu0 %v281
    %322 = vmatpush1.bf16.msra.mxu0 %v280
    %323 = vmatprep.subr.bf16.mxu0 0
    %324 = vmatpush1.bf16.msra.mxu0 0
    %325 = vmatprep.subr.bf16.mxu0 0
    %326 = vmatpush1.bf16.msra.mxu0 0
    %327 = vmatprep.subr.bf16.mxu0 0
    %328 = vmatpush1.bf16.msra.mxu0 0
    %329 = vmatprep.subr.bf16.mxu0 0
    %330 = vmatpush1.bf16.msra.mxu0 0
    %331 = vmatprep.subr.bf16.mxu0 0
    %332 = vmatpush1.bf16.msra.mxu0 0
    %333 = vmatprep.subr.bf16.mxu0 0
    %334 = vmatpush1.bf16.msra.mxu0 0
    %335 = vmatprep.subr.bf16.mxu0 0
    %336 = vmatpush1.bf16.msra.mxu0 0
    %337 = vmatprep.subr.bf16.mxu0 0
    %338 = vmatpush1.bf16.msra.mxu0 0
    %339 = vmatprep.mubr.bf16.mxu0 0
    %340 = vmatmul.mubr.bf16.gmra.mrb[0].mxu0 %v177
    %v341 = vpop.f32.mrb[0].mxu0
    %v342 = vadd.f32 %v161, %v341
    %v343 = vpop.f32.mrb[0].mxu0
    %v344 = vadd.f32 %v165, %v343
    %v345 = vpop.f32.mrb[0].mxu0
    %v346 = vadd.f32 %v161, %v345
    %v347 = vpop.f32.mrb[0].mxu0
    %v348 = vadd.f32 %v165, %v347
    %349 = vdwg.mxu0
    %350 = vmatprep.subr.bf16.mxu0 0
    %351 = vmatpush1.bf16.msra.mxu0 %v261
    %352 = vmatprep.subr.bf16.mxu0 0
    %353 = vmatpush1.bf16.msra.mxu0 %v264
    %354 = vmatprep.subr.bf16.mxu0 0
    %355 = vmatpush1.bf16.msra.mxu0 %v267
    %356 = vmatprep.subr.bf16.mxu0 0
    %357 = vmatpush1.bf16.msra.mxu0 %v270
    %358 = vmatprep.subr.bf16.mxu0 0
    %359 = vmatpush1.bf16.msra.mxu0 %v273
    %360 = vmatprep.subr.bf16.mxu0 0
    %361 = vmatpush1.bf16.msra.mxu0 %v276
    %362 = vmatprep.subr.bf16.mxu0 0
    %363 = vmatpush1.bf16.msra.mxu0 %v279
    %364 = vmatprep.subr.bf16.mxu0 0
    %365 = vmatpush1.bf16.msra.mxu0 %v282
    %366 = vmatprep.subr.bf16.mxu0 0
    %367 = vmatpush1.bf16.msra.mxu0 0
    %368 = vmatprep.subr.bf16.mxu0 0
    %369 = vmatpush1.bf16.msra.mxu0 0
    %370 = vmatprep.subr.bf16.mxu0 0
    %371 = vmatpush1.bf16.msra.mxu0 0
    %372 = vmatprep.subr.bf16.mxu0 0
    %373 = vmatpush1.bf16.msra.mxu0 0
    %374 = vmatprep.subr.bf16.mxu0 0
    %375 = vmatpush1.bf16.msra.mxu0 0
    %376 = vmatprep.subr.bf16.mxu0 0
    %377 = vmatpush1.bf16.msra.mxu0 0
    %378 = vmatprep.subr.bf16.mxu0 0
    %379 = vmatpush1.bf16.msra.mxu0 0
    %380 = vmatprep.subr.bf16.mxu0 0
    %381 = vmatpush1.bf16.msra.mxu0 0
    %382 = vmatprep.mubr.bf16.mxu0 0
    %383 = vmatmul.mubr.bf16.gmra.mrb[0].mxu0 %v177
    %v384 = vpop.f32.mrb[0].mxu0
    %v385 = vadd.f32 %v169, %v384
    %v386 = vpop.f32.mrb[0].mxu0
    %v387 = vpop.f32.mrb[0].mxu0
    %v388 = vadd.f32 %v169, %v387
    %v389 = vpop.f32.mrb[0].mxu0
    %390 = vdwg.mxu0
    %v391 = vpack.c.bf16 %v346, %v342
    %v392 = vpack.c.bf16 %v348, %v344
    %v393 = vpack.c.bf16 %v388, %v385
    %394 = vst [vmem:[#allocation2] sm:$0xff] %v391
    %395 = vst [vmem:[#allocation2 + $0x8] sm:$0xff] %v392
    %396 = vst [vmem:[#allocation2 + $0x10] sm:$0xff] %v393
    %s397 = scalar_lea.vmem [#allocation3], 8
    %v398 = vld [vmem:[%s397] sm:$0xf]
    %v399 = vld [vmem:[%s397 + $0x4] sm:$0xf]
    %v402 = vunpack.c.l.b16 %v398
    %v403 = vunpack.c.l.b16 %v399
    %v404 = vpack.c.b16 %v403, %v402
    %406 = vmatprep.subr.bf16.mxu0 %v260
    %407 = vmatpush1.bf16.msra.mxu0 %v259
    %408 = vmatprep.subr.bf16.mxu0 %v263
    %409 = vmatpush1.bf16.msra.mxu0 %v262
    %410 = vmatprep.subr.bf16.mxu0 %v266
    %411 = vmatpush1.bf16.msra.mxu0 %v265
    %412 = vmatprep.subr.bf16.mxu0 %v269
    %413 = vmatpush1.bf16.msra.mxu0 %v268
    %414 = vmatprep.subr.bf16.mxu0 %v272
    %415 = vmatpush1.bf16.msra.mxu0 %v271
    %416 = vmatprep.subr.bf16.mxu0 %v275
    %417 = vmatpush1.bf16.msra.mxu0 %v274
    %418 = vmatprep.subr.bf16.mxu0 %v278
    %419 = vmatpush1.bf16.msra.mxu0 %v277
    %420 = vmatprep.subr.bf16.mxu0 %v281
    %421 = vmatpush1.bf16.msra.mxu0 %v280
    %422 = vmatprep.subr.bf16.mxu0 0
    %423 = vmatpush1.bf16.msra.mxu0 0
    %424 = vmatprep.subr.bf16.mxu0 0
    %425 = vmatpush1.bf16.msra.mxu0 0
    %426 = vmatprep.subr.bf16.mxu0 0
    %427 = vmatpush1.bf16.msra.mxu0 0
    %428 = vmatprep.subr.bf16.mxu0 0
    %429 = vmatpush1.bf16.msra.mxu0 0
    %430 = vmatprep.subr.bf16.mxu0 0
    %431 = vmatpush1.bf16.msra.mxu0 0
    %432 = vmatprep.subr.bf16.mxu0 0
    %433 = vmatpush1.bf16.msra.mxu0 0
    %434 = vmatprep.subr.bf16.mxu0 0
    %435 = vmatpush1.bf16.msra.mxu0 0
    %436 = vmatprep.subr.bf16.mxu0 0
    %437 = vmatpush1.bf16.msra.mxu0 0
    %438 = vmatprep.mubr.bf16.mxu0 0
    %439 = vmatmul.mubr.bf16.gmra.mrb[0].mxu0 %v404
    %v440 = vpop.f32.mrb[0].mxu0
    %v441 = vadd.f32 %v161, %v440
    %v442 = vpop.f32.mrb[0].mxu0
    %v443 = vadd.f32 %v165, %v442
    %v444 = vpop.f32.mrb[0].mxu0
    %v445 = vadd.f32 %v161, %v444
    %v446 = vpop.f32.mrb[0].mxu0
    %v447 = vadd.f32 %v165, %v446
    %448 = vdwg.mxu0
    %449 = vmatprep.subr.bf16.mxu0 0
    %450 = vmatpush1.bf16.msra.mxu0 %v261
    %451 = vmatprep.subr.bf16.mxu0 0
    %452 = vmatpush1.bf16.msra.mxu0 %v264
    %453 = vmatprep.subr.bf16.mxu0 0
    %454 = vmatpush1.bf16.msra.mxu0 %v267
    %455 = vmatprep.subr.bf16.mxu0 0
    %456 = vmatpush1.bf16.msra.mxu0 %v270
    %457 = vmatprep.subr.bf16.mxu0 0
    %458 = vmatpush1.bf16.msra.mxu0 %v273
    %459 = vmatprep.subr.bf16.mxu0 0
    %460 = vmatpush1.bf16.msra.mxu0 %v276
    %461 = vmatprep.subr.bf16.mxu0 0
    %462 = vmatpush1.bf16.msra.mxu0 %v279
    %463 = vmatprep.subr.bf16.mxu0 0
    %464 = vmatpush1.bf16.msra.mxu0 %v282
    %465 = vmatprep.subr.bf16.mxu0 0
    %466 = vmatpush1.bf16.msra.mxu0 0
    %467 = vmatprep.subr.bf16.mxu0 0
    %468 = vmatpush1.bf16.msra.mxu0 0
    %469 = vmatprep.subr.bf16.mxu0 0
    %470 = vmatpush1.bf16.msra.mxu0 0
    %471 = vmatprep.subr.bf16.mxu0 0
    %472 = vmatpush1.bf16.msra.mxu0 0
    %473 = vmatprep.subr.bf16.mxu0 0
    %474 = vmatpush1.bf16.msra.mxu0 0
    %475 = vmatprep.subr.bf16.mxu0 0
    %476 = vmatpush1.bf16.msra.mxu0 0
    %477 = vmatprep.subr.bf16.mxu0 0
    %478 = vmatpush1.bf16.msra.mxu0 0
    %479 = vmatprep.subr.bf16.mxu0 0
    %480 = vmatpush1.bf16.msra.mxu0 0
    %481 = vmatprep.mubr.bf16.mxu0 0
    %482 = vmatmul.mubr.bf16.gmra.mrb[0].mxu0 %v404
    %v483 = vpop.f32.mrb[0].mxu0
    %v484 = vadd.f32 %v169, %v483
    %v485 = vpop.f32.mrb[0].mxu0
    %v486 = vpop.f32.mrb[0].mxu0
    %v487 = vadd.f32 %v169, %v486
    %v488 = vpop.f32.mrb[0].mxu0
    %489 = vdwg.mxu0
    %v490 = vpack.c.bf16 %v445, %v441
    %v491 = vpack.c.bf16 %v447, %v443
    %v492 = vpack.c.bf16 %v487, %v484
    %s493 = scalar_lea.vmem [#allocation2], 24
    %494 = vst [vmem:[%s493] sm:$0xff] %v490
    %495 = vst [vmem:[%s493 + $0x8] sm:$0xff] %v491
    %496 = vst [vmem:[%s493 + $0x10] sm:$0xff] %v492
    %s497 = scalar_lea.vmem [#allocation3], 16
    %v498 = vld [vmem:[%s497] sm:$0xf]
    %v499 = vld [vmem:[%s497 + $0x4] sm:$0xf]
    %v502 = vunpack.c.l.b16 %v498
    %v503 = vunpack.c.l.b16 %v499
    %v504 = vpack.c.b16 %v503, %v502
    %506 = vmatprep.subr.bf16.mxu0 %v260
    %507 = vmatpush1.bf16.msra.mxu0 %v259
    %508 = vmatprep.subr.bf16.mxu0 %v263
    %509 = vmatpush1.bf16.msra.mxu0 %v262
    %510 = vmatprep.subr.bf16.mxu0 %v266
    %511 = vmatpush1.bf16.msra.mxu0 %v265
    %512 = vmatprep.subr.bf16.mxu0 %v269
    %513 = vmatpush1.bf16.msra.mxu0 %v268
    %514 = vmatprep.subr.bf16.mxu0 %v272
    %515 = vmatpush1.bf16.msra.mxu0 %v271
    %516 = vmatprep.subr.bf16.mxu0 %v275
    %517 = vmatpush1.bf16.msra.mxu0 %v274
    %518 = vmatprep.subr.bf16.mxu0 %v278
    %519 = vmatpush1.bf16.msra.mxu0 %v277
    %520 = vmatprep.subr.bf16.mxu0 %v281
    %521 = vmatpush1.bf16.msra.mxu0 %v280
    %522 = vmatprep.subr.bf16.mxu0 0
    %523 = vmatpush1.bf16.msra.mxu0 0
    %524 = vmatprep.subr.bf16.mxu0 0
    %525 = vmatpush1.bf16.msra.mxu0 0
    %526 = vmatprep.subr.bf16.mxu0 0
    %527 = vmatpush1.bf16.msra.mxu0 0
    %528 = vmatprep.subr.bf16.mxu0 0
    %529 = vmatpush1.bf16.msra.mxu0 0
    %530 = vmatprep.subr.bf16.mxu0 0
    %531 = vmatpush1.bf16.msra.mxu0 0
    %532 = vmatprep.subr.bf16.mxu0 0
    %533 = vmatpush1.bf16.msra.mxu0 0
    %534 = vmatprep.subr.bf16.mxu0 0
    %535 = vmatpush1.bf16.msra.mxu0 0
    %536 = vmatprep.subr.bf16.mxu0 0
    %537 = vmatpush1.bf16.msra.mxu0 0
    %538 = vmatprep.mubr.bf16.mxu0 0
    %539 = vmatmul.mubr.bf16.gmra.mrb[0].mxu0 %v504
    %v540 = vpop.f32.mrb[0].mxu0
    %v541 = vadd.f32 %v161, %v540
    %v542 = vpop.f32.mrb[0].mxu0
    %v543 = vadd.f32 %v165, %v542
    %v544 = vpop.f32.mrb[0].mxu0
    %v545 = vadd.f32 %v161, %v544
    %v546 = vpop.f32.mrb[0].mxu0
    %v547 = vadd.f32 %v165, %v546
    %548 = vdwg.mxu0
    %549 = vmatprep.subr.bf16.mxu0 0
    %550 = vmatpush1.bf16.msra.mxu0 %v261
    %551 = vmatprep.subr.bf16.mxu0 0
    %552 = vmatpush1.bf16.msra.mxu0 %v264
    %553 = vmatprep.subr.bf16.mxu0 0
    %554 = vmatpush1.bf16.msra.mxu0 %v267
    %555 = vmatprep.subr.bf16.mxu0 0
    %556 = vmatpush1.bf16.msra.mxu0 %v270
    %557 = vmatprep.subr.bf16.mxu0 0
    %558 = vmatpush1.bf16.msra.mxu0 %v273
    %559 = vmatprep.subr.bf16.mxu0 0
    %560 = vmatpush1.bf16.msra.mxu0 %v276
    %561 = vmatprep.subr.bf16.mxu0 0
    %562 = vmatpush1.bf16.msra.mxu0 %v279
    %563 = vmatprep.subr.bf16.mxu0 0
    %564 = vmatpush1.bf16.msra.mxu0 %v282
    %565 = vmatprep.subr.bf16.mxu0 0
    %566 = vmatpush1.bf16.msra.mxu0 0
    %567 = vmatprep.subr.bf16.mxu0 0
    %568 = vmatpush1.bf16.msra.mxu0 0
    %569 = vmatprep.subr.bf16.mxu0 0
    %570 = vmatpush1.bf16.msra.mxu0 0
    %571 = vmatprep.subr.bf16.mxu0 0
    %572 = vmatpush1.bf16.msra.mxu0 0
    %573 = vmatprep.subr.bf16.mxu0 0
    %574 = vmatpush1.bf16.msra.mxu0 0
    %575 = vmatprep.subr.bf16.mxu0 0
    %576 = vmatpush1.bf16.msra.mxu0 0
    %577 = vmatprep.subr.bf16.mxu0 0
    %578 = vmatpush1.bf16.msra.mxu0 0
    %579 = vmatprep.subr.bf16.mxu0 0
    %580 = vmatpush1.bf16.msra.mxu0 0
    %581 = vmatprep.mubr.bf16.mxu0 0
    %582 = vmatmul.mubr.bf16.gmra.mrb[0].mxu0 %v504
    %v583 = vpop.f32.mrb[0].mxu0
    %v584 = vadd.f32 %v169, %v583
    %v585 = vpop.f32.mrb[0].mxu0
    %v586 = vpop.f32.mrb[0].mxu0
    %v587 = vadd.f32 %v169, %v586
    %v588 = vpop.f32.mrb[0].mxu0
    %589 = vdwg.mxu0
    %v590 = vpack.c.bf16 %v545, %v541
    %v591 = vpack.c.bf16 %v547, %v543
    %v592 = vpack.c.bf16 %v587, %v584
    %s593 = scalar_lea.vmem [#allocation2], 48
    %594 = vst [vmem:[%s593] sm:$0xff] %v590
    %595 = vst [vmem:[%s593 + $0x8] sm:$0xff] %v591
    %596 = vst [vmem:[%s593 + $0x10] sm:$0xff] %v592
    %s597 = scalar_lea.vmem [#allocation3], 24
    %v598 = vld [vmem:[%s597] sm:$0xf]
    %v599 = vld [vmem:[%s597 + $0x4] sm:$0xf]
    %v602 = vunpack.c.l.b16 %v598
    %v603 = vunpack.c.l.b16 %v599
    %v604 = vpack.c.b16 %v603, %v602
    %606 = vmatprep.subr.bf16.mxu0 %v260
    %607 = vmatpush1.bf16.msra.mxu0 %v259
    %608 = vmatprep.subr.bf16.mxu0 %v263
    %609 = vmatpush1.bf16.msra.mxu0 %v262
    %610 = vmatprep.subr.bf16.mxu0 %v266
    %611 = vmatpush1.bf16.msra.mxu0 %v265
    %612 = vmatprep.subr.bf16.mxu0 %v269
    %613 = vmatpush1.bf16.msra.mxu0 %v268
    %614 = vmatprep.subr.bf16.mxu0 %v272
    %615 = vmatpush1.bf16.msra.mxu0 %v271
    %616 = vmatprep.subr.bf16.mxu0 %v275
    %617 = vmatpush1.bf16.msra.mxu0 %v274
    %618 = vmatprep.subr.bf16.mxu0 %v278
    %619 = vmatpush1.bf16.msra.mxu0 %v277
    %620 = vmatprep.subr.bf16.mxu0 %v281
    %621 = vmatpush1.bf16.msra.mxu0 %v280
    %622 = vmatprep.subr.bf16.mxu0 0
    %623 = vmatpush1.bf16.msra.mxu0 0
    %624 = vmatprep.subr.bf16.mxu0 0
    %625 = vmatpush1.bf16.msra.mxu0 0
    %626 = vmatprep.subr.bf16.mxu0 0
    %627 = vmatpush1.bf16.msra.mxu0 0
    %628 = vmatprep.subr.bf16.mxu0 0
    %629 = vmatpush1.bf16.msra.mxu0 0
    %630 = vmatprep.subr.bf16.mxu0 0
    %631 = vmatpush1.bf16.msra.mxu0 0
    %632 = vmatprep.subr.bf16.mxu0 0
    %633 = vmatpush1.bf16.msra.mxu0 0
    %634 = vmatprep.subr.bf16.mxu0 0
    %635 = vmatpush1.bf16.msra.mxu0 0
    %636 = vmatprep.subr.bf16.mxu0 0
    %637 = vmatpush1.bf16.msra.mxu0 0
    %638 = vmatprep.mubr.bf16.mxu0 0
    %639 = vmatmul.mubr.bf16.gmra.mrb[0].mxu0 %v604
    %v640 = vpop.f32.mrb[0].mxu0
    %v641 = vadd.f32 %v161, %v640
    %v642 = vpop.f32.mrb[0].mxu0
    %v643 = vadd.f32 %v165, %v642
    %v644 = vpop.f32.mrb[0].mxu0
    %v645 = vadd.f32 %v161, %v644
    %v646 = vpop.f32.mrb[0].mxu0
    %v647 = vadd.f32 %v165, %v646
    %648 = vdwg.mxu0
    %649 = vmatprep.subr.bf16.mxu0 0
    %650 = vmatpush1.bf16.msra.mxu0 %v261
    %651 = vmatprep.subr.bf16.mxu0 0
    %652 = vmatpush1.bf16.msra.mxu0 %v264
    %653 = vmatprep.subr.bf16.mxu0 0
    %654 = vmatpush1.bf16.msra.mxu0 %v267
    %655 = vmatprep.subr.bf16.mxu0 0
    %656 = vmatpush1.bf16.msra.mxu0 %v270
    %657 = vmatprep.subr.bf16.mxu0 0
    %658 = vmatpush1.bf16.msra.mxu0 %v273
    %659 = vmatprep.subr.bf16.mxu0 0
    %660 = vmatpush1.bf16.msra.mxu0 %v276
    %661 = vmatprep.subr.bf16.mxu0 0
    %662 = vmatpush1.bf16.msra.mxu0 %v279
    %663 = vmatprep.subr.bf16.mxu0 0
    %664 = vmatpush1.bf16.msra.mxu0 %v282
    %665 = vmatprep.subr.bf16.mxu0 0
    %666 = vmatpush1.bf16.msra.mxu0 0
    %667 = vmatprep.subr.bf16.mxu0 0
    %668 = vmatpush1.bf16.msra.mxu0 0
    %669 = vmatprep.subr.bf16.mxu0 0
    %670 = vmatpush1.bf16.msra.mxu0 0
    %671 = vmatprep.subr.bf16.mxu0 0
    %672 = vmatpush1.bf16.msra.mxu0 0
    %673 = vmatprep.subr.bf16.mxu0 0
    %674 = vmatpush1.bf16.msra.mxu0 0
    %675 = vmatprep.subr.bf16.mxu0 0
    %676 = vmatpush1.bf16.msra.mxu0 0
    %677 = vmatprep.subr.bf16.mxu0 0
    %678 = vmatpush1.bf16.msra.mxu0 0
    %679 = vmatprep.subr.bf16.mxu0 0
    %680 = vmatpush1.bf16.msra.mxu0 0
    %681 = vmatprep.mubr.bf16.mxu0 0
    %682 = vmatmul.mubr.bf16.gmra.mrb[0].mxu0 %v604
    %v683 = vpop.f32.mrb[0].mxu0
    %v684 = vadd.f32 %v169, %v683
    %v685 = vpop.f32.mrb[0].mxu0
    %v686 = vpop.f32.mrb[0].mxu0
    %v687 = vadd.f32 %v169, %v686
    %v688 = vpop.f32.mrb[0].mxu0
    %689 = vdwg.mxu0
    %v690 = vpack.c.bf16 %v645, %v641
    %v691 = vpack.c.bf16 %v647, %v643
    %v692 = vpack.c.bf16 %v687, %v684
    %s693 = scalar_lea.vmem [#allocation2], 72
    %694 = vst [vmem:[%s693] sm:$0xff] %v690
    %695 = vst [vmem:[%s693 + $0x8] sm:$0xff] %v691
    %696 = vst [vmem:[%s693 + $0x10] sm:$0xff] %v692
    %s697 = scalar_lea.vmem [#allocation3], 32
    %v698 = vld [vmem:[%s697] sm:$0xf]
    %v699 = vld [vmem:[%s697 + $0x4] sm:$0xf]
    %v702 = vunpack.c.l.b16 %v698
    %v703 = vunpack.c.l.b16 %v699
    %v704 = vpack.c.b16 %v703, %v702
    %706 = vmatprep.subr.bf16.mxu0 %v260
    %707 = vmatpush1.bf16.msra.mxu0 %v259
    %708 = vmatprep.subr.bf16.mxu0 %v263
    %709 = vmatpush1.bf16.msra.mxu0 %v262
    %710 = vmatprep.subr.bf16.mxu0 %v266
    %711 = vmatpush1.bf16.msra.mxu0 %v265
    %712 = vmatprep.subr.bf16.mxu0 %v269
    %713 = vmatpush1.bf16.msra.mxu0 %v268
    %714 = vmatprep.subr.bf16.mxu0 %v272
    %715 = vmatpush1.bf16.msra.mxu0 %v271
    %716 = vmatprep.subr.bf16.mxu0 %v275
    %717 = vmatpush1.bf16.msra.mxu0 %v274
    %718 = vmatprep.subr.bf16.mxu0 %v278
    %719 = vmatpush1.bf16.msra.mxu0 %v277
    %720 = vmatprep.subr.bf16.mxu0 %v281
    %721 = vmatpush1.bf16.msra.mxu0 %v280
    %722 = vmatprep.subr.bf16.mxu0 0
    %723 = vmatpush1.bf16.msra.mxu0 0
    %724 = vmatprep.subr.bf16.mxu0 0
    %725 = vmatpush1.bf16.msra.mxu0 0
    %726 = vmatprep.subr.bf16.mxu0 0
    %727 = vmatpush1.bf16.msra.mxu0 0
    %728 = vmatprep.subr.bf16.mxu0 0
    %729 = vmatpush1.bf16.msra.mxu0 0
    %730 = vmatprep.subr.bf16.mxu0 0
    %731 = vmatpush1.bf16.msra.mxu0 0
    %732 = vmatprep.subr.bf16.mxu0 0
    %733 = vmatpush1.bf16.msra.mxu0 0
    %734 = vmatprep.subr.bf16.mxu0 0
    %735 = vmatpush1.bf16.msra.mxu0 0
    %736 = vmatprep.subr.bf16.mxu0 0
    %737 = vmatpush1.bf16.msra.mxu0 0
    %738 = vmatprep.mubr.bf16.mxu0 0
    %739 = vmatmul.mubr.bf16.gmra.mrb[0].mxu0 %v704
    %v740 = vpop.f32.mrb[0].mxu0
    %v741 = vadd.f32 %v161, %v740
    %v742 = vpop.f32.mrb[0].mxu0
    %v743 = vadd.f32 %v165, %v742
    %v744 = vpop.f32.mrb[0].mxu0
    %v745 = vadd.f32 %v161, %v744
    %v746 = vpop.f32.mrb[0].mxu0
    %v747 = vadd.f32 %v165, %v746
    %748 = vdwg.mxu0
    %749 = vmatprep.subr.bf16.mxu0 0
    %750 = vmatpush1.bf16.msra.mxu0 %v261
    %751 = vmatprep.subr.bf16.mxu0 0
    %752 = vmatpush1.bf16.msra.mxu0 %v264
    %753 = vmatprep.subr.bf16.mxu0 0
    %754 = vmatpush1.bf16.msra.mxu0 %v267
    %755 = vmatprep.subr.bf16.mxu0 0
    %756 = vmatpush1.bf16.msra.mxu0 %v270
    %757 = vmatprep.subr.bf16.mxu0 0
    %758 = vmatpush1.bf16.msra.mxu0 %v273
    %759 = vmatprep.subr.bf16.mxu0 0
    %760 = vmatpush1.bf16.msra.mxu0 %v276
    %761 = vmatprep.subr.bf16.mxu0 0
    %762 = vmatpush1.bf16.msra.mxu0 %v279
    %763 = vmatprep.subr.bf16.mxu0 0
    %764 = vmatpush1.bf16.msra.mxu0 %v282
    %765 = vmatprep.subr.bf16.mxu0 0
    %766 = vmatpush1.bf16.msra.mxu0 0
    %767 = vmatprep.subr.bf16.mxu0 0
    %768 = vmatpush1.bf16.msra.mxu0 0
    %769 = vmatprep.subr.bf16.mxu0 0
    %770 = vmatpush1.bf16.msra.mxu0 0
    %771 = vmatprep.subr.bf16.mxu0 0
    %772 = vmatpush1.bf16.msra.mxu0 0
    %773 = vmatprep.subr.bf16.mxu0 0
    %774 = vmatpush1.bf16.msra.mxu0 0
    %775 = vmatprep.subr.bf16.mxu0 0
    %776 = vmatpush1.bf16.msra.mxu0 0
    %777 = vmatprep.subr.bf16.mxu0 0
    %778 = vmatpush1.bf16.msra.mxu0 0
    %779 = vmatprep.subr.bf16.mxu0 0
    %780 = vmatpush1.bf16.msra.mxu0 0
    %781 = vmatprep.mubr.bf16.mxu0 0
    %782 = vmatmul.mubr.bf16.gmra.mrb[0].mxu0 %v704
    %v783 = vpop.f32.mrb[0].mxu0
    %v784 = vadd.f32 %v169, %v783
    %v785 = vpop.f32.mrb[0].mxu0
    %v786 = vpop.f32.mrb[0].mxu0
    %v787 = vadd.f32 %v169, %v786
    %v788 = vpop.f32.mrb[0].mxu0
    %789 = vdwg.mxu0
    %v790 = vpack.c.bf16 %v745, %v741
    %v791 = vpack.c.bf16 %v747, %v743
    %v792 = vpack.c.bf16 %v787, %v784
    %s793 = scalar_lea.vmem [#allocation2], 96
    %794 = vst [vmem:[%s793] sm:$0xff] %v790
    %795 = vst [vmem:[%s793 + $0x8] sm:$0xff] %v791
    %796 = vst [vmem:[%s793 + $0x10] sm:$0xff] %v792
    %s797 = scalar_lea.vmem [#allocation3], 40
    %v798 = vld [vmem:[%s797] sm:$0xf]
    %v799 = vld [vmem:[%s797 + $0x4] sm:$0xf]
    %v802 = vunpack.c.l.b16 %v798
    %v803 = vunpack.c.l.b16 %v799
    %v804 = vpack.c.b16 %v803, %v802
    %806 = vmatprep.subr.bf16.mxu0 %v260
    %807 = vmatpush1.bf16.msra.mxu0 %v259
    %808 = vmatprep.subr.bf16.mxu0 %v263
    %809 = vmatpush1.bf16.msra.mxu0 %v262
    %810 = vmatprep.subr.bf16.mxu0 %v266
    %811 = vmatpush1.bf16.msra.mxu0 %v265
    %812 = vmatprep.subr.bf16.mxu0 %v269
    %813 = vmatpush1.bf16.msra.mxu0 %v268
    %814 = vmatprep.subr.bf16.mxu0 %v272
    %815 = vmatpush1.bf16.msra.mxu0 %v271
    %816 = vmatprep.subr.bf16.mxu0 %v275
    %817 = vmatpush1.bf16.msra.mxu0 %v274
    %818 = vmatprep.subr.bf16.mxu0 %v278
    %819 = vmatpush1.bf16.msra.mxu0 %v277
    %820 = vmatprep.subr.bf16.mxu0 %v281
    %821 = vmatpush1.bf16.msra.mxu0 %v280
    %822 = vmatprep.subr.bf16.mxu0 0
    %823 = vmatpush1.bf16.msra.mxu0 0
    %824 = vmatprep.subr.bf16.mxu0 0
    %825 = vmatpush1.bf16.msra.mxu0 0
    %826 = vmatprep.subr.bf16.mxu0 0
    %827 = vmatpush1.bf16.msra.mxu0 0
    %828 = vmatprep.subr.bf16.mxu0 0
    %829 = vmatpush1.bf16.msra.mxu0 0
    %830 = vmatprep.subr.bf16.mxu0 0
    %831 = vmatpush1.bf16.msra.mxu0 0
    %832 = vmatprep.subr.bf16.mxu0 0
    %833 = vmatpush1.bf16.msra.mxu0 0
    %834 = vmatprep.subr.bf16.mxu0 0
    %835 = vmatpush1.bf16.msra.mxu0 0
    %836 = vmatprep.subr.bf16.mxu0 0
    %837 = vmatpush1.bf16.msra.mxu0 0
    %838 = vmatprep.mubr.bf16.mxu0 0
    %839 = vmatmul.mubr.bf16.gmra.mrb[0].mxu0 %v804
    %v840 = vpop.f32.mrb[0].mxu0
    %v841 = vadd.f32 %v161, %v840
    %v842 = vpop.f32.mrb[0].mxu0
    %v843 = vadd.f32 %v165, %v842
    %v844 = vpop.f32.mrb[0].mxu0
    %v845 = vadd.f32 %v161, %v844
    %v846 = vpop.f32.mrb[0].mxu0
    %v847 = vadd.f32 %v165, %v846
    %848 = vdwg.mxu0
    %849 = vmatprep.subr.bf16.mxu0 0
    %850 = vmatpush1.bf16.msra.mxu0 %v261
    %851 = vmatprep.subr.bf16.mxu0 0
    %852 = vmatpush1.bf16.msra.mxu0 %v264
    %853 = vmatprep.subr.bf16.mxu0 0
    %854 = vmatpush1.bf16.msra.mxu0 %v267
    %855 = vmatprep.subr.bf16.mxu0 0
    %856 = vmatpush1.bf16.msra.mxu0 %v270
    %857 = vmatprep.subr.bf16.mxu0 0
    %858 = vmatpush1.bf16.msra.mxu0 %v273
    %859 = vmatprep.subr.bf16.mxu0 0
    %860 = vmatpush1.bf16.msra.mxu0 %v276
    %861 = vmatprep.subr.bf16.mxu0 0
    %862 = vmatpush1.bf16.msra.mxu0 %v279
    %863 = vmatprep.subr.bf16.mxu0 0
    %864 = vmatpush1.bf16.msra.mxu0 %v282
    %865 = vmatprep.subr.bf16.mxu0 0
    %866 = vmatpush1.bf16.msra.mxu0 0
    %867 = vmatprep.subr.bf16.mxu0 0
    %868 = vmatpush1.bf16.msra.mxu0 0
    %869 = vmatprep.subr.bf16.mxu0 0
    %870 = vmatpush1.bf16.msra.mxu0 0
    %871 = vmatprep.subr.bf16.mxu0 0
    %872 = vmatpush1.bf16.msra.mxu0 0
    %873 = vmatprep.subr.bf16.mxu0 0
    %874 = vmatpush1.bf16.msra.mxu0 0
    %875 = vmatprep.subr.bf16.mxu0 0
    %876 = vmatpush1.bf16.msra.mxu0 0
    %877 = vmatprep.subr.bf16.mxu0 0
    %878 = vmatpush1.bf16.msra.mxu0 0
    %879 = vmatprep.subr.bf16.mxu0 0
    %880 = vmatpush1.bf16.msra.mxu0 0
    %881 = vmatprep.mubr.bf16.mxu0 0
    %882 = vmatmul.mubr.bf16.gmra.mrb[0].mxu0 %v804
    %v883 = vpop.f32.mrb[0].mxu0
    %v884 = vadd.f32 %v169, %v883
    %v885 = vpop.f32.mrb[0].mxu0
    %v886 = vpop.f32.mrb[0].mxu0
    %v887 = vadd.f32 %v169, %v886
    %v888 = vpop.f32.mrb[0].mxu0
    %889 = vdwg.mxu0
    %v890 = vpack.c.bf16 %v845, %v841
    %v891 = vpack.c.bf16 %v847, %v843
    %v892 = vpack.c.bf16 %v887, %v884
    %s893 = scalar_lea.vmem [#allocation2], 120
    %894 = vst [vmem:[%s893] sm:$0xff] %v890
    %895 = vst [vmem:[%s893 + $0x8] sm:$0xff] %v891
    %896 = vst [vmem:[%s893 + $0x10] sm:$0xff] %v892
    %s897 = scalar_lea.vmem [#allocation3], 48
    %v898 = vld [vmem:[%s897] sm:$0xf]
    %v899 = vld [vmem:[%s897 + $0x4] sm:$0xf]
    %v902 = vunpack.c.l.b16 %v898
    %v903 = vunpack.c.l.b16 %v899
    %v904 = vpack.c.b16 %v903, %v902
    %906 = vmatprep.subr.bf16.mxu0 %v260
    %907 = vmatpush1.bf16.msra.mxu0 %v259
    %908 = vmatprep.subr.bf16.mxu0 %v263
    %909 = vmatpush1.bf16.msra.mxu0 %v262
    %910 = vmatprep.subr.bf16.mxu0 %v266
    %911 = vmatpush1.bf16.msra.mxu0 %v265
    %912 = vmatprep.subr.bf16.mxu0 %v269
    %913 = vmatpush1.bf16.msra.mxu0 %v268
    %914 = vmatprep.subr.bf16.mxu0 %v272
    %915 = vmatpush1.bf16.msra.mxu0 %v271
    %916 = vmatprep.subr.bf16.mxu0 %v275
    %917 = vmatpush1.bf16.msra.mxu0 %v274
    %918 = vmatprep.subr.bf16.mxu0 %v278
    %919 = vmatpush1.bf16.msra.mxu0 %v277
    %920 = vmatprep.subr.bf16.mxu0 %v281
    %921 = vmatpush1.bf16.msra.mxu0 %v280
    %922 = vmatprep.subr.bf16.mxu0 0
    %923 = vmatpush1.bf16.msra.mxu0 0
    %924 = vmatprep.subr.bf16.mxu0 0
    %925 = vmatpush1.bf16.msra.mxu0 0
    %926 = vmatprep.subr.bf16.mxu0 0
    %927 = vmatpush1.bf16.msra.mxu0 0
    %928 = vmatprep.subr.bf16.mxu0 0
    %929 = vmatpush1.bf16.msra.mxu0 0
    %930 = vmatprep.subr.bf16.mxu0 0
    %931 = vmatpush1.bf16.msra.mxu0 0
    %932 = vmatprep.subr.bf16.mxu0 0
    %933 = vmatpush1.bf16.msra.mxu0 0
    %934 = vmatprep.subr.bf16.mxu0 0
    %935 = vmatpush1.bf16.msra.mxu0 0
    %936 = vmatprep.subr.bf16.mxu0 0
    %937 = vmatpush1.bf16.msra.mxu0 0
    %938 = vmatprep.mubr.bf16.mxu0 0
    %939 = vmatmul.mubr.bf16.gmra.mrb[0].mxu0 %v904
    %v940 = vpop.f32.mrb[0].mxu0
    %v941 = vadd.f32 %v161, %v940
    %v942 = vpop.f32.mrb[0].mxu0
    %v943 = vadd.f32 %v165, %v942
    %v944 = vpop.f32.mrb[0].mxu0
    %v945 = vadd.f32 %v161, %v944
    %v946 = vpop.f32.mrb[0].mxu0
    %v947 = vadd.f32 %v165, %v946
    %948 = vdwg.mxu0
    %949 = vmatprep.subr.bf16.mxu0 0
    %950 = vmatpush1.bf16.msra.mxu0 %v261
    %951 = vmatprep.subr.bf16.mxu0 0
    %952 = vmatpush1.bf16.msra.mxu0 %v264
    %953 = vmatprep.subr.bf16.mxu0 0
    %954 = vmatpush1.bf16.msra.mxu0 %v267
    %955 = vmatprep.subr.bf16.mxu0 0
    %956 = vmatpush1.bf16.msra.mxu0 %v270
    %957 = vmatprep.subr.bf16.mxu0 0
    %958 = vmatpush1.bf16.msra.mxu0 %v273
    %959 = vmatprep.subr.bf16.mxu0 0
    %960 = vmatpush1.bf16.msra.mxu0 %v276
    %961 = vmatprep.subr.bf16.mxu0 0
    %962 = vmatpush1.bf16.msra.mxu0 %v279
    %963 = vmatprep.subr.bf16.mxu0 0
    %964 = vmatpush1.bf16.msra.mxu0 %v282
    %965 = vmatprep.subr.bf16.mxu0 0
    %966 = vmatpush1.bf16.msra.mxu0 0
    %967 = vmatprep.subr.bf16.mxu0 0
    %968 = vmatpush1.bf16.msra.mxu0 0
    %969 = vmatprep.subr.bf16.mxu0 0
    %970 = vmatpush1.bf16.msra.mxu0 0
    %971 = vmatprep.subr.bf16.mxu0 0
    %972 = vmatpush1.bf16.msra.mxu0 0
    %973 = vmatprep.subr.bf16.mxu0 0
    %974 = vmatpush1.bf16.msra.mxu0 0
    %975 = vmatprep.subr.bf16.mxu0 0
    %976 = vmatpush1.bf16.msra.mxu0 0
    %977 = vmatprep.subr.bf16.mxu0 0
    %978 = vmatpush1.bf16.msra.mxu0 0
    %979 = vmatprep.subr.bf16.mxu0 0
    %980 = vmatpush1.bf16.msra.mxu0 0
    %981 = vmatprep.mubr.bf16.mxu0 0
    %982 = vmatmul.mubr.bf16.gmra.mrb[0].mxu0 %v904
    %v983 = vpop.f32.mrb[0].mxu0
    %v984 = vadd.f32 %v169, %v983
    %v985 = vpop.f32.mrb[0].mxu0
    %v986 = vpop.f32.mrb[0].mxu0
    %v987 = vadd.f32 %v169, %v986
    %v988 = vpop.f32.mrb[0].mxu0
    %989 = vdwg.mxu0
    %v990 = vpack.c.bf16 %v945, %v941
    %v991 = vpack.c.bf16 %v947, %v943
    %v992 = vpack.c.bf16 %v987, %v984
    %s993 = scalar_lea.vmem [#allocation2], 144
    %994 = vst [vmem:[%s993] sm:$0xff] %v990
    %995 = vst [vmem:[%s993 + $0x8] sm:$0xff] %v991
    %996 = vst [vmem:[%s993 + $0x10] sm:$0xff] %v992
    %s997 = scalar_lea.vmem [#allocation3], 56
    %v998 = vld [vmem:[%s997] sm:$0xf]
    %v999 = vld [vmem:[%s997 + $0x4] sm:$0xf]
    %v1002 = vunpack.c.l.b16 %v998
    %v1003 = vunpack.c.l.b16 %v999
    %v1004 = vpack.c.b16 %v1003, %v1002
    %1006 = vmatprep.subr.bf16.mxu0 %v260
    %1007 = vmatpush1.bf16.msra.mxu0 %v259
    %1008 = vmatprep.subr.bf16.mxu0 %v263
    %1009 = vmatpush1.bf16.msra.mxu0 %v262
    %1010 = vmatprep.subr.bf16.mxu0 %v266
    %1011 = vmatpush1.bf16.msra.mxu0 %v265
    %1012 = vmatprep.subr.bf16.mxu0 %v269
    %1013 = vmatpush1.bf16.msra.mxu0 %v268
    %1014 = vmatprep.subr.bf16.mxu0 %v272
    %1015 = vmatpush1.bf16.msra.mxu0 %v271
    %1016 = vmatprep.subr.bf16.mxu0 %v275
    %1017 = vmatpush1.bf16.msra.mxu0 %v274
    %1018 = vmatprep.subr.bf16.mxu0 %v278
    %1019 = vmatpush1.bf16.msra.mxu0 %v277
    %1020 = vmatprep.subr.bf16.mxu0 %v281
    %1021 = vmatpush1.bf16.msra.mxu0 %v280
    %1022 = vmatprep.subr.bf16.mxu0 0
    %1023 = vmatpush1.bf16.msra.mxu0 0
    %1024 = vmatprep.subr.bf16.mxu0 0
    %1025 = vmatpush1.bf16.msra.mxu0 0
    %1026 = vmatprep.subr.bf16.mxu0 0
    %1027 = vmatpush1.bf16.msra.mxu0 0
    %1028 = vmatprep.subr.bf16.mxu0 0
    %1029 = vmatpush1.bf16.msra.mxu0 0
    %1030 = vmatprep.subr.bf16.mxu0 0
    %1031 = vmatpush1.bf16.msra.mxu0 0
    %1032 = vmatprep.subr.bf16.mxu0 0
    %1033 = vmatpush1.bf16.msra.mxu0 0
    %1034 = vmatprep.subr.bf16.mxu0 0
    %1035 = vmatpush1.bf16.msra.mxu0 0
    %1036 = vmatprep.subr.bf16.mxu0 0
    %1037 = vmatpush1.bf16.msra.mxu0 0
    %1038 = vmatprep.mubr.bf16.mxu0 0
    %1039 = vmatmul.mubr.bf16.gmra.mrb[0].mxu0 %v1004
    %v1040 = vpop.f32.mrb[0].mxu0
    %v1041 = vadd.f32 %v161, %v1040
    %v1042 = vpop.f32.mrb[0].mxu0
    %v1043 = vadd.f32 %v165, %v1042
    %v1044 = vpop.f32.mrb[0].mxu0
    %v1045 = vadd.f32 %v161, %v1044
    %v1046 = vpop.f32.mrb[0].mxu0
    %v1047 = vadd.f32 %v165, %v1046
    %1048 = vdwg.mxu0
    %1049 = vmatprep.subr.bf16.mxu0 0
    %1050 = vmatpush1.bf16.msra.mxu0 %v261
    %1051 = vmatprep.subr.bf16.mxu0 0
    %1052 = vmatpush1.bf16.msra.mxu0 %v264
    %1053 = vmatprep.subr.bf16.mxu0 0
    %1054 = vmatpush1.bf16.msra.mxu0 %v267
    %1055 = vmatprep.subr.bf16.mxu0 0
    %1056 = vmatpush1.bf16.msra.mxu0 %v270
    %1057 = vmatprep.subr.bf16.mxu0 0
    %1058 = vmatpush1.bf16.msra.mxu0 %v273
    %1059 = vmatprep.subr.bf16.mxu0 0
    %1060 = vmatpush1.bf16.msra.mxu0 %v276
    %1061 = vmatprep.subr.bf16.mxu0 0
    %1062 = vmatpush1.bf16.msra.mxu0 %v279
    %1063 = vmatprep.subr.bf16.mxu0 0
    %1064 = vmatpush1.bf16.msra.mxu0 %v282
    %1065 = vmatprep.subr.bf16.mxu0 0
    %1066 = vmatpush1.bf16.msra.mxu0 0
    %1067 = vmatprep.subr.bf16.mxu0 0
    %1068 = vmatpush1.bf16.msra.mxu0 0
    %1069 = vmatprep.subr.bf16.mxu0 0
    %1070 = vmatpush1.bf16.msra.mxu0 0
    %1071 = vmatprep.subr.bf16.mxu0 0
    %1072 = vmatpush1.bf16.msra.mxu0 0
    %1073 = vmatprep.subr.bf16.mxu0 0
    %1074 = vmatpush1.bf16.msra.mxu0 0
    %1075 = vmatprep.subr.bf16.mxu0 0
    %1076 = vmatpush1.bf16.msra.mxu0 0
    %1077 = vmatprep.subr.bf16.mxu0 0
    %1078 = vmatpush1.bf16.msra.mxu0 0
    %1079 = vmatprep.subr.bf16.mxu0 0
    %1080 = vmatpush1.bf16.msra.mxu0 0
    %1081 = vmatprep.mubr.bf16.mxu0 0
    %1082 = vmatmul.mubr.bf16.gmra.mrb[0].mxu0 %v1004
    %v1083 = vpop.f32.mrb[0].mxu0
    %v1084 = vadd.f32 %v169, %v1083
    %v1085 = vpop.f32.mrb[0].mxu0
    %v1086 = vpop.f32.mrb[0].mxu0
    %v1087 = vadd.f32 %v169, %v1086
    %v1088 = vpop.f32.mrb[0].mxu0
    %1089 = vdwg.mxu0
    %v1090 = vpack.c.bf16 %v1045, %v1041
    %v1091 = vpack.c.bf16 %v1047, %v1043
    %v1092 = vpack.c.bf16 %v1087, %v1084
    %s1093 = scalar_lea.vmem [#allocation2], 168
    %1094 = vst [vmem:[%s1093] sm:$0xff] %v1090
    %1095 = vst [vmem:[%s1093 + $0x8] sm:$0xff] %v1091
    %1096 = vst [vmem:[%s1093 + $0x10] sm:$0xff] %v1092
    %v1097 = vld [vmem:[#allocation8] sm:$0xff]
    %v1098 = vld [vmem:[#allocation8 + $0x8] sm:$0xf]
    %v1099 = vld [vmem:[#allocation8 + $0xc] sm:$0xff]
    %v1100 = vld [vmem:[#allocation8 + $0x14] sm:$0xf]
    %v1101 = vld [vmem:[#allocation8 + $0x18] sm:$0xff]
    %v1102 = vld [vmem:[#allocation8 + $0x20] sm:$0xf]
    %v1103 = vld [vmem:[#allocation8 + $0x24] sm:$0xff]
    %v1104 = vld [vmem:[#allocation8 + $0x2c] sm:$0xf]
    %v1105 = vld [vmem:[#allocation8 + $0x30] sm:$0xff]
    %v1106 = vld [vmem:[#allocation8 + $0x38] sm:$0xf]
    %v1107 = vld [vmem:[#allocation8 + $0x3c] sm:$0xff]
    %v1108 = vld [vmem:[#allocation8 + $0x44] sm:$0xf]
    %v1109 = vld [vmem:[#allocation8 + $0x48] sm:$0xff]
    %v1110 = vld [vmem:[#allocation8 + $0x50] sm:$0xf]
    %v1111 = vld [vmem:[#allocation8 + $0x54] sm:$0xff]
    %v1112 = vld [vmem:[#allocation8 + $0x5c] sm:$0xf]
    %v1113 = vld [vmem:[#allocation8 + $0x60] sm:$0xff]
    %v1114 = vld [vmem:[#allocation8 + $0x68] sm:$0xf]
    %v1115 = vld [vmem:[#allocation8 + $0x6c] sm:$0xff]
    %v1116 = vld [vmem:[#allocation8 + $0x74] sm:$0xf]
    %v1117 = vld [vmem:[#allocation8 + $0x78] sm:$0xff]
    %v1118 = vld [vmem:[#allocation8 + $0x80] sm:$0xf]
    %v1119 = vld [vmem:[#allocation8 + $0x84] sm:$0xff]
    %v1120 = vld [vmem:[#allocation8 + $0x8c] sm:$0xf]
    %v1121 = vld [vmem:[#allocation8 + $0x90] sm:$0xff]
    %v1122 = vld [vmem:[#allocation8 + $0x98] sm:$0xf]
    %v1123 = vld [vmem:[#allocation8 + $0x9c] sm:$0xff]
    %v1124 = vld [vmem:[#allocation8 + $0xa4] sm:$0xf]
    %v1125 = vld [vmem:[#allocation8 + $0xa8] sm:$0xff]
    %v1126 = vld [vmem:[#allocation8 + $0xb0] sm:$0xf]
    %v1127 = vld [vmem:[#allocation8 + $0xb4] sm:$0xff]
    %v1128 = vld [vmem:[#allocation8 + $0xbc] sm:$0xf]
    %v1129 = vld [vmem:[%s4] sm:$0x1]
    %v1131 = vlaneseq
    %v1132 = vshrl.u32 %v1131, 7
    %v1133 = vsub.s32 0, %v1132
    %v1134 = vrot.slane %v1129, %v1133
    %v1136 = vld [vmem:[#allocation2] sm:$0xff]
    %v1137 = vld [vmem:[#allocation2 + $0x8] sm:$0xff]
    %v1138 = vld [vmem:[#allocation2 + $0x10] sm:$0xff]
    %v1139 = vunpack.c.l.bf16 %v1136
    %v1140 = vunpack.c.l.bf16 %v1137
    %v1141 = vunpack.c.l.bf16 %v1138
    %v1142 = vunpack.c.h.bf16 %v1136
    %v1143 = vunpack.c.h.bf16 %v1137
    %v1144 = vunpack.c.h.bf16 %v1138
    %v1177 = vunpack.c.l.b16 %v1097
    %v1178 = vunpack.c.h.b16 %v1097
    %v1179 = vunpack.c.l.b16 %v1098
    %v1180 = vunpack.c.l.b16 %v1099
    %v1181 = vunpack.c.h.b16 %v1099
    %v1182 = vunpack.c.l.b16 %v1100
    %v1183 = vunpack.c.l.b16 %v1101
    %v1184 = vunpack.c.h.b16 %v1101
    %v1185 = vunpack.c.l.b16 %v1102
    %v1186 = vunpack.c.l.b16 %v1103
    %v1187 = vunpack.c.h.b16 %v1103
    %v1188 = vunpack.c.l.b16 %v1104
    %v1189 = vunpack.c.l.b16 %v1105
    %v1190 = vunpack.c.h.b16 %v1105
    %v1191 = vunpack.c.l.b16 %v1106
    %v1192 = vunpack.c.l.b16 %v1107
    %v1193 = vunpack.c.h.b16 %v1107
    %v1194 = vunpack.c.l.b16 %v1108
    %v1195 = vunpack.c.l.b16 %v1109
    %v1196 = vunpack.c.h.b16 %v1109
    %v1197 = vunpack.c.l.b16 %v1110
    %v1198 = vunpack.c.l.b16 %v1111
    %v1199 = vunpack.c.h.b16 %v1111
    %v1200 = vunpack.c.l.b16 %v1112
    %v1201 = vunpack.c.l.b16 %v1113
    %v1202 = vunpack.c.h.b16 %v1113
    %v1203 = vunpack.c.l.b16 %v1114
    %v1204 = vunpack.c.l.b16 %v1115
    %v1205 = vunpack.c.h.b16 %v1115
    %v1206 = vunpack.c.l.b16 %v1116
    %v1207 = vunpack.c.l.b16 %v1117
    %v1208 = vunpack.c.h.b16 %v1117
    %v1209 = vunpack.c.l.b16 %v1118
    %v1210 = vunpack.c.l.b16 %v1119
    %v1211 = vunpack.c.h.b16 %v1119
    %v1212 = vunpack.c.l.b16 %v1120
    %v1213 = vunpack.c.l.b16 %v1121
    %v1214 = vunpack.c.h.b16 %v1121
    %v1215 = vunpack.c.l.b16 %v1122
    %v1216 = vunpack.c.l.b16 %v1123
    %v1217 = vunpack.c.h.b16 %v1123
    %v1218 = vunpack.c.l.b16 %v1124
    %v1219 = vunpack.c.l.b16 %v1125
    %v1220 = vunpack.c.h.b16 %v1125
    %v1221 = vunpack.c.l.b16 %v1126
    %v1222 = vunpack.c.l.b16 %v1127
    %v1223 = vunpack.c.h.b16 %v1127
    %v1224 = vunpack.c.l.b16 %v1128
    %v1225 = vpack.c.b16 %v1180, %v1177
    %v1226 = vpack.c.b16 %v1181, %v1178
    %v1227 = vpack.c.b16 %v1182, %v1179
    %v1228 = vpack.c.b16 %v1186, %v1183
    %v1229 = vpack.c.b16 %v1187, %v1184
    %v1230 = vpack.c.b16 %v1188, %v1185
    %v1231 = vpack.c.b16 %v1192, %v1189
    %v1232 = vpack.c.b16 %v1193, %v1190
    %v1233 = vpack.c.b16 %v1194, %v1191
    %v1234 = vpack.c.b16 %v1198, %v1195
    %v1235 = vpack.c.b16 %v1199, %v1196
    %v1236 = vpack.c.b16 %v1200, %v1197
    %v1237 = vpack.c.b16 %v1204, %v1201
    %v1238 = vpack.c.b16 %v1205, %v1202
    %v1239 = vpack.c.b16 %v1206, %v1203
    %v1240 = vpack.c.b16 %v1210, %v1207
    %v1241 = vpack.c.b16 %v1211, %v1208
    %v1242 = vpack.c.b16 %v1212, %v1209
    %v1243 = vpack.c.b16 %v1216, %v1213
    %v1244 = vpack.c.b16 %v1217, %v1214
    %v1245 = vpack.c.b16 %v1218, %v1215
    %v1246 = vpack.c.b16 %v1222, %v1219
    %v1247 = vpack.c.b16 %v1223, %v1220
    %v1248 = vpack.c.b16 %v1224, %v1221
    %1273 = vmatprep.subr.bf16.mxu0 %v1226
    %1274 = vmatpush1.bf16.msra.mxu0 %v1225
    %1275 = vmatprep.subr.bf16.mxu0 %v1229
    %1276 = vmatpush1.bf16.msra.mxu0 %v1228
    %1277 = vmatprep.subr.bf16.mxu0 %v1232
    %1278 = vmatpush1.bf16.msra.mxu0 %v1231
    %1279 = vmatprep.subr.bf16.mxu0 %v1235
    %1280 = vmatpush1.bf16.msra.mxu0 %v1234
    %1281 = vmatprep.subr.bf16.mxu0 %v1238
    %1282 = vmatpush1.bf16.msra.mxu0 %v1237
    %1283 = vmatprep.subr.bf16.mxu0 %v1241
    %1284 = vmatpush1.bf16.msra.mxu0 %v1240
    %1285 = vmatprep.subr.bf16.mxu0 %v1244
    %1286 = vmatpush1.bf16.msra.mxu0 %v1243
    %1287 = vmatprep.subr.bf16.mxu0 %v1247
    %1288 = vmatpush1.bf16.msra.mxu0 %v1246
    %1289 = vmatprep.subr.bf16.mxu0 0
    %1290 = vmatpush1.bf16.msra.mxu0 0
    %1291 = vmatprep.subr.bf16.mxu0 0
    %1292 = vmatpush1.bf16.msra.mxu0 0
    %1293 = vmatprep.subr.bf16.mxu0 0
    %1294 = vmatpush1.bf16.msra.mxu0 0
    %1295 = vmatprep.subr.bf16.mxu0 0
    %1296 = vmatpush1.bf16.msra.mxu0 0
    %1297 = vmatprep.subr.bf16.mxu0 0
    %1298 = vmatpush1.bf16.msra.mxu0 0
    %1299 = vmatprep.subr.bf16.mxu0 0
    %1300 = vmatpush1.bf16.msra.mxu0 0
    %1301 = vmatprep.subr.bf16.mxu0 0
    %1302 = vmatpush1.bf16.msra.mxu0 0
    %1303 = vmatprep.subr.bf16.mxu0 0
    %1304 = vmatpush1.bf16.msra.mxu0 0
    %1305 = vmatprep.mubr.bf16.mxu0 0
    %1306 = vmatmul.mubr.bf16.gmra.mrb[0].mxu0 0
    %v1307 = vpop.f32.mrb[0].mxu0
    %v1308 = vadd.f32 0.0, %v1307
    %v1309 = vpop.f32.mrb[0].mxu0
    %v1310 = vadd.f32 0.0, %v1309
    %v1311 = vpop.f32.mrb[0].mxu0
    %v1312 = vadd.f32 0.0, %v1311
    %v1313 = vpop.f32.mrb[0].mxu0
    %v1314 = vadd.f32 0.0, %v1313
    %1315 = vdwg.mxu0
    %1316 = vmatprep.subr.bf16.mxu0 0
    %1317 = vmatpush1.bf16.msra.mxu0 %v1227
    %1318 = vmatprep.subr.bf16.mxu0 0
    %1319 = vmatpush1.bf16.msra.mxu0 %v1230
    %1320 = vmatprep.subr.bf16.mxu0 0
    %1321 = vmatpush1.bf16.msra.mxu0 %v1233
    %1322 = vmatprep.subr.bf16.mxu0 0
    %1323 = vmatpush1.bf16.msra.mxu0 %v1236
    %1324 = vmatprep.subr.bf16.mxu0 0
    %1325 = vmatpush1.bf16.msra.mxu0 %v1239
    %1326 = vmatprep.subr.bf16.mxu0 0
    %1327 = vmatpush1.bf16.msra.mxu0 %v1242
    %1328 = vmatprep.subr.bf16.mxu0 0
    %1329 = vmatpush1.bf16.msra.mxu0 %v1245
    %1330 = vmatprep.subr.bf16.mxu0 0
    %1331 = vmatpush1.bf16.msra.mxu0 %v1248
    %1332 = vmatprep.subr.bf16.mxu0 0
    %1333 = vmatpush1.bf16.msra.mxu0 0
    %1334 = vmatprep.subr.bf16.mxu0 0
    %1335 = vmatpush1.bf16.msra.mxu0 0
    %1336 = vmatprep.subr.bf16.mxu0 0
    %1337 = vmatpush1.bf16.msra.mxu0 0
    %1338 = vmatprep.subr.bf16.mxu0 0
    %1339 = vmatpush1.bf16.msra.mxu0 0
    %1340 = vmatprep.subr.bf16.mxu0 0
    %1341 = vmatpush1.bf16.msra.mxu0 0
    %1342 = vmatprep.subr.bf16.mxu0 0
    %1343 = vmatpush1.bf16.msra.mxu0 0
    %1344 = vmatprep.subr.bf16.mxu0 0
    %1345 = vmatpush1.bf16.msra.mxu0 0
    %1346 = vmatprep.subr.bf16.mxu0 0
    %1347 = vmatpush1.bf16.msra.mxu0 0
    %1348 = vmatprep.mubr.bf16.mxu0 0
    %1349 = vmatmul.mubr.bf16.gmra.mrb[0].mxu0 0
    %v1350 = vpop.f32.mrb[0].mxu0
    %v1351 = vadd.f32 0.0, %v1350
    %v1352 = vpop.f32.mrb[0].mxu0
    %v1353 = vpop.f32.mrb[0].mxu0
    %v1354 = vadd.f32 0.0, %v1353
    %v1355 = vpop.f32.mrb[0].mxu0
    %1356 = vdwg.mxu0
    %v1357 = vadd.f32 %v1139, %v1308
    %v1358 = vadd.f32 %v1142, %v1312
    %v1359 = vxor.u32 %v1357, 2147483648
    %v1360 = vxor.u32 %v1358, 2147483648
    %v1361 = vmul.f32 %v1359, 1.442695
    %v1362 = vpow.pop %v1361
    %v1363 = vmul.f32 %v1360, 1.442695
    %v1364 = vpow.pop %v1363
    %v1365 = vadd.f32 %v1362, 1.0
    %v1366 = vadd.f32 %v1364, 1.0
    %v1367 = vrcp.pop %v1365
    %v1368 = vmul.f32 1.0, %v1367
    %v1369 = vrcp.pop %v1366
    %v1370 = vmul.f32 1.0, %v1369
    %v1371 = vadd.f32 %v1140, %v1310
    %v1372 = vadd.f32 %v1143, %v1314
    %v1373 = vxor.u32 %v1371, 2147483648
    %v1374 = vxor.u32 %v1372, 2147483648
    %v1375 = vmul.f32 %v1373, 1.442695
    %v1376 = vpow.pop %v1375
    %v1377 = vmul.f32 %v1374, 1.442695
    %v1378 = vpow.pop %v1377
    %v1379 = vadd.f32 %v1376, 1.0
    %v1380 = vadd.f32 %v1378, 1.0
    %v1381 = vrcp.pop %v1379
    %v1382 = vmul.f32 1.0, %v1381
    %v1383 = vrcp.pop %v1380
    %v1384 = vmul.f32 1.0, %v1383
    %v1385 = vadd.f32 %v1351, %v1134
    %v1386 = vadd.f32 %v1354, %v1134
    %v1387 = vmul.f32 %v1368, %v1385
    %v1388 = vmul.f32 %v1370, %v1386
    %v1389 = vadd.f32 %v1141, %v1387
    %v1390 = vadd.f32 %v1144, %v1388
    %v1391 = vtanh.pop %v1389
    %v1392 = vtanh.pop %v1390
    %v1393 = vsub.f32 0.0, %v1391
    %v1394 = vsub.f32 0.0, %v1392
    %v1395 = vmul.f32 %v1382, %v1393
    %v1396 = vmul.f32 %v1384, %v1394
    %v1397 = vadd.f32 %v1391, %v1395
    %v1398 = vadd.f32 %v1392, %v1396
    %v1399 = vld [vmem:[%s493] sm:$0xff]
    %v1400 = vld [vmem:[%s493 + $0x8] sm:$0xff]
    %v1401 = vld [vmem:[%s493 + $0x10] sm:$0xff]
    %v1402 = vunpack.c.l.bf16 %v1399
    %v1403 = vunpack.c.l.bf16 %v1400
    %v1404 = vunpack.c.l.bf16 %v1401
    %v1405 = vunpack.c.h.bf16 %v1399
    %v1406 = vunpack.c.h.bf16 %v1400
    %v1407 = vunpack.c.h.bf16 %v1401
    %v1408 = vpack.c.bf16 %v1398, %v1397
    %1409 = vmatprep.subr.bf16.mxu0 %v1226
    %1410 = vmatpush1.bf16.msra.mxu0 %v1225
    %1411 = vmatprep.subr.bf16.mxu0 %v1229
    %1412 = vmatpush1.bf16.msra.mxu0 %v1228
    %1413 = vmatprep.subr.bf16.mxu0 %v1232
    %1414 = vmatpush1.bf16.msra.mxu0 %v1231
    %1415 = vmatprep.subr.bf16.mxu0 %v1235
    %1416 = vmatpush1.bf16.msra.mxu0 %v1234
    %1417 = vmatprep.subr.bf16.mxu0 %v1238
    %1418 = vmatpush1.bf16.msra.mxu0 %v1237
    %1419 = vmatprep.subr.bf16.mxu0 %v1241
    %1420 = vmatpush1.bf16.msra.mxu0 %v1240
    %1421 = vmatprep.subr.bf16.mxu0 %v1244
    %1422 = vmatpush1.bf16.msra.mxu0 %v1243
    %1423 = vmatprep.subr.bf16.mxu0 %v1247
    %1424 = vmatpush1.bf16.msra.mxu0 %v1246
    %1425 = vmatprep.subr.bf16.mxu0 0
    %1426 = vmatpush1.bf16.msra.mxu0 0
    %1427 = vmatprep.subr.bf16.mxu0 0
    %1428 = vmatpush1.bf16.msra.mxu0 0
    %1429 = vmatprep.subr.bf16.mxu0 0
    %1430 = vmatpush1.bf16.msra.mxu0 0
    %1431 = vmatprep.subr.bf16.mxu0 0
    %1432 = vmatpush1.bf16.msra.mxu0 0
    %1433 = vmatprep.subr.bf16.mxu0 0
    %1434 = vmatpush1.bf16.msra.mxu0 0
    %1435 = vmatprep.subr.bf16.mxu0 0
    %1436 = vmatpush1.bf16.msra.mxu0 0
    %1437 = vmatprep.subr.bf16.mxu0 0
    %1438 = vmatpush1.bf16.msra.mxu0 0
    %1439 = vmatprep.subr.bf16.mxu0 0
    %1440 = vmatpush1.bf16.msra.mxu0 0
    %1441 = vmatprep.mubr.bf16.mxu0 0
    %1442 = vmatmul.mubr.bf16.gmra.mrb[0].mxu0 %v1408
    %v1443 = vpop.f32.mrb[0].mxu0
    %v1444 = vadd.f32 0.0, %v1443
    %v1445 = vpop.f32.mrb[0].mxu0
    %v1446 = vadd.f32 0.0, %v1445
    %v1447 = vpop.f32.mrb[0].mxu0
    %v1448 = vadd.f32 0.0, %v1447
    %v1449 = vpop.f32.mrb[0].mxu0
    %v1450 = vadd.f32 0.0, %v1449
    %1451 = vdwg.mxu0
    %1452 = vmatprep.subr.bf16.mxu0 0
    %1453 = vmatpush1.bf16.msra.mxu0 %v1227
    %1454 = vmatprep.subr.bf16.mxu0 0
    %1455 = vmatpush1.bf16.msra.mxu0 %v1230
    %1456 = vmatprep.subr.bf16.mxu0 0
    %1457 = vmatpush1.bf16.msra.mxu0 %v1233
    %1458 = vmatprep.subr.bf16.mxu0 0
    %1459 = vmatpush1.bf16.msra.mxu0 %v1236
    %1460 = vmatprep.subr.bf16.mxu0 0
    %1461 = vmatpush1.bf16.msra.mxu0 %v1239
    %1462 = vmatprep.subr.bf16.mxu0 0
    %1463 = vmatpush1.bf16.msra.mxu0 %v1242
    %1464 = vmatprep.subr.bf16.mxu0 0
    %1465 = vmatpush1.bf16.msra.mxu0 %v1245
    %1466 = vmatprep.subr.bf16.mxu0 0
    %1467 = vmatpush1.bf16.msra.mxu0 %v1248
    %1468 = vmatprep.subr.bf16.mxu0 0
    %1469 = vmatpush1.bf16.msra.mxu0 0
    %1470 = vmatprep.subr.bf16.mxu0 0
    %1471 = vmatpush1.bf16.msra.mxu0 0
    %1472 = vmatprep.subr.bf16.mxu0 0
    %1473 = vmatpush1.bf16.msra.mxu0 0
    %1474 = vmatprep.subr.bf16.mxu0 0
    %1475 = vmatpush1.bf16.msra.mxu0 0
    %1476 = vmatprep.subr.bf16.mxu0 0
    %1477 = vmatpush1.bf16.msra.mxu0 0
    %1478 = vmatprep.subr.bf16.mxu0 0
    %1479 = vmatpush1.bf16.msra.mxu0 0
    %1480 = vmatprep.subr.bf16.mxu0 0
    %1481 = vmatpush1.bf16.msra.mxu0 0
    %1482 = vmatprep.subr.bf16.mxu0 0
    %1483 = vmatpush1.bf16.msra.mxu0 0
    %1484 = vmatprep.mubr.bf16.mxu0 0
    %1485 = vmatmul.mubr.bf16.gmra.mrb[0].mxu0 %v1408
    %v1486 = vpop.f32.mrb[0].mxu0
    %v1487 = vadd.f32 0.0, %v1486
    %v1488 = vpop.f32.mrb[0].mxu0
    %v1489 = vpop.f32.mrb[0].mxu0
    %v1490 = vadd.f32 0.0, %v1489
    %v1491 = vpop.f32.mrb[0].mxu0
    %1492 = vdwg.mxu0
    %v1493 = vadd.f32 %v1402, %v1444
    %v1494 = vadd.f32 %v1405, %v1448
    %v1495 = vxor.u32 %v1493, 2147483648
    %v1496 = vxor.u32 %v1494, 2147483648
    %v1497 = vmul.f32 %v1495, 1.442695
    %v1498 = vpow.pop %v1497
    %v1499 = vmul.f32 %v1496, 1.442695
    %v1500 = vpow.pop %v1499
    %v1501 = vadd.f32 %v1498, 1.0
    %v1502 = vadd.f32 %v1500, 1.0
    %v1503 = vrcp.pop %v1501
    %v1504 = vmul.f32 1.0, %v1503
    %v1505 = vrcp.pop %v1502
    %v1506 = vmul.f32 1.0, %v1505
    %v1507 = vadd.f32 %v1403, %v1446
    %v1508 = vadd.f32 %v1406, %v1450
    %v1509 = vxor.u32 %v1507, 2147483648
    %v1510 = vxor.u32 %v1508, 2147483648
    %v1511 = vmul.f32 %v1509, 1.442695
    %v1512 = vpow.pop %v1511
    %v1513 = vmul.f32 %v1510, 1.442695
    %v1514 = vpow.pop %v1513
    %v1515 = vadd.f32 %v1512, 1.0
    %v1516 = vadd.f32 %v1514, 1.0
    %v1517 = vrcp.pop %v1515
    %v1518 = vmul.f32 1.0, %v1517
    %v1519 = vrcp.pop %v1516
    %v1520 = vmul.f32 1.0, %v1519
    %v1521 = vadd.f32 %v1487, %v1134
    %v1522 = vadd.f32 %v1490, %v1134
    %v1523 = vmul.f32 %v1504, %v1521
    %v1524 = vmul.f32 %v1506, %v1522
    %v1525 = vadd.f32 %v1404, %v1523
    %v1526 = vadd.f32 %v1407, %v1524
    %v1527 = vtanh.pop %v1525
    %v1528 = vtanh.pop %v1526
    %v1529 = vsub.f32 %v1397, %v1527
    %v1530 = vsub.f32 %v1398, %v1528
    %v1531 = vmul.f32 %v1518, %v1529
    %v1532 = vmul.f32 %v1520, %v1530
    %v1533 = vadd.f32 %v1527, %v1531
    %v1534 = vadd.f32 %v1528, %v1532
    %v1535 = vld [vmem:[%s593] sm:$0xff]
    %v1536 = vld [vmem:[%s593 + $0x8] sm:$0xff]
    %v1537 = vld [vmem:[%s593 + $0x10] sm:$0xff]
    %v1538 = vunpack.c.l.bf16 %v1535
    %v1539 = vunpack.c.l.bf16 %v1536
    %v1540 = vunpack.c.l.bf16 %v1537
    %v1541 = vunpack.c.h.bf16 %v1535
    %v1542 = vunpack.c.h.bf16 %v1536
    %v1543 = vunpack.c.h.bf16 %v1537
    %v1544 = vpack.c.bf16 %v1534, %v1533
    %1545 = vmatprep.subr.bf16.mxu0 %v1226
    %1546 = vmatpush1.bf16.msra.mxu0 %v1225
    %1547 = vmatprep.subr.bf16.mxu0 %v1229
    %1548 = vmatpush1.bf16.msra.mxu0 %v1228
    %1549 = vmatprep.subr.bf16.mxu0 %v1232
    %1550 = vmatpush1.bf16.msra.mxu0 %v1231
    %1551 = vmatprep.subr.bf16.mxu0 %v1235
    %1552 = vmatpush1.bf16.msra.mxu0 %v1234
    %1553 = vmatprep.subr.bf16.mxu0 %v1238
    %1554 = vmatpush1.bf16.msra.mxu0 %v1237
    %1555 = vmatprep.subr.bf16.mxu0 %v1241
    %1556 = vmatpush1.bf16.msra.mxu0 %v1240
    %1557 = vmatprep.subr.bf16.mxu0 %v1244
    %1558 = vmatpush1.bf16.msra.mxu0 %v1243
    %1559 = vmatprep.subr.bf16.mxu0 %v1247
    %1560 = vmatpush1.bf16.msra.mxu0 %v1246
    %1561 = vmatprep.subr.bf16.mxu0 0
    %1562 = vmatpush1.bf16.msra.mxu0 0
    %1563 = vmatprep.subr.bf16.mxu0 0
    %1564 = vmatpush1.bf16.msra.mxu0 0
    %1565 = vmatprep.subr.bf16.mxu0 0
    %1566 = vmatpush1.bf16.msra.mxu0 0
    %1567 = vmatprep.subr.bf16.mxu0 0
    %1568 = vmatpush1.bf16.msra.mxu0 0
    %1569 = vmatprep.subr.bf16.mxu0 0
    %1570 = vmatpush1.bf16.msra.mxu0 0
    %1571 = vmatprep.subr.bf16.mxu0 0
    %1572 = vmatpush1.bf16.msra.mxu0 0
    %1573 = vmatprep.subr.bf16.mxu0 0
    %1574 = vmatpush1.bf16.msra.mxu0 0
    %1575 = vmatprep.subr.bf16.mxu0 0
    %1576 = vmatpush1.bf16.msra.mxu0 0
    %1577 = vmatprep.mubr.bf16.mxu0 0
    %1578 = vmatmul.mubr.bf16.gmra.mrb[0].mxu0 %v1544
    %v1579 = vpop.f32.mrb[0].mxu0
    %v1580 = vadd.f32 0.0, %v1579
    %v1581 = vpop.f32.mrb[0].mxu0
    %v1582 = vadd.f32 0.0, %v1581
    %v1583 = vpop.f32.mrb[0].mxu0
    %v1584 = vadd.f32 0.0, %v1583
    %v1585 = vpop.f32.mrb[0].mxu0
    %v1586 = vadd.f32 0.0, %v1585
    %1587 = vdwg.mxu0
    %1588 = vmatprep.subr.bf16.mxu0 0
    %1589 = vmatpush1.bf16.msra.mxu0 %v1227
    %1590 = vmatprep.subr.bf16.mxu0 0
    %1591 = vmatpush1.bf16.msra.mxu0 %v1230
    %1592 = vmatprep.subr.bf16.mxu0 0
    %1593 = vmatpush1.bf16.msra.mxu0 %v1233
    %1594 = vmatprep.subr.bf16.mxu0 0
    %1595 = vmatpush1.bf16.msra.mxu0 %v1236
    %1596 = vmatprep.subr.bf16.mxu0 0
    %1597 = vmatpush1.bf16.msra.mxu0 %v1239
    %1598 = vmatprep.subr.bf16.mxu0 0
    %1599 = vmatpush1.bf16.msra.mxu0 %v1242
    %1600 = vmatprep.subr.bf16.mxu0 0
    %1601 = vmatpush1.bf16.msra.mxu0 %v1245
    %1602 = vmatprep.subr.bf16.mxu0 0
    %1603 = vmatpush1.bf16.msra.mxu0 %v1248
    %1604 = vmatprep.subr.bf16.mxu0 0
    %1605 = vmatpush1.bf16.msra.mxu0 0
    %1606 = vmatprep.subr.bf16.mxu0 0
    %1607 = vmatpush1.bf16.msra.mxu0 0
    %1608 = vmatprep.subr.bf16.mxu0 0
    %1609 = vmatpush1.bf16.msra.mxu0 0
    %1610 = vmatprep.subr.bf16.mxu0 0
    %1611 = vmatpush1.bf16.msra.mxu0 0
    %1612 = vmatprep.subr.bf16.mxu0 0
    %1613 = vmatpush1.bf16.msra.mxu0 0
    %1614 = vmatprep.subr.bf16.mxu0 0
    %1615 = vmatpush1.bf16.msra.mxu0 0
    %1616 = vmatprep.subr.bf16.mxu0 0
    %1617 = vmatpush1.bf16.msra.mxu0 0
    %1618 = vmatprep.subr.bf16.mxu0 0
    %1619 = vmatpush1.bf16.msra.mxu0 0
    %1620 = vmatprep.mubr.bf16.mxu0 0
    %1621 = vmatmul.mubr.bf16.gmra.mrb[0].mxu0 %v1544
    %v1622 = vpop.f32.mrb[0].mxu0
    %v1623 = vadd.f32 0.0, %v1622
    %v1624 = vpop.f32.mrb[0].mxu0
    %v1625 = vpop.f32.mrb[0].mxu0
    %v1626 = vadd.f32 0.0, %v1625
    %v1627 = vpop.f32.mrb[0].mxu0
    %1628 = vdwg.mxu0
    %v1629 = vadd.f32 %v1538, %v1580
    %v1630 = vadd.f32 %v1541, %v1584
    %v1631 = vxor.u32 %v1629, 2147483648
    %v1632 = vxor.u32 %v1630, 2147483648
    %v1633 = vmul.f32 %v1631, 1.442695
    %v1634 = vpow.pop %v1633
    %v1635 = vmul.f32 %v1632, 1.442695
    %v1636 = vpow.pop %v1635
    %v1637 = vadd.f32 %v1634, 1.0
    %v1638 = vadd.f32 %v1636, 1.0
    %v1639 = vrcp.pop %v1637
    %v1640 = vmul.f32 1.0, %v1639
    %v1641 = vrcp.pop %v1638
    %v1642 = vmul.f32 1.0, %v1641
    %v1643 = vadd.f32 %v1539, %v1582
    %v1644 = vadd.f32 %v1542, %v1586
    %v1645 = vxor.u32 %v1643, 2147483648
    %v1646 = vxor.u32 %v1644, 2147483648
    %v1647 = vmul.f32 %v1645, 1.442695
    %v1648 = vpow.pop %v1647
    %v1649 = vmul.f32 %v1646, 1.442695
    %v1650 = vpow.pop %v1649
    %v1651 = vadd.f32 %v1648, 1.0
    %v1652 = vadd.f32 %v1650, 1.0
    %v1653 = vrcp.pop %v1651
    %v1654 = vmul.f32 1.0, %v1653
    %v1655 = vrcp.pop %v1652
    %v1656 = vmul.f32 1.0, %v1655
    %v1657 = vadd.f32 %v1623, %v1134
    %v1658 = vadd.f32 %v1626, %v1134
    %v1659 = vmul.f32 %v1640, %v1657
    %v1660 = vmul.f32 %v1642, %v1658
    %v1661 = vadd.f32 %v1540, %v1659
    %v1662 = vadd.f32 %v1543, %v1660
    %v1663 = vtanh.pop %v1661
    %v1664 = vtanh.pop %v1662
    %v1665 = vsub.f32 %v1533, %v1663
    %v1666 = vsub.f32 %v1534, %v1664
    %v1667 = vmul.f32 %v1654, %v1665
    %v1668 = vmul.f32 %v1656, %v1666
    %v1669 = vadd.f32 %v1663, %v1667
    %v1670 = vadd.f32 %v1664, %v1668
    %v1671 = vld [vmem:[%s693] sm:$0xff]
    %v1672 = vld [vmem:[%s693 + $0x8] sm:$0xff]
    %v1673 = vld [vmem:[%s693 + $0x10] sm:$0xff]
    %v1674 = vunpack.c.l.bf16 %v1671
    %v1675 = vunpack.c.l.bf16 %v1672
    %v1676 = vunpack.c.l.bf16 %v1673
    %v1677 = vunpack.c.h.bf16 %v1671
    %v1678 = vunpack.c.h.bf16 %v1672
    %v1679 = vunpack.c.h.bf16 %v1673
    %v1680 = vpack.c.bf16 %v1670, %v1669
    %1681 = vmatprep.subr.bf16.mxu0 %v1226
    %1682 = vmatpush1.bf16.msra.mxu0 %v1225
    %1683 = vmatprep.subr.bf16.mxu0 %v1229
    %1684 = vmatpush1.bf16.msra.mxu0 %v1228
    %1685 = vmatprep.subr.bf16.mxu0 %v1232
    %1686 = vmatpush1.bf16.msra.mxu0 %v1231
    %1687 = vmatprep.subr.bf16.mxu0 %v1235
    %1688 = vmatpush1.bf16.msra.mxu0 %v1234
    %1689 = vmatprep.subr.bf16.mxu0 %v1238
    %1690 = vmatpush1.bf16.msra.mxu0 %v1237
    %1691 = vmatprep.subr.bf16.mxu0 %v1241
    %1692 = vmatpush1.bf16.msra.mxu0 %v1240
    %1693 = vmatprep.subr.bf16.mxu0 %v1244
    %1694 = vmatpush1.bf16.msra.mxu0 %v1243
    %1695 = vmatprep.subr.bf16.mxu0 %v1247
    %1696 = vmatpush1.bf16.msra.mxu0 %v1246
    %1697 = vmatprep.subr.bf16.mxu0 0
    %1698 = vmatpush1.bf16.msra.mxu0 0
    %1699 = vmatprep.subr.bf16.mxu0 0
    %1700 = vmatpush1.bf16.msra.mxu0 0
    %1701 = vmatprep.subr.bf16.mxu0 0
    %1702 = vmatpush1.bf16.msra.mxu0 0
    %1703 = vmatprep.subr.bf16.mxu0 0
    %1704 = vmatpush1.bf16.msra.mxu0 0
    %1705 = vmatprep.subr.bf16.mxu0 0
    %1706 = vmatpush1.bf16.msra.mxu0 0
    %1707 = vmatprep.subr.bf16.mxu0 0
    %1708 = vmatpush1.bf16.msra.mxu0 0
    %1709 = vmatprep.subr.bf16.mxu0 0
    %1710 = vmatpush1.bf16.msra.mxu0 0
    %1711 = vmatprep.subr.bf16.mxu0 0
    %1712 = vmatpush1.bf16.msra.mxu0 0
    %1713 = vmatprep.mubr.bf16.mxu0 0
    %1714 = vmatmul.mubr.bf16.gmra.mrb[0].mxu0 %v1680
    %v1715 = vpop.f32.mrb[0].mxu0
    %v1716 = vadd.f32 0.0, %v1715
    %v1717 = vpop.f32.mrb[0].mxu0
    %v1718 = vadd.f32 0.0, %v1717
    %v1719 = vpop.f32.mrb[0].mxu0
    %v1720 = vadd.f32 0.0, %v1719
    %v1721 = vpop.f32.mrb[0].mxu0
    %v1722 = vadd.f32 0.0, %v1721
    %1723 = vdwg.mxu0
    %1724 = vmatprep.subr.bf16.mxu0 0
    %1725 = vmatpush1.bf16.msra.mxu0 %v1227
    %1726 = vmatprep.subr.bf16.mxu0 0
    %1727 = vmatpush1.bf16.msra.mxu0 %v1230
    %1728 = vmatprep.subr.bf16.mxu0 0
    %1729 = vmatpush1.bf16.msra.mxu0 %v1233
    %1730 = vmatprep.subr.bf16.mxu0 0
    %1731 = vmatpush1.bf16.msra.mxu0 %v1236
    %1732 = vmatprep.subr.bf16.mxu0 0
    %1733 = vmatpush1.bf16.msra.mxu0 %v1239
    %1734 = vmatprep.subr.bf16.mxu0 0
    %1735 = vmatpush1.bf16.msra.mxu0 %v1242
    %1736 = vmatprep.subr.bf16.mxu0 0
    %1737 = vmatpush1.bf16.msra.mxu0 %v1245
    %1738 = vmatprep.subr.bf16.mxu0 0
    %1739 = vmatpush1.bf16.msra.mxu0 %v1248
    %1740 = vmatprep.subr.bf16.mxu0 0
    %1741 = vmatpush1.bf16.msra.mxu0 0
    %1742 = vmatprep.subr.bf16.mxu0 0
    %1743 = vmatpush1.bf16.msra.mxu0 0
    %1744 = vmatprep.subr.bf16.mxu0 0
    %1745 = vmatpush1.bf16.msra.mxu0 0
    %1746 = vmatprep.subr.bf16.mxu0 0
    %1747 = vmatpush1.bf16.msra.mxu0 0
    %1748 = vmatprep.subr.bf16.mxu0 0
    %1749 = vmatpush1.bf16.msra.mxu0 0
    %1750 = vmatprep.subr.bf16.mxu0 0
    %1751 = vmatpush1.bf16.msra.mxu0 0
    %1752 = vmatprep.subr.bf16.mxu0 0
    %1753 = vmatpush1.bf16.msra.mxu0 0
    %1754 = vmatprep.subr.bf16.mxu0 0
    %1755 = vmatpush1.bf16.msra.mxu0 0
    %1756 = vmatprep.mubr.bf16.mxu0 0
    %1757 = vmatmul.mubr.bf16.gmra.mrb[0].mxu0 %v1680
    %v1758 = vpop.f32.mrb[0].mxu0
    %v1759 = vadd.f32 0.0, %v1758
    %v1760 = vpop.f32.mrb[0].mxu0
    %v1761 = vpop.f32.mrb[0].mxu0
    %v1762 = vadd.f32 0.0, %v1761
    %v1763 = vpop.f32.mrb[0].mxu0
    %1764 = vdwg.mxu0
    %v1765 = vadd.f32 %v1674, %v1716
    %v1766 = vadd.f32 %v1677, %v1720
    %v1767 = vxor.u32 %v1765, 2147483648
    %v1768 = vxor.u32 %v1766, 2147483648
    %v1769 = vmul.f32 %v1767, 1.442695
    %v1770 = vpow.pop %v1769
    %v1771 = vmul.f32 %v1768, 1.442695
    %v1772 = vpow.pop %v1771
    %v1773 = vadd.f32 %v1770, 1.0
    %v1774 = vadd.f32 %v1772, 1.0
    %v1775 = vrcp.pop %v1773
    %v1776 = vmul.f32 1.0, %v1775
    %v1777 = vrcp.pop %v1774
    %v1778 = vmul.f32 1.0, %v1777
    %v1779 = vadd.f32 %v1675, %v1718
    %v1780 = vadd.f32 %v1678, %v1722
    %v1781 = vxor.u32 %v1779, 2147483648
    %v1782 = vxor.u32 %v1780, 2147483648
    %v1783 = vmul.f32 %v1781, 1.442695
    %v1784 = vpow.pop %v1783
    %v1785 = vmul.f32 %v1782, 1.442695
    %v1786 = vpow.pop %v1785
    %v1787 = vadd.f32 %v1784, 1.0
    %v1788 = vadd.f32 %v1786, 1.0
    %v1789 = vrcp.pop %v1787
    %v1790 = vmul.f32 1.0, %v1789
    %v1791 = vrcp.pop %v1788
    %v1792 = vmul.f32 1.0, %v1791
    %v1793 = vadd.f32 %v1759, %v1134
    %v1794 = vadd.f32 %v1762, %v1134
    %v1795 = vmul.f32 %v1776, %v1793
    %v1796 = vmul.f32 %v1778, %v1794
    %v1797 = vadd.f32 %v1676, %v1795
    %v1798 = vadd.f32 %v1679, %v1796
    %v1799 = vtanh.pop %v1797
    %v1800 = vtanh.pop %v1798
    %v1801 = vsub.f32 %v1669, %v1799
    %v1802 = vsub.f32 %v1670, %v1800
    %v1803 = vmul.f32 %v1790, %v1801
    %v1804 = vmul.f32 %v1792, %v1802
    %v1805 = vadd.f32 %v1799, %v1803
    %v1806 = vadd.f32 %v1800, %v1804
    %v1807 = vld [vmem:[%s793] sm:$0xff]
    %v1808 = vld [vmem:[%s793 + $0x8] sm:$0xff]
    %v1809 = vld [vmem:[%s793 + $0x10] sm:$0xff]
    %v1810 = vunpack.c.l.bf16 %v1807
    %v1811 = vunpack.c.l.bf16 %v1808
    %v1812 = vunpack.c.l.bf16 %v1809
    %v1813 = vunpack.c.h.bf16 %v1807
    %v1814 = vunpack.c.h.bf16 %v1808
    %v1815 = vunpack.c.h.bf16 %v1809
    %v1816 = vpack.c.bf16 %v1806, %v1805
    %1817 = vmatprep.subr.bf16.mxu0 %v1226
    %1818 = vmatpush1.bf16.msra.mxu0 %v1225
    %1819 = vmatprep.subr.bf16.mxu0 %v1229
    %1820 = vmatpush1.bf16.msra.mxu0 %v1228
    %1821 = vmatprep.subr.bf16.mxu0 %v1232
    %1822 = vmatpush1.bf16.msra.mxu0 %v1231
    %1823 = vmatprep.subr.bf16.mxu0 %v1235
    %1824 = vmatpush1.bf16.msra.mxu0 %v1234
    %1825 = vmatprep.subr.bf16.mxu0 %v1238
    %1826 = vmatpush1.bf16.msra.mxu0 %v1237
    %1827 = vmatprep.subr.bf16.mxu0 %v1241
    %1828 = vmatpush1.bf16.msra.mxu0 %v1240
    %1829 = vmatprep.subr.bf16.mxu0 %v1244
    %1830 = vmatpush1.bf16.msra.mxu0 %v1243
    %1831 = vmatprep.subr.bf16.mxu0 %v1247
    %1832 = vmatpush1.bf16.msra.mxu0 %v1246
    %1833 = vmatprep.subr.bf16.mxu0 0
    %1834 = vmatpush1.bf16.msra.mxu0 0
    %1835 = vmatprep.subr.bf16.mxu0 0
    %1836 = vmatpush1.bf16.msra.mxu0 0
    %1837 = vmatprep.subr.bf16.mxu0 0
    %1838 = vmatpush1.bf16.msra.mxu0 0
    %1839 = vmatprep.subr.bf16.mxu0 0
    %1840 = vmatpush1.bf16.msra.mxu0 0
    %1841 = vmatprep.subr.bf16.mxu0 0
    %1842 = vmatpush1.bf16.msra.mxu0 0
    %1843 = vmatprep.subr.bf16.mxu0 0
    %1844 = vmatpush1.bf16.msra.mxu0 0
    %1845 = vmatprep.subr.bf16.mxu0 0
    %1846 = vmatpush1.bf16.msra.mxu0 0
    %1847 = vmatprep.subr.bf16.mxu0 0
    %1848 = vmatpush1.bf16.msra.mxu0 0
    %1849 = vmatprep.mubr.bf16.mxu0 0
    %1850 = vmatmul.mubr.bf16.gmra.mrb[0].mxu0 %v1816
    %v1851 = vpop.f32.mrb[0].mxu0
    %v1852 = vadd.f32 0.0, %v1851
    %v1853 = vpop.f32.mrb[0].mxu0
    %v1854 = vadd.f32 0.0, %v1853
    %v1855 = vpop.f32.mrb[0].mxu0
    %v1856 = vadd.f32 0.0, %v1855
    %v1857 = vpop.f32.mrb[0].mxu0
    %v1858 = vadd.f32 0.0, %v1857
    %1859 = vdwg.mxu0
    %1860 = vmatprep.subr.bf16.mxu0 0
    %1861 = vmatpush1.bf16.msra.mxu0 %v1227
    %1862 = vmatprep.subr.bf16.mxu0 0
    %1863 = vmatpush1.bf16.msra.mxu0 %v1230
    %1864 = vmatprep.subr.bf16.mxu0 0
    %1865 = vmatpush1.bf16.msra.mxu0 %v1233
    %1866 = vmatprep.subr.bf16.mxu0 0
    %1867 = vmatpush1.bf16.msra.mxu0 %v1236
    %1868 = vmatprep.subr.bf16.mxu0 0
    %1869 = vmatpush1.bf16.msra.mxu0 %v1239
    %1870 = vmatprep.subr.bf16.mxu0 0
    %1871 = vmatpush1.bf16.msra.mxu0 %v1242
    %1872 = vmatprep.subr.bf16.mxu0 0
    %1873 = vmatpush1.bf16.msra.mxu0 %v1245
    %1874 = vmatprep.subr.bf16.mxu0 0
    %1875 = vmatpush1.bf16.msra.mxu0 %v1248
    %1876 = vmatprep.subr.bf16.mxu0 0
    %1877 = vmatpush1.bf16.msra.mxu0 0
    %1878 = vmatprep.subr.bf16.mxu0 0
    %1879 = vmatpush1.bf16.msra.mxu0 0
    %1880 = vmatprep.subr.bf16.mxu0 0
    %1881 = vmatpush1.bf16.msra.mxu0 0
    %1882 = vmatprep.subr.bf16.mxu0 0
    %1883 = vmatpush1.bf16.msra.mxu0 0
    %1884 = vmatprep.subr.bf16.mxu0 0
    %1885 = vmatpush1.bf16.msra.mxu0 0
    %1886 = vmatprep.subr.bf16.mxu0 0
    %1887 = vmatpush1.bf16.msra.mxu0 0
    %1888 = vmatprep.subr.bf16.mxu0 0
    %1889 = vmatpush1.bf16.msra.mxu0 0
    %1890 = vmatprep.subr.bf16.mxu0 0
    %1891 = vmatpush1.bf16.msra.mxu0 0
    %1892 = vmatprep.mubr.bf16.mxu0 0
    %1893 = vmatmul.mubr.bf16.gmra.mrb[0].mxu0 %v1816
    %v1894 = vpop.f32.mrb[0].mxu0
    %v1895 = vadd.f32 0.0, %v1894
    %v1896 = vpop.f32.mrb[0].mxu0
    %v1897 = vpop.f32.mrb[0].mxu0
    %v1898 = vadd.f32 0.0, %v1897
    %v1899 = vpop.f32.mrb[0].mxu0
    %1900 = vdwg.mxu0
    %v1901 = vadd.f32 %v1810, %v1852
    %v1902 = vadd.f32 %v1813, %v1856
    %v1903 = vxor.u32 %v1901, 2147483648
    %v1904 = vxor.u32 %v1902, 2147483648
    %v1905 = vmul.f32 %v1903, 1.442695
    %v1906 = vpow.pop %v1905
    %v1907 = vmul.f32 %v1904, 1.442695
    %v1908 = vpow.pop %v1907
    %v1909 = vadd.f32 %v1906, 1.0
    %v1910 = vadd.f32 %v1908, 1.0
    %v1911 = vrcp.pop %v1909
    %v1912 = vmul.f32 1.0, %v1911
    %v1913 = vrcp.pop %v1910
    %v1914 = vmul.f32 1.0, %v1913
    %v1915 = vadd.f32 %v1811, %v1854
    %v1916 = vadd.f32 %v1814, %v1858
    %v1917 = vxor.u32 %v1915, 2147483648
    %v1918 = vxor.u32 %v1916, 2147483648
    %v1919 = vmul.f32 %v1917, 1.442695
    %v1920 = vpow.pop %v1919
    %v1921 = vmul.f32 %v1918, 1.442695
    %v1922 = vpow.pop %v1921
    %v1923 = vadd.f32 %v1920, 1.0
    %v1924 = vadd.f32 %v1922, 1.0
    %v1925 = vrcp.pop %v1923
    %v1926 = vmul.f32 1.0, %v1925
    %v1927 = vrcp.pop %v1924
    %v1928 = vmul.f32 1.0, %v1927
    %v1929 = vadd.f32 %v1895, %v1134
    %v1930 = vadd.f32 %v1898, %v1134
    %v1931 = vmul.f32 %v1912, %v1929
    %v1932 = vmul.f32 %v1914, %v1930
    %v1933 = vadd.f32 %v1812, %v1931
    %v1934 = vadd.f32 %v1815, %v1932
    %v1935 = vtanh.pop %v1933
    %v1936 = vtanh.pop %v1934
    %v1937 = vsub.f32 %v1805, %v1935
    %v1938 = vsub.f32 %v1806, %v1936
    %v1939 = vmul.f32 %v1926, %v1937
    %v1940 = vmul.f32 %v1928, %v1938
    %v1941 = vadd.f32 %v1935, %v1939
    %v1942 = vadd.f32 %v1936, %v1940
    %v1943 = vld [vmem:[%s893] sm:$0xff]
    %v1944 = vld [vmem:[%s893 + $0x8] sm:$0xff]
    %v1945 = vld [vmem:[%s893 + $0x10] sm:$0xff]
    %v1946 = vunpack.c.l.bf16 %v1943
    %v1947 = vunpack.c.l.bf16 %v1944
    %v1948 = vunpack.c.l.bf16 %v1945
    %v1949 = vunpack.c.h.bf16 %v1943
    %v1950 = vunpack.c.h.bf16 %v1944
    %v1951 = vunpack.c.h.bf16 %v1945
    %v1952 = vpack.c.bf16 %v1942, %v1941
    %1953 = vmatprep.subr.bf16.mxu0 %v1226
    %1954 = vmatpush1.bf16.msra.mxu0 %v1225
    %1955 = vmatprep.subr.bf16.mxu0 %v1229
    %1956 = vmatpush1.bf16.msra.mxu0 %v1228
    %1957 = vmatprep.subr.bf16.mxu0 %v1232
    %1958 = vmatpush1.bf16.msra.mxu0 %v1231
    %1959 = vmatprep.subr.bf16.mxu0 %v1235
    %1960 = vmatpush1.bf16.msra.mxu0 %v1234
    %1961 = vmatprep.subr.bf16.mxu0 %v1238
    %1962 = vmatpush1.bf16.msra.mxu0 %v1237
    %1963 = vmatprep.subr.bf16.mxu0 %v1241
    %1964 = vmatpush1.bf16.msra.mxu0 %v1240
    %1965 = vmatprep.subr.bf16.mxu0 %v1244
    %1966 = vmatpush1.bf16.msra.mxu0 %v1243
    %1967 = vmatprep.subr.bf16.mxu0 %v1247
    %1968 = vmatpush1.bf16.msra.mxu0 %v1246
    %1969 = vmatprep.subr.bf16.mxu0 0
    %1970 = vmatpush1.bf16.msra.mxu0 0
    %1971 = vmatprep.subr.bf16.mxu0 0
    %1972 = vmatpush1.bf16.msra.mxu0 0
    %1973 = vmatprep.subr.bf16.mxu0 0
    %1974 = vmatpush1.bf16.msra.mxu0 0
    %1975 = vmatprep.subr.bf16.mxu0 0
    %1976 = vmatpush1.bf16.msra.mxu0 0
    %1977 = vmatprep.subr.bf16.mxu0 0
    %1978 = vmatpush1.bf16.msra.mxu0 0
    %1979 = vmatprep.subr.bf16.mxu0 0
    %1980 = vmatpush1.bf16.msra.mxu0 0
    %1981 = vmatprep.subr.bf16.mxu0 0
    %1982 = vmatpush1.bf16.msra.mxu0 0
    %1983 = vmatprep.subr.bf16.mxu0 0
    %1984 = vmatpush1.bf16.msra.mxu0 0
    %1985 = vmatprep.mubr.bf16.mxu0 0
    %1986 = vmatmul.mubr.bf16.gmra.mrb[0].mxu0 %v1952
    %v1987 = vpop.f32.mrb[0].mxu0
    %v1988 = vadd.f32 0.0, %v1987
    %v1989 = vpop.f32.mrb[0].mxu0
    %v1990 = vadd.f32 0.0, %v1989
    %v1991 = vpop.f32.mrb[0].mxu0
    %v1992 = vadd.f32 0.0, %v1991
    %v1993 = vpop.f32.mrb[0].mxu0
    %v1994 = vadd.f32 0.0, %v1993
    %1995 = vdwg.mxu0
    %1996 = vmatprep.subr.bf16.mxu0 0
    %1997 = vmatpush1.bf16.msra.mxu0 %v1227
    %1998 = vmatprep.subr.bf16.mxu0 0
    %1999 = vmatpush1.bf16.msra.mxu0 %v1230
    %2000 = vmatprep.subr.bf16.mxu0 0
    %2001 = vmatpush1.bf16.msra.mxu0 %v1233
    %2002 = vmatprep.subr.bf16.mxu0 0
    %2003 = vmatpush1.bf16.msra.mxu0 %v1236
    %2004 = vmatprep.subr.bf16.mxu0 0
    %2005 = vmatpush1.bf16.msra.mxu0 %v1239
    %2006 = vmatprep.subr.bf16.mxu0 0
    %2007 = vmatpush1.bf16.msra.mxu0 %v1242
    %2008 = vmatprep.subr.bf16.mxu0 0
    %2009 = vmatpush1.bf16.msra.mxu0 %v1245
    %2010 = vmatprep.subr.bf16.mxu0 0
    %2011 = vmatpush1.bf16.msra.mxu0 %v1248
    %2012 = vmatprep.subr.bf16.mxu0 0
    %2013 = vmatpush1.bf16.msra.mxu0 0
    %2014 = vmatprep.subr.bf16.mxu0 0
    %2015 = vmatpush1.bf16.msra.mxu0 0
    %2016 = vmatprep.subr.bf16.mxu0 0
    %2017 = vmatpush1.bf16.msra.mxu0 0
    %2018 = vmatprep.subr.bf16.mxu0 0
    %2019 = vmatpush1.bf16.msra.mxu0 0
    %2020 = vmatprep.subr.bf16.mxu0 0
    %2021 = vmatpush1.bf16.msra.mxu0 0
    %2022 = vmatprep.subr.bf16.mxu0 0
    %2023 = vmatpush1.bf16.msra.mxu0 0
    %2024 = vmatprep.subr.bf16.mxu0 0
    %2025 = vmatpush1.bf16.msra.mxu0 0
    %2026 = vmatprep.subr.bf16.mxu0 0
    %2027 = vmatpush1.bf16.msra.mxu0 0
    %2028 = vmatprep.mubr.bf16.mxu0 0
    %2029 = vmatmul.mubr.bf16.gmra.mrb[0].mxu0 %v1952
    %v2030 = vpop.f32.mrb[0].mxu0
    %v2031 = vadd.f32 0.0, %v2030
    %v2032 = vpop.f32.mrb[0].mxu0
    %v2033 = vpop.f32.mrb[0].mxu0
    %v2034 = vadd.f32 0.0, %v2033
    %v2035 = vpop.f32.mrb[0].mxu0
    %2036 = vdwg.mxu0
    %v2037 = vadd.f32 %v1946, %v1988
    %v2038 = vadd.f32 %v1949, %v1992
    %v2039 = vxor.u32 %v2037, 2147483648
    %v2040 = vxor.u32 %v2038, 2147483648
    %v2041 = vmul.f32 %v2039, 1.442695
    %v2042 = vpow.pop %v2041
    %v2043 = vmul.f32 %v2040, 1.442695
    %v2044 = vpow.pop %v2043
    %v2045 = vadd.f32 %v2042, 1.0
    %v2046 = vadd.f32 %v2044, 1.0
    %v2047 = vrcp.pop %v2045
    %v2048 = vmul.f32 1.0, %v2047
    %v2049 = vrcp.pop %v2046
    %v2050 = vmul.f32 1.0, %v2049
    %v2051 = vadd.f32 %v1947, %v1990
    %v2052 = vadd.f32 %v1950, %v1994
    %v2053 = vxor.u32 %v2051, 2147483648
    %v2054 = vxor.u32 %v2052, 2147483648
    %v2055 = vmul.f32 %v2053, 1.442695
    %v2056 = vpow.pop %v2055
    %v2057 = vmul.f32 %v2054, 1.442695
    %v2058 = vpow.pop %v2057
    %v2059 = vadd.f32 %v2056, 1.0
    %v2060 = vadd.f32 %v2058, 1.0
    %v2061 = vrcp.pop %v2059
    %v2062 = vmul.f32 1.0, %v2061
    %v2063 = vrcp.pop %v2060
    %v2064 = vmul.f32 1.0, %v2063
    %v2065 = vadd.f32 %v2031, %v1134
    %v2066 = vadd.f32 %v2034, %v1134
    %v2067 = vmul.f32 %v2048, %v2065
    %v2068 = vmul.f32 %v2050, %v2066
    %v2069 = vadd.f32 %v1948, %v2067
    %v2070 = vadd.f32 %v1951, %v2068
    %v2071 = vtanh.pop %v2069
    %v2072 = vtanh.pop %v2070
    %v2073 = vsub.f32 %v1941, %v2071
    %v2074 = vsub.f32 %v1942, %v2072
    %v2075 = vmul.f32 %v2062, %v2073
    %v2076 = vmul.f32 %v2064, %v2074
    %v2077 = vadd.f32 %v2071, %v2075
    %v2078 = vadd.f32 %v2072, %v2076
    %v2079 = vld [vmem:[%s993] sm:$0xff]
    %v2080 = vld [vmem:[%s993 + $0x8] sm:$0xff]
    %v2081 = vld [vmem:[%s993 + $0x10] sm:$0xff]
    %v2082 = vunpack.c.l.bf16 %v2079
    %v2083 = vunpack.c.l.bf16 %v2080
    %v2084 = vunpack.c.l.bf16 %v2081
    %v2085 = vunpack.c.h.bf16 %v2079
    %v2086 = vunpack.c.h.bf16 %v2080
    %v2087 = vunpack.c.h.bf16 %v2081
    %v2088 = vpack.c.bf16 %v2078, %v2077
    %2089 = vmatprep.subr.bf16.mxu0 %v1226
    %2090 = vmatpush1.bf16.msra.mxu0 %v1225
    %2091 = vmatprep.subr.bf16.mxu0 %v1229
    %2092 = vmatpush1.bf16.msra.mxu0 %v1228
    %2093 = vmatprep.subr.bf16.mxu0 %v1232
    %2094 = vmatpush1.bf16.msra.mxu0 %v1231
    %2095 = vmatprep.subr.bf16.mxu0 %v1235
    %2096 = vmatpush1.bf16.msra.mxu0 %v1234
    %2097 = vmatprep.subr.bf16.mxu0 %v1238
    %2098 = vmatpush1.bf16.msra.mxu0 %v1237
    %2099 = vmatprep.subr.bf16.mxu0 %v1241
    %2100 = vmatpush1.bf16.msra.mxu0 %v1240
    %2101 = vmatprep.subr.bf16.mxu0 %v1244
    %2102 = vmatpush1.bf16.msra.mxu0 %v1243
    %2103 = vmatprep.subr.bf16.mxu0 %v1247
    %2104 = vmatpush1.bf16.msra.mxu0 %v1246
    %2105 = vmatprep.subr.bf16.mxu0 0
    %2106 = vmatpush1.bf16.msra.mxu0 0
    %2107 = vmatprep.subr.bf16.mxu0 0
    %2108 = vmatpush1.bf16.msra.mxu0 0
    %2109 = vmatprep.subr.bf16.mxu0 0
    %2110 = vmatpush1.bf16.msra.mxu0 0
    %2111 = vmatprep.subr.bf16.mxu0 0
    %2112 = vmatpush1.bf16.msra.mxu0 0
    %2113 = vmatprep.subr.bf16.mxu0 0
    %2114 = vmatpush1.bf16.msra.mxu0 0
    %2115 = vmatprep.subr.bf16.mxu0 0
    %2116 = vmatpush1.bf16.msra.mxu0 0
    %2117 = vmatprep.subr.bf16.mxu0 0
    %2118 = vmatpush1.bf16.msra.mxu0 0
    %2119 = vmatprep.subr.bf16.mxu0 0
    %2120 = vmatpush1.bf16.msra.mxu0 0
    %2121 = vmatprep.mubr.bf16.mxu0 0
    %2122 = vmatmul.mubr.bf16.gmra.mrb[0].mxu0 %v2088
    %v2123 = vpop.f32.mrb[0].mxu0
    %v2124 = vadd.f32 0.0, %v2123
    %v2125 = vpop.f32.mrb[0].mxu0
    %v2126 = vadd.f32 0.0, %v2125
    %v2127 = vpop.f32.mrb[0].mxu0
    %v2128 = vadd.f32 0.0, %v2127
    %v2129 = vpop.f32.mrb[0].mxu0
    %v2130 = vadd.f32 0.0, %v2129
    %2131 = vdwg.mxu0
    %2132 = vmatprep.subr.bf16.mxu0 0
    %2133 = vmatpush1.bf16.msra.mxu0 %v1227
    %2134 = vmatprep.subr.bf16.mxu0 0
    %2135 = vmatpush1.bf16.msra.mxu0 %v1230
    %2136 = vmatprep.subr.bf16.mxu0 0
    %2137 = vmatpush1.bf16.msra.mxu0 %v1233
    %2138 = vmatprep.subr.bf16.mxu0 0
    %2139 = vmatpush1.bf16.msra.mxu0 %v1236
    %2140 = vmatprep.subr.bf16.mxu0 0
    %2141 = vmatpush1.bf16.msra.mxu0 %v1239
    %2142 = vmatprep.subr.bf16.mxu0 0
    %2143 = vmatpush1.bf16.msra.mxu0 %v1242
    %2144 = vmatprep.subr.bf16.mxu0 0
    %2145 = vmatpush1.bf16.msra.mxu0 %v1245
    %2146 = vmatprep.subr.bf16.mxu0 0
    %2147 = vmatpush1.bf16.msra.mxu0 %v1248
    %2148 = vmatprep.subr.bf16.mxu0 0
    %2149 = vmatpush1.bf16.msra.mxu0 0
    %2150 = vmatprep.subr.bf16.mxu0 0
    %2151 = vmatpush1.bf16.msra.mxu0 0
    %2152 = vmatprep.subr.bf16.mxu0 0
    %2153 = vmatpush1.bf16.msra.mxu0 0
    %2154 = vmatprep.subr.bf16.mxu0 0
    %2155 = vmatpush1.bf16.msra.mxu0 0
    %2156 = vmatprep.subr.bf16.mxu0 0
    %2157 = vmatpush1.bf16.msra.mxu0 0
    %2158 = vmatprep.subr.bf16.mxu0 0
    %2159 = vmatpush1.bf16.msra.mxu0 0
    %2160 = vmatprep.subr.bf16.mxu0 0
    %2161 = vmatpush1.bf16.msra.mxu0 0
    %2162 = vmatprep.subr.bf16.mxu0 0
    %2163 = vmatpush1.bf16.msra.mxu0 0
    %2164 = vmatprep.mubr.bf16.mxu0 0
    %2165 = vmatmul.mubr.bf16.gmra.mrb[0].mxu0 %v2088
    %v2166 = vpop.f32.mrb[0].mxu0
    %v2167 = vadd.f32 0.0, %v2166
    %v2168 = vpop.f32.mrb[0].mxu0
    %v2169 = vpop.f32.mrb[0].mxu0
    %v2170 = vadd.f32 0.0, %v2169
    %v2171 = vpop.f32.mrb[0].mxu0
    %2172 = vdwg.mxu0
    %v2173 = vadd.f32 %v2082, %v2124
    %v2174 = vadd.f32 %v2085, %v2128
    %v2175 = vxor.u32 %v2173, 2147483648
    %v2176 = vxor.u32 %v2174, 2147483648
    %v2177 = vmul.f32 %v2175, 1.442695
    %v2178 = vpow.pop %v2177
    %v2179 = vmul.f32 %v2176, 1.442695
    %v2180 = vpow.pop %v2179
    %v2181 = vadd.f32 %v2178, 1.0
    %v2182 = vadd.f32 %v2180, 1.0
    %v2183 = vrcp.pop %v2181
    %v2184 = vmul.f32 1.0, %v2183
    %v2185 = vrcp.pop %v2182
    %v2186 = vmul.f32 1.0, %v2185
    %v2187 = vadd.f32 %v2083, %v2126
    %v2188 = vadd.f32 %v2086, %v2130
    %v2189 = vxor.u32 %v2187, 2147483648
    %v2190 = vxor.u32 %v2188, 2147483648
    %v2191 = vmul.f32 %v2189, 1.442695
    %v2192 = vpow.pop %v2191
    %v2193 = vmul.f32 %v2190, 1.442695
    %v2194 = vpow.pop %v2193
    %v2195 = vadd.f32 %v2192, 1.0
    %v2196 = vadd.f32 %v2194, 1.0
    %v2197 = vrcp.pop %v2195
    %v2198 = vmul.f32 1.0, %v2197
    %v2199 = vrcp.pop %v2196
    %v2200 = vmul.f32 1.0, %v2199
    %v2201 = vadd.f32 %v2167, %v1134
    %v2202 = vadd.f32 %v2170, %v1134
    %v2203 = vmul.f32 %v2184, %v2201
    %v2204 = vmul.f32 %v2186, %v2202
    %v2205 = vadd.f32 %v2084, %v2203
    %v2206 = vadd.f32 %v2087, %v2204
    %v2207 = vtanh.pop %v2205
    %v2208 = vtanh.pop %v2206
    %v2209 = vsub.f32 %v2077, %v2207
    %v2210 = vsub.f32 %v2078, %v2208
    %v2211 = vmul.f32 %v2198, %v2209
    %v2212 = vmul.f32 %v2200, %v2210
    %v2213 = vadd.f32 %v2207, %v2211
    %v2214 = vadd.f32 %v2208, %v2212
    %v2215 = vld [vmem:[%s1093] sm:$0xff]
    %v2216 = vld [vmem:[%s1093 + $0x8] sm:$0xff]
    %v2217 = vld [vmem:[%s1093 + $0x10] sm:$0xff]
    %v2218 = vunpack.c.l.bf16 %v2215
    %v2219 = vunpack.c.l.bf16 %v2216
    %v2220 = vunpack.c.l.bf16 %v2217
    %v2221 = vunpack.c.h.bf16 %v2215
    %v2222 = vunpack.c.h.bf16 %v2216
    %v2223 = vunpack.c.h.bf16 %v2217
    %v2224 = vpack.c.bf16 %v2214, %v2213
    %2225 = vmatprep.subr.bf16.mxu0 %v1226
    %2226 = vmatpush1.bf16.msra.mxu0 %v1225
    %2227 = vmatprep.subr.bf16.mxu0 %v1229
    %2228 = vmatpush1.bf16.msra.mxu0 %v1228
    %2229 = vmatprep.subr.bf16.mxu0 %v1232
    %2230 = vmatpush1.bf16.msra.mxu0 %v1231
    %2231 = vmatprep.subr.bf16.mxu0 %v1235
    %2232 = vmatpush1.bf16.msra.mxu0 %v1234
    %2233 = vmatprep.subr.bf16.mxu0 %v1238
    %2234 = vmatpush1.bf16.msra.mxu0 %v1237
    %2235 = vmatprep.subr.bf16.mxu0 %v1241
    %2236 = vmatpush1.bf16.msra.mxu0 %v1240
    %2237 = vmatprep.subr.bf16.mxu0 %v1244
    %2238 = vmatpush1.bf16.msra.mxu0 %v1243
    %2239 = vmatprep.subr.bf16.mxu0 %v1247
    %2240 = vmatpush1.bf16.msra.mxu0 %v1246
    %2241 = vmatprep.subr.bf16.mxu0 0
    %2242 = vmatpush1.bf16.msra.mxu0 0
    %2243 = vmatprep.subr.bf16.mxu0 0
    %2244 = vmatpush1.bf16.msra.mxu0 0
    %2245 = vmatprep.subr.bf16.mxu0 0
    %2246 = vmatpush1.bf16.msra.mxu0 0
    %2247 = vmatprep.subr.bf16.mxu0 0
    %2248 = vmatpush1.bf16.msra.mxu0 0
    %2249 = vmatprep.subr.bf16.mxu0 0
    %2250 = vmatpush1.bf16.msra.mxu0 0
    %2251 = vmatprep.subr.bf16.mxu0 0
    %2252 = vmatpush1.bf16.msra.mxu0 0
    %2253 = vmatprep.subr.bf16.mxu0 0
    %2254 = vmatpush1.bf16.msra.mxu0 0
    %2255 = vmatprep.subr.bf16.mxu0 0
    %2256 = vmatpush1.bf16.msra.mxu0 0
    %2257 = vmatprep.mubr.bf16.mxu0 0
    %2258 = vmatmul.mubr.bf16.gmra.mrb[0].mxu0 %v2224
    %v2259 = vpop.f32.mrb[0].mxu0
    %v2260 = vadd.f32 0.0, %v2259
    %v2261 = vpop.f32.mrb[0].mxu0
    %v2262 = vadd.f32 0.0, %v2261
    %v2263 = vpop.f32.mrb[0].mxu0
    %v2264 = vadd.f32 0.0, %v2263
    %v2265 = vpop.f32.mrb[0].mxu0
    %v2266 = vadd.f32 0.0, %v2265
    %2267 = vdwg.mxu0
    %2268 = vmatprep.subr.bf16.mxu0 0
    %2269 = vmatpush1.bf16.msra.mxu0 %v1227
    %2270 = vmatprep.subr.bf16.mxu0 0
    %2271 = vmatpush1.bf16.msra.mxu0 %v1230
    %2272 = vmatprep.subr.bf16.mxu0 0
    %2273 = vmatpush1.bf16.msra.mxu0 %v1233
    %2274 = vmatprep.subr.bf16.mxu0 0
    %2275 = vmatpush1.bf16.msra.mxu0 %v1236
    %2276 = vmatprep.subr.bf16.mxu0 0
    %2277 = vmatpush1.bf16.msra.mxu0 %v1239
    %2278 = vmatprep.subr.bf16.mxu0 0
    %2279 = vmatpush1.bf16.msra.mxu0 %v1242
    %2280 = vmatprep.subr.bf16.mxu0 0
    %2281 = vmatpush1.bf16.msra.mxu0 %v1245
    %2282 = vmatprep.subr.bf16.mxu0 0
    %2283 = vmatpush1.bf16.msra.mxu0 %v1248
    %2284 = vmatprep.subr.bf16.mxu0 0
    %2285 = vmatpush1.bf16.msra.mxu0 0
    %2286 = vmatprep.subr.bf16.mxu0 0
    %2287 = vmatpush1.bf16.msra.mxu0 0
    %2288 = vmatprep.subr.bf16.mxu0 0
    %2289 = vmatpush1.bf16.msra.mxu0 0
    %2290 = vmatprep.subr.bf16.mxu0 0
    %2291 = vmatpush1.bf16.msra.mxu0 0
    %2292 = vmatprep.subr.bf16.mxu0 0
    %2293 = vmatpush1.bf16.msra.mxu0 0
    %2294 = vmatprep.subr.bf16.mxu0 0
    %2295 = vmatpush1.bf16.msra.mxu0 0
    %2296 = vmatprep.subr.bf16.mxu0 0
    %2297 = vmatpush1.bf16.msra.mxu0 0
    %2298 = vmatprep.subr.bf16.mxu0 0
    %2299 = vmatpush1.bf16.msra.mxu0 0
    %2300 = vmatprep.mubr.bf16.mxu0 0
    %2301 = vmatmul.mubr.bf16.gmra.mrb[0].mxu0 %v2224
    %v2302 = vpop.f32.mrb[0].mxu0
    %v2303 = vadd.f32 0.0, %v2302
    %v2304 = vpop.f32.mrb[0].mxu0
    %v2305 = vpop.f32.mrb[0].mxu0
    %v2306 = vadd.f32 0.0, %v2305
    %v2307 = vpop.f32.mrb[0].mxu0
    %2308 = vdwg.mxu0
    %v2309 = vadd.f32 %v2218, %v2260
    %v2310 = vadd.f32 %v2221, %v2264
    %v2311 = vxor.u32 %v2309, 2147483648
    %v2312 = vxor.u32 %v2310, 2147483648
    %v2313 = vmul.f32 %v2311, 1.442695
    %v2314 = vpow.pop %v2313
    %v2315 = vmul.f32 %v2312, 1.442695
    %v2316 = vpow.pop %v2315
    %v2317 = vadd.f32 %v2314, 1.0
    %v2318 = vadd.f32 %v2316, 1.0
    %v2319 = vrcp.pop %v2317
    %v2320 = vmul.f32 1.0, %v2319
    %v2321 = vrcp.pop %v2318
    %v2322 = vmul.f32 1.0, %v2321
    %v2323 = vadd.f32 %v2219, %v2262
    %v2324 = vadd.f32 %v2222, %v2266
    %v2325 = vxor.u32 %v2323, 2147483648
    %v2326 = vxor.u32 %v2324, 2147483648
    %v2327 = vmul.f32 %v2325, 1.442695
    %v2328 = vpow.pop %v2327
    %v2329 = vmul.f32 %v2326, 1.442695
    %v2330 = vpow.pop %v2329
    %v2331 = vadd.f32 %v2328, 1.0
    %v2332 = vadd.f32 %v2330, 1.0
    %v2333 = vrcp.pop %v2331
    %v2334 = vmul.f32 1.0, %v2333
    %v2335 = vrcp.pop %v2332
    %v2336 = vmul.f32 1.0, %v2335
    %v2337 = vadd.f32 %v2303, %v1134
    %v2338 = vadd.f32 %v2306, %v1134
    %v2339 = vmul.f32 %v2320, %v2337
    %v2340 = vmul.f32 %v2322, %v2338
    %v2341 = vadd.f32 %v2220, %v2339
    %v2342 = vadd.f32 %v2223, %v2340
    %v2343 = vtanh.pop %v2341
    %v2344 = vtanh.pop %v2342
    %v2345 = vsub.f32 %v2213, %v2343
    %v2346 = vsub.f32 %v2214, %v2344
    %v2347 = vmul.f32 %v2334, %v2345
    %v2348 = vmul.f32 %v2336, %v2346
    %v2349 = vadd.f32 %v2343, %v2347
    %v2350 = vadd.f32 %v2344, %v2348
    %v2351 = vld [vmem:[%s997] sm:$0xf]
    %v2352 = vld [vmem:[%s997 + $0x4] sm:$0xf]
    %v2353 = vld [vmem:[#allocation9] sm:$0xff]
    %v2354 = vld [vmem:[#allocation9 + $0x8] sm:$0xf]
    %v2355 = vld [vmem:[#allocation9 + $0xc] sm:$0xff]
    %v2356 = vld [vmem:[#allocation9 + $0x14] sm:$0xf]
    %v2357 = vld [vmem:[#allocation9 + $0x18] sm:$0xff]
    %v2358 = vld [vmem:[#allocation9 + $0x20] sm:$0xf]
    %v2359 = vld [vmem:[#allocation9 + $0x24] sm:$0xff]
    %v2360 = vld [vmem:[#allocation9 + $0x2c] sm:$0xf]
    %v2361 = vld [vmem:[#allocation9 + $0x30] sm:$0xff]
    %v2362 = vld [vmem:[#allocation9 + $0x38] sm:$0xf]
    %v2363 = vld [vmem:[#allocation9 + $0x3c] sm:$0xff]
    %v2364 = vld [vmem:[#allocation9 + $0x44] sm:$0xf]
    %v2365 = vld [vmem:[#allocation9 + $0x48] sm:$0xff]
    %v2366 = vld [vmem:[#allocation9 + $0x50] sm:$0xf]
    %v2367 = vld [vmem:[#allocation9 + $0x54] sm:$0xff]
    %v2368 = vld [vmem:[#allocation9 + $0x5c] sm:$0xf]
    %v2369 = vld [vmem:[#allocation9 + $0x60] sm:$0xff]
    %v2370 = vld [vmem:[#allocation9 + $0x68] sm:$0xf]
    %v2371 = vld [vmem:[#allocation9 + $0x6c] sm:$0xff]
    %v2372 = vld [vmem:[#allocation9 + $0x74] sm:$0xf]
    %v2373 = vld [vmem:[#allocation9 + $0x78] sm:$0xff]
    %v2374 = vld [vmem:[#allocation9 + $0x80] sm:$0xf]
    %v2375 = vld [vmem:[#allocation9 + $0x84] sm:$0xff]
    %v2376 = vld [vmem:[#allocation9 + $0x8c] sm:$0xf]
    %v2377 = vld [vmem:[#allocation9 + $0x90] sm:$0xff]
    %v2378 = vld [vmem:[#allocation9 + $0x98] sm:$0xf]
    %v2379 = vld [vmem:[#allocation9 + $0x9c] sm:$0xff]
    %v2380 = vld [vmem:[#allocation9 + $0xa4] sm:$0xf]
    %v2381 = vld [vmem:[#allocation9 + $0xa8] sm:$0xff]
    %v2382 = vld [vmem:[#allocation9 + $0xb0] sm:$0xf]
    %v2383 = vld [vmem:[#allocation9 + $0xb4] sm:$0xff]
    %v2384 = vld [vmem:[#allocation9 + $0xbc] sm:$0xf]
    %v2385 = vld [vmem:[%s6] sm:$0x7]
    %v2387 = vlaneseq
    %v2388 = vshrl.u32 %v2387, 7
    %v2389 = vsub.s32 0, %v2388
    %v2390 = vrot.slane %v2385, %v2389
    %v2391 = vlaneseq
    %v2392 = vshrl.u32 %v2391, 7
    %v2393 = vsub.s32 1, %v2392
    %v2394 = vrot.slane %v2385, %v2393
    %v2395 = vlaneseq
    %v2396 = vshrl.u32 %v2395, 7
    %v2397 = vsub.s32 2, %v2396
    %v2398 = vrot.slane %v2385, %v2397
    %v2404 = vunpack.c.l.b16 %v2351
    %v2405 = vunpack.c.l.b16 %v2352
    %v2406 = vpack.c.b16 %v2405, %v2404
    %v2440 = vunpack.c.l.b16 %v2353
    %v2441 = vunpack.c.h.b16 %v2353
    %v2442 = vunpack.c.l.b16 %v2354
    %v2443 = vunpack.c.l.b16 %v2355
    %v2444 = vunpack.c.h.b16 %v2355
    %v2445 = vunpack.c.l.b16 %v2356
    %v2446 = vunpack.c.l.b16 %v2357
    %v2447 = vunpack.c.h.b16 %v2357
    %v2448 = vunpack.c.l.b16 %v2358
    %v2449 = vunpack.c.l.b16 %v2359
    %v2450 = vunpack.c.h.b16 %v2359
    %v2451 = vunpack.c.l.b16 %v2360
    %v2452 = vunpack.c.l.b16 %v2361
    %v2453 = vunpack.c.h.b16 %v2361
    %v2454 = vunpack.c.l.b16 %v2362
    %v2455 = vunpack.c.l.b16 %v2363
    %v2456 = vunpack.c.h.b16 %v2363
    %v2457 = vunpack.c.l.b16 %v2364
    %v2458 = vunpack.c.l.b16 %v2365
    %v2459 = vunpack.c.h.b16 %v2365
    %v2460 = vunpack.c.l.b16 %v2366
    %v2461 = vunpack.c.l.b16 %v2367
    %v2462 = vunpack.c.h.b16 %v2367
    %v2463 = vunpack.c.l.b16 %v2368
    %v2464 = vunpack.c.l.b16 %v2369
    %v2465 = vunpack.c.h.b16 %v2369
    %v2466 = vunpack.c.l.b16 %v2370
    %v2467 = vunpack.c.l.b16 %v2371
    %v2468 = vunpack.c.h.b16 %v2371
    %v2469 = vunpack.c.l.b16 %v2372
    %v2470 = vunpack.c.l.b16 %v2373
    %v2471 = vunpack.c.h.b16 %v2373
    %v2472 = vunpack.c.l.b16 %v2374
    %v2473 = vunpack.c.l.b16 %v2375
    %v2474 = vunpack.c.h.b16 %v2375
    %v2475 = vunpack.c.l.b16 %v2376
    %v2476 = vunpack.c.l.b16 %v2377
    %v2477 = vunpack.c.h.b16 %v2377
    %v2478 = vunpack.c.l.b16 %v2378
    %v2479 = vunpack.c.l.b16 %v2379
    %v2480 = vunpack.c.h.b16 %v2379
    %v2481 = vunpack.c.l.b16 %v2380
    %v2482 = vunpack.c.l.b16 %v2381
    %v2483 = vunpack.c.h.b16 %v2381
    %v2484 = vunpack.c.l.b16 %v2382
    %v2485 = vunpack.c.l.b16 %v2383
    %v2486 = vunpack.c.h.b16 %v2383
    %v2487 = vunpack.c.l.b16 %v2384
    %v2488 = vpack.c.b16 %v2443, %v2440
    %v2489 = vpack.c.b16 %v2444, %v2441
    %v2490 = vpack.c.b16 %v2445, %v2442
    %v2491 = vpack.c.b16 %v2449, %v2446
    %v2492 = vpack.c.b16 %v2450, %v2447
    %v2493 = vpack.c.b16 %v2451, %v2448
    %v2494 = vpack.c.b16 %v2455, %v2452
    %v2495 = vpack.c.b16 %v2456, %v2453
    %v2496 = vpack.c.b16 %v2457, %v2454
    %v2497 = vpack.c.b16 %v2461, %v2458
    %v2498 = vpack.c.b16 %v2462, %v2459
    %v2499 = vpack.c.b16 %v2463, %v2460
    %v2500 = vpack.c.b16 %v2467, %v2464
    %v2501 = vpack.c.b16 %v2468, %v2465
    %v2502 = vpack.c.b16 %v2469, %v2466
    %v2503 = vpack.c.b16 %v2473, %v2470
    %v2504 = vpack.c.b16 %v2474, %v2471
    %v2505 = vpack.c.b16 %v2475, %v2472
    %v2506 = vpack.c.b16 %v2479, %v2476
    %v2507 = vpack.c.b16 %v2480, %v2477
    %v2508 = vpack.c.b16 %v2481, %v2478
    %v2509 = vpack.c.b16 %v2485, %v2482
    %v2510 = vpack.c.b16 %v2486, %v2483
    %v2511 = vpack.c.b16 %v2487, %v2484
    %2536 = vmatprep.subr.bf16.mxu0 %v2489
    %2537 = vmatpush1.bf16.msra.mxu0 %v2488
    %2538 = vmatprep.subr.bf16.mxu0 %v2492
    %2539 = vmatpush1.bf16.msra.mxu0 %v2491
    %2540 = vmatprep.subr.bf16.mxu0 %v2495
    %2541 = vmatpush1.bf16.msra.mxu0 %v2494
    %2542 = vmatprep.subr.bf16.mxu0 %v2498
    %2543 = vmatpush1.bf16.msra.mxu0 %v2497
    %2544 = vmatprep.subr.bf16.mxu0 %v2501
    %2545 = vmatpush1.bf16.msra.mxu0 %v2500
    %2546 = vmatprep.subr.bf16.mxu0 %v2504
    %2547 = vmatpush1.bf16.msra.mxu0 %v2503
    %2548 = vmatprep.subr.bf16.mxu0 %v2507
    %2549 = vmatpush1.bf16.msra.mxu0 %v2506
    %2550 = vmatprep.subr.bf16.mxu0 %v2510
    %2551 = vmatpush1.bf16.msra.mxu0 %v2509
    %2552 = vmatprep.subr.bf16.mxu0 0
    %2553 = vmatpush1.bf16.msra.mxu0 0
    %2554 = vmatprep.subr.bf16.mxu0 0
    %2555 = vmatpush1.bf16.msra.mxu0 0
    %2556 = vmatprep.subr.bf16.mxu0 0
    %2557 = vmatpush1.bf16.msra.mxu0 0
    %2558 = vmatprep.subr.bf16.mxu0 0
    %2559 = vmatpush1.bf16.msra.mxu0 0
    %2560 = vmatprep.subr.bf16.mxu0 0
    %2561 = vmatpush1.bf16.msra.mxu0 0
    %2562 = vmatprep.subr.bf16.mxu0 0
    %2563 = vmatpush1.bf16.msra.mxu0 0
    %2564 = vmatprep.subr.bf16.mxu0 0
    %2565 = vmatpush1.bf16.msra.mxu0 0
    %2566 = vmatprep.subr.bf16.mxu0 0
    %2567 = vmatpush1.bf16.msra.mxu0 0
    %2568 = vmatprep.mubr.bf16.mxu0 0
    %2569 = vmatmul.mubr.bf16.gmra.mrb[0].mxu0 %v2406
    %v2570 = vpop.f32.mrb[0].mxu0
    %v2571 = vadd.f32 %v2390, %v2570
    %v2572 = vpop.f32.mrb[0].mxu0
    %v2573 = vadd.f32 %v2394, %v2572
    %v2574 = vpop.f32.mrb[0].mxu0
    %v2575 = vadd.f32 %v2390, %v2574
    %v2576 = vpop.f32.mrb[0].mxu0
    %v2577 = vadd.f32 %v2394, %v2576
    %2578 = vdwg.mxu0
    %2579 = vmatprep.subr.bf16.mxu0 0
    %2580 = vmatpush1.bf16.msra.mxu0 %v2490
    %2581 = vmatprep.subr.bf16.mxu0 0
    %2582 = vmatpush1.bf16.msra.mxu0 %v2493
    %2583 = vmatprep.subr.bf16.mxu0 0
    %2584 = vmatpush1.bf16.msra.mxu0 %v2496
    %2585 = vmatprep.subr.bf16.mxu0 0
    %2586 = vmatpush1.bf16.msra.mxu0 %v2499
    %2587 = vmatprep.subr.bf16.mxu0 0
    %2588 = vmatpush1.bf16.msra.mxu0 %v2502
    %2589 = vmatprep.subr.bf16.mxu0 0
    %2590 = vmatpush1.bf16.msra.mxu0 %v2505
    %2591 = vmatprep.subr.bf16.mxu0 0
    %2592 = vmatpush1.bf16.msra.mxu0 %v2508
    %2593 = vmatprep.subr.bf16.mxu0 0
    %2594 = vmatpush1.bf16.msra.mxu0 %v2511
    %2595 = vmatprep.subr.bf16.mxu0 0
    %2596 = vmatpush1.bf16.msra.mxu0 0
    %2597 = vmatprep.subr.bf16.mxu0 0
    %2598 = vmatpush1.bf16.msra.mxu0 0
    %2599 = vmatprep.subr.bf16.mxu0 0
    %2600 = vmatpush1.bf16.msra.mxu0 0
    %2601 = vmatprep.subr.bf16.mxu0 0
    %2602 = vmatpush1.bf16.msra.mxu0 0
    %2603 = vmatprep.subr.bf16.mxu0 0
    %2604 = vmatpush1.bf16.msra.mxu0 0
    %2605 = vmatprep.subr.bf16.mxu0 0
    %2606 = vmatpush1.bf16.msra.mxu0 0
    %2607 = vmatprep.subr.bf16.mxu0 0
    %2608 = vmatpush1.bf16.msra.mxu0 0
    %2609 = vmatprep.subr.bf16.mxu0 0
    %2610 = vmatpush1.bf16.msra.mxu0 0
    %2611 = vmatprep.mubr.bf16.mxu0 0
    %2612 = vmatmul.mubr.bf16.gmra.mrb[0].mxu0 %v2406
    %v2613 = vpop.f32.mrb[0].mxu0
    %v2614 = vadd.f32 %v2398, %v2613
    %v2615 = vpop.f32.mrb[0].mxu0
    %v2616 = vpop.f32.mrb[0].mxu0
    %v2617 = vadd.f32 %v2398, %v2616
    %v2618 = vpop.f32.mrb[0].mxu0
    %2619 = vdwg.mxu0
    %v2620 = vxor.u32 %v2571, 2147483648
    %v2621 = vxor.u32 %v2575, 2147483648
    %v2622 = vmul.f32 %v2620, 1.442695
    %v2623 = vpow.pop %v2622
    %v2624 = vmul.f32 %v2621, 1.442695
    %v2625 = vpow.pop %v2624
    %v2626 = vadd.f32 %v2623, 1.0
    %v2627 = vadd.f32 %v2625, 1.0
    %v2628 = vrcp.pop %v2626
    %v2629 = vmul.f32 1.0, %v2628
    %v2630 = vrcp.pop %v2627
    %v2631 = vmul.f32 1.0, %v2630
    %v2632 = vxor.u32 %v2573, 2147483648
    %v2633 = vxor.u32 %v2577, 2147483648
    %v2634 = vmul.f32 %v2632, 1.442695
    %v2635 = vpow.pop %v2634
    %v2636 = vmul.f32 %v2633, 1.442695
    %v2637 = vpow.pop %v2636
    %v2638 = vadd.f32 %v2635, 1.0
    %v2639 = vadd.f32 %v2637, 1.0
    %v2640 = vrcp.pop %v2638
    %v2641 = vmul.f32 1.0, %v2640
    %v2642 = vrcp.pop %v2639
    %v2643 = vmul.f32 1.0, %v2642
    %v2644 = vld [vmem:[%s7] sm:$0x1]
    %v2646 = vlaneseq
    %v2647 = vshrl.u32 %v2646, 7
    %v2648 = vsub.s32 0, %v2647
    %v2649 = vrot.slane %v2644, %v2648
    %v2651 = vmul.f32 %v2629, %v2649
    %v2652 = vmul.f32 %v2631, %v2649
    %v2653 = vadd.f32 %v2614, %v2651
    %v2654 = vadd.f32 %v2617, %v2652
    %v2655 = vtanh.pop %v2653
    %v2656 = vtanh.pop %v2654
    %v2657 = vsub.f32 1.0, %v2641
    %v2658 = vsub.f32 1.0, %v2643
    %v2659 = vmul.f32 %v2657, %v2655
    %v2660 = vmul.f32 %v2658, %v2656
    %v2661 = vpack.c.bf16 %v2350, %v2349
    %v2662 = vld [vmem:[#allocation11] sm:$0xf]
    %v2663 = vld [vmem:[#allocation11 + $0x4] sm:$0xf]
    %v2664 = vld [vmem:[#allocation11 + $0x8] sm:$0xf]
    %v2665 = vld [vmem:[#allocation11 + $0xc] sm:$0xf]
    %v2666 = vld [vmem:[#allocation11 + $0x10] sm:$0xf]
    %v2667 = vld [vmem:[#allocation11 + $0x14] sm:$0xf]
    %v2668 = vld [vmem:[#allocation11 + $0x18] sm:$0xf]
    %v2669 = vld [vmem:[#allocation11 + $0x1c] sm:$0xf]
    %v2670 = vld [vmem:[#allocation11 + $0x20] sm:$0xf]
    %v2671 = vld [vmem:[#allocation11 + $0x24] sm:$0xf]
    %v2672 = vld [vmem:[#allocation11 + $0x28] sm:$0xf]
    %v2673 = vld [vmem:[#allocation11 + $0x2c] sm:$0xf]
    %v2674 = vld [vmem:[#allocation11 + $0x30] sm:$0xf]
    %v2675 = vld [vmem:[#allocation11 + $0x34] sm:$0xf]
    %v2676 = vld [vmem:[#allocation11 + $0x38] sm:$0xf]
    %v2677 = vld [vmem:[#allocation11 + $0x3c] sm:$0xf]
    %v2678 = vpack.c.bf16 %v2660, %v2659
    %v2679 = vld [vmem:[#allocation12] sm:$0xf]
    %v2680 = vld [vmem:[#allocation12 + $0x4] sm:$0xf]
    %v2681 = vld [vmem:[#allocation12 + $0x8] sm:$0xf]
    %v2682 = vld [vmem:[#allocation12 + $0xc] sm:$0xf]
    %v2683 = vld [vmem:[#allocation12 + $0x10] sm:$0xf]
    %v2684 = vld [vmem:[#allocation12 + $0x14] sm:$0xf]
    %v2685 = vld [vmem:[#allocation12 + $0x18] sm:$0xf]
    %v2686 = vld [vmem:[#allocation12 + $0x1c] sm:$0xf]
    %v2687 = vld [vmem:[#allocation12 + $0x20] sm:$0xf]
    %v2688 = vld [vmem:[#allocation12 + $0x24] sm:$0xf]
    %v2689 = vld [vmem:[#allocation12 + $0x28] sm:$0xf]
    %v2690 = vld [vmem:[#allocation12 + $0x2c] sm:$0xf]
    %v2691 = vld [vmem:[#allocation12 + $0x30] sm:$0xf]
    %v2692 = vld [vmem:[#allocation12 + $0x34] sm:$0xf]
    %v2693 = vld [vmem:[#allocation12 + $0x38] sm:$0xf]
    %v2694 = vld [vmem:[#allocation12 + $0x3c] sm:$0xf]
    %v2711 = vunpack.c.l.b16 %v2679
    %v2712 = vunpack.c.l.b16 %v2680
    %v2713 = vunpack.c.l.b16 %v2681
    %v2714 = vunpack.c.l.b16 %v2682
    %v2715 = vunpack.c.l.b16 %v2683
    %v2716 = vunpack.c.l.b16 %v2684
    %v2717 = vunpack.c.l.b16 %v2685
    %v2718 = vunpack.c.l.b16 %v2686
    %v2719 = vunpack.c.l.b16 %v2687
    %v2720 = vunpack.c.l.b16 %v2688
    %v2721 = vunpack.c.l.b16 %v2689
    %v2722 = vunpack.c.l.b16 %v2690
    %v2723 = vunpack.c.l.b16 %v2691
    %v2724 = vunpack.c.l.b16 %v2692
    %v2725 = vunpack.c.l.b16 %v2693
    %v2726 = vunpack.c.l.b16 %v2694
    %v2727 = vpack.c.b16 %v2712, %v2711
    %v2728 = vpack.c.b16 %v2714, %v2713
    %v2729 = vpack.c.b16 %v2716, %v2715
    %v2730 = vpack.c.b16 %v2718, %v2717
    %v2731 = vpack.c.b16 %v2720, %v2719
    %v2732 = vpack.c.b16 %v2722, %v2721
    %v2733 = vpack.c.b16 %v2724, %v2723
    %v2734 = vpack.c.b16 %v2726, %v2725
    %2743 = vmatprep.subr.bf16.mxu0 0
    %2744 = vmatpush1.bf16.msra.mxu0 %v2727
    %2745 = vmatprep.subr.bf16.mxu0 0
    %2746 = vmatpush1.bf16.msra.mxu0 %v2728
    %2747 = vmatprep.subr.bf16.mxu0 0
    %2748 = vmatpush1.bf16.msra.mxu0 %v2729
    %2749 = vmatprep.subr.bf16.mxu0 0
    %2750 = vmatpush1.bf16.msra.mxu0 %v2730
    %2751 = vmatprep.subr.bf16.mxu0 0
    %2752 = vmatpush1.bf16.msra.mxu0 %v2731
    %2753 = vmatprep.subr.bf16.mxu0 0
    %2754 = vmatpush1.bf16.msra.mxu0 %v2732
    %2755 = vmatprep.subr.bf16.mxu0 0
    %2756 = vmatpush1.bf16.msra.mxu0 %v2733
    %2757 = vmatprep.subr.bf16.mxu0 0
    %2758 = vmatpush1.bf16.msra.mxu0 %v2734
    %2759 = vmatprep.subr.bf16.mxu0 0
    %2760 = vmatpush1.bf16.msra.mxu0 0
    %2761 = vmatprep.subr.bf16.mxu0 0
    %2762 = vmatpush1.bf16.msra.mxu0 0
    %2763 = vmatprep.subr.bf16.mxu0 0
    %2764 = vmatpush1.bf16.msra.mxu0 0
    %2765 = vmatprep.subr.bf16.mxu0 0
    %2766 = vmatpush1.bf16.msra.mxu0 0
    %2767 = vmatprep.subr.bf16.mxu0 0
    %2768 = vmatpush1.bf16.msra.mxu0 0
    %2769 = vmatprep.subr.bf16.mxu0 0
    %2770 = vmatpush1.bf16.msra.mxu0 0
    %2771 = vmatprep.subr.bf16.mxu0 0
    %2772 = vmatpush1.bf16.msra.mxu0 0
    %2773 = vmatprep.subr.bf16.mxu0 0
    %2774 = vmatpush1.bf16.msra.mxu0 0
    %2775 = vmatprep.mubr.bf16.mxu0 0
    %2776 = vmatmul.mubr.bf16.gmra.mrb[0].mxu0 %v2678
    %v2777 = vpop.f32.mrb[0].mxu0
    %v2778 = vadd.f32 0.0, %v2777
    %v2779 = vpop.f32.mrb[0].mxu0
    %v2780 = vpop.f32.mrb[0].mxu0
    %v2781 = vadd.f32 0.0, %v2780
    %v2782 = vpop.f32.mrb[0].mxu0
    %2783 = vdwg.mxu0
    %v2800 = vunpack.c.l.b16 %v2662
    %v2801 = vunpack.c.l.b16 %v2663
    %v2802 = vunpack.c.l.b16 %v2664
    %v2803 = vunpack.c.l.b16 %v2665
    %v2804 = vunpack.c.l.b16 %v2666
    %v2805 = vunpack.c.l.b16 %v2667
    %v2806 = vunpack.c.l.b16 %v2668
    %v2807 = vunpack.c.l.b16 %v2669
    %v2808 = vunpack.c.l.b16 %v2670
    %v2809 = vunpack.c.l.b16 %v2671
    %v2810 = vunpack.c.l.b16 %v2672
    %v2811 = vunpack.c.l.b16 %v2673
    %v2812 = vunpack.c.l.b16 %v2674
    %v2813 = vunpack.c.l.b16 %v2675
    %v2814 = vunpack.c.l.b16 %v2676
    %v2815 = vunpack.c.l.b16 %v2677
    %v2816 = vpack.c.b16 %v2801, %v2800
    %v2817 = vpack.c.b16 %v2803, %v2802
    %v2818 = vpack.c.b16 %v2805, %v2804
    %v2819 = vpack.c.b16 %v2807, %v2806
    %v2820 = vpack.c.b16 %v2809, %v2808
    %v2821 = vpack.c.b16 %v2811, %v2810
    %v2822 = vpack.c.b16 %v2813, %v2812
    %v2823 = vpack.c.b16 %v2815, %v2814
    %2832 = vmatprep.subr.bf16.mxu0 0
    %2833 = vmatpush1.bf16.msra.mxu0 %v2816
    %2834 = vmatprep.subr.bf16.mxu0 0
    %2835 = vmatpush1.bf16.msra.mxu0 %v2817
    %2836 = vmatprep.subr.bf16.mxu0 0
    %2837 = vmatpush1.bf16.msra.mxu0 %v2818
    %2838 = vmatprep.subr.bf16.mxu0 0
    %2839 = vmatpush1.bf16.msra.mxu0 %v2819
    %2840 = vmatprep.subr.bf16.mxu0 0
    %2841 = vmatpush1.bf16.msra.mxu0 %v2820
    %2842 = vmatprep.subr.bf16.mxu0 0
    %2843 = vmatpush1.bf16.msra.mxu0 %v2821
    %2844 = vmatprep.subr.bf16.mxu0 0
    %2845 = vmatpush1.bf16.msra.mxu0 %v2822
    %2846 = vmatprep.subr.bf16.mxu0 0
    %2847 = vmatpush1.bf16.msra.mxu0 %v2823
    %2848 = vmatprep.subr.bf16.mxu0 0
    %2849 = vmatpush1.bf16.msra.mxu0 0
    %2850 = vmatprep.subr.bf16.mxu0 0
    %2851 = vmatpush1.bf16.msra.mxu0 0
    %2852 = vmatprep.subr.bf16.mxu0 0
    %2853 = vmatpush1.bf16.msra.mxu0 0
    %2854 = vmatprep.subr.bf16.mxu0 0
    %2855 = vmatpush1.bf16.msra.mxu0 0
    %2856 = vmatprep.subr.bf16.mxu0 0
    %2857 = vmatpush1.bf16.msra.mxu0 0
    %2858 = vmatprep.subr.bf16.mxu0 0
    %2859 = vmatpush1.bf16.msra.mxu0 0
    %2860 = vmatprep.subr.bf16.mxu0 0
    %2861 = vmatpush1.bf16.msra.mxu0 0
    %2862 = vmatprep.subr.bf16.mxu0 0
    %2863 = vmatpush1.bf16.msra.mxu0 0
    %2864 = vmatprep.mubr.bf16.mxu0 0
    %2865 = vmatmul.mubr.bf16.gmra.mrb[0].mxu0 %v2661
    %v2866 = vpop.f32.mrb[0].mxu0
    %v2867 = vadd.f32 %v2778, %v2866
    %v2868 = vpop.f32.mrb[0].mxu0
    %v2869 = vpop.f32.mrb[0].mxu0
    %v2870 = vadd.f32 %v2781, %v2869
    %v2871 = vpop.f32.mrb[0].mxu0
    %2872 = vdwg.mxu0
    %v2873 = vld [vmem:[%s10] sm:$0x1]
    %v2875 = vlaneseq
    %v2876 = vshrl.u32 %v2875, 7
    %v2877 = vsub.s32 0, %v2876
    %v2878 = vrot.slane %v2873, %v2877
    %v2880 = vadd.f32 %v2867, %v2878
    %v2881 = vadd.f32 %v2870, %v2878
    %2882 = vst [vmem:[#allocation14] sm:$0xff] %v2880
    %2883 = vst [vmem:[#allocation14 + $0x8] sm:$0xff] %v2881
    // Predicated region
    $region70: #{tpu_custom_call.1} parent=1 // pred_check
      _
    $region71: #{tpu_custom_call.1} parent=1 // pred_check_branch
      %2885 = sbr.rel (0) target = $region73
    $region72: #{tpu_custom_call.1} parent=1 // pred_region
      %s2887 = ssub.s32 256, 256
      %2888 = vsyncadd [#allocation5], %s2887
      %s2889 = sshll.u32 [#allocation14], 4
      %s2890 = int_to_ptr.vmem [resolvable:$true] %s2889
      %2895 = dma.vmem_to_hbm [thread:$0]  %s2890, 256, %s11, [#allocation5], 128, 128, 8
    $region73: #{tpu_custom_call.1} parent=1 // pred_fallthru
      _
    // Predicated region
    $region74: #{tpu_custom_call.1} parent=1 // pred_check
      _
    $region75: #{tpu_custom_call.1} parent=1 // pred_check_branch
      %2897 = sbr.rel (0) target = $region77
    $region76: #{tpu_custom_call.1} parent=1 // pred_region
      %2898 = dma.done [#allocation5], 256
    $region77: #{tpu_custom_call.1} parent=1 // pred_fallthru
      _
    %2899 = vsyncpa [#allocation4], 1
    %2900 = vsyncpa [#allocation7], 1
    %2901 = vsyncpa [#allocation10], 1
    %2902 = vsyncpa [#allocation13], 1
    %2903 = vsyncpa [#allocation5], 1

// kernel: tpu_custom_call.1
$region0: #{tpu_custom_call.1}
  #allocation0 [shape = 'u32[]', space=smem, size = 0x4, offset = 0x4, fixed_abs, tag = 'smem constant byte address 0x4 - core index']
  #allocation1 [shape = 'u32[144,128]{1,0:T(1,128)}', space=vmem, size = 0x12000, scoped, tag = 'internal scratch']
  #allocation2 [shape = 'bf16[8,16,384]{2,1,0:T(16,128)(2,1)}', space=vmem, size = 0x18000, scoped, tag = 'scratch operand']
  %s0 = inlined_call_operand.hbm [shape: bf16[8,16,128], index: 0, kind: input, shape index: {}]
  %s1 = inlined_call_operand.hbm [shape: bf16[128,384], index: 1, kind: input, shape index: {}]
  %s2 = inlined_call_operand.hbm [shape: bf16[128,384], index: 2, kind: input, shape index: {}]
  %s3 = inlined_call_operand.vmem [shape: f32[1,384], index: 3, kind: input, shape index: {}]
  %s4 = inlined_call_operand.vmem [shape: f32[1,128], index: 4, kind: input, shape index: {}]
  %s5 = inlined_call_operand.hbm [shape: bf16[128,384], index: 5, kind: input, shape index: {}]
  %s6 = inlined_call_operand.vmem [shape: f32[1,384], index: 6, kind: input, shape index: {}]
  %s7 = inlined_call_operand.vmem [shape: f32[1,128], index: 7, kind: input, shape index: {}]
  %s8 = inlined_call_operand.hbm [shape: bf16[128,128], index: 8, kind: input, shape index: {}]
  %s9 = inlined_call_operand.hbm [shape: bf16[128,128], index: 9, kind: input, shape index: {}]
  %s10 = inlined_call_operand.vmem [shape: f32[1,128], index: 10, kind: input, shape index: {}]
  %s11 = inlined_call_operand.hbm [shape: f32[16,128], index: 11, kind: output, shape index: {}]
  %s12 = sld [smem:[#allocation0]]
  $region78: #{tpu_custom_call.1} parent=0
    _
  %s14 = ssub.s32 1, %s12
  %s15 = scalar_select 0, %s14, %s12
  $region1: #{tpu_custom_call.1} parent=0
    #allocation3 [shape = 'u8[32768]{0}', space=vmem, size = 0x8000, scoped, tag = 'input window, operand 0, single buffered']
    #allocation4 [shape = 's32[1]{0}', space=sflag, size = 0x4, scoped, tag = 'scoped memory for tpu_custom_call.1']
    #allocation5 [shape = 's32[1]{0}', space=sflag, size = 0x4, scoped, tag = 'scoped memory for tpu_custom_call.1']
    #allocation6 [shape = 'u8[98304]{0}', space=vmem, size = 0x18000, scoped, tag = 'input window, operand 1, single buffered']
    #allocation7 [shape = 's32[1]{0}', space=sflag, size = 0x4, scoped, tag = 'scoped memory for tpu_custom_call.1']
    #allocation8 [shape = 'u8[98304]{0}', space=vmem, size = 0x18000, scoped, tag = 'input window, operand 2, single buffered']
    #allocation9 [shape = 'u8[98304]{0}', space=vmem, size = 0x18000, scoped, tag = 'input window, operand 5, single buffered']
    #allocation10 [shape = 's32[1]{0}', space=sflag, size = 0x4, scoped, tag = 'scoped memory for tpu_custom_call.1']
    #allocation11 [shape = 'u8[32768]{0}', space=vmem, size = 0x8000, scoped, tag = 'input window, operand 8, single buffered']
    #allocation12 [shape = 'u8[32768]{0}', space=vmem, size = 0x8000, scoped, tag = 'input window, operand 9, single buffered']
    #allocation13 [shape = 's32[1]{0}', space=sflag, size = 0x4, scoped, tag = 'scoped memory for tpu_custom_call.1']
    #allocation14 [shape = 'u8[8192]{0}', space=vmem, size = 0x2000, scoped, tag = 'output window, operand 0, single buffered']
    %16 = vsyncpa [#allocation4], 0
    %17 = vsyncpa [#allocation7], 0
    %18 = vsyncpa [#allocation10], 0
    %19 = vsyncpa [#allocation13], 0
    %20 = vsyncpa [#allocation5], 0
    // Predicated region
    $region2: #{tpu_custom_call.1} parent=1 // pred_check
      _
    $region3: #{tpu_custom_call.1} parent=1 // pred_check_branch
      %22 = sbr.rel (0) target = $region5
    $region4: #{tpu_custom_call.1} parent=1 // pred_region
      %s24 = ssub.s32 1024, 1024
      %25 = vsyncadd [#allocation4], %s24
      %s26 = sshll.u32 [#allocation3], 4
      %s27 = int_to_ptr.vmem [resolvable:$true] %s26
      %32 = dma.hbm_to_vmem [thread:$0]  %s0, 1024, %s27, [#allocation4], 64, 64, 4
    $region5: #{tpu_custom_call.1} parent=1 // pred_fallthru
      _
    // Predicated region
    $region6: #{tpu_custom_call.1} parent=1 // pred_check
      _
    $region7: #{tpu_custom_call.1} parent=1 // pred_check_branch
      %34 = sbr.rel (0) target = $region9
    $region8: #{tpu_custom_call.1} parent=1 // pred_region
      %s36 = ssub.s32 3072, 3072
      %37 = vsyncadd [#allocation7], %s36
      %s38 = sshll.u32 [#allocation6], 4
      %s39 = int_to_ptr.vmem [resolvable:$true] %s38
      %44 = dma.hbm_to_vmem [thread:$0]  %s1, 3072, %s39, [#allocation7], 192, 192, 12
    $region9: #{tpu_custom_call.1} parent=1 // pred_fallthru
      _
    // Predicated region
    $region10: #{tpu_custom_call.1} parent=1 // pred_check
      _
    $region11: #{tpu_custom_call.1} parent=1 // pred_check_branch
      %46 = sbr.rel (0) target = $region13
    $region12: #{tpu_custom_call.1} parent=1 // pred_region
      %s48 = ssub.s32 3072, 3072
      %49 = vsyncadd [#allocation7], %s48
      %s50 = sshll.u32 [#allocation8], 4
      %s51 = int_to_ptr.vmem [resolvable:$true] %s50
      %56 = dma.hbm_to_vmem [thread:$0]  %s2, 3072, %s51, [#allocation7], 192, 192, 12
    $region13: #{tpu_custom_call.1} parent=1 // pred_fallthru
      _
    // Predicated region
    $region14: #{tpu_custom_call.1} parent=1 // pred_check
      _
    $region15: #{tpu_custom_call.1} parent=1 // pred_check_branch
      %58 = sbr.rel (0) target = $region17
    $region16: #{tpu_custom_call.1} parent=1 // pred_region
      _
    $region17: #{tpu_custom_call.1} parent=1 // pred_fallthru
      _
    // Predicated region
    $region18: #{tpu_custom_call.1} parent=1 // pred_check
      _
    $region19: #{tpu_custom_call.1} parent=1 // pred_check_branch
      %60 = sbr.rel (0) target = $region21
    $region20: #{tpu_custom_call.1} parent=1 // pred_region
      _
    $region21: #{tpu_custom_call.1} parent=1 // pred_fallthru
      _
    // Predicated region
    $region22: #{tpu_custom_call.1} parent=1 // pred_check
      _
    $region23: #{tpu_custom_call.1} parent=1 // pred_check_branch
      %62 = sbr.rel (0) target = $region25
    $region24: #{tpu_custom_call.1} parent=1 // pred_region
      %s64 = ssub.s32 3072, 3072
      %65 = vsyncadd [#allocation10], %s64
      %s66 = sshll.u32 [#allocation9], 4
      %s67 = int_to_ptr.vmem [resolvable:$true] %s66
      %72 = dma.hbm_to_vmem [thread:$0]  %s5, 3072, %s67, [#allocation10], 192, 192, 12
    $region25: #{tpu_custom_call.1} parent=1 // pred_fallthru
      _
    // Predicated region
    $region26: #{tpu_custom_call.1} parent=1 // pred_check
      _
    $region27: #{tpu_custom_call.1} parent=1 // pred_check_branch
      %74 = sbr.rel (0) target = $region29
    $region28: #{tpu_custom_call.1} parent=1 // pred_region
      _
    $region29: #{tpu_custom_call.1} parent=1 // pred_fallthru
      _
    // Predicated region
    $region30: #{tpu_custom_call.1} parent=1 // pred_check
      _
    $region31: #{tpu_custom_call.1} parent=1 // pred_check_branch
      %76 = sbr.rel (0) target = $region33
    $region32: #{tpu_custom_call.1} parent=1 // pred_region
      _
    $region33: #{tpu_custom_call.1} parent=1 // pred_fallthru
      _
    // Predicated region
    $region34: #{tpu_custom_call.1} parent=1 // pred_check
      _
    $region35: #{tpu_custom_call.1} parent=1 // pred_check_branch
      %78 = sbr.rel (0) target = $region37
    $region36: #{tpu_custom_call.1} parent=1 // pred_region
      %s80 = ssub.s32 1024, 1024
      %81 = vsyncadd [#allocation10], %s80
      %s82 = sshll.u32 [#allocation11], 4
      %s83 = int_to_ptr.vmem [resolvable:$true] %s82
      %88 = dma.hbm_to_vmem [thread:$0]  %s8, 1024, %s83, [#allocation10], 64, 64, 4
    $region37: #{tpu_custom_call.1} parent=1 // pred_fallthru
      _
    // Predicated region
    $region38: #{tpu_custom_call.1} parent=1 // pred_check
      _
    $region39: #{tpu_custom_call.1} parent=1 // pred_check_branch
      %90 = sbr.rel (0) target = $region41
    $region40: #{tpu_custom_call.1} parent=1 // pred_region
      %s92 = ssub.s32 1024, 1024
      %93 = vsyncadd [#allocation13], %s92
      %s94 = sshll.u32 [#allocation12], 4
      %s95 = int_to_ptr.vmem [resolvable:$true] %s94
      %100 = dma.hbm_to_vmem [thread:$0]  %s9, 1024, %s95, [#allocation13], 64, 64, 4
    $region41: #{tpu_custom_call.1} parent=1 // pred_fallthru
      _
    // Predicated region
    $region42: #{tpu_custom_call.1} parent=1 // pred_check
      _
    $region43: #{tpu_custom_call.1} parent=1 // pred_check_branch
      %102 = sbr.rel (0) target = $region45
    $region44: #{tpu_custom_call.1} parent=1 // pred_region
      _
    $region45: #{tpu_custom_call.1} parent=1 // pred_fallthru
      _
    // Predicated region
    $region46: #{tpu_custom_call.1} parent=1 // pred_check
      _
    $region47: #{tpu_custom_call.1} parent=1 // pred_check_branch
      %104 = sbr.rel (0) target = $region49
    $region48: #{tpu_custom_call.1} parent=1 // pred_region
      %105 = dma.done [#allocation4], 1024
    $region49: #{tpu_custom_call.1} parent=1 // pred_fallthru
      _
    // Predicated region
    $region50: #{tpu_custom_call.1} parent=1 // pred_check
      _
    $region51: #{tpu_custom_call.1} parent=1 // pred_check_branch
      %107 = sbr.rel (0) target = $region53
    $region52: #{tpu_custom_call.1} parent=1 // pred_region
      %108 = dma.done [#allocation7], 3072
    $region53: #{tpu_custom_call.1} parent=1 // pred_fallthru
      _
    // Predicated region
    $region54: #{tpu_custom_call.1} parent=1 // pred_check
      _
    $region55: #{tpu_custom_call.1} parent=1 // pred_check_branch
      %110 = sbr.rel (0) target = $region57
    $region56: #{tpu_custom_call.1} parent=1 // pred_region
      %111 = dma.done [#allocation7], 3072
    $region57: #{tpu_custom_call.1} parent=1 // pred_fallthru
      _
    // Predicated region
    $region58: #{tpu_custom_call.1} parent=1 // pred_check
      _
    $region59: #{tpu_custom_call.1} parent=1 // pred_check_branch
      %113 = sbr.rel (0) target = $region61
    $region60: #{tpu_custom_call.1} parent=1 // pred_region
      %114 = dma.done [#allocation10], 3072
    $region61: #{tpu_custom_call.1} parent=1 // pred_fallthru
      _
    // Predicated region
    $region62: #{tpu_custom_call.1} parent=1 // pred_check
      _
    $region63: #{tpu_custom_call.1} parent=1 // pred_check_branch
      %116 = sbr.rel (0) target = $region65
    $region64: #{tpu_custom_call.1} parent=1 // pred_region
      %117 = dma.done [#allocation10], 1024
    $region65: #{tpu_custom_call.1} parent=1 // pred_fallthru
      _
    // Predicated region
    $region66: #{tpu_custom_call.1} parent=1 // pred_check
      _
    $region67: #{tpu_custom_call.1} parent=1 // pred_check_branch
      %119 = sbr.rel (0) target = $region69
    $region68: #{tpu_custom_call.1} parent=1 // pred_region
      %120 = dma.done [#allocation13], 1024
    $region69: #{tpu_custom_call.1} parent=1 // pred_fallthru
      _
    %v122 = vld [vmem:[#allocation6] sm:$0xff]
    %v123 = vld [vmem:[#allocation6 + $0x8] sm:$0xf]
    %v124 = vld [vmem:[#allocation6 + $0xc] sm:$0xff]
    %v125 = vld [vmem:[#allocation6 + $0x14] sm:$0xf]
    %v126 = vld [vmem:[#allocation6 + $0x18] sm:$0xff]
    %v127 = vld [vmem:[#allocation6 + $0x20] sm:$0xf]
    %v128 = vld [vmem:[#allocation6 + $0x24] sm:$0xff]
    %v129 = vld [vmem:[#allocation6 + $0x2c] sm:$0xf]
    %v130 = vld [vmem:[#allocation6 + $0x30] sm:$0xff]
    %v131 = vld [vmem:[#allocation6 + $0x38] sm:$0xf]
    %v132 = vld [vmem:[#allocation6 + $0x3c] sm:$0xff]
    %v133 = vld [vmem:[#allocation6 + $0x44] sm:$0xf]
    %v134 = vld [vmem:[#allocation6 + $0x48] sm:$0xff]
    %v135 = vld [vmem:[#allocation6 + $0x50] sm:$0xf]
    %v136 = vld [vmem:[#allocation6 + $0x54] sm:$0xff]
    %v137 = vld [vmem:[#allocation6 + $0x5c] sm:$0xf]
    %v138 = vld [vmem:[#allocation6 + $0x60] sm:$0xff]
    %v139 = vld [vmem:[#allocation6 + $0x68] sm:$0xf]
    %v140 = vld [vmem:[#allocation6 + $0x6c] sm:$0xff]
    %v141 = vld [vmem:[#allocation6 + $0x74] sm:$0xf]
    %v142 = vld [vmem:[#allocation6 + $0x78] sm:$0xff]
    %v143 = vld [vmem:[#allocation6 + $0x80] sm:$0xf]
    %v144 = vld [vmem:[#allocation6 + $0x84] sm:$0xff]
    %v145 = vld [vmem:[#allocation6 + $0x8c] sm:$0xf]
    %v146 = vld [vmem:[#allocation6 + $0x90] sm:$0xff]
    %v147 = vld [vmem:[#allocation6 + $0x98] sm:$0xf]
    %v148 = vld [vmem:[#allocation6 + $0x9c] sm:$0xff]
    %v149 = vld [vmem:[#allocation6 + $0xa4] sm:$0xf]
    %v150 = vld [vmem:[#allocation6 + $0xa8] sm:$0xff]
    %v151 = vld [vmem:[#allocation6 + $0xb0] sm:$0xf]
    %v152 = vld [vmem:[#allocation6 + $0xb4] sm:$0xff]
    %v153 = vld [vmem:[#allocation6 + $0xbc] sm:$0xf]
    %v154 = vld [vmem:[%s3] sm:$0x7]
    %v155 = vld [vmem:[#allocation3] sm:$0xf]
    %v156 = vld [vmem:[#allocation3 + $0x4] sm:$0xf]
    %v158 = vlaneseq
    %v159 = vshrl.u32 %v158, 7
    %v160 = vsub.s32 0, %v159
    %v161 = vrot.slane %v154, %v160
    %v162 = vlaneseq
    %v163 = vshrl.u32 %v162, 7
    %v164 = vsub.s32 1, %v163
    %v165 = vrot.slane %v154, %v164
    %v166 = vlaneseq
    %v167 = vshrl.u32 %v166, 7
    %v168 = vsub.s32 2, %v167
    %v169 = vrot.slane %v154, %v168
    %v175 = vunpack.c.l.b16 %v155
    %v176 = vunpack.c.l.b16 %v156
    %v177 = vpack.c.b16 %v176, %v175
    %v211 = vunpack.c.l.b16 %v122
    %v212 = vunpack.c.h.b16 %v122
    %v213 = vunpack.c.l.b16 %v123
    %v214 = vunpack.c.l.b16 %v124
    %v215 = vunpack.c.h.b16 %v124
    %v216 = vunpack.c.l.b16 %v125
    %v217 = vunpack.c.l.b16 %v126
    %v218 = vunpack.c.h.b16 %v126
    %v219 = vunpack.c.l.b16 %v127
    %v220 = vunpack.c.l.b16 %v128
    %v221 = vunpack.c.h.b16 %v128
    %v222 = vunpack.c.l.b16 %v129
    %v223 = vunpack.c.l.b16 %v130
    %v224 = vunpack.c.h.b16 %v130
    %v225 = vunpack.c.l.b16 %v131
    %v226 = vunpack.c.l.b16 %v132
    %v227 = vunpack.c.h.b16 %v132
    %v228 = vunpack.c.l.b16 %v133
    %v229 = vunpack.c.l.b16 %v134
    %v230 = vunpack.c.h.b16 %v134
    %v231 = vunpack.c.l.b16 %v135
    %v232 = vunpack.c.l.b16 %v136
    %v233 = vunpack.c.h.b16 %v136
    %v234 = vunpack.c.l.b16 %v137
    %v235 = vunpack.c.l.b16 %v138
    %v236 = vunpack.c.h.b16 %v138
    %v237 = vunpack.c.l.b16 %v139
    %v238 = vunpack.c.l.b16 %v140
    %v239 = vunpack.c.h.b16 %v140
    %v240 = vunpack.c.l.b16 %v141
    %v241 = vunpack.c.l.b16 %v142
    %v242 = vunpack.c.h.b16 %v142
    %v243 = vunpack.c.l.b16 %v143
    %v244 = vunpack.c.l.b16 %v144
    %v245 = vunpack.c.h.b16 %v144
    %v246 = vunpack.c.l.b16 %v145
    %v247 = vunpack.c.l.b16 %v146
    %v248 = vunpack.c.h.b16 %v146
    %v249 = vunpack.c.l.b16 %v147
    %v250 = vunpack.c.l.b16 %v148
    %v251 = vunpack.c.h.b16 %v148
    %v252 = vunpack.c.l.b16 %v149
    %v253 = vunpack.c.l.b16 %v150
    %v254 = vunpack.c.h.b16 %v150
    %v255 = vunpack.c.l.b16 %v151
    %v256 = vunpack.c.l.b16 %v152
    %v257 = vunpack.c.h.b16 %v152
    %v258 = vunpack.c.l.b16 %v153
    %v259 = vpack.c.b16 %v214, %v211
    %v260 = vpack.c.b16 %v215, %v212
    %v261 = vpack.c.b16 %v216, %v213
    %v262 = vpack.c.b16 %v220, %v217
    %v263 = vpack.c.b16 %v221, %v218
    %v264 = vpack.c.b16 %v222, %v219
    %v265 = vpack.c.b16 %v226, %v223
    %v266 = vpack.c.b16 %v227, %v224
    %v267 = vpack.c.b16 %v228, %v225
    %v268 = vpack.c.b16 %v232, %v229
    %v269 = vpack.c.b16 %v233, %v230
    %v270 = vpack.c.b16 %v234, %v231
    %v271 = vpack.c.b16 %v238, %v235
    %v272 = vpack.c.b16 %v239, %v236
    %v273 = vpack.c.b16 %v240, %v237
    %v274 = vpack.c.b16 %v244, %v241
    %v275 = vpack.c.b16 %v245, %v242
    %v276 = vpack.c.b16 %v246, %v243
    %v277 = vpack.c.b16 %v250, %v247
    %v278 = vpack.c.b16 %v251, %v248
    %v279 = vpack.c.b16 %v252, %v249
    %v280 = vpack.c.b16 %v256, %v253
    %v281 = vpack.c.b16 %v257, %v254
    %v282 = vpack.c.b16 %v258, %v255
    %307 = vmatprep.subr.bf16.mxu0 %v260
    %308 = vmatpush1.bf16.msra.mxu0 %v259
    %309 = vmatprep.subr.bf16.mxu0 %v263
    %310 = vmatpush1.bf16.msra.mxu0 %v262
    %311 = vmatprep.subr.bf16.mxu0 %v266
    %312 = vmatpush1.bf16.msra.mxu0 %v265
    %313 = vmatprep.subr.bf16.mxu0 %v269
    %314 = vmatpush1.bf16.msra.mxu0 %v268
    %315 = vmatprep.subr.bf16.mxu0 %v272
    %316 = vmatpush1.bf16.msra.mxu0 %v271
    %317 = vmatprep.subr.bf16.mxu0 %v275
    %318 = vmatpush1.bf16.msra.mxu0 %v274
    %319 = vmatprep.subr.bf16.mxu0 %v278
    %320 = vmatpush1.bf16.msra.mxu0 %v277
    %321 = vmatprep.subr.bf16.mxu0 %v281
    %322 = vmatpush1.bf16.msra.mxu0 %v280
    %323 = vmatprep.subr.bf16.mxu0 0
    %324 = vmatpush1.bf16.msra.mxu0 0
    %325 = vmatprep.subr.bf16.mxu0 0
    %326 = vmatpush1.bf16.msra.mxu0 0
    %327 = vmatprep.subr.bf16.mxu0 0
    %328 = vmatpush1.bf16.msra.mxu0 0
    %329 = vmatprep.subr.bf16.mxu0 0
    %330 = vmatpush1.bf16.msra.mxu0 0
    %331 = vmatprep.subr.bf16.mxu0 0
    %332 = vmatpush1.bf16.msra.mxu0 0
    %333 = vmatprep.subr.bf16.mxu0 0
    %334 = vmatpush1.bf16.msra.mxu0 0
    %335 = vmatprep.subr.bf16.mxu0 0
    %336 = vmatpush1.bf16.msra.mxu0 0
    %337 = vmatprep.subr.bf16.mxu0 0
    %338 = vmatpush1.bf16.msra.mxu0 0
    %339 = vmatprep.mubr.bf16.mxu0 0
    %340 = vmatmul.mubr.bf16.gmra.mrb[0].mxu0 %v177
    %v341 = vpop.f32.mrb[0].mxu0
    %v342 = vadd.f32 %v161, %v341
    %v343 = vpop.f32.mrb[0].mxu0
    %v344 = vadd.f32 %v165, %v343
    %v345 = vpop.f32.mrb[0].mxu0
    %v346 = vadd.f32 %v161, %v345
    %v347 = vpop.f32.mrb[0].mxu0
    %v348 = vadd.f32 %v165, %v347
    %349 = vdwg.mxu0
    %350 = vmatprep.subr.bf16.mxu0 0
    %351 = vmatpush1.bf16.msra.mxu0 %v261
    %352 = vmatprep.subr.bf16.mxu0 0
    %353 = vmatpush1.bf16.msra.mxu0 %v264
    %354 = vmatprep.subr.bf16.mxu0 0
    %355 = vmatpush1.bf16.msra.mxu0 %v267
    %356 = vmatprep.subr.bf16.mxu0 0
    %357 = vmatpush1.bf16.msra.mxu0 %v270
    %358 = vmatprep.subr.bf16.mxu0 0
    %359 = vmatpush1.bf16.msra.mxu0 %v273
    %360 = vmatprep.subr.bf16.mxu0 0
    %361 = vmatpush1.bf16.msra.mxu0 %v276
    %362 = vmatprep.subr.bf16.mxu0 0
    %363 = vmatpush1.bf16.msra.mxu0 %v279
    %364 = vmatprep.subr.bf16.mxu0 0
    %365 = vmatpush1.bf16.msra.mxu0 %v282
    %366 = vmatprep.subr.bf16.mxu0 0
    %367 = vmatpush1.bf16.msra.mxu0 0
    %368 = vmatprep.subr.bf16.mxu0 0
    %369 = vmatpush1.bf16.msra.mxu0 0
    %370 = vmatprep.subr.bf16.mxu0 0
    %371 = vmatpush1.bf16.msra.mxu0 0
    %372 = vmatprep.subr.bf16.mxu0 0
    %373 = vmatpush1.bf16.msra.mxu0 0
    %374 = vmatprep.subr.bf16.mxu0 0
    %375 = vmatpush1.bf16.msra.mxu0 0
    %376 = vmatprep.subr.bf16.mxu0 0
    %377 = vmatpush1.bf16.msra.mxu0 0
    %378 = vmatprep.subr.bf16.mxu0 0
    %379 = vmatpush1.bf16.msra.mxu0 0
    %380 = vmatprep.subr.bf16.mxu0 0
    %381 = vmatpush1.bf16.msra.mxu0 0
    %382 = vmatprep.mubr.bf16.mxu0 0
    %383 = vmatmul.mubr.bf16.gmra.mrb[0].mxu0 %v177
    %v384 = vpop.f32.mrb[0].mxu0
    %v385 = vadd.f32 %v169, %v384
    %v386 = vpop.f32.mrb[0].mxu0
    %v387 = vpop.f32.mrb[0].mxu0
    %v388 = vadd.f32 %v169, %v387
    %v389 = vpop.f32.mrb[0].mxu0
    %390 = vdwg.mxu0
    %v391 = vpack.c.bf16 %v346, %v342
    %v392 = vpack.c.bf16 %v348, %v344
    %v393 = vpack.c.bf16 %v388, %v385
    %394 = vst [vmem:[#allocation2] sm:$0xff] %v391
    %395 = vst [vmem:[#allocation2 + $0x8] sm:$0xff] %v392
    %396 = vst [vmem:[#allocation2 + $0x10] sm:$0xff] %v393
    %s397 = scalar_lea.vmem [#allocation3], 8
    %v398 = vld [vmem:[%s397] sm:$0xf]
    %v399 = vld [vmem:[%s397 + $0x4] sm:$0xf]
    %v402 = vunpack.c.l.b16 %v398
    %v403 = vunpack.c.l.b16 %v399
    %v404 = vpack.c.b16 %v403, %v402
    %406 = vmatprep.subr.bf16.mxu0 %v260
    %407 = vmatpush1.bf16.msra.mxu0 %v259
    %408 = vmatprep.subr.bf16.mxu0 %v263
    %409 = vmatpush1.bf16.msra.mxu0 %v262
    %410 = vmatprep.subr.bf16.mxu0 %v266
    %411 = vmatpush1.bf16.msra.mxu0 %v265
    %412 = vmatprep.subr.bf16.mxu0 %v269
    %413 = vmatpush1.bf16.msra.mxu0 %v268
    %414 = vmatprep.subr.bf16.mxu0 %v272
    %415 = vmatpush1.bf16.msra.mxu0 %v271
    %416 = vmatprep.subr.bf16.mxu0 %v275
    %417 = vmatpush1.bf16.msra.mxu0 %v274
    %418 = vmatprep.subr.bf16.mxu0 %v278
    %419 = vmatpush1.bf16.msra.mxu0 %v277
    %420 = vmatprep.subr.bf16.mxu0 %v281
    %421 = vmatpush1.bf16.msra.mxu0 %v280
    %422 = vmatprep.subr.bf16.mxu0 0
    %423 = vmatpush1.bf16.msra.mxu0 0
    %424 = vmatprep.subr.bf16.mxu0 0
    %425 = vmatpush1.bf16.msra.mxu0 0
    %426 = vmatprep.subr.bf16.mxu0 0
    %427 = vmatpush1.bf16.msra.mxu0 0
    %428 = vmatprep.subr.bf16.mxu0 0
    %429 = vmatpush1.bf16.msra.mxu0 0
    %430 = vmatprep.subr.bf16.mxu0 0
    %431 = vmatpush1.bf16.msra.mxu0 0
    %432 = vmatprep.subr.bf16.mxu0 0
    %433 = vmatpush1.bf16.msra.mxu0 0
    %434 = vmatprep.subr.bf16.mxu0 0
    %435 = vmatpush1.bf16.msra.mxu0 0
    %436 = vmatprep.subr.bf16.mxu0 0
    %437 = vmatpush1.bf16.msra.mxu0 0
    %438 = vmatprep.mubr.bf16.mxu0 0
    %439 = vmatmul.mubr.bf16.gmra.mrb[0].mxu0 %v404
    %v440 = vpop.f32.mrb[0].mxu0
    %v441 = vadd.f32 %v161, %v440
    %v442 = vpop.f32.mrb[0].mxu0
    %v443 = vadd.f32 %v165, %v442
    %v444 = vpop.f32.mrb[0].mxu0
    %v445 = vadd.f32 %v161, %v444
    %v446 = vpop.f32.mrb[0].mxu0
    %v447 = vadd.f32 %v165, %v446
    %448 = vdwg.mxu0
    %449 = vmatprep.subr.bf16.mxu0 0
    %450 = vmatpush1.bf16.msra.mxu0 %v261
    %451 = vmatprep.subr.bf16.mxu0 0
    %452 = vmatpush1.bf16.msra.mxu0 %v264
    %453 = vmatprep.subr.bf16.mxu0 0
    %454 = vmatpush1.bf16.msra.mxu0 %v267
    %455 = vmatprep.subr.bf16.mxu0 0
    %456 = vmatpush1.bf16.msra.mxu0 %v270
    %457 = vmatprep.subr.bf16.mxu0 0
    %458 = vmatpush1.bf16.msra.mxu0 %v273
    %459 = vmatprep.subr.bf16.mxu0 0
    %460 = vmatpush1.bf16.msra.mxu0 %v276
    %461 = vmatprep.subr.bf16.mxu0 0
    %462 = vmatpush1.bf16.msra.mxu0 %v279
    %463 = vmatprep.subr.bf16.mxu0 0
    %464 = vmatpush1.bf16.msra.mxu0 %v282
    %465 = vmatprep.subr.bf16.mxu0 0
    %466 = vmatpush1.bf16.msra.mxu0 0
    %467 = vmatprep.subr.bf16.mxu0 0
    %468 = vmatpush1.bf16.msra.mxu0 0
    %469 = vmatprep.subr.bf16.mxu0 0
    %470 = vmatpush1.bf16.msra.mxu0 0
    %471 = vmatprep.subr.bf16.mxu0 0
    %472 = vmatpush1.bf16.msra.mxu0 0
    %473 = vmatprep.subr.bf16.mxu0 0
    %474 = vmatpush1.bf16.msra.mxu0 0
    %475 = vmatprep.subr.bf16.mxu0 0
    %476 = vmatpush1.bf16.msra.mxu0 0
    %477 = vmatprep.subr.bf16.mxu0 0
    %478 = vmatpush1.bf16.msra.mxu0 0
    %479 = vmatprep.subr.bf16.mxu0 0
    %480 = vmatpush1.bf16.msra.mxu0 0
    %481 = vmatprep.mubr.bf16.mxu0 0
    %482 = vmatmul.mubr.bf16.gmra.mrb[0].mxu0 %v404
    %v483 = vpop.f32.mrb[0].mxu0
    %v484 = vadd.f32 %v169, %v483
    %v485 = vpop.f32.mrb[0].mxu0
    %v486 = vpop.f32.mrb[0].mxu0
    %v487 = vadd.f32 %v169, %v486
    %v488 = vpop.f32.mrb[0].mxu0
    %489 = vdwg.mxu0
    %v490 = vpack.c.bf16 %v445, %v441
    %v491 = vpack.c.bf16 %v447, %v443
    %v492 = vpack.c.bf16 %v487, %v484
    %s493 = scalar_lea.vmem [#allocation2], 24
    %494 = vst [vmem:[%s493] sm:$0xff] %v490
    %495 = vst [vmem:[%s493 + $0x8] sm:$0xff] %v491
    %496 = vst [vmem:[%s493 + $0x10] sm:$0xff] %v492
    %s497 = scalar_lea.vmem [#allocation3], 16
    %v498 = vld [vmem:[%s497] sm:$0xf]
    %v499 = vld [vmem:[%s497 + $0x4] sm:$0xf]
    %v502 = vunpack.c.l.b16 %v498
    %v503 = vunpack.c.l.b16 %v499
    %v504 = vpack.c.b16 %v503, %v502
    %506 = vmatprep.subr.bf16.mxu0 %v260
    %507 = vmatpush1.bf16.msra.mxu0 %v259
    %508 = vmatprep.subr.bf16.mxu0 %v263
    %509 = vmatpush1.bf16.msra.mxu0 %v262
    %510 = vmatprep.subr.bf16.mxu0 %v266
    %511 = vmatpush1.bf16.msra.mxu0 %v265
    %512 = vmatprep.subr.bf16.mxu0 %v269
    %513 = vmatpush1.bf16.msra.mxu0 %v268
    %514 = vmatprep.subr.bf16.mxu0 %v272
    %515 = vmatpush1.bf16.msra.mxu0 %v271
    %516 = vmatprep.subr.bf16.mxu0 %v275
    %517 = vmatpush1.bf16.msra.mxu0 %v274
    %518 = vmatprep.subr.bf16.mxu0 %v278
    %519 = vmatpush1.bf16.msra.mxu0 %v277
    %520 = vmatprep.subr.bf16.mxu0 %v281
    %521 = vmatpush1.bf16.msra.mxu0 %v280
    %522 = vmatprep.subr.bf16.mxu0 0
    %523 = vmatpush1.bf16.msra.mxu0 0
    %524 = vmatprep.subr.bf16.mxu0 0
    %525 = vmatpush1.bf16.msra.mxu0 0
    %526 = vmatprep.subr.bf16.mxu0 0
    %527 = vmatpush1.bf16.msra.mxu0 0
    %528 = vmatprep.subr.bf16.mxu0 0
    %529 = vmatpush1.bf16.msra.mxu0 0
    %530 = vmatprep.subr.bf16.mxu0 0
    %531 = vmatpush1.bf16.msra.mxu0 0
    %532 = vmatprep.subr.bf16.mxu0 0
    %533 = vmatpush1.bf16.msra.mxu0 0
    %534 = vmatprep.subr.bf16.mxu0 0
    %535 = vmatpush1.bf16.msra.mxu0 0
    %536 = vmatprep.subr.bf16.mxu0 0
    %537 = vmatpush1.bf16.msra.mxu0 0
    %538 = vmatprep.mubr.bf16.mxu0 0
    %539 = vmatmul.mubr.bf16.gmra.mrb[0].mxu0 %v504
    %v540 = vpop.f32.mrb[0].mxu0
    %v541 = vadd.f32 %v161, %v540
    %v542 = vpop.f32.mrb[0].mxu0
    %v543 = vadd.f32 %v165, %v542
    %v544 = vpop.f32.mrb[0].mxu0
    %v545 = vadd.f32 %v161, %v544
    %v546 = vpop.f32.mrb[0].mxu0
    %v547 = vadd.f32 %v165, %v546
    %548 = vdwg.mxu0
    %549 = vmatprep.subr.bf16.mxu0 0
    %550 = vmatpush1.bf16.msra.mxu0 %v261
    %551 = vmatprep.subr.bf16.mxu0 0
    %552 = vmatpush1.bf16.msra.mxu0 %v264
    %553 = vmatprep.subr.bf16.mxu0 0
    %554 = vmatpush1.bf16.msra.mxu0 %v267
    %555 = vmatprep.subr.bf16.mxu0 0
    %556 = vmatpush1.bf16.msra.mxu0 %v270
    %557 = vmatprep.subr.bf16.mxu0 0
    %558 = vmatpush1.bf16.msra.mxu0 %v273
    %559 = vmatprep.subr.bf16.mxu0 0
    %560 = vmatpush1.bf16.msra.mxu0 %v276
    %561 = vmatprep.subr.bf16.mxu0 0
    %562 = vmatpush1.bf16.msra.mxu0 %v279
    %563 = vmatprep.subr.bf16.mxu0 0
    %564 = vmatpush1.bf16.msra.mxu0 %v282
    %565 = vmatprep.subr.bf16.mxu0 0
    %566 = vmatpush1.bf16.msra.mxu0 0
    %567 = vmatprep.subr.bf16.mxu0 0
    %568 = vmatpush1.bf16.msra.mxu0 0
    %569 = vmatprep.subr.bf16.mxu0 0
    %570 = vmatpush1.bf16.msra.mxu0 0
    %571 = vmatprep.subr.bf16.mxu0 0
    %572 = vmatpush1.bf16.msra.mxu0 0
    %573 = vmatprep.subr.bf16.mxu0 0
    %574 = vmatpush1.bf16.msra.mxu0 0
    %575 = vmatprep.subr.bf16.mxu0 0
    %576 = vmatpush1.bf16.msra.mxu0 0
    %577 = vmatprep.subr.bf16.mxu0 0
    %578 = vmatpush1.bf16.msra.mxu0 0
    %579 = vmatprep.subr.bf16.mxu0 0
    %580 = vmatpush1.bf16.msra.mxu0 0
    %581 = vmatprep.mubr.bf16.mxu0 0
    %582 = vmatmul.mubr.bf16.gmra.mrb[0].mxu0 %v504
    %v583 = vpop.f32.mrb[0].mxu0
    %v584 = vadd.f32 %v169, %v583
    %v585 = vpop.f32.mrb[0].mxu0
    %v586 = vpop.f32.mrb[0].mxu0
    %v587 = vadd.f32 %v169, %v586
    %v588 = vpop.f32.mrb[0].mxu0
    %589 = vdwg.mxu0
    %v590 = vpack.c.bf16 %v545, %v541
    %v591 = vpack.c.bf16 %v547, %v543
    %v592 = vpack.c.bf16 %v587, %v584
    %s593 = scalar_lea.vmem [#allocation2], 48
    %594 = vst [vmem:[%s593] sm:$0xff] %v590
    %595 = vst [vmem:[%s593 + $0x8] sm:$0xff] %v591
    %596 = vst [vmem:[%s593 + $0x10] sm:$0xff] %v592
    %s597 = scalar_lea.vmem [#allocation3], 24
    %v598 = vld [vmem:[%s597] sm:$0xf]
    %v599 = vld [vmem:[%s597 + $0x4] sm:$0xf]
    %v602 = vunpack.c.l.b16 %v598
    %v603 = vunpack.c.l.b16 %v599
    %v604 = vpack.c.b16 %v603, %v602
    %606 = vmatprep.subr.bf16.mxu0 %v260
    %607 = vmatpush1.bf16.msra.mxu0 %v259
    %608 = vmatprep.subr.bf16.mxu0 %v263
    %609 = vmatpush1.bf16.msra.mxu0 %v262
    %610 = vmatprep.subr.bf16.mxu0 %v266
    %611 = vmatpush1.bf16.msra.mxu0 %v265
    %612 = vmatprep.subr.bf16.mxu0 %v269
    %613 = vmatpush1.bf16.msra.mxu0 %v268
    %614 = vmatprep.subr.bf16.mxu0 %v272
    %615 = vmatpush1.bf16.msra.mxu0 %v271
    %616 = vmatprep.subr.bf16.mxu0 %v275
    %617 = vmatpush1.bf16.msra.mxu0 %v274
    %618 = vmatprep.subr.bf16.mxu0 %v278
    %619 = vmatpush1.bf16.msra.mxu0 %v277
    %620 = vmatprep.subr.bf16.mxu0 %v281
    %621 = vmatpush1.bf16.msra.mxu0 %v280
    %622 = vmatprep.subr.bf16.mxu0 0
    %623 = vmatpush1.bf16.msra.mxu0 0
    %624 = vmatprep.subr.bf16.mxu0 0
    %625 = vmatpush1.bf16.msra.mxu0 0
    %626 = vmatprep.subr.bf16.mxu0 0
    %627 = vmatpush1.bf16.msra.mxu0 0
    %628 = vmatprep.subr.bf16.mxu0 0
    %629 = vmatpush1.bf16.msra.mxu0 0
    %630 = vmatprep.subr.bf16.mxu0 0
    %631 = vmatpush1.bf16.msra.mxu0 0
    %632 = vmatprep.subr.bf16.mxu0 0
    %633 = vmatpush1.bf16.msra.mxu0 0
    %634 = vmatprep.subr.bf16.mxu0 0
    %635 = vmatpush1.bf16.msra.mxu0 0
    %636 = vmatprep.subr.bf16.mxu0 0
    %637 = vmatpush1.bf16.msra.mxu0 0
    %638 = vmatprep.mubr.bf16.mxu0 0
    %639 = vmatmul.mubr.bf16.gmra.mrb[0].mxu0 %v604
    %v640 = vpop.f32.mrb[0].mxu0
    %v641 = vadd.f32 %v161, %v640
    %v642 = vpop.f32.mrb[0].mxu0
    %v643 = vadd.f32 %v165, %v642
    %v644 = vpop.f32.mrb[0].mxu0
    %v645 = vadd.f32 %v161, %v644
    %v646 = vpop.f32.mrb[0].mxu0
    %v647 = vadd.f32 %v165, %v646
    %648 = vdwg.mxu0
    %649 = vmatprep.subr.bf16.mxu0 0
    %650 = vmatpush1.bf16.msra.mxu0 %v261
    %651 = vmatprep.subr.bf16.mxu0 0
    %652 = vmatpush1.bf16.msra.mxu0 %v264
    %653 = vmatprep.subr.bf16.mxu0 0
    %654 = vmatpush1.bf16.msra.mxu0 %v267
    %655 = vmatprep.subr.bf16.mxu0 0
    %656 = vmatpush1.bf16.msra.mxu0 %v270
    %657 = vmatprep.subr.bf16.mxu0 0
    %658 = vmatpush1.bf16.msra.mxu0 %v273
    %659 = vmatprep.subr.bf16.mxu0 0
    %660 = vmatpush1.bf16.msra.mxu0 %v276
    %661 = vmatprep.subr.bf16.mxu0 0
    %662 = vmatpush1.bf16.msra.mxu0 %v279
    %663 = vmatprep.subr.bf16.mxu0 0
    %664 = vmatpush1.bf16.msra.mxu0 %v282
    %665 = vmatprep.subr.bf16.mxu0 0
    %666 = vmatpush1.bf16.msra.mxu0 0
    %667 = vmatprep.subr.bf16.mxu0 0
    %668 = vmatpush1.bf16.msra.mxu0 0
    %669 = vmatprep.subr.bf16.mxu0 0
    %670 = vmatpush1.bf16.msra.mxu0 0
    %671 = vmatprep.subr.bf16.mxu0 0
    %672 = vmatpush1.bf16.msra.mxu0 0
    %673 = vmatprep.subr.bf16.mxu0 0
    %674 = vmatpush1.bf16.msra.mxu0 0
    %675 = vmatprep.subr.bf16.mxu0 0
    %676 = vmatpush1.bf16.msra.mxu0 0
    %677 = vmatprep.subr.bf16.mxu0 0
    %678 = vmatpush1.bf16.msra.mxu0 0
    %679 = vmatprep.subr.bf16.mxu0 0
    %680 = vmatpush1.bf16.msra.mxu0 0
    %681 = vmatprep.mubr.bf16.mxu0 0
    %682 = vmatmul.mubr.bf16.gmra.mrb[0].mxu0 %v604
    %v683 = vpop.f32.mrb[0].mxu0
    %v684 = vadd.f32 %v169, %v683
    %v685 = vpop.f32.mrb[0].mxu0
    %v686 = vpop.f32.mrb[0].mxu0
    %v687 = vadd.f32 %v169, %v686
    %v688 = vpop.f32.mrb[0].mxu0
    %689 = vdwg.mxu0
    %v690 = vpack.c.bf16 %v645, %v641
    %v691 = vpack.c.bf16 %v647, %v643
    %v692 = vpack.c.bf16 %v687, %v684
    %s693 = scalar_lea.vmem [#allocation2], 72
    %694 = vst [vmem:[%s693] sm:$0xff] %v690
    %695 = vst [vmem:[%s693 + $0x8] sm:$0xff] %v691
    %696 = vst [vmem:[%s693 + $0x10] sm:$0xff] %v692
    %s697 = scalar_lea.vmem [#allocation3], 32
    %v698 = vld [vmem:[%s697] sm:$0xf]
    %v699 = vld [vmem:[%s697 + $0x4] sm:$0xf]
    %v702 = vunpack.c.l.b16 %v698
    %v703 = vunpack.c.l.b16 %v699
    %v704 = vpack.c.b16 %v703, %v702
    %706 = vmatprep.subr.bf16.mxu0 %v260
    %707 = vmatpush1.bf16.msra.mxu0 %v259
    %708 = vmatprep.subr.bf16.mxu0 %v263
    %709 = vmatpush1.bf16.msra.mxu0 %v262
    %710 = vmatprep.subr.bf16.mxu0 %v266
    %711 = vmatpush1.bf16.msra.mxu0 %v265
    %712 = vmatprep.subr.bf16.mxu0 %v269
    %713 = vmatpush1.bf16.msra.mxu0 %v268
    %714 = vmatprep.subr.bf16.mxu0 %v272
    %715 = vmatpush1.bf16.msra.mxu0 %v271
    %716 = vmatprep.subr.bf16.mxu0 %v275
    %717 = vmatpush1.bf16.msra.mxu0 %v274
    %718 = vmatprep.subr.bf16.mxu0 %v278
    %719 = vmatpush1.bf16.msra.mxu0 %v277
    %720 = vmatprep.subr.bf16.mxu0 %v281
    %721 = vmatpush1.bf16.msra.mxu0 %v280
    %722 = vmatprep.subr.bf16.mxu0 0
    %723 = vmatpush1.bf16.msra.mxu0 0
    %724 = vmatprep.subr.bf16.mxu0 0
    %725 = vmatpush1.bf16.msra.mxu0 0
    %726 = vmatprep.subr.bf16.mxu0 0
    %727 = vmatpush1.bf16.msra.mxu0 0
    %728 = vmatprep.subr.bf16.mxu0 0
    %729 = vmatpush1.bf16.msra.mxu0 0
    %730 = vmatprep.subr.bf16.mxu0 0
    %731 = vmatpush1.bf16.msra.mxu0 0
    %732 = vmatprep.subr.bf16.mxu0 0
    %733 = vmatpush1.bf16.msra.mxu0 0
    %734 = vmatprep.subr.bf16.mxu0 0
    %735 = vmatpush1.bf16.msra.mxu0 0
    %736 = vmatprep.subr.bf16.mxu0 0
    %737 = vmatpush1.bf16.msra.mxu0 0
    %738 = vmatprep.mubr.bf16.mxu0 0
    %739 = vmatmul.mubr.bf16.gmra.mrb[0].mxu0 %v704
    %v740 = vpop.f32.mrb[0].mxu0
    %v741 = vadd.f32 %v161, %v740
    %v742 = vpop.f32.mrb[0].mxu0
    %v743 = vadd.f32 %v165, %v742
    %v744 = vpop.f32.mrb[0].mxu0
    %v745 = vadd.f32 %v161, %v744
    %v746 = vpop.f32.mrb[0].mxu0
    %v747 = vadd.f32 %v165, %v746
    %748 = vdwg.mxu0
    %749 = vmatprep.subr.bf16.mxu0 0
    %750 = vmatpush1.bf16.msra.mxu0 %v261
    %751 = vmatprep.subr.bf16.mxu0 0
    %752 = vmatpush1.bf16.msra.mxu0 %v264
    %753 = vmatprep.subr.bf16.mxu0 0
    %754 = vmatpush1.bf16.msra.mxu0 %v267
    %755 = vmatprep.subr.bf16.mxu0 0
    %756 = vmatpush1.bf16.msra.mxu0 %v270
    %757 = vmatprep.subr.bf16.mxu0 0
    %758 = vmatpush1.bf16.msra.mxu0 %v273
    %759 = vmatprep.subr.bf16.mxu0 0
    %760 = vmatpush1.bf16.msra.mxu0 %v276
    %761 = vmatprep.subr.bf16.mxu0 0
    %762 = vmatpush1.bf16.msra.mxu0 %v279
    %763 = vmatprep.subr.bf16.mxu0 0
    %764 = vmatpush1.bf16.msra.mxu0 %v282
    %765 = vmatprep.subr.bf16.mxu0 0
    %766 = vmatpush1.bf16.msra.mxu0 0
    %767 = vmatprep.subr.bf16.mxu0 0
    %768 = vmatpush1.bf16.msra.mxu0 0
    %769 = vmatprep.subr.bf16.mxu0 0
    %770 = vmatpush1.bf16.msra.mxu0 0
    %771 = vmatprep.subr.bf16.mxu0 0
    %772 = vmatpush1.bf16.msra.mxu0 0
    %773 = vmatprep.subr.bf16.mxu0 0
    %774 = vmatpush1.bf16.msra.mxu0 0
    %775 = vmatprep.subr.bf16.mxu0 0
    %776 = vmatpush1.bf16.msra.mxu0 0
    %777 = vmatprep.subr.bf16.mxu0 0
    %778 = vmatpush1.bf16.msra.mxu0 0
    %779 = vmatprep.subr.bf16.mxu0 0
    %780 = vmatpush1.bf16.msra.mxu0 0
    %781 = vmatprep.mubr.bf16.mxu0 0
    %782 = vmatmul.mubr.bf16.gmra.mrb[0].mxu0 %v704
    %v783 = vpop.f32.mrb[0].mxu0
    %v784 = vadd.f32 %v169, %v783
    %v785 = vpop.f32.mrb[0].mxu0
    %v786 = vpop.f32.mrb[0].mxu0
    %v787 = vadd.f32 %v169, %v786
    %v788 = vpop.f32.mrb[0].mxu0
    %789 = vdwg.mxu0
    %v790 = vpack.c.bf16 %v745, %v741
    %v791 = vpack.c.bf16 %v747, %v743
    %v792 = vpack.c.bf16 %v787, %v784
    %s793 = scalar_lea.vmem [#allocation2], 96
    %794 = vst [vmem:[%s793] sm:$0xff] %v790
    %795 = vst [vmem:[%s793 + $0x8] sm:$0xff] %v791
    %796 = vst [vmem:[%s793 + $0x10] sm:$0xff] %v792
    %s797 = scalar_lea.vmem [#allocation3], 40
    %v798 = vld [vmem:[%s797] sm:$0xf]
    %v799 = vld [vmem:[%s797 + $0x4] sm:$0xf]
    %v802 = vunpack.c.l.b16 %v798
    %v803 = vunpack.c.l.b16 %v799
    %v804 = vpack.c.b16 %v803, %v802
    %806 = vmatprep.subr.bf16.mxu0 %v260
    %807 = vmatpush1.bf16.msra.mxu0 %v259
    %808 = vmatprep.subr.bf16.mxu0 %v263
    %809 = vmatpush1.bf16.msra.mxu0 %v262
    %810 = vmatprep.subr.bf16.mxu0 %v266
    %811 = vmatpush1.bf16.msra.mxu0 %v265
    %812 = vmatprep.subr.bf16.mxu0 %v269
    %813 = vmatpush1.bf16.msra.mxu0 %v268
    %814 = vmatprep.subr.bf16.mxu0 %v272
    %815 = vmatpush1.bf16.msra.mxu0 %v271
    %816 = vmatprep.subr.bf16.mxu0 %v275
    %817 = vmatpush1.bf16.msra.mxu0 %v274
    %818 = vmatprep.subr.bf16.mxu0 %v278
    %819 = vmatpush1.bf16.msra.mxu0 %v277
    %820 = vmatprep.subr.bf16.mxu0 %v281
    %821 = vmatpush1.bf16.msra.mxu0 %v280
    %822 = vmatprep.subr.bf16.mxu0 0
    %823 = vmatpush1.bf16.msra.mxu0 0
    %824 = vmatprep.subr.bf16.mxu0 0
    %825 = vmatpush1.bf16.msra.mxu0 0
    %826 = vmatprep.subr.bf16.mxu0 0
    %827 = vmatpush1.bf16.msra.mxu0 0
    %828 = vmatprep.subr.bf16.mxu0 0
    %829 = vmatpush1.bf16.msra.mxu0 0
    %830 = vmatprep.subr.bf16.mxu0 0
    %831 = vmatpush1.bf16.msra.mxu0 0
    %832 = vmatprep.subr.bf16.mxu0 0
    %833 = vmatpush1.bf16.msra.mxu0 0
    %834 = vmatprep.subr.bf16.mxu0 0
    %835 = vmatpush1.bf16.msra.mxu0 0
    %836 = vmatprep.subr.bf16.mxu0 0
    %837 = vmatpush1.bf16.msra.mxu0 0
    %838 = vmatprep.mubr.bf16.mxu0 0
    %839 = vmatmul.mubr.bf16.gmra.mrb[0].mxu0 %v804
    %v840 = vpop.f32.mrb[0].mxu0
    %v841 = vadd.f32 %v161, %v840
    %v842 = vpop.f32.mrb[0].mxu0
    %v843 = vadd.f32 %v165, %v842
    %v844 = vpop.f32.mrb[0].mxu0
    %v845 = vadd.f32 %v161, %v844
    %v846 = vpop.f32.mrb[0].mxu0
    %v847 = vadd.f32 %v165, %v846
    %848 = vdwg.mxu0
    %849 = vmatprep.subr.bf16.mxu0 0
    %850 = vmatpush1.bf16.msra.mxu0 %v261
    %851 = vmatprep.subr.bf16.mxu0 0
    %852 = vmatpush1.bf16.msra.mxu0 %v264
    %853 = vmatprep.subr.bf16.mxu0 0
    %854 = vmatpush1.bf16.msra.mxu0 %v267
    %855 = vmatprep.subr.bf16.mxu0 0
    %856 = vmatpush1.bf16.msra.mxu0 %v270
    %857 = vmatprep.subr.bf16.mxu0 0
    %858 = vmatpush1.bf16.msra.mxu0 %v273
    %859 = vmatprep.subr.bf16.mxu0 0
    %860 = vmatpush1.bf16.msra.mxu0 %v276
    %861 = vmatprep.subr.bf16.mxu0 0
    %862 = vmatpush1.bf16.msra.mxu0 %v279
    %863 = vmatprep.subr.bf16.mxu0 0
    %864 = vmatpush1.bf16.msra.mxu0 %v282
    %865 = vmatprep.subr.bf16.mxu0 0
    %866 = vmatpush1.bf16.msra.mxu0 0
    %867 = vmatprep.subr.bf16.mxu0 0
    %868 = vmatpush1.bf16.msra.mxu0 0
    %869 = vmatprep.subr.bf16.mxu0 0
    %870 = vmatpush1.bf16.msra.mxu0 0
    %871 = vmatprep.subr.bf16.mxu0 0
    %872 = vmatpush1.bf16.msra.mxu0 0
    %873 = vmatprep.subr.bf16.mxu0 0
    %874 = vmatpush1.bf16.msra.mxu0 0
    %875 = vmatprep.subr.bf16.mxu0 0
    %876 = vmatpush1.bf16.msra.mxu0 0
    %877 = vmatprep.subr.bf16.mxu0 0
    %878 = vmatpush1.bf16.msra.mxu0 0
    %879 = vmatprep.subr.bf16.mxu0 0
    %880 = vmatpush1.bf16.msra.mxu0 0
    %881 = vmatprep.mubr.bf16.mxu0 0
    %882 = vmatmul.mubr.bf16.gmra.mrb[0].mxu0 %v804
    %v883 = vpop.f32.mrb[0].mxu0
    %v884 = vadd.f32 %v169, %v883
    %v885 = vpop.f32.mrb[0].mxu0
    %v886 = vpop.f32.mrb[0].mxu0
    %v887 = vadd.f32 %v169, %v886
    %v888 = vpop.f32.mrb[0].mxu0
    %889 = vdwg.mxu0
    %v890 = vpack.c.bf16 %v845, %v841
    %v891 = vpack.c.bf16 %v847, %v843
    %v892 = vpack.c.bf16 %v887, %v884
    %s893 = scalar_lea.vmem [#allocation2], 120
    %894 = vst [vmem:[%s893] sm:$0xff] %v890
    %895 = vst [vmem:[%s893 + $0x8] sm:$0xff] %v891
    %896 = vst [vmem:[%s893 + $0x10] sm:$0xff] %v892
    %s897 = scalar_lea.vmem [#allocation3], 48
    %v898 = vld [vmem:[%s897] sm:$0xf]
    %v899 = vld [vmem:[%s897 + $0x4] sm:$0xf]
    %v902 = vunpack.c.l.b16 %v898
    %v903 = vunpack.c.l.b16 %v899
    %v904 = vpack.c.b16 %v903, %v902
    %906 = vmatprep.subr.bf16.mxu0 %v260
    %907 = vmatpush1.bf16.msra.mxu0 %v259
    %908 = vmatprep.subr.bf16.mxu0 %v263
    %909 = vmatpush1.bf16.msra.mxu0 %v262
    %910 = vmatprep.subr.bf16.mxu0 %v266
    %911 = vmatpush1.bf16.msra.mxu0 %v265
    %912 = vmatprep.subr.bf16.mxu0 %v269
    %913 = vmatpush1.bf16.msra.mxu0 %v268
    %914 = vmatprep.subr.bf16.mxu0 %v272
    %915 = vmatpush1.bf16.msra.mxu0 %v271
    %916 = vmatprep.subr.bf16.mxu0 %v275
    %917 = vmatpush1.bf16.msra.mxu0 %v274
    %918 = vmatprep.subr.bf16.mxu0 %v278
    %919 = vmatpush1.bf16.msra.mxu0 %v277
    %920 = vmatprep.subr.bf16.mxu0 %v281
    %921 = vmatpush1.bf16.msra.mxu0 %v280
    %922 = vmatprep.subr.bf16.mxu0 0
    %923 = vmatpush1.bf16.msra.mxu0 0
    %924 = vmatprep.subr.bf16.mxu0 0
    %925 = vmatpush1.bf16.msra.mxu0 0
    %926 = vmatprep.subr.bf16.mxu0 0
    %927 = vmatpush1.bf16.msra.mxu0 0
    %928 = vmatprep.subr.bf16.mxu0 0
    %929 = vmatpush1.bf16.msra.mxu0 0
    %930 = vmatprep.subr.bf16.mxu0 0
    %931 = vmatpush1.bf16.msra.mxu0 0
    %932 = vmatprep.subr.bf16.mxu0 0
    %933 = vmatpush1.bf16.msra.mxu0 0
    %934 = vmatprep.subr.bf16.mxu0 0
    %935 = vmatpush1.bf16.msra.mxu0 0
    %936 = vmatprep.subr.bf16.mxu0 0
    %937 = vmatpush1.bf16.msra.mxu0 0
    %938 = vmatprep.mubr.bf16.mxu0 0
    %939 = vmatmul.mubr.bf16.gmra.mrb[0].mxu0 %v904
    %v940 = vpop.f32.mrb[0].mxu0
    %v941 = vadd.f32 %v161, %v940
    %v942 = vpop.f32.mrb[0].mxu0
    %v943 = vadd.f32 %v165, %v942
    %v944 = vpop.f32.mrb[0].mxu0
    %v945 = vadd.f32 %v161, %v944
    %v946 = vpop.f32.mrb[0].mxu0
    %v947 = vadd.f32 %v165, %v946
    %948 = vdwg.mxu0
    %949 = vmatprep.subr.bf16.mxu0 0
    %950 = vmatpush1.bf16.msra.mxu0 %v261
    %951 = vmatprep.subr.bf16.mxu0 0
    %952 = vmatpush1.bf16.msra.mxu0 %v264
    %953 = vmatprep.subr.bf16.mxu0 0
    %954 = vmatpush1.bf16.msra.mxu0 %v267
    %955 = vmatprep.subr.bf16.mxu0 0
    %956 = vmatpush1.bf16.msra.mxu0 %v270
    %957 = vmatprep.subr.bf16.mxu0 0
    %958 = vmatpush1.bf16.msra.mxu0 %v273
    %959 = vmatprep.subr.bf16.mxu0 0
    %960 = vmatpush1.bf16.msra.mxu0 %v276
    %961 = vmatprep.subr.bf16.mxu0 0
    %962 = vmatpush1.bf16.msra.mxu0 %v279
    %963 = vmatprep.subr.bf16.mxu0 0
    %964 = vmatpush1.bf16.msra.mxu0 %v282
    %965 = vmatprep.subr.bf16.mxu0 0
    %966 = vmatpush1.bf16.msra.mxu0 0
    %967 = vmatprep.subr.bf16.mxu0 0
    %968 = vmatpush1.bf16.msra.mxu0 0
    %969 = vmatprep.subr.bf16.mxu0 0
    %970 = vmatpush1.bf16.msra.mxu0 0
    %971 = vmatprep.subr.bf16.mxu0 0
    %972 = vmatpush1.bf16.msra.mxu0 0
    %973 = vmatprep.subr.bf16.mxu0 0
    %974 = vmatpush1.bf16.msra.mxu0 0
    %975 = vmatprep.subr.bf16.mxu0 0
    %976 = vmatpush1.bf16.msra.mxu0 0
    %977 = vmatprep.subr.bf16.mxu0 0
    %978 = vmatpush1.bf16.msra.mxu0 0
    %979 = vmatprep.subr.bf16.mxu0 0
    %980 = vmatpush1.bf16.msra.mxu0 0
    %981 = vmatprep.mubr.bf16.mxu0 0
    %982 = vmatmul.mubr.bf16.gmra.mrb[0].mxu0 %v904
    %v983 = vpop.f32.mrb[0].mxu0
    %v984 = vadd.f32 %v169, %v983
    %v985 = vpop.f32.mrb[0].mxu0
    %v986 = vpop.f32.mrb[0].mxu0
    %v987 = vadd.f32 %v169, %v986
    %v988 = vpop.f32.mrb[0].mxu0
    %989 = vdwg.mxu0
    %v990 = vpack.c.bf16 %v945, %v941
    %v991 = vpack.c.bf16 %v947, %v943
    %v992 = vpack.c.bf16 %v987, %v984
    %s993 = scalar_lea.vmem [#allocation2], 144
    %994 = vst [vmem:[%s993] sm:$0xff] %v990
    %995 = vst [vmem:[%s993 + $0x8] sm:$0xff] %v991
    %996 = vst [vmem:[%s993 + $0x10] sm:$0xff] %v992
    %s997 = scalar_lea.vmem [#allocation3], 56
    %v998 = vld [vmem:[%s997] sm:$0xf]
    %v999 = vld [vmem:[%s997 + $0x4] sm:$0xf]
    %v1002 = vunpack.c.l.b16 %v998
    %v1003 = vunpack.c.l.b16 %v999
    %v1004 = vpack.c.b16 %v1003, %v1002
    %1006 = vmatprep.subr.bf16.mxu0 %v260
    %1007 = vmatpush1.bf16.msra.mxu0 %v259
    %1008 = vmatprep.subr.bf16.mxu0 %v263
    %1009 = vmatpush1.bf16.msra.mxu0 %v262
    %1010 = vmatprep.subr.bf16.mxu0 %v266
    %1011 = vmatpush1.bf16.msra.mxu0 %v265
    %1012 = vmatprep.subr.bf16.mxu0 %v269
    %1013 = vmatpush1.bf16.msra.mxu0 %v268
    %1014 = vmatprep.subr.bf16.mxu0 %v272
    %1015 = vmatpush1.bf16.msra.mxu0 %v271
    %1016 = vmatprep.subr.bf16.mxu0 %v275
    %1017 = vmatpush1.bf16.msra.mxu0 %v274
    %1018 = vmatprep.subr.bf16.mxu0 %v278
    %1019 = vmatpush1.bf16.msra.mxu0 %v277
    %1020 = vmatprep.subr.bf16.mxu0 %v281
    %1021 = vmatpush1.bf16.msra.mxu0 %v280
    %1022 = vmatprep.subr.bf16.mxu0 0
    %1023 = vmatpush1.bf16.msra.mxu0 0
    %1024 = vmatprep.subr.bf16.mxu0 0
    %1025 = vmatpush1.bf16.msra.mxu0 0
    %1026 = vmatprep.subr.bf16.mxu0 0
    %1027 = vmatpush1.bf16.msra.mxu0 0
    %1028 = vmatprep.subr.bf16.mxu0 0
    %1029 = vmatpush1.bf16.msra.mxu0 0
    %1030 = vmatprep.subr.bf16.mxu0 0
    %1031 = vmatpush1.bf16.msra.mxu0 0
    %1032 = vmatprep.subr.bf16.mxu0 0
    %1033 = vmatpush1.bf16.msra.mxu0 0
    %1034 = vmatprep.subr.bf16.mxu0 0
    %1035 = vmatpush1.bf16.msra.mxu0 0
    %1036 = vmatprep.subr.bf16.mxu0 0
    %1037 = vmatpush1.bf16.msra.mxu0 0
    %1038 = vmatprep.mubr.bf16.mxu0 0
    %1039 = vmatmul.mubr.bf16.gmra.mrb[0].mxu0 %v1004
    %v1040 = vpop.f32.mrb[0].mxu0
    %v1041 = vadd.f32 %v161, %v1040
    %v1042 = vpop.f32.mrb[0].mxu0
    %v1043 = vadd.f32 %v165, %v1042
    %v1044 = vpop.f32.mrb[0].mxu0
    %v1045 = vadd.f32 %v161, %v1044
    %v1046 = vpop.f32.mrb[0].mxu0
    %v1047 = vadd.f32 %v165, %v1046
    %1048 = vdwg.mxu0
    %1049 = vmatprep.subr.bf16.mxu0 0
    %1050 = vmatpush1.bf16.msra.mxu0 %v261
    %1051 = vmatprep.subr.bf16.mxu0 0
    %1052 = vmatpush1.bf16.msra.mxu0 %v264
    %1053 = vmatprep.subr.bf16.mxu0 0
    %1054 = vmatpush1.bf16.msra.mxu0 %v267
    %1055 = vmatprep.subr.bf16.mxu0 0
    %1056 = vmatpush1.bf16.msra.mxu0 %v270
    %1057 = vmatprep.subr.bf16.mxu0 0
    %1058 = vmatpush1.bf16.msra.mxu0 %v273
    %1059 = vmatprep.subr.bf16.mxu0 0
    %1060 = vmatpush1.bf16.msra.mxu0 %v276
    %1061 = vmatprep.subr.bf16.mxu0 0
    %1062 = vmatpush1.bf16.msra.mxu0 %v279
    %1063 = vmatprep.subr.bf16.mxu0 0
    %1064 = vmatpush1.bf16.msra.mxu0 %v282
    %1065 = vmatprep.subr.bf16.mxu0 0
    %1066 = vmatpush1.bf16.msra.mxu0 0
    %1067 = vmatprep.subr.bf16.mxu0 0
    %1068 = vmatpush1.bf16.msra.mxu0 0
    %1069 = vmatprep.subr.bf16.mxu0 0
    %1070 = vmatpush1.bf16.msra.mxu0 0
    %1071 = vmatprep.subr.bf16.mxu0 0
    %1072 = vmatpush1.bf16.msra.mxu0 0
    %1073 = vmatprep.subr.bf16.mxu0 0
    %1074 = vmatpush1.bf16.msra.mxu0 0
    %1075 = vmatprep.subr.bf16.mxu0 0
    %1076 = vmatpush1.bf16.msra.mxu0 0
    %1077 = vmatprep.subr.bf16.mxu0 0
    %1078 = vmatpush1.bf16.msra.mxu0 0
    %1079 = vmatprep.subr.bf16.mxu0 0
    %1080 = vmatpush1.bf16.msra.mxu0 0
    %1081 = vmatprep.mubr.bf16.mxu0 0
    %1082 = vmatmul.mubr.bf16.gmra.mrb[0].mxu0 %v1004
    %v1083 = vpop.f32.mrb[0].mxu0
    %v1084 = vadd.f32 %v169, %v1083
    %v1085 = vpop.f32.mrb[0].mxu0
    %v1086 = vpop.f32.mrb[0].mxu0
    %v1087 = vadd.f32 %v169, %v1086
    %v1088 = vpop.f32.mrb[0].mxu0
    %1089 = vdwg.mxu0
    %v1090 = vpack.c.bf16 %v1045, %v1041
    %v1091 = vpack.c.bf16 %v1047, %v1043
    %v1092 = vpack.c.bf16 %v1087, %v1084
    %s1093 = scalar_lea.vmem [#allocation2], 168
    %1094 = vst [vmem:[%s1093] sm:$0xff] %v1090
    %1095 = vst [vmem:[%s1093 + $0x8] sm:$0xff] %v1091
    %1096 = vst [vmem:[%s1093 + $0x10] sm:$0xff] %v1092
    %v1097 = vld [vmem:[#allocation8] sm:$0xff]
    %v1098 = vld [vmem:[#allocation8 + $0x8] sm:$0xf]
    %v1099 = vld [vmem:[#allocation8 + $0xc] sm:$0xff]
    %v1100 = vld [vmem:[#allocation8 + $0x14] sm:$0xf]
    %v1101 = vld [vmem:[#allocation8 + $0x18] sm:$0xff]
    %v1102 = vld [vmem:[#allocation8 + $0x20] sm:$0xf]
    %v1103 = vld [vmem:[#allocation8 + $0x24] sm:$0xff]
    %v1104 = vld [vmem:[#allocation8 + $0x2c] sm:$0xf]
    %v1105 = vld [vmem:[#allocation8 + $0x30] sm:$0xff]
    %v1106 = vld [vmem:[#allocation8 + $0x38] sm:$0xf]
    %v1107 = vld [vmem:[#allocation8 + $0x3c] sm:$0xff]
    %v1108 = vld [vmem:[#allocation8 + $0x44] sm:$0xf]
    %v1109 = vld [vmem:[#allocation8 + $0x48] sm:$0xff]
    %v1110 = vld [vmem:[#allocation8 + $0x50] sm:$0xf]
    %v1111 = vld [vmem:[#allocation8 + $0x54] sm:$0xff]
    %v1112 = vld [vmem:[#allocation8 + $0x5c] sm:$0xf]
    %v1113 = vld [vmem:[#allocation8 + $0x60] sm:$0xff]
    %v1114 = vld [vmem:[#allocation8 + $0x68] sm:$0xf]
    %v1115 = vld [vmem:[#allocation8 + $0x6c] sm:$0xff]
    %v1116 = vld [vmem:[#allocation8 + $0x74] sm:$0xf]
    %v1117 = vld [vmem:[#allocation8 + $0x78] sm:$0xff]
    %v1118 = vld [vmem:[#allocation8 + $0x80] sm:$0xf]
    %v1119 = vld [vmem:[#allocation8 + $0x84] sm:$0xff]
    %v1120 = vld [vmem:[#allocation8 + $0x8c] sm:$0xf]
    %v1121 = vld [vmem:[#allocation8 + $0x90] sm:$0xff]
    %v1122 = vld [vmem:[#allocation8 + $0x98] sm:$0xf]
    %v1123 = vld [vmem:[#allocation8 + $0x9c] sm:$0xff]
    %v1124 = vld [vmem:[#allocation8 + $0xa4] sm:$0xf]
    %v1125 = vld [vmem:[#allocation8 + $0xa8] sm:$0xff]
    %v1126 = vld [vmem:[#allocation8 + $0xb0] sm:$0xf]
    %v1127 = vld [vmem:[#allocation8 + $0xb4] sm:$0xff]
    %v1128 = vld [vmem:[#allocation8 + $0xbc] sm:$0xf]
    %v1129 = vld [vmem:[%s4] sm:$0x1]
    %v1131 = vlaneseq
    %v1132 = vshrl.u32 %v1131, 7
    %v1133 = vsub.s32 0, %v1132
    %v1134 = vrot.slane %v1129, %v1133
    %v1136 = vld [vmem:[#allocation2] sm:$0xff]
    %v1137 = vld [vmem:[#allocation2 + $0x8] sm:$0xff]
    %v1138 = vld [vmem:[#allocation2 + $0x10] sm:$0xff]
    %v1139 = vunpack.c.l.bf16 %v1136
    %v1140 = vunpack.c.l.bf16 %v1137
    %v1141 = vunpack.c.l.bf16 %v1138
    %v1142 = vunpack.c.h.bf16 %v1136
    %v1143 = vunpack.c.h.bf16 %v1137
    %v1144 = vunpack.c.h.bf16 %v1138
    %v1177 = vunpack.c.l.b16 %v1097
    %v1178 = vunpack.c.h.b16 %v1097
    %v1179 = vunpack.c.l.b16 %v1098
    %v1180 = vunpack.c.l.b16 %v1099
    %v1181 = vunpack.c.h.b16 %v1099
    %v1182 = vunpack.c.l.b16 %v1100
    %v1183 = vunpack.c.l.b16 %v1101
    %v1184 = vunpack.c.h.b16 %v1101
    %v1185 = vunpack.c.l.b16 %v1102
    %v1186 = vunpack.c.l.b16 %v1103
    %v1187 = vunpack.c.h.b16 %v1103
    %v1188 = vunpack.c.l.b16 %v1104
    %v1189 = vunpack.c.l.b16 %v1105
    %v1190 = vunpack.c.h.b16 %v1105
    %v1191 = vunpack.c.l.b16 %v1106
    %v1192 = vunpack.c.l.b16 %v1107
    %v1193 = vunpack.c.h.b16 %v1107
    %v1194 = vunpack.c.l.b16 %v1108
    %v1195 = vunpack.c.l.b16 %v1109
    %v1196 = vunpack.c.h.b16 %v1109
    %v1197 = vunpack.c.l.b16 %v1110
    %v1198 = vunpack.c.l.b16 %v1111
    %v1199 = vunpack.c.h.b16 %v1111
    %v1200 = vunpack.c.l.b16 %v1112
    %v1201 = vunpack.c.l.b16 %v1113
    %v1202 = vunpack.c.h.b16 %v1113
    %v1203 = vunpack.c.l.b16 %v1114
    %v1204 = vunpack.c.l.b16 %v1115
    %v1205 = vunpack.c.h.b16 %v1115
    %v1206 = vunpack.c.l.b16 %v1116
    %v1207 = vunpack.c.l.b16 %v1117
    %v1208 = vunpack.c.h.b16 %v1117
    %v1209 = vunpack.c.l.b16 %v1118
    %v1210 = vunpack.c.l.b16 %v1119
    %v1211 = vunpack.c.h.b16 %v1119
    %v1212 = vunpack.c.l.b16 %v1120
    %v1213 = vunpack.c.l.b16 %v1121
    %v1214 = vunpack.c.h.b16 %v1121
    %v1215 = vunpack.c.l.b16 %v1122
    %v1216 = vunpack.c.l.b16 %v1123
    %v1217 = vunpack.c.h.b16 %v1123
    %v1218 = vunpack.c.l.b16 %v1124
    %v1219 = vunpack.c.l.b16 %v1125
    %v1220 = vunpack.c.h.b16 %v1125
    %v1221 = vunpack.c.l.b16 %v1126
    %v1222 = vunpack.c.l.b16 %v1127
    %v1223 = vunpack.c.h.b16 %v1127
    %v1224 = vunpack.c.l.b16 %v1128
    %v1225 = vpack.c.b16 %v1180, %v1177
    %v1226 = vpack.c.b16 %v1181, %v1178
    %v1227 = vpack.c.b16 %v1182, %v1179
    %v1228 = vpack.c.b16 %v1186, %v1183
    %v1229 = vpack.c.b16 %v1187, %v1184
    %v1230 = vpack.c.b16 %v1188, %v1185
    %v1231 = vpack.c.b16 %v1192, %v1189
    %v1232 = vpack.c.b16 %v1193, %v1190
    %v1233 = vpack.c.b16 %v1194, %v1191
    %v1234 = vpack.c.b16 %v1198, %v1195
    %v1235 = vpack.c.b16 %v1199, %v1196
    %v1236 = vpack.c.b16 %v1200, %v1197
    %v1237 = vpack.c.b16 %v1204, %v1201
    %v1238 = vpack.c.b16 %v1205, %v1202
    %v1239 = vpack.c.b16 %v1206, %v1203
    %v1240 = vpack.c.b16 %v1210, %v1207
    %v1241 = vpack.c.b16 %v1211, %v1208
    %v1242 = vpack.c.b16 %v1212, %v1209
    %v1243 = vpack.c.b16 %v1216, %v1213
    %v1244 = vpack.c.b16 %v1217, %v1214
    %v1245 = vpack.c.b16 %v1218, %v1215
    %v1246 = vpack.c.b16 %v1222, %v1219
    %v1247 = vpack.c.b16 %v1223, %v1220
    %v1248 = vpack.c.b16 %v1224, %v1221
    %1273 = vmatprep.subr.bf16.mxu0 %v1226
    %1274 = vmatpush1.bf16.msra.mxu0 %v1225
    %1275 = vmatprep.subr.bf16.mxu0 %v1229
    %1276 = vmatpush1.bf16.msra.mxu0 %v1228
    %1277 = vmatprep.subr.bf16.mxu0 %v1232
    %1278 = vmatpush1.bf16.msra.mxu0 %v1231
    %1279 = vmatprep.subr.bf16.mxu0 %v1235
    %1280 = vmatpush1.bf16.msra.mxu0 %v1234
    %1281 = vmatprep.subr.bf16.mxu0 %v1238
    %1282 = vmatpush1.bf16.msra.mxu0 %v1237
    %1283 = vmatprep.subr.bf16.mxu0 %v1241
    %1284 = vmatpush1.bf16.msra.mxu0 %v1240
    %1285 = vmatprep.subr.bf16.mxu0 %v1244
    %1286 = vmatpush1.bf16.msra.mxu0 %v1243
    %1287 = vmatprep.subr.bf16.mxu0 %v1247
    %1288 = vmatpush1.bf16.msra.mxu0 %v1246
    %1289 = vmatprep.subr.bf16.mxu0 0
    %1290 = vmatpush1.bf16.msra.mxu0 0
    %1291 = vmatprep.subr.bf16.mxu0 0
    %1292 = vmatpush1.bf16.msra.mxu0 0
    %1293 = vmatprep.subr.bf16.mxu0 0
    %1294 = vmatpush1.bf16.msra.mxu0 0
    %1295 = vmatprep.subr.bf16.mxu0 0
    %1296 = vmatpush1.bf16.msra.mxu0 0
    %1297 = vmatprep.subr.bf16.mxu0 0
    %1298 = vmatpush1.bf16.msra.mxu0 0
    %1299 = vmatprep.subr.bf16.mxu0 0
    %1300 = vmatpush1.bf16.msra.mxu0 0
    %1301 = vmatprep.subr.bf16.mxu0 0
    %1302 = vmatpush1.bf16.msra.mxu0 0
    %1303 = vmatprep.subr.bf16.mxu0 0
    %1304 = vmatpush1.bf16.msra.mxu0 0
    %1305 = vmatprep.mubr.bf16.mxu0 0
    %1306 = vmatmul.mubr.bf16.gmra.mrb[0].mxu0 0
    %v1307 = vpop.f32.mrb[0].mxu0
    %v1308 = vadd.f32 0.0, %v1307
    %v1309 = vpop.f32.mrb[0].mxu0
    %v1310 = vadd.f32 0.0, %v1309
    %v1311 = vpop.f32.mrb[0].mxu0
    %v1312 = vadd.f32 0.0, %v1311
    %v1313 = vpop.f32.mrb[0].mxu0
    %v1314 = vadd.f32 0.0, %v1313
    %1315 = vdwg.mxu0
    %1316 = vmatprep.subr.bf16.mxu0 0
    %1317 = vmatpush1.bf16.msra.mxu0 %v1227
    %1318 = vmatprep.subr.bf16.mxu0 0
    %1319 = vmatpush1.bf16.msra.mxu0 %v1230
    %1320 = vmatprep.subr.bf16.mxu0 0
    %1321 = vmatpush1.bf16.msra.mxu0 %v1233
    %1322 = vmatprep.subr.bf16.mxu0 0
    %1323 = vmatpush1.bf16.msra.mxu0 %v1236
    %1324 = vmatprep.subr.bf16.mxu0 0
    %1325 = vmatpush1.bf16.msra.mxu0 %v1239
    %1326 = vmatprep.subr.bf16.mxu0 0
    %1327 = vmatpush1.bf16.msra.mxu0 %v1242
    %1328 = vmatprep.subr.bf16.mxu0 0
    %1329 = vmatpush1.bf16.msra.mxu0 %v1245
    %1330 = vmatprep.subr.bf16.mxu0 0
    %1331 = vmatpush1.bf16.msra.mxu0 %v1248
    %1332 = vmatprep.subr.bf16.mxu0 0
    %1333 = vmatpush1.bf16.msra.mxu0 0
    %1334 = vmatprep.subr.bf16.mxu0 0
    %1335 = vmatpush1.bf16.msra.mxu0 0
    %1336 = vmatprep.subr.bf16.mxu0 0
    %1337 = vmatpush1.bf16.msra.mxu0 0
    %1338 = vmatprep.subr.bf16.mxu0 0
    %1339 = vmatpush1.bf16.msra.mxu0 0
    %1340 = vmatprep.subr.bf16.mxu0 0
    %1341 = vmatpush1.bf16.msra.mxu0 0
    %1342 = vmatprep.subr.bf16.mxu0 0
    %1343 = vmatpush1.bf16.msra.mxu0 0
    %1344 = vmatprep.subr.bf16.mxu0 0
    %1345 = vmatpush1.bf16.msra.mxu0 0
    %1346 = vmatprep.subr.bf16.mxu0 0
    %1347 = vmatpush1.bf16.msra.mxu0 0
    %1348 = vmatprep.mubr.bf16.mxu0 0
    %1349 = vmatmul.mubr.bf16.gmra.mrb[0].mxu0 0
    %v1350 = vpop.f32.mrb[0].mxu0
    %v1351 = vadd.f32 0.0, %v1350
    %v1352 = vpop.f32.mrb[0].mxu0
    %v1353 = vpop.f32.mrb[0].mxu0
    %v1354 = vadd.f32 0.0, %v1353
    %v1355 = vpop.f32.mrb[0].mxu0
    %1356 = vdwg.mxu0
    %v1357 = vadd.f32 %v1139, %v1308
    %v1358 = vadd.f32 %v1142, %v1312
    %v1359 = vxor.u32 %v1357, 2147483648
    %v1360 = vxor.u32 %v1358, 2147483648
    %v1361 = vmul.f32 %v1359, 1.442695
    %v1362 = vpow.pop %v1361
    %v1363 = vmul.f32 %v1360, 1.442695
    %v1364 = vpow.pop %v1363
    %v1365 = vadd.f32 %v1362, 1.0
    %v1366 = vadd.f32 %v1364, 1.0
    %v1367 = vrcp.pop %v1365
    %v1368 = vmul.f32 1.0, %v1367
    %v1369 = vrcp.pop %v1366
    %v1370 = vmul.f32 1.0, %v1369
    %v1371 = vadd.f32 %v1140, %v1310
    %v1372 = vadd.f32 %v1143, %v1314
    %v1373 = vxor.u32 %v1371, 2147483648
    %v1374 = vxor.u32 %v1372, 2147483648
    %v1375 = vmul.f32 %v1373, 1.442695
    %v1376 = vpow.pop %v1375
    %v1377 = vmul.f32 %v1374, 1.442695
    %v1378 = vpow.pop %v1377
    %v1379 = vadd.f32 %v1376, 1.0
    %v1380 = vadd.f32 %v1378, 1.0
    %v1381 = vrcp.pop %v1379
    %v1382 = vmul.f32 1.0, %v1381
    %v1383 = vrcp.pop %v1380
    %v1384 = vmul.f32 1.0, %v1383
    %v1385 = vadd.f32 %v1351, %v1134
    %v1386 = vadd.f32 %v1354, %v1134
    %v1387 = vmul.f32 %v1368, %v1385
    %v1388 = vmul.f32 %v1370, %v1386
    %v1389 = vadd.f32 %v1141, %v1387
    %v1390 = vadd.f32 %v1144, %v1388
    %v1391 = vtanh.pop %v1389
    %v1392 = vtanh.pop %v1390
    %v1393 = vsub.f32 0.0, %v1391
    %v1394 = vsub.f32 0.0, %v1392
    %v1395 = vmul.f32 %v1382, %v1393
    %v1396 = vmul.f32 %v1384, %v1394
    %v1397 = vadd.f32 %v1391, %v1395
    %v1398 = vadd.f32 %v1392, %v1396
    %v1399 = vld [vmem:[%s493] sm:$0xff]
    %v1400 = vld [vmem:[%s493 + $0x8] sm:$0xff]
    %v1401 = vld [vmem:[%s493 + $0x10] sm:$0xff]
    %v1402 = vunpack.c.l.bf16 %v1399
    %v1403 = vunpack.c.l.bf16 %v1400
    %v1404 = vunpack.c.l.bf16 %v1401
    %v1405 = vunpack.c.h.bf16 %v1399
    %v1406 = vunpack.c.h.bf16 %v1400
    %v1407 = vunpack.c.h.bf16 %v1401
    %v1408 = vpack.c.bf16 %v1398, %v1397
    %1409 = vmatprep.subr.bf16.mxu0 %v1226
    %1410 = vmatpush1.bf16.msra.mxu0 %v1225
    %1411 = vmatprep.subr.bf16.mxu0 %v1229
    %1412 = vmatpush1.bf16.msra.mxu0 %v1228
    %1413 = vmatprep.subr.bf16.mxu0 %v1232
    %1414 = vmatpush1.bf16.msra.mxu0 %v1231
    %1415 = vmatprep.subr.bf16.mxu0 %v1235
    %1416 = vmatpush1.bf16.msra.mxu0 %v1234
    %1417 = vmatprep.subr.bf16.mxu0 %v1238
    %1418 = vmatpush1.bf16.msra.mxu0 %v1237
    %1419 = vmatprep.subr.bf16.mxu0 %v1241
    %1420 = vmatpush1.bf16.msra.mxu0 %v1240
    %1421 = vmatprep.subr.bf16.mxu0 %v1244
    %1422 = vmatpush1.bf16.msra.mxu0 %v1243
    %1423 = vmatprep.subr.bf16.mxu0 %v1247
    %1424 = vmatpush1.bf16.msra.mxu0 %v1246
    %1425 = vmatprep.subr.bf16.mxu0 0
    %1426 = vmatpush1.bf16.msra.mxu0 0
    %1427 = vmatprep.subr.bf16.mxu0 0
    %1428 = vmatpush1.bf16.msra.mxu0 0
    %1429 = vmatprep.subr.bf16.mxu0 0
    %1430 = vmatpush1.bf16.msra.mxu0 0
    %1431 = vmatprep.subr.bf16.mxu0 0
    %1432 = vmatpush1.bf16.msra.mxu0 0
    %1433 = vmatprep.subr.bf16.mxu0 0
    %1434 = vmatpush1.bf16.msra.mxu0 0
    %1435 = vmatprep.subr.bf16.mxu0 0
    %1436 = vmatpush1.bf16.msra.mxu0 0
    %1437 = vmatprep.subr.bf16.mxu0 0
    %1438 = vmatpush1.bf16.msra.mxu0 0
    %1439 = vmatprep.subr.bf16.mxu0 0
    %1440 = vmatpush1.bf16.msra.mxu0 0
    %1441 = vmatprep.mubr.bf16.mxu0 0
    %1442 = vmatmul.mubr.bf16.gmra.mrb[0].mxu0 %v1408
    %v1443 = vpop.f32.mrb[0].mxu0
    %v1444 = vadd.f32 0.0, %v1443
    %v1445 = vpop.f32.mrb[0].mxu0
    %v1446 = vadd.f32 0.0, %v1445
    %v1447 = vpop.f32.mrb[0].mxu0
    %v1448 = vadd.f32 0.0, %v1447
    %v1449 = vpop.f32.mrb[0].mxu0
    %v1450 = vadd.f32 0.0, %v1449
    %1451 = vdwg.mxu0
    %1452 = vmatprep.subr.bf16.mxu0 0
    %1453 = vmatpush1.bf16.msra.mxu0 %v1227
    %1454 = vmatprep.subr.bf16.mxu0 0
    %1455 = vmatpush1.bf16.msra.mxu0 %v1230
    %1456 = vmatprep.subr.bf16.mxu0 0
    %1457 = vmatpush1.bf16.msra.mxu0 %v1233
    %1458 = vmatprep.subr.bf16.mxu0 0
    %1459 = vmatpush1.bf16.msra.mxu0 %v1236
    %1460 = vmatprep.subr.bf16.mxu0 0
    %1461 = vmatpush1.bf16.msra.mxu0 %v1239
    %1462 = vmatprep.subr.bf16.mxu0 0
    %1463 = vmatpush1.bf16.msra.mxu0 %v1242
    %1464 = vmatprep.subr.bf16.mxu0 0
    %1465 = vmatpush1.bf16.msra.mxu0 %v1245
    %1466 = vmatprep.subr.bf16.mxu0 0
    %1467 = vmatpush1.bf16.msra.mxu0 %v1248
    %1468 = vmatprep.subr.bf16.mxu0 0
    %1469 = vmatpush1.bf16.msra.mxu0 0
    %1470 = vmatprep.subr.bf16.mxu0 0
    %1471 = vmatpush1.bf16.msra.mxu0 0
    %1472 = vmatprep.subr.bf16.mxu0 0
    %1473 = vmatpush1.bf16.msra.mxu0 0
    %1474 = vmatprep.subr.bf16.mxu0 0
    %1475 = vmatpush1.bf16.msra.mxu0 0
    %1476 = vmatprep.subr.bf16.mxu0 0
    %1477 = vmatpush1.bf16.msra.mxu0 0
    %1478 = vmatprep.subr.bf16.mxu0 0
    %1479 = vmatpush1.bf16.msra.mxu0 0
    %1480 = vmatprep.subr.bf16.mxu0 0
    %1481 = vmatpush1.bf16.msra.mxu0 0
    %1482 = vmatprep.subr.bf16.mxu0 0
    %1483 = vmatpush1.bf16.msra.mxu0 0
    %1484 = vmatprep.mubr.bf16.mxu0 0
    %1485 = vmatmul.mubr.bf16.gmra.mrb[0].mxu0 %v1408
    %v1486 = vpop.f32.mrb[0].mxu0
    %v1487 = vadd.f32 0.0, %v1486
    %v1488 = vpop.f32.mrb[0].mxu0
    %v1489 = vpop.f32.mrb[0].mxu0
    %v1490 = vadd.f32 0.0, %v1489
    %v1491 = vpop.f32.mrb[0].mxu0
    %1492 = vdwg.mxu0
    %v1493 = vadd.f32 %v1402, %v1444
    %v1494 = vadd.f32 %v1405, %v1448
    %v1495 = vxor.u32 %v1493, 2147483648
    %v1496 = vxor.u32 %v1494, 2147483648
    %v1497 = vmul.f32 %v1495, 1.442695
    %v1498 = vpow.pop %v1497
    %v1499 = vmul.f32 %v1496, 1.442695
    %v1500 = vpow.pop %v1499
    %v1501 = vadd.f32 %v1498, 1.0
    %v1502 = vadd.f32 %v1500, 1.0
    %v1503 = vrcp.pop %v1501
    %v1504 = vmul.f32 1.0, %v1503
    %v1505 = vrcp.pop %v1502
    %v1506 = vmul.f32 1.0, %v1505
    %v1507 = vadd.f32 %v1403, %v1446
    %v1508 = vadd.f32 %v1406, %v1450
    %v1509 = vxor.u32 %v1507, 2147483648
    %v1510 = vxor.u32 %v1508, 2147483648
    %v1511 = vmul.f32 %v1509, 1.442695
    %v1512 = vpow.pop %v1511
    %v1513 = vmul.f32 %v1510, 1.442695
    %v1514 = vpow.pop %v1513
    %v1515 = vadd.f32 %v1512, 1.0
    %v1516 = vadd.f32 %v1514, 1.0
    %v1517 = vrcp.pop %v1515
    %v1518 = vmul.f32 1.0, %v1517
    %v1519 = vrcp.pop %v1516
    %v1520 = vmul.f32 1.0, %v1519
    %v1521 = vadd.f32 %v1487, %v1134
    %v1522 = vadd.f32 %v1490, %v1134
    %v1523 = vmul.f32 %v1504, %v1521
    %v1524 = vmul.f32 %v1506, %v1522
    %v1525 = vadd.f32 %v1404, %v1523
    %v1526 = vadd.f32 %v1407, %v1524
    %v1527 = vtanh.pop %v1525
    %v1528 = vtanh.pop %v1526
    %v1529 = vsub.f32 %v1397, %v1527
    %v1530 = vsub.f32 %v1398, %v1528
    %v1531 = vmul.f32 %v1518, %v1529
    %v1532 = vmul.f32 %v1520, %v1530
    %v1533 = vadd.f32 %v1527, %v1531
    %v1534 = vadd.f32 %v1528, %v1532
    %v1535 = vld [vmem:[%s593] sm:$0xff]
    %v1536 = vld [vmem:[%s593 + $0x8] sm:$0xff]
    %v1537 = vld [vmem:[%s593 + $0x10] sm:$0xff]
    %v1538 = vunpack.c.l.bf16 %v1535
    %v1539 = vunpack.c.l.bf16 %v1536
    %v1540 = vunpack.c.l.bf16 %v1537
    %v1541 = vunpack.c.h.bf16 %v1535
    %v1542 = vunpack.c.h.bf16 %v1536
    %v1543 = vunpack.c.h.bf16 %v1537
    %v1544 = vpack.c.bf16 %v1534, %v1533
    %1545 = vmatprep.subr.bf16.mxu0 %v1226
    %1546 = vmatpush1.bf16.msra.mxu0 %v1225
    %1547 = vmatprep.subr.bf16.mxu0 %v1229
    %1548 = vmatpush1.bf16.msra.mxu0 %v1228
    %1549 = vmatprep.subr.bf16.mxu0 %v1232
    %1550 = vmatpush1.bf16.msra.mxu0 %v1231
    %1551 = vmatprep.subr.bf16.mxu0 %v1235
    %1552 = vmatpush1.bf16.msra.mxu0 %v1234
    %1553 = vmatprep.subr.bf16.mxu0 %v1238
    %1554 = vmatpush1.bf16.msra.mxu0 %v1237
    %1555 = vmatprep.subr.bf16.mxu0 %v1241
    %1556 = vmatpush1.bf16.msra.mxu0 %v1240
    %1557 = vmatprep.subr.bf16.mxu0 %v1244
    %1558 = vmatpush1.bf16.msra.mxu0 %v1243
    %1559 = vmatprep.subr.bf16.mxu0 %v1247
    %1560 = vmatpush1.bf16.msra.mxu0 %v1246
    %1561 = vmatprep.subr.bf16.mxu0 0
    %1562 = vmatpush1.bf16.msra.mxu0 0
    %1563 = vmatprep.subr.bf16.mxu0 0
    %1564 = vmatpush1.bf16.msra.mxu0 0
    %1565 = vmatprep.subr.bf16.mxu0 0
    %1566 = vmatpush1.bf16.msra.mxu0 0
    %1567 = vmatprep.subr.bf16.mxu0 0
    %1568 = vmatpush1.bf16.msra.mxu0 0
    %1569 = vmatprep.subr.bf16.mxu0 0
    %1570 = vmatpush1.bf16.msra.mxu0 0
    %1571 = vmatprep.subr.bf16.mxu0 0
    %1572 = vmatpush1.bf16.msra.mxu0 0
    %1573 = vmatprep.subr.bf16.mxu0 0
    %1574 = vmatpush1.bf16.msra.mxu0 0
    %1575 = vmatprep.subr.bf16.mxu0 0
    %1576 = vmatpush1.bf16.msra.mxu0 0
    %1577 = vmatprep.mubr.bf16.mxu0 0
    %1578 = vmatmul.mubr.bf16.gmra.mrb[0].mxu0 %v1544
    %v1579 = vpop.f32.mrb[0].mxu0
    %v1580 = vadd.f32 0.0, %v1579
    %v1581 = vpop.f32.mrb[0].mxu0
    %v1582 = vadd.f32 0.0, %v1581
    %v1583 = vpop.f32.mrb[0].mxu0
    %v1584 = vadd.f32 0.0, %v1583
    %v1585 = vpop.f32.mrb[0].mxu0
    %v1586 = vadd.f32 0.0, %v1585
    %1587 = vdwg.mxu0
    %1588 = vmatprep.subr.bf16.mxu0 0
    %1589 = vmatpush1.bf16.msra.mxu0 %v1227
    %1590 = vmatprep.subr.bf16.mxu0 0
    %1591 = vmatpush1.bf16.msra.mxu0 %v1230
    %1592 = vmatprep.subr.bf16.mxu0 0
    %1593 = vmatpush1.bf16.msra.mxu0 %v1233
    %1594 = vmatprep.subr.bf16.mxu0 0
    %1595 = vmatpush1.bf16.msra.mxu0 %v1236
    %1596 = vmatprep.subr.bf16.mxu0 0
    %1597 = vmatpush1.bf16.msra.mxu0 %v1239
    %1598 = vmatprep.subr.bf16.mxu0 0
    %1599 = vmatpush1.bf16.msra.mxu0 %v1242
    %1600 = vmatprep.subr.bf16.mxu0 0
    %1601 = vmatpush1.bf16.msra.mxu0 %v1245
    %1602 = vmatprep.subr.bf16.mxu0 0
    %1603 = vmatpush1.bf16.msra.mxu0 %v1248
    %1604 = vmatprep.subr.bf16.mxu0 0
    %1605 = vmatpush1.bf16.msra.mxu0 0
    %1606 = vmatprep.subr.bf16.mxu0 0
    %1607 = vmatpush1.bf16.msra.mxu0 0
    %1608 = vmatprep.subr.bf16.mxu0 0
    %1609 = vmatpush1.bf16.msra.mxu0 0
    %1610 = vmatprep.subr.bf16.mxu0 0
    %1611 = vmatpush1.bf16.msra.mxu0 0
    %1612 = vmatprep.subr.bf16.mxu0 0
    %1613 = vmatpush1.bf16.msra.mxu0 0
    %1614 = vmatprep.subr.bf16.mxu0 0
    %1615 = vmatpush1.bf16.msra.mxu0 0
    %1616 = vmatprep.subr.bf16.mxu0 0
    %1617 = vmatpush1.bf16.msra.mxu0 0
    %1618 = vmatprep.subr.bf16.mxu0 0
    %1619 = vmatpush1.bf16.msra.mxu0 0
    %1620 = vmatprep.mubr.bf16.mxu0 0
    %1621 = vmatmul.mubr.bf16.gmra.mrb[0].mxu0 %v1544
    %v1622 = vpop.f32.mrb[0].mxu0
    %v1623 = vadd.f32 0.0, %v1622
    %v1624 = vpop.f32.mrb[0].mxu0
    %v1625 = vpop.f32.mrb[0].mxu0
    %v1626 = vadd.f32 0.0, %v1625
    %v1627 = vpop.f32.mrb[0].mxu0
    %1628 = vdwg.mxu0
    %v1629 = vadd.f32 %v1538, %v1580
    %v1630 = vadd.f32 %v1541, %v1584
    %v1631 = vxor.u32 %v1629, 2147483648
    %v1632 = vxor.u32 %v1630, 2147483648
    %v1633 = vmul.f32 %v1631, 1.442695
    %v1634 = vpow.pop %v1633
    %v1635 = vmul.f32 %v1632, 1.442695
    %v1636 = vpow.pop %v1635
    %v1637 = vadd.f32 %v1634, 1.0
    %v1638 = vadd.f32 %v1636, 1.0
    %v1639 = vrcp.pop %v1637
    %v1640 = vmul.f32 1.0, %v1639
    %v1641 = vrcp.pop %v1638
    %v1642 = vmul.f32 1.0, %v1641
    %v1643 = vadd.f32 %v1539, %v1582
    %v1644 = vadd.f32 %v1542, %v1586
    %v1645 = vxor.u32 %v1643, 2147483648
    %v1646 = vxor.u32 %v1644, 2147483648
    %v1647 = vmul.f32 %v1645, 1.442695
    %v1648 = vpow.pop %v1647
    %v1649 = vmul.f32 %v1646, 1.442695
    %v1650 = vpow.pop %v1649
    %v1651 = vadd.f32 %v1648, 1.0
    %v1652 = vadd.f32 %v1650, 1.0
    %v1653 = vrcp.pop %v1651
    %v1654 = vmul.f32 1.0, %v1653
    %v1655 = vrcp.pop %v1652
    %v1656 = vmul.f32 1.0, %v1655
    %v1657 = vadd.f32 %v1623, %v1134
    %v1658 = vadd.f32 %v1626, %v1134
    %v1659 = vmul.f32 %v1640, %v1657
    %v1660 = vmul.f32 %v1642, %v1658
    %v1661 = vadd.f32 %v1540, %v1659
    %v1662 = vadd.f32 %v1543, %v1660
    %v1663 = vtanh.pop %v1661
    %v1664 = vtanh.pop %v1662
    %v1665 = vsub.f32 %v1533, %v1663
    %v1666 = vsub.f32 %v1534, %v1664
    %v1667 = vmul.f32 %v1654, %v1665
    %v1668 = vmul.f32 %v1656, %v1666
    %v1669 = vadd.f32 %v1663, %v1667
    %v1670 = vadd.f32 %v1664, %v1668
    %v1671 = vld [vmem:[%s693] sm:$0xff]
    %v1672 = vld [vmem:[%s693 + $0x8] sm:$0xff]
    %v1673 = vld [vmem:[%s693 + $0x10] sm:$0xff]
    %v1674 = vunpack.c.l.bf16 %v1671
    %v1675 = vunpack.c.l.bf16 %v1672
    %v1676 = vunpack.c.l.bf16 %v1673
    %v1677 = vunpack.c.h.bf16 %v1671
    %v1678 = vunpack.c.h.bf16 %v1672
    %v1679 = vunpack.c.h.bf16 %v1673
    %v1680 = vpack.c.bf16 %v1670, %v1669
    %1681 = vmatprep.subr.bf16.mxu0 %v1226
    %1682 = vmatpush1.bf16.msra.mxu0 %v1225
    %1683 = vmatprep.subr.bf16.mxu0 %v1229
    %1684 = vmatpush1.bf16.msra.mxu0 %v1228
    %1685 = vmatprep.subr.bf16.mxu0 %v1232
    %1686 = vmatpush1.bf16.msra.mxu0 %v1231
    %1687 = vmatprep.subr.bf16.mxu0 %v1235
    %1688 = vmatpush1.bf16.msra.mxu0 %v1234
    %1689 = vmatprep.subr.bf16.mxu0 %v1238
    %1690 = vmatpush1.bf16.msra.mxu0 %v1237
    %1691 = vmatprep.subr.bf16.mxu0 %v1241
    %1692 = vmatpush1.bf16.msra.mxu0 %v1240
    %1693 = vmatprep.subr.bf16.mxu0 %v1244
    %1694 = vmatpush1.bf16.msra.mxu0 %v1243
    %1695 = vmatprep.subr.bf16.mxu0 %v1247
    %1696 = vmatpush1.bf16.msra.mxu0 %v1246
    %1697 = vmatprep.subr.bf16.mxu0 0
    %1698 = vmatpush1.bf16.msra.mxu0 0
    %1699 = vmatprep.subr.bf16.mxu0 0
    %1700 = vmatpush1.bf16.msra.mxu0 0
    %1701 = vmatprep.subr.bf16.mxu0 0
    %1702 = vmatpush1.bf16.msra.mxu0 0
    %1703 = vmatprep.subr.bf16.mxu0 0
    %1704 = vmatpush1.bf16.msra.mxu0 0
    %1705 = vmatprep.subr.bf16.mxu0 0
    %1706 = vmatpush1.bf16.msra.mxu0 0
    %1707 = vmatprep.subr.bf16.mxu0 0
    %1708 = vmatpush1.bf16.msra.mxu0 0
    %1709 = vmatprep.subr.bf16.mxu0 0
    %1710 = vmatpush1.bf16.msra.mxu0 0
    %1711 = vmatprep.subr.bf16.mxu0 0
    %1712 = vmatpush1.bf16.msra.mxu0 0
    %1713 = vmatprep.mubr.bf16.mxu0 0
    %1714 = vmatmul.mubr.bf16.gmra.mrb[0].mxu0 %v1680
    %v1715 = vpop.f32.mrb[0].mxu0
    %v1716 = vadd.f32 0.0, %v1715
    %v1717 = vpop.f32.mrb[0].mxu0
    %v1718 = vadd.f32 0.0, %v1717
    %v1719 = vpop.f32.mrb[0].mxu0
    %v1720 = vadd.f32 0.0, %v1719
    %v1721 = vpop.f32.mrb[0].mxu0
    %v1722 = vadd.f32 0.0, %v1721
    %1723 = vdwg.mxu0
    %1724 = vmatprep.subr.bf16.mxu0 0
    %1725 = vmatpush1.bf16.msra.mxu0 %v1227
    %1726 = vmatprep.subr.bf16.mxu0 0
    %1727 = vmatpush1.bf16.msra.mxu0 %v1230
    %1728 = vmatprep.subr.bf16.mxu0 0
    %1729 = vmatpush1.bf16.msra.mxu0 %v1233
    %1730 = vmatprep.subr.bf16.mxu0 0
    %1731 = vmatpush1.bf16.msra.mxu0 %v1236
    %1732 = vmatprep.subr.bf16.mxu0 0
    %1733 = vmatpush1.bf16.msra.mxu0 %v1239
    %1734 = vmatprep.subr.bf16.mxu0 0
    %1735 = vmatpush1.bf16.msra.mxu0 %v1242
    %1736 = vmatprep.subr.bf16.mxu0 0
    %1737 = vmatpush1.bf16.msra.mxu0 %v1245
    %1738 = vmatprep.subr.bf16.mxu0 0
    %1739 = vmatpush1.bf16.msra.mxu0 %v1248
    %1740 = vmatprep.subr.bf16.mxu0 0
    %1741 = vmatpush1.bf16.msra.mxu0 0
    %1742 = vmatprep.subr.bf16.mxu0 0
    %1743 = vmatpush1.bf16.msra.mxu0 0
    %1744 = vmatprep.subr.bf16.mxu0 0
    %1745 = vmatpush1.bf16.msra.mxu0 0
    %1746 = vmatprep.subr.bf16.mxu0 0
    %1747 = vmatpush1.bf16.msra.mxu0 0
    %1748 = vmatprep.subr.bf16.mxu0 0
    %1749 = vmatpush1.bf16.msra.mxu0 0
    %1750 = vmatprep.subr.bf16.mxu0 0
    %1751 = vmatpush1.bf16.msra.mxu0 0
    %1752 = vmatprep.subr.bf16.mxu0 0
    %1753 = vmatpush1.bf16.msra.mxu0 0
    %1754 = vmatprep.subr.bf16.mxu0 0
    %1755 = vmatpush1.bf16.msra.mxu0 0
    %1756 = vmatprep.mubr.bf16.mxu0 0
    %1757 = vmatmul.mubr.bf16.gmra.mrb[0].mxu0 %v1680
    %v1758 = vpop.f32.mrb[0].mxu0
    %v1759 = vadd.f32 0.0, %v1758
    %v1760 = vpop.f32.mrb[0].mxu0
    %v1761 = vpop.f32.mrb[0].mxu0
    %v1762 = vadd.f32 0.0, %v1761
    %v1763 = vpop.f32.mrb[0].mxu0
    %1764 = vdwg.mxu0
    %v1765 = vadd.f32 %v1674, %v1716
    %v1766 = vadd.f32 %v1677, %v1720
    %v1767 = vxor.u32 %v1765, 2147483648
    %v1768 = vxor.u32 %v1766, 2147483648
    %v1769 = vmul.f32 %v1767, 1.442695
    %v1770 = vpow.pop %v1769
    %v1771 = vmul.f32 %v1768, 1.442695
    %v1772 = vpow.pop %v1771
    %v1773 = vadd.f32 %v1770, 1.0
    %v1774 = vadd.f32 %v1772, 1.0
    %v1775 = vrcp.pop %v1773
    %v1776 = vmul.f32 1.0, %v1775
    %v1777 = vrcp.pop %v1774
    %v1778 = vmul.f32 1.0, %v1777
    %v1779 = vadd.f32 %v1675, %v1718
    %v1780 = vadd.f32 %v1678, %v1722
    %v1781 = vxor.u32 %v1779, 2147483648
    %v1782 = vxor.u32 %v1780, 2147483648
    %v1783 = vmul.f32 %v1781, 1.442695
    %v1784 = vpow.pop %v1783
    %v1785 = vmul.f32 %v1782, 1.442695
    %v1786 = vpow.pop %v1785
    %v1787 = vadd.f32 %v1784, 1.0
    %v1788 = vadd.f32 %v1786, 1.0
    %v1789 = vrcp.pop %v1787
    %v1790 = vmul.f32 1.0, %v1789
    %v1791 = vrcp.pop %v1788
    %v1792 = vmul.f32 1.0, %v1791
    %v1793 = vadd.f32 %v1759, %v1134
    %v1794 = vadd.f32 %v1762, %v1134
    %v1795 = vmul.f32 %v1776, %v1793
    %v1796 = vmul.f32 %v1778, %v1794
    %v1797 = vadd.f32 %v1676, %v1795
    %v1798 = vadd.f32 %v1679, %v1796
    %v1799 = vtanh.pop %v1797
    %v1800 = vtanh.pop %v1798
    %v1801 = vsub.f32 %v1669, %v1799
    %v1802 = vsub.f32 %v1670, %v1800
    %v1803 = vmul.f32 %v1790, %v1801
    %v1804 = vmul.f32 %v1792, %v1802
    %v1805 = vadd.f32 %v1799, %v1803
    %v1806 = vadd.f32 %v1800, %v1804
    %v1807 = vld [vmem:[%s793] sm:$0xff]
    %v1808 = vld [vmem:[%s793 + $0x8] sm:$0xff]
    %v1809 = vld [vmem:[%s793 + $0x10] sm:$0xff]
    %v1810 = vunpack.c.l.bf16 %v1807
    %v1811 = vunpack.c.l.bf16 %v1808
    %v1812 = vunpack.c.l.bf16 %v1809
    %v1813 = vunpack.c.h.bf16 %v1807
    %v1814 = vunpack.c.h.bf16 %v1808
    %v1815 = vunpack.c.h.bf16 %v1809
    %v1816 = vpack.c.bf16 %v1806, %v1805
    %1817 = vmatprep.subr.bf16.mxu0 %v1226
    %1818 = vmatpush1.bf16.msra.mxu0 %v1225
    %1819 = vmatprep.subr.bf16.mxu0 %v1229
    %1820 = vmatpush1.bf16.msra.mxu0 %v1228
    %1821 = vmatprep.subr.bf16.mxu0 %v1232
    %1822 = vmatpush1.bf16.msra.mxu0 %v1231
    %1823 = vmatprep.subr.bf16.mxu0 %v1235
    %1824 = vmatpush1.bf16.msra.mxu0 %v1234
    %1825 = vmatprep.subr.bf16.mxu0 %v1238
    %1826 = vmatpush1.bf16.msra.mxu0 %v1237
    %1827 = vmatprep.subr.bf16.mxu0 %v1241
    %1828 = vmatpush1.bf16.msra.mxu0 %v1240
    %1829 = vmatprep.subr.bf16.mxu0 %v1244
    %1830 = vmatpush1.bf16.msra.mxu0 %v1243
    %1831 = vmatprep.subr.bf16.mxu0 %v1247
    %1832 = vmatpush1.bf16.msra.mxu0 %v1246
    %1833 = vmatprep.subr.bf16.mxu0 0
    %1834 = vmatpush1.bf16.msra.mxu0 0
    %1835 = vmatprep.subr.bf16.mxu0 0
    %1836 = vmatpush1.bf16.msra.mxu0 0
    %1837 = vmatprep.subr.bf16.mxu0 0
    %1838 = vmatpush1.bf16.msra.mxu0 0
    %1839 = vmatprep.subr.bf16.mxu0 0
    %1840 = vmatpush1.bf16.msra.mxu0 0
    %1841 = vmatprep.subr.bf16.mxu0 0
    %1842 = vmatpush1.bf16.msra.mxu0 0
    %1843 = vmatprep.subr.bf16.mxu0 0
    %1844 = vmatpush1.bf16.msra.mxu0 0
    %1845 = vmatprep.subr.bf16.mxu0 0
    %1846 = vmatpush1.bf16.msra.mxu0 0
    %1847 = vmatprep.subr.bf16.mxu0 0
    %1848 = vmatpush1.bf16.msra.mxu0 0
    %1849 = vmatprep.mubr.bf16.mxu0 0
    %1850 = vmatmul.mubr.bf16.gmra.mrb[0].mxu0 %v1816
    %v1851 = vpop.f32.mrb[0].mxu0
    %v1852 = vadd.f32 0.0, %v1851
    %v1853 = vpop.f32.mrb[0].mxu0
    %v1854 = vadd.f32 0.0, %v1853
    %v1855 = vpop.f32.mrb[0].mxu0
    %v1856 = vadd.f32 0.0, %v1855
    %v1857 = vpop.f32.mrb[0].mxu0
    %v1858 = vadd.f32 0.0, %v1857
    %1859 = vdwg.mxu0
    %1860 = vmatprep.subr.bf16.mxu0 0
    %1861 = vmatpush1.bf16.msra.mxu0 %v1227
    %1862 = vmatprep.subr.bf16.mxu0 0
    %1863 = vmatpush1.bf16.msra.mxu0 %v1230
    %1864 = vmatprep.subr.bf16.mxu0 0
    %1865 = vmatpush1.bf16.msra.mxu0 %v1233
    %1866 = vmatprep.subr.bf16.mxu0 0
    %1867 = vmatpush1.bf16.msra.mxu0 %v1236
    %1868 = vmatprep.subr.bf16.mxu0 0
    %1869 = vmatpush1.bf16.msra.mxu0 %v1239
    %1870 = vmatprep.subr.bf16.mxu0 0
    %1871 = vmatpush1.bf16.msra.mxu0 %v1242
    %1872 = vmatprep.subr.bf16.mxu0 0
    %1873 = vmatpush1.bf16.msra.mxu0 %v1245
    %1874 = vmatprep.subr.bf16.mxu0 0
    %1875 = vmatpush1.bf16.msra.mxu0 %v1248
    %1876 = vmatprep.subr.bf16.mxu0 0
    %1877 = vmatpush1.bf16.msra.mxu0 0
    %1878 = vmatprep.subr.bf16.mxu0 0
    %1879 = vmatpush1.bf16.msra.mxu0 0
    %1880 = vmatprep.subr.bf16.mxu0 0
    %1881 = vmatpush1.bf16.msra.mxu0 0
    %1882 = vmatprep.subr.bf16.mxu0 0
    %1883 = vmatpush1.bf16.msra.mxu0 0
    %1884 = vmatprep.subr.bf16.mxu0 0
    %1885 = vmatpush1.bf16.msra.mxu0 0
    %1886 = vmatprep.subr.bf16.mxu0 0
    %1887 = vmatpush1.bf16.msra.mxu0 0
    %1888 = vmatprep.subr.bf16.mxu0 0
    %1889 = vmatpush1.bf16.msra.mxu0 0
    %1890 = vmatprep.subr.bf16.mxu0 0
    %1891 = vmatpush1.bf16.msra.mxu0 0
    %1892 = vmatprep.mubr.bf16.mxu0 0
    %1893 = vmatmul.mubr.bf16.gmra.mrb[0].mxu0 %v1816
    %v1894 = vpop.f32.mrb[0].mxu0
    %v1895 = vadd.f32 0.0, %v1894
    %v1896 = vpop.f32.mrb[0].mxu0
    %v1897 = vpop.f32.mrb[0].mxu0
    %v1898 = vadd.f32 0.0, %v1897
    %v1899 = vpop.f32.mrb[0].mxu0
    %1900 = vdwg.mxu0
    %v1901 = vadd.f32 %v1810, %v1852
    %v1902 = vadd.f32 %v1813, %v1856
    %v1903 = vxor.u32 %v1901, 2147483648
    %v1904 = vxor.u32 %v1902, 2147483648
    %v1905 = vmul.f32 %v1903, 1.442695
    %v1906 = vpow.pop %v1905
    %v1907 = vmul.f32 %v1904, 1.442695
    %v1908 = vpow.pop %v1907
    %v1909 = vadd.f32 %v1906, 1.0
    %v1910 = vadd.f32 %v1908, 1.0
    %v1911 = vrcp.pop %v1909
    %v1912 = vmul.f32 1.0, %v1911
    %v1913 = vrcp.pop %v1910
    %v1914 = vmul.f32 1.0, %v1913
    %v1915 = vadd.f32 %v1811, %v1854
    %v1916 = vadd.f32 %v1814, %v1858
    %v1917 = vxor.u32 %v1915, 2147483648
    %v1918 = vxor.u32 %v1916, 2147483648
    %v1919 = vmul.f32 %v1917, 1.442695
    %v1920 = vpow.pop %v1919
    %v1921 = vmul.f32 %v1918, 1.442695
    %v1922 = vpow.pop %v1921
    %v1923 = vadd.f32 %v1920, 1.0
    %v1924 = vadd.f32 %v1922, 1.0
    %v1925 = vrcp.pop %v1923
    %v1926 = vmul.f32 1.0, %v1925
    %v1927 = vrcp.pop %v1924
    %v1928 = vmul.f32 1.0, %v1927
    %v1929 = vadd.f32 %v1895, %v1134
    %v1930 = vadd.f32 %v1898, %v1134
    %v1931 = vmul.f32 %v1912, %v1929
    %v1932 = vmul.f32 %v1914, %v1930
    %v1933 = vadd.f32 %v1812, %v1931
    %v1934 = vadd.f32 %v1815, %v1932
    %v1935 = vtanh.pop %v1933
    %v1936 = vtanh.pop %v1934
    %v1937 = vsub.f32 %v1805, %v1935
    %v1938 = vsub.f32 %v1806, %v1936
    %v1939 = vmul.f32 %v1926, %v1937
    %v1940 = vmul.f32 %v1928, %v1938
    %v1941 = vadd.f32 %v1935, %v1939
    %v1942 = vadd.f32 %v1936, %v1940
    %v1943 = vld [vmem:[%s893] sm:$0xff]
    %v1944 = vld [vmem:[%s893 + $0x8] sm:$0xff]
    %v1945 = vld [vmem:[%s893 + $0x10] sm:$0xff]
    %v1946 = vunpack.c.l.bf16 %v1943
    %v1947 = vunpack.c.l.bf16 %v1944
    %v1948 = vunpack.c.l.bf16 %v1945
    %v1949 = vunpack.c.h.bf16 %v1943
    %v1950 = vunpack.c.h.bf16 %v1944
    %v1951 = vunpack.c.h.bf16 %v1945
    %v1952 = vpack.c.bf16 %v1942, %v1941
    %1953 = vmatprep.subr.bf16.mxu0 %v1226
    %1954 = vmatpush1.bf16.msra.mxu0 %v1225
    %1955 = vmatprep.subr.bf16.mxu0 %v1229
    %1956 = vmatpush1.bf16.msra.mxu0 %v1228
    %1957 = vmatprep.subr.bf16.mxu0 %v1232
    %1958 = vmatpush1.bf16.msra.mxu0 %v1231
    %1959 = vmatprep.subr.bf16.mxu0 %v1235
    %1960 = vmatpush1.bf16.msra.mxu0 %v1234
    %1961 = vmatprep.subr.bf16.mxu0 %v1238
    %1962 = vmatpush1.bf16.msra.mxu0 %v1237
    %1963 = vmatprep.subr.bf16.mxu0 %v1241
    %1964 = vmatpush1.bf16.msra.mxu0 %v1240
    %1965 = vmatprep.subr.bf16.mxu0 %v1244
    %1966 = vmatpush1.bf16.msra.mxu0 %v1243
    %1967 = vmatprep.subr.bf16.mxu0 %v1247
    %1968 = vmatpush1.bf16.msra.mxu0 %v1246
    %1969 = vmatprep.subr.bf16.mxu0 0
    %1970 = vmatpush1.bf16.msra.mxu0 0
    %1971 = vmatprep.subr.bf16.mxu0 0
    %1972 = vmatpush1.bf16.msra.mxu0 0
    %1973 = vmatprep.subr.bf16.mxu0 0
    %1974 = vmatpush1.bf16.msra.mxu0 0
    %1975 = vmatprep.subr.bf16.mxu0 0
    %1976 = vmatpush1.bf16.msra.mxu0 0
    %1977 = vmatprep.subr.bf16.mxu0 0
    %1978 = vmatpush1.bf16.msra.mxu0 0
    %1979 = vmatprep.subr.bf16.mxu0 0
    %1980 = vmatpush1.bf16.msra.mxu0 0
    %1981 = vmatprep.subr.bf16.mxu0 0
    %1982 = vmatpush1.bf16.msra.mxu0 0
    %1983 = vmatprep.subr.bf16.mxu0 0
    %1984 = vmatpush1.bf16.msra.mxu0 0
    %1985 = vmatprep.mubr.bf16.mxu0 0
    %1986 = vmatmul.mubr.bf16.gmra.mrb[0].mxu0 %v1952
    %v1987 = vpop.f32.mrb[0].mxu0
    %v1988 = vadd.f32 0.0, %v1987
    %v1989 = vpop.f32.mrb[0].mxu0
    %v1990 = vadd.f32 0.0, %v1989
    %v1991 = vpop.f32.mrb[0].mxu0
    %v1992 = vadd.f32 0.0, %v1991
    %v1993 = vpop.f32.mrb[0].mxu0
    %v1994 = vadd.f32 0.0, %v1993
    %1995 = vdwg.mxu0
    %1996 = vmatprep.subr.bf16.mxu0 0
    %1997 = vmatpush1.bf16.msra.mxu0 %v1227
    %1998 = vmatprep.subr.bf16.mxu0 0
    %1999 = vmatpush1.bf16.msra.mxu0 %v1230
    %2000 = vmatprep.subr.bf16.mxu0 0
    %2001 = vmatpush1.bf16.msra.mxu0 %v1233
    %2002 = vmatprep.subr.bf16.mxu0 0
    %2003 = vmatpush1.bf16.msra.mxu0 %v1236
    %2004 = vmatprep.subr.bf16.mxu0 0
    %2005 = vmatpush1.bf16.msra.mxu0 %v1239
    %2006 = vmatprep.subr.bf16.mxu0 0
    %2007 = vmatpush1.bf16.msra.mxu0 %v1242
    %2008 = vmatprep.subr.bf16.mxu0 0
    %2009 = vmatpush1.bf16.msra.mxu0 %v1245
    %2010 = vmatprep.subr.bf16.mxu0 0
    %2011 = vmatpush1.bf16.msra.mxu0 %v1248
    %2012 = vmatprep.subr.bf16.mxu0 0
    %2013 = vmatpush1.bf16.msra.mxu0 0
    %2014 = vmatprep.subr.bf16.mxu0 0
    %2015 = vmatpush1.bf16.msra.mxu0 0
    %2016 = vmatprep.subr.bf16.mxu0 0
    %2017 = vmatpush1.bf16.msra.mxu0 0
    %2018 = vmatprep.subr.bf16.mxu0 0
    %2019 = vmatpush1.bf16.msra.mxu0 0
    %2020 = vmatprep.subr.bf16.mxu0 0
    %2021 = vmatpush1.bf16.msra.mxu0 0
    %2022 = vmatprep.subr.bf16.mxu0 0
    %2023 = vmatpush1.bf16.msra.mxu0 0
    %2024 = vmatprep.subr.bf16.mxu0 0
    %2025 = vmatpush1.bf16.msra.mxu0 0
    %2026 = vmatprep.subr.bf16.mxu0 0
    %2027 = vmatpush1.bf16.msra.mxu0 0
    %2028 = vmatprep.mubr.bf16.mxu0 0
    %2029 = vmatmul.mubr.bf16.gmra.mrb[0].mxu0 %v1952
    %v2030 = vpop.f32.mrb[0].mxu0
    %v2031 = vadd.f32 0.0, %v2030
    %v2032 = vpop.f32.mrb[0].mxu0
    %v2033 = vpop.f32.mrb[0].mxu0
    %v2034 = vadd.f32 0.0, %v2033
    %v2035 = vpop.f32.mrb[0].mxu0
    %2036 = vdwg.mxu0
    %v2037 = vadd.f32 %v1946, %v1988
    %v2038 = vadd.f32 %v1949, %v1992
    %v2039 = vxor.u32 %v2037, 2147483648
    %v2040 = vxor.u32 %v2038, 2147483648
    %v2041 = vmul.f32 %v2039, 1.442695
    %v2042 = vpow.pop %v2041
    %v2043 = vmul.f32 %v2040, 1.442695
    %v2044 = vpow.pop %v2043
    %v2045 = vadd.f32 %v2042, 1.0
    %v2046 = vadd.f32 %v2044, 1.0
    %v2047 = vrcp.pop %v2045
    %v2048 = vmul.f32 1.0, %v2047
    %v2049 = vrcp.pop %v2046
    %v2050 = vmul.f32 1.0, %v2049
    %v2051 = vadd.f32 %v1947, %v1990
    %v2052 = vadd.f32 %v1950, %v1994
    %v2053 = vxor.u32 %v2051, 2147483648
    %v2054 = vxor.u32 %v2052, 2147483648
    %v2055 = vmul.f32 %v2053, 1.442695
    %v2056 = vpow.pop %v2055
    %v2057 = vmul.f32 %v2054, 1.442695
    %v2058 = vpow.pop %v2057
    %v2059 = vadd.f32 %v2056, 1.0
    %v2060 = vadd.f32 %v2058, 1.0
    %v2061 = vrcp.pop %v2059
    %v2062 = vmul.f32 1.0, %v2061
    %v2063 = vrcp.pop %v2060
    %v2064 = vmul.f32 1.0, %v2063
    %v2065 = vadd.f32 %v2031, %v1134
    %v2066 = vadd.f32 %v2034, %v1134
    %v2067 = vmul.f32 %v2048, %v2065
    %v2068 = vmul.f32 %v2050, %v2066
    %v2069 = vadd.f32 %v1948, %v2067
    %v2070 = vadd.f32 %v1951, %v2068
    %v2071 = vtanh.pop %v2069
    %v2072 = vtanh.pop %v2070
    %v2073 = vsub.f32 %v1941, %v2071
    %v2074 = vsub.f32 %v1942, %v2072
    %v2075 = vmul.f32 %v2062, %v2073
    %v2076 = vmul.f32 %v2064, %v2074
    %v2077 = vadd.f32 %v2071, %v2075
    %v2078 = vadd.f32 %v2072, %v2076
    %v2079 = vld [vmem:[%s993] sm:$0xff]
    %v2080 = vld [vmem:[%s993 + $0x8] sm:$0xff]
    %v2081 = vld [vmem:[%s993 + $0x10] sm:$0xff]
    %v2082 = vunpack.c.l.bf16 %v2079
    %v2083 = vunpack.c.l.bf16 %v2080
    %v2084 = vunpack.c.l.bf16 %v2081
    %v2085 = vunpack.c.h.bf16 %v2079
    %v2086 = vunpack.c.h.bf16 %v2080
    %v2087 = vunpack.c.h.bf16 %v2081
    %v2088 = vpack.c.bf16 %v2078, %v2077
    %2089 = vmatprep.subr.bf16.mxu0 %v1226
    %2090 = vmatpush1.bf16.msra.mxu0 %v1225
    %2091 = vmatprep.subr.bf16.mxu0 %v1229
    %2092 = vmatpush1.bf16.msra.mxu0 %v1228
    %2093 = vmatprep.subr.bf16.mxu0 %v1232
    %2094 = vmatpush1.bf16.msra.mxu0 %v1231
    %2095 = vmatprep.subr.bf16.mxu0 %v1235
    %2096 = vmatpush1.bf16.msra.mxu0 %v1234
    %2097 = vmatprep.subr.bf16.mxu0 %v1238
    %2098 = vmatpush1.bf16.msra.mxu0 %v1237
    %2099 = vmatprep.subr.bf16.mxu0 %v1241
    %2100 = vmatpush1.bf16.msra.mxu0 %v1240
    %2101 = vmatprep.subr.bf16.mxu0 %v1244
    %2102 = vmatpush1.bf16.msra.mxu0 %v1243
    %2103 = vmatprep.subr.bf16.mxu0 %v1247
    %2104 = vmatpush1.bf16.msra.mxu0 %v1246
    %2105 = vmatprep.subr.bf16.mxu0 0
    %2106 = vmatpush1.bf16.msra.mxu0 0
    %2107 = vmatprep.subr.bf16.mxu0 0
    %2108 = vmatpush1.bf16.msra.mxu0 0
    %2109 = vmatprep.subr.bf16.mxu0 0
    %2110 = vmatpush1.bf16.msra.mxu0 0
    %2111 = vmatprep.subr.bf16.mxu0 0
    %2112 = vmatpush1.bf16.msra.mxu0 0
    %2113 = vmatprep.subr.bf16.mxu0 0
    %2114 = vmatpush1.bf16.msra.mxu0 0
    %2115 = vmatprep.subr.bf16.mxu0 0
    %2116 = vmatpush1.bf16.msra.mxu0 0
    %2117 = vmatprep.subr.bf16.mxu0 0
    %2118 = vmatpush1.bf16.msra.mxu0 0
    %2119 = vmatprep.subr.bf16.mxu0 0
    %2120 = vmatpush1.bf16.msra.mxu0 0
    %2121 = vmatprep.mubr.bf16.mxu0 0
    %2122 = vmatmul.mubr.bf16.gmra.mrb[0].mxu0 %v2088
    %v2123 = vpop.f32.mrb[0].mxu0
    %v2124 = vadd.f32 0.0, %v2123
    %v2125 = vpop.f32.mrb[0].mxu0
    %v2126 = vadd.f32 0.0, %v2125
    %v2127 = vpop.f32.mrb[0].mxu0
    %v2128 = vadd.f32 0.0, %v2127
    %v2129 = vpop.f32.mrb[0].mxu0
    %v2130 = vadd.f32 0.0, %v2129
    %2131 = vdwg.mxu0
    %2132 = vmatprep.subr.bf16.mxu0 0
    %2133 = vmatpush1.bf16.msra.mxu0 %v1227
    %2134 = vmatprep.subr.bf16.mxu0 0
    %2135 = vmatpush1.bf16.msra.mxu0 %v1230
    %2136 = vmatprep.subr.bf16.mxu0 0
    %2137 = vmatpush1.bf16.msra.mxu0 %v1233
    %2138 = vmatprep.subr.bf16.mxu0 0
    %2139 = vmatpush1.bf16.msra.mxu0 %v1236
    %2140 = vmatprep.subr.bf16.mxu0 0
    %2141 = vmatpush1.bf16.msra.mxu0 %v1239
    %2142 = vmatprep.subr.bf16.mxu0 0
    %2143 = vmatpush1.bf16.msra.mxu0 %v1242
    %2144 = vmatprep.subr.bf16.mxu0 0
    %2145 = vmatpush1.bf16.msra.mxu0 %v1245
    %2146 = vmatprep.subr.bf16.mxu0 0
    %2147 = vmatpush1.bf16.msra.mxu0 %v1248
    %2148 = vmatprep.subr.bf16.mxu0 0
    %2149 = vmatpush1.bf16.msra.mxu0 0
    %2150 = vmatprep.subr.bf16.mxu0 0
    %2151 = vmatpush1.bf16.msra.mxu0 0
    %2152 = vmatprep.subr.bf16.mxu0 0
    %2153 = vmatpush1.bf16.msra.mxu0 0
    %2154 = vmatprep.subr.bf16.mxu0 0
    %2155 = vmatpush1.bf16.msra.mxu0 0
    %2156 = vmatprep.subr.bf16.mxu0 0
    %2157 = vmatpush1.bf16.msra.mxu0 0
    %2158 = vmatprep.subr.bf16.mxu0 0
    %2159 = vmatpush1.bf16.msra.mxu0 0
    %2160 = vmatprep.subr.bf16.mxu0 0
    %2161 = vmatpush1.bf16.msra.mxu0 0
    %2162 = vmatprep.subr.bf16.mxu0 0
    %2163 = vmatpush1.bf16.msra.mxu0 0
    %2164 = vmatprep.mubr.bf16.mxu0 0
    %2165 = vmatmul.mubr.bf16.gmra.mrb[0].mxu0 %v2088
    %v2166 = vpop.f32.mrb[0].mxu0
    %v2167 = vadd.f32 0.0, %v2166
    %v2168 = vpop.f32.mrb[0].mxu0
    %v2169 = vpop.f32.mrb[0].mxu0
    %v2170 = vadd.f32 0.0, %v2169
    %v2171 = vpop.f32.mrb[0].mxu0
    %2172 = vdwg.mxu0
    %v2173 = vadd.f32 %v2082, %v2124
    %v2174 = vadd.f32 %v2085, %v2128
    %v2175 = vxor.u32 %v2173, 2147483648
    %v2176 = vxor.u32 %v2174, 2147483648
    %v2177 = vmul.f32 %v2175, 1.442695
    %v2178 = vpow.pop %v2177
    %v2179 = vmul.f32 %v2176, 1.442695
    %v2180 = vpow.pop %v2179
    %v2181 = vadd.f32 %v2178, 1.0
    %v2182 = vadd.f32 %v2180, 1.0
    %v2183 = vrcp.pop %v2181
    %v2184 = vmul.f32 1.0, %v2183
    %v2185 = vrcp.pop %v2182
    %v2186 = vmul.f32 1.0, %v2185
    %v2187 = vadd.f32 %v2083, %v2126
    %v2188 = vadd.f32 %v2086, %v2130
    %v2189 = vxor.u32 %v2187, 2147483648
    %v2190 = vxor.u32 %v2188, 2147483648
    %v2191 = vmul.f32 %v2189, 1.442695
    %v2192 = vpow.pop %v2191
    %v2193 = vmul.f32 %v2190, 1.442695
    %v2194 = vpow.pop %v2193
    %v2195 = vadd.f32 %v2192, 1.0
    %v2196 = vadd.f32 %v2194, 1.0
    %v2197 = vrcp.pop %v2195
    %v2198 = vmul.f32 1.0, %v2197
    %v2199 = vrcp.pop %v2196
    %v2200 = vmul.f32 1.0, %v2199
    %v2201 = vadd.f32 %v2167, %v1134
    %v2202 = vadd.f32 %v2170, %v1134
    %v2203 = vmul.f32 %v2184, %v2201
    %v2204 = vmul.f32 %v2186, %v2202
    %v2205 = vadd.f32 %v2084, %v2203
    %v2206 = vadd.f32 %v2087, %v2204
    %v2207 = vtanh.pop %v2205
    %v2208 = vtanh.pop %v2206
    %v2209 = vsub.f32 %v2077, %v2207
    %v2210 = vsub.f32 %v2078, %v2208
    %v2211 = vmul.f32 %v2198, %v2209
    %v2212 = vmul.f32 %v2200, %v2210
    %v2213 = vadd.f32 %v2207, %v2211
    %v2214 = vadd.f32 %v2208, %v2212
    %v2215 = vld [vmem:[%s1093] sm:$0xff]
    %v2216 = vld [vmem:[%s1093 + $0x8] sm:$0xff]
    %v2217 = vld [vmem:[%s1093 + $0x10] sm:$0xff]
    %v2218 = vunpack.c.l.bf16 %v2215
    %v2219 = vunpack.c.l.bf16 %v2216
    %v2220 = vunpack.c.l.bf16 %v2217
    %v2221 = vunpack.c.h.bf16 %v2215
    %v2222 = vunpack.c.h.bf16 %v2216
    %v2223 = vunpack.c.h.bf16 %v2217
    %v2224 = vpack.c.bf16 %v2214, %v2213
    %2225 = vmatprep.subr.bf16.mxu0 %v1226
    %2226 = vmatpush1.bf16.msra.mxu0 %v1225
    %2227 = vmatprep.subr.bf16.mxu0 %v1229
    %2228 = vmatpush1.bf16.msra.mxu0 %v1228
    %2229 = vmatprep.subr.bf16.mxu0 %v1232
    %2230 = vmatpush1.bf16.msra.mxu0 %v1231
    %2231 = vmatprep.subr.bf16.mxu0 %v1235
    %2232 = vmatpush1.bf16.msra.mxu0 %v1234
    %2233 = vmatprep.subr.bf16.mxu0 %v1238
    %2234 = vmatpush1.bf16.msra.mxu0 %v1237
    %2235 = vmatprep.subr.bf16.mxu0 %v1241
    %2236 = vmatpush1.bf16.msra.mxu0 %v1240
    %2237 = vmatprep.subr.bf16.mxu0 %v1244
    %2238 = vmatpush1.bf16.msra.mxu0 %v1243
    %2239 = vmatprep.subr.bf16.mxu0 %v1247
    %2240 = vmatpush1.bf16.msra.mxu0 %v1246
    %2241 = vmatprep.subr.bf16.mxu0 0
    %2242 = vmatpush1.bf16.msra.mxu0 0
    %2243 = vmatprep.subr.bf16.mxu0 0
    %2244 = vmatpush1.bf16.msra.mxu0 0
    %2245 = vmatprep.subr.bf16.mxu0 0
    %2246 = vmatpush1.bf16.msra.mxu0 0
    %2247 = vmatprep.subr.bf16.mxu0 0
    %2248 = vmatpush1.bf16.msra.mxu0 0
    %2249 = vmatprep.subr.bf16.mxu0 0
    %2250 = vmatpush1.bf16.msra.mxu0 0
    %2251 = vmatprep.subr.bf16.mxu0 0
    %2252 = vmatpush1.bf16.msra.mxu0 0
    %2253 = vmatprep.subr.bf16.mxu0 0
    %2254 = vmatpush1.bf16.msra.mxu0 0
    %2255 = vmatprep.subr.bf16.mxu0 0
    %2256 = vmatpush1.bf16.msra.mxu0 0
    %2257 = vmatprep.mubr.bf16.mxu0 0
    %2258 = vmatmul.mubr.bf16.gmra.mrb[0].mxu0 %v2224
    %v2259 = vpop.f32.mrb[0].mxu0
    %v2260 = vadd.f32 0.0, %v2259
    %v2261 = vpop.f32.mrb[0].mxu0
    %v2262 = vadd.f32 0.0, %v2261
    %v2263 = vpop.f32.mrb[0].mxu0
    %v2264 = vadd.f32 0.0, %v2263
    %v2265 = vpop.f32.mrb[0].mxu0
    %v2266 = vadd.f32 0.0, %v2265
    %2267 = vdwg.mxu0
    %2268 = vmatprep.subr.bf16.mxu0 0
    %2269 = vmatpush1.bf16.msra.mxu0 %v1227
    %2270 = vmatprep.subr.bf16.mxu0 0
    %2271 = vmatpush1.bf16.msra.mxu0 %v1230
    %2272 = vmatprep.subr.bf16.mxu0 0
    %2273 = vmatpush1.bf16.msra.mxu0 %v1233
    %2274 = vmatprep.subr.bf16.mxu0 0
    %2275 = vmatpush1.bf16.msra.mxu0 %v1236
    %2276 = vmatprep.subr.bf16.mxu0 0
    %2277 = vmatpush1.bf16.msra.mxu0 %v1239
    %2278 = vmatprep.subr.bf16.mxu0 0
    %2279 = vmatpush1.bf16.msra.mxu0 %v1242
    %2280 = vmatprep.subr.bf16.mxu0 0
    %2281 = vmatpush1.bf16.msra.mxu0 %v1245
    %2282 = vmatprep.subr.bf16.mxu0 0
    %2283 = vmatpush1.bf16.msra.mxu0 %v1248
    %2284 = vmatprep.subr.bf16.mxu0 0
    %2285 = vmatpush1.bf16.msra.mxu0 0
    %2286 = vmatprep.subr.bf16.mxu0 0
    %2287 = vmatpush1.bf16.msra.mxu0 0
    %2288 = vmatprep.subr.bf16.mxu0 0
    %2289 = vmatpush1.bf16.msra.mxu0 0
    %2290 = vmatprep.subr.bf16.mxu0 0
    %2291 = vmatpush1.bf16.msra.mxu0 0
    %2292 = vmatprep.subr.bf16.mxu0 0
    %2293 = vmatpush1.bf16.msra.mxu0 0
    %2294 = vmatprep.subr.bf16.mxu0 0
    %2295 = vmatpush1.bf16.msra.mxu0 0
    %2296 = vmatprep.subr.bf16.mxu0 0
    %2297 = vmatpush1.bf16.msra.mxu0 0
    %2298 = vmatprep.subr.bf16.mxu0 0
    %2299 = vmatpush1.bf16.msra.mxu0 0
    %2300 = vmatprep.mubr.bf16.mxu0 0
    %2301 = vmatmul.mubr.bf16.gmra.mrb[0].mxu0 %v2224
    %v2302 = vpop.f32.mrb[0].mxu0
    %v2303 = vadd.f32 0.0, %v2302
    %v2304 = vpop.f32.mrb[0].mxu0
    %v2305 = vpop.f32.mrb[0].mxu0
    %v2306 = vadd.f32 0.0, %v2305
    %v2307 = vpop.f32.mrb[0].mxu0
    %2308 = vdwg.mxu0
    %v2309 = vadd.f32 %v2218, %v2260
    %v2310 = vadd.f32 %v2221, %v2264
    %v2311 = vxor.u32 %v2309, 2147483648
    %v2312 = vxor.u32 %v2310, 2147483648
    %v2313 = vmul.f32 %v2311, 1.442695
    %v2314 = vpow.pop %v2313
    %v2315 = vmul.f32 %v2312, 1.442695
    %v2316 = vpow.pop %v2315
    %v2317 = vadd.f32 %v2314, 1.0
    %v2318 = vadd.f32 %v2316, 1.0
    %v2319 = vrcp.pop %v2317
    %v2320 = vmul.f32 1.0, %v2319
    %v2321 = vrcp.pop %v2318
    %v2322 = vmul.f32 1.0, %v2321
    %v2323 = vadd.f32 %v2219, %v2262
    %v2324 = vadd.f32 %v2222, %v2266
    %v2325 = vxor.u32 %v2323, 2147483648
    %v2326 = vxor.u32 %v2324, 2147483648
    %v2327 = vmul.f32 %v2325, 1.442695
    %v2328 = vpow.pop %v2327
    %v2329 = vmul.f32 %v2326, 1.442695
    %v2330 = vpow.pop %v2329
    %v2331 = vadd.f32 %v2328, 1.0
    %v2332 = vadd.f32 %v2330, 1.0
    %v2333 = vrcp.pop %v2331
    %v2334 = vmul.f32 1.0, %v2333
    %v2335 = vrcp.pop %v2332
    %v2336 = vmul.f32 1.0, %v2335
    %v2337 = vadd.f32 %v2303, %v1134
    %v2338 = vadd.f32 %v2306, %v1134
    %v2339 = vmul.f32 %v2320, %v2337
    %v2340 = vmul.f32 %v2322, %v2338
    %v2341 = vadd.f32 %v2220, %v2339
    %v2342 = vadd.f32 %v2223, %v2340
    %v2343 = vtanh.pop %v2341
    %v2344 = vtanh.pop %v2342
    %v2345 = vsub.f32 %v2213, %v2343
    %v2346 = vsub.f32 %v2214, %v2344
    %v2347 = vmul.f32 %v2334, %v2345
    %v2348 = vmul.f32 %v2336, %v2346
    %v2349 = vadd.f32 %v2343, %v2347
    %v2350 = vadd.f32 %v2344, %v2348
    %v2351 = vld [vmem:[%s997] sm:$0xf]
    %v2352 = vld [vmem:[%s997 + $0x4] sm:$0xf]
    %v2353 = vld [vmem:[#allocation9] sm:$0xff]
    %v2354 = vld [vmem:[#allocation9 + $0x8] sm:$0xf]
    %v2355 = vld [vmem:[#allocation9 + $0xc] sm:$0xff]
    %v2356 = vld [vmem:[#allocation9 + $0x14] sm:$0xf]
    %v2357 = vld [vmem:[#allocation9 + $0x18] sm:$0xff]
    %v2358 = vld [vmem:[#allocation9 + $0x20] sm:$0xf]
    %v2359 = vld [vmem:[#allocation9 + $0x24] sm:$0xff]
    %v2360 = vld [vmem:[#allocation9 + $0x2c] sm:$0xf]
    %v2361 = vld [vmem:[#allocation9 + $0x30] sm:$0xff]
    %v2362 = vld [vmem:[#allocation9 + $0x38] sm:$0xf]
    %v2363 = vld [vmem:[#allocation9 + $0x3c] sm:$0xff]
    %v2364 = vld [vmem:[#allocation9 + $0x44] sm:$0xf]
    %v2365 = vld [vmem:[#allocation9 + $0x48] sm:$0xff]
    %v2366 = vld [vmem:[#allocation9 + $0x50] sm:$0xf]
    %v2367 = vld [vmem:[#allocation9 + $0x54] sm:$0xff]
    %v2368 = vld [vmem:[#allocation9 + $0x5c] sm:$0xf]
    %v2369 = vld [vmem:[#allocation9 + $0x60] sm:$0xff]
    %v2370 = vld [vmem:[#allocation9 + $0x68] sm:$0xf]
    %v2371 = vld [vmem:[#allocation9 + $0x6c] sm:$0xff]
    %v2372 = vld [vmem:[#allocation9 + $0x74] sm:$0xf]
    %v2373 = vld [vmem:[#allocation9 + $0x78] sm:$0xff]
    %v2374 = vld [vmem:[#allocation9 + $0x80] sm:$0xf]
    %v2375 = vld [vmem:[#allocation9 + $0x84] sm:$0xff]
    %v2376 = vld [vmem:[#allocation9 + $0x8c] sm:$0xf]
    %v2377 = vld [vmem:[#allocation9 + $0x90] sm:$0xff]
    %v2378 = vld [vmem:[#allocation9 + $0x98] sm:$0xf]
    %v2379 = vld [vmem:[#allocation9 + $0x9c] sm:$0xff]
    %v2380 = vld [vmem:[#allocation9 + $0xa4] sm:$0xf]
    %v2381 = vld [vmem:[#allocation9 + $0xa8] sm:$0xff]
    %v2382 = vld [vmem:[#allocation9 + $0xb0] sm:$0xf]
    %v2383 = vld [vmem:[#allocation9 + $0xb4] sm:$0xff]
    %v2384 = vld [vmem:[#allocation9 + $0xbc] sm:$0xf]
    %v2385 = vld [vmem:[%s6] sm:$0x7]
    %v2387 = vlaneseq
    %v2388 = vshrl.u32 %v2387, 7
    %v2389 = vsub.s32 0, %v2388
    %v2390 = vrot.slane %v2385, %v2389
    %v2391 = vlaneseq
    %v2392 = vshrl.u32 %v2391, 7
    %v2393 = vsub.s32 1, %v2392
    %v2394 = vrot.slane %v2385, %v2393
    %v2395 = vlaneseq
    %v2396 = vshrl.u32 %v2395, 7
    %v2397 = vsub.s32 2, %v2396
    %v2398 = vrot.slane %v2385, %v2397
    %v2404 = vunpack.c.l.b16 %v2351
    %v2405 = vunpack.c.l.b16 %v2352
    %v2406 = vpack.c.b16 %v2405, %v2404
    %v2440 = vunpack.c.l.b16 %v2353
    %v2441 = vunpack.c.h.b16 %v2353
    %v2442 = vunpack.c.l.b16 %v2354
    %v2443 = vunpack.c.l.b16 %v2355
    %v2444 = vunpack.c.h.b16 %v2355
    %v2445 = vunpack.c.l.b16 %v2356
    %v2446 = vunpack.c.l.b16 %v2357
    %v2447 = vunpack.c.h.b16 %v2357
    %v2448 = vunpack.c.l.b16 %v2358
    %v2449 = vunpack.c.l.b16 %v2359
    %v2450 = vunpack.c.h.b16 %v2359
    %v2451 = vunpack.c.l.b16 %v2360
    %v2452 = vunpack.c.l.b16 %v2361
    %v2453 = vunpack.c.h.b16 %v2361
    %v2454 = vunpack.c.l.b16 %v2362
    %v2455 = vunpack.c.l.b16 %v2363
    %v2456 = vunpack.c.h.b16 %v2363
    %v2457 = vunpack.c.l.b16 %v2364
    %v2458 = vunpack.c.l.b16 %v2365
    %v2459 = vunpack.c.h.b16 %v2365
    %v2460 = vunpack.c.l.b16 %v2366
    %v2461 = vunpack.c.l.b16 %v2367
    %v2462 = vunpack.c.h.b16 %v2367
    %v2463 = vunpack.c.l.b16 %v2368
    %v2464 = vunpack.c.l.b16 %v2369
    %v2465 = vunpack.c.h.b16 %v2369
    %v2466 = vunpack.c.l.b16 %v2370
    %v2467 = vunpack.c.l.b16 %v2371
    %v2468 = vunpack.c.h.b16 %v2371
    %v2469 = vunpack.c.l.b16 %v2372
    %v2470 = vunpack.c.l.b16 %v2373
    %v2471 = vunpack.c.h.b16 %v2373
    %v2472 = vunpack.c.l.b16 %v2374
    %v2473 = vunpack.c.l.b16 %v2375
    %v2474 = vunpack.c.h.b16 %v2375
    %v2475 = vunpack.c.l.b16 %v2376
    %v2476 = vunpack.c.l.b16 %v2377
    %v2477 = vunpack.c.h.b16 %v2377
    %v2478 = vunpack.c.l.b16 %v2378
    %v2479 = vunpack.c.l.b16 %v2379
    %v2480 = vunpack.c.h.b16 %v2379
    %v2481 = vunpack.c.l.b16 %v2380
    %v2482 = vunpack.c.l.b16 %v2381
    %v2483 = vunpack.c.h.b16 %v2381
    %v2484 = vunpack.c.l.b16 %v2382
    %v2485 = vunpack.c.l.b16 %v2383
    %v2486 = vunpack.c.h.b16 %v2383
    %v2487 = vunpack.c.l.b16 %v2384
    %v2488 = vpack.c.b16 %v2443, %v2440
    %v2489 = vpack.c.b16 %v2444, %v2441
    %v2490 = vpack.c.b16 %v2445, %v2442
    %v2491 = vpack.c.b16 %v2449, %v2446
    %v2492 = vpack.c.b16 %v2450, %v2447
    %v2493 = vpack.c.b16 %v2451, %v2448
    %v2494 = vpack.c.b16 %v2455, %v2452
    %v2495 = vpack.c.b16 %v2456, %v2453
    %v2496 = vpack.c.b16 %v2457, %v2454
    %v2497 = vpack.c.b16 %v2461, %v2458
    %v2498 = vpack.c.b16 %v2462, %v2459
    %v2499 = vpack.c.b16 %v2463, %v2460
    %v2500 = vpack.c.b16 %v2467, %v2464
    %v2501 = vpack.c.b16 %v2468, %v2465
    %v2502 = vpack.c.b16 %v2469, %v2466
    %v2503 = vpack.c.b16 %v2473, %v2470
    %v2504 = vpack.c.b16 %v2474, %v2471
    %v2505 = vpack.c.b16 %v2475, %v2472
    %v2506 = vpack.c.b16 %v2479, %v2476
    %v2507 = vpack.c.b16 %v2480, %v2477
    %v2508 = vpack.c.b16 %v2481, %v2478
    %v2509 = vpack.c.b16 %v2485, %v2482
    %v2510 = vpack.c.b16 %v2486, %v2483
    %v2511 = vpack.c.b16 %v2487, %v2484
    %2536 = vmatprep.subr.bf16.mxu0 %v2489
    %2537 = vmatpush1.bf16.msra.mxu0 %v2488
    %2538 = vmatprep.subr.bf16.mxu0 %v2492
    %2539 = vmatpush1.bf16.msra.mxu0 %v2491
    %2540 = vmatprep.subr.bf16.mxu0 %v2495
    %2541 = vmatpush1.bf16.msra.mxu0 %v2494
    %2542 = vmatprep.subr.bf16.mxu0 %v2498
    %2543 = vmatpush1.bf16.msra.mxu0 %v2497
    %2544 = vmatprep.subr.bf16.mxu0 %v2501
    %2545 = vmatpush1.bf16.msra.mxu0 %v2500
    %2546 = vmatprep.subr.bf16.mxu0 %v2504
    %2547 = vmatpush1.bf16.msra.mxu0 %v2503
    %2548 = vmatprep.subr.bf16.mxu0 %v2507
    %2549 = vmatpush1.bf16.msra.mxu0 %v2506
    %2550 = vmatprep.subr.bf16.mxu0 %v2510
    %2551 = vmatpush1.bf16.msra.mxu0 %v2509
    %2552 = vmatprep.subr.bf16.mxu0 0
    %2553 = vmatpush1.bf16.msra.mxu0 0
    %2554 = vmatprep.subr.bf16.mxu0 0
    %2555 = vmatpush1.bf16.msra.mxu0 0
    %2556 = vmatprep.subr.bf16.mxu0 0
    %2557 = vmatpush1.bf16.msra.mxu0 0
    %2558 = vmatprep.subr.bf16.mxu0 0
    %2559 = vmatpush1.bf16.msra.mxu0 0
    %2560 = vmatprep.subr.bf16.mxu0 0
    %2561 = vmatpush1.bf16.msra.mxu0 0
    %2562 = vmatprep.subr.bf16.mxu0 0
    %2563 = vmatpush1.bf16.msra.mxu0 0
    %2564 = vmatprep.subr.bf16.mxu0 0
    %2565 = vmatpush1.bf16.msra.mxu0 0
    %2566 = vmatprep.subr.bf16.mxu0 0
    %2567 = vmatpush1.bf16.msra.mxu0 0
    %2568 = vmatprep.mubr.bf16.mxu0 0
    %2569 = vmatmul.mubr.bf16.gmra.mrb[0].mxu0 %v2406
    %v2570 = vpop.f32.mrb[0].mxu0
    %v2571 = vadd.f32 %v2390, %v2570
    %v2572 = vpop.f32.mrb[0].mxu0
    %v2573 = vadd.f32 %v2394, %v2572
    %v2574 = vpop.f32.mrb[0].mxu0
    %v2575 = vadd.f32 %v2390, %v2574
    %v2576 = vpop.f32.mrb[0].mxu0
    %v2577 = vadd.f32 %v2394, %v2576
    %2578 = vdwg.mxu0
    %2579 = vmatprep.subr.bf16.mxu0 0
    %2580 = vmatpush1.bf16.msra.mxu0 %v2490
    %2581 = vmatprep.subr.bf16.mxu0 0
    %2582 = vmatpush1.bf16.msra.mxu0 %v2493
    %2583 = vmatprep.subr.bf16.mxu0 0
    %2584 = vmatpush1.bf16.msra.mxu0 %v2496
    %2585 = vmatprep.subr.bf16.mxu0 0
    %2586 = vmatpush1.bf16.msra.mxu0 %v2499
    %2587 = vmatprep.subr.bf16.mxu0 0
    %2588 = vmatpush1.bf16.msra.mxu0 %v2502
    %2589 = vmatprep.subr.bf16.mxu0 0
    %2590 = vmatpush1.bf16.msra.mxu0 %v2505
    %2591 = vmatprep.subr.bf16.mxu0 0
    %2592 = vmatpush1.bf16.msra.mxu0 %v2508
    %2593 = vmatprep.subr.bf16.mxu0 0
    %2594 = vmatpush1.bf16.msra.mxu0 %v2511
    %2595 = vmatprep.subr.bf16.mxu0 0
    %2596 = vmatpush1.bf16.msra.mxu0 0
    %2597 = vmatprep.subr.bf16.mxu0 0
    %2598 = vmatpush1.bf16.msra.mxu0 0
    %2599 = vmatprep.subr.bf16.mxu0 0
    %2600 = vmatpush1.bf16.msra.mxu0 0
    %2601 = vmatprep.subr.bf16.mxu0 0
    %2602 = vmatpush1.bf16.msra.mxu0 0
    %2603 = vmatprep.subr.bf16.mxu0 0
    %2604 = vmatpush1.bf16.msra.mxu0 0
    %2605 = vmatprep.subr.bf16.mxu0 0
    %2606 = vmatpush1.bf16.msra.mxu0 0
    %2607 = vmatprep.subr.bf16.mxu0 0
    %2608 = vmatpush1.bf16.msra.mxu0 0
    %2609 = vmatprep.subr.bf16.mxu0 0
    %2610 = vmatpush1.bf16.msra.mxu0 0
    %2611 = vmatprep.mubr.bf16.mxu0 0
    %2612 = vmatmul.mubr.bf16.gmra.mrb[0].mxu0 %v2406
    %v2613 = vpop.f32.mrb[0].mxu0
    %v2614 = vadd.f32 %v2398, %v2613
    %v2615 = vpop.f32.mrb[0].mxu0
    %v2616 = vpop.f32.mrb[0].mxu0
    %v2617 = vadd.f32 %v2398, %v2616
    %v2618 = vpop.f32.mrb[0].mxu0
    %2619 = vdwg.mxu0
    %v2620 = vxor.u32 %v2571, 2147483648
    %v2621 = vxor.u32 %v2575, 2147483648
    %v2622 = vmul.f32 %v2620, 1.442695
    %v2623 = vpow.pop %v2622
    %v2624 = vmul.f32 %v2621, 1.442695
    %v2625 = vpow.pop %v2624
    %v2626 = vadd.f32 %v2623, 1.0
    %v2627 = vadd.f32 %v2625, 1.0
    %v2628 = vrcp.pop %v2626
    %v2629 = vmul.f32 1.0, %v2628
    %v2630 = vrcp.pop %v2627
    %v2631 = vmul.f32 1.0, %v2630
    %v2632 = vxor.u32 %v2573, 2147483648
    %v2633 = vxor.u32 %v2577, 2147483648
    %v2634 = vmul.f32 %v2632, 1.442695
    %v2635 = vpow.pop %v2634
    %v2636 = vmul.f32 %v2633, 1.442695
    %v2637 = vpow.pop %v2636
    %v2638 = vadd.f32 %v2635, 1.0
    %v2639 = vadd.f32 %v2637, 1.0
    %v2640 = vrcp.pop %v2638
    %v2641 = vmul.f32 1.0, %v2640
    %v2642 = vrcp.pop %v2639
    %v2643 = vmul.f32 1.0, %v2642
    %v2644 = vld [vmem:[%s7] sm:$0x1]
    %v2646 = vlaneseq
    %v2647 = vshrl.u32 %v2646, 7
    %v2648 = vsub.s32 0, %v2647
    %v2649 = vrot.slane %v2644, %v2648
    %v2651 = vmul.f32 %v2629, %v2649
    %v2652 = vmul.f32 %v2631, %v2649
    %v2653 = vadd.f32 %v2614, %v2651
    %v2654 = vadd.f32 %v2617, %v2652
    %v2655 = vtanh.pop %v2653
    %v2656 = vtanh.pop %v2654
    %v2657 = vsub.f32 1.0, %v2641
    %v2658 = vsub.f32 1.0, %v2643
    %v2659 = vmul.f32 %v2657, %v2655
    %v2660 = vmul.f32 %v2658, %v2656
    %v2661 = vpack.c.bf16 %v2350, %v2349
    %v2662 = vld [vmem:[#allocation11] sm:$0xf]
    %v2663 = vld [vmem:[#allocation11 + $0x4] sm:$0xf]
    %v2664 = vld [vmem:[#allocation11 + $0x8] sm:$0xf]
    %v2665 = vld [vmem:[#allocation11 + $0xc] sm:$0xf]
    %v2666 = vld [vmem:[#allocation11 + $0x10] sm:$0xf]
    %v2667 = vld [vmem:[#allocation11 + $0x14] sm:$0xf]
    %v2668 = vld [vmem:[#allocation11 + $0x18] sm:$0xf]
    %v2669 = vld [vmem:[#allocation11 + $0x1c] sm:$0xf]
    %v2670 = vld [vmem:[#allocation11 + $0x20] sm:$0xf]
    %v2671 = vld [vmem:[#allocation11 + $0x24] sm:$0xf]
    %v2672 = vld [vmem:[#allocation11 + $0x28] sm:$0xf]
    %v2673 = vld [vmem:[#allocation11 + $0x2c] sm:$0xf]
    %v2674 = vld [vmem:[#allocation11 + $0x30] sm:$0xf]
    %v2675 = vld [vmem:[#allocation11 + $0x34] sm:$0xf]
    %v2676 = vld [vmem:[#allocation11 + $0x38] sm:$0xf]
    %v2677 = vld [vmem:[#allocation11 + $0x3c] sm:$0xf]
    %v2678 = vpack.c.bf16 %v2660, %v2659
    %v2679 = vld [vmem:[#allocation12] sm:$0xf]
    %v2680 = vld [vmem:[#allocation12 + $0x4] sm:$0xf]
    %v2681 = vld [vmem:[#allocation12 + $0x8] sm:$0xf]
    %v2682 = vld [vmem:[#allocation12 + $0xc] sm:$0xf]
    %v2683 = vld [vmem:[#allocation12 + $0x10] sm:$0xf]
    %v2684 = vld [vmem:[#allocation12 + $0x14] sm:$0xf]
    %v2685 = vld [vmem:[#allocation12 + $0x18] sm:$0xf]
    %v2686 = vld [vmem:[#allocation12 + $0x1c] sm:$0xf]
    %v2687 = vld [vmem:[#allocation12 + $0x20] sm:$0xf]
    %v2688 = vld [vmem:[#allocation12 + $0x24] sm:$0xf]
    %v2689 = vld [vmem:[#allocation12 + $0x28] sm:$0xf]
    %v2690 = vld [vmem:[#allocation12 + $0x2c] sm:$0xf]
    %v2691 = vld [vmem:[#allocation12 + $0x30] sm:$0xf]
    %v2692 = vld [vmem:[#allocation12 + $0x34] sm:$0xf]
    %v2693 = vld [vmem:[#allocation12 + $0x38] sm:$0xf]
    %v2694 = vld [vmem:[#allocation12 + $0x3c] sm:$0xf]
    %v2711 = vunpack.c.l.b16 %v2679
    %v2712 = vunpack.c.l.b16 %v2680
    %v2713 = vunpack.c.l.b16 %v2681
    %v2714 = vunpack.c.l.b16 %v2682
    %v2715 = vunpack.c.l.b16 %v2683
    %v2716 = vunpack.c.l.b16 %v2684
    %v2717 = vunpack.c.l.b16 %v2685
    %v2718 = vunpack.c.l.b16 %v2686
    %v2719 = vunpack.c.l.b16 %v2687
    %v2720 = vunpack.c.l.b16 %v2688
    %v2721 = vunpack.c.l.b16 %v2689
    %v2722 = vunpack.c.l.b16 %v2690
    %v2723 = vunpack.c.l.b16 %v2691
    %v2724 = vunpack.c.l.b16 %v2692
    %v2725 = vunpack.c.l.b16 %v2693
    %v2726 = vunpack.c.l.b16 %v2694
    %v2727 = vpack.c.b16 %v2712, %v2711
    %v2728 = vpack.c.b16 %v2714, %v2713
    %v2729 = vpack.c.b16 %v2716, %v2715
    %v2730 = vpack.c.b16 %v2718, %v2717
    %v2731 = vpack.c.b16 %v2720, %v2719
    %v2732 = vpack.c.b16 %v2722, %v2721
    %v2733 = vpack.c.b16 %v2724, %v2723
    %v2734 = vpack.c.b16 %v2726, %v2725
    %2743 = vmatprep.subr.bf16.mxu0 0
    %2744 = vmatpush1.bf16.msra.mxu0 %v2727
    %2745 = vmatprep.subr.bf16.mxu0 0
    %2746 = vmatpush1.bf16.msra.mxu0 %v2728
    %2747 = vmatprep.subr.bf16.mxu0 0
    %2748 = vmatpush1.bf16.msra.mxu0 %v2729
    %2749 = vmatprep.subr.bf16.mxu0 0
    %2750 = vmatpush1.bf16.msra.mxu0 %v2730
    %2751 = vmatprep.subr.bf16.mxu0 0
    %2752 = vmatpush1.bf16.msra.mxu0 %v2731
    %2753 = vmatprep.subr.bf16.mxu0 0
    %2754 = vmatpush1.bf16.msra.mxu0 %v2732
    %2755 = vmatprep.subr.bf16.mxu0 0
    %2756 = vmatpush1.bf16.msra.mxu0 %v2733
    %2757 = vmatprep.subr.bf16.mxu0 0
    %2758 = vmatpush1.bf16.msra.mxu0 %v2734
    %2759 = vmatprep.subr.bf16.mxu0 0
    %2760 = vmatpush1.bf16.msra.mxu0 0
    %2761 = vmatprep.subr.bf16.mxu0 0
    %2762 = vmatpush1.bf16.msra.mxu0 0
    %2763 = vmatprep.subr.bf16.mxu0 0
    %2764 = vmatpush1.bf16.msra.mxu0 0
    %2765 = vmatprep.subr.bf16.mxu0 0
    %2766 = vmatpush1.bf16.msra.mxu0 0
    %2767 = vmatprep.subr.bf16.mxu0 0
    %2768 = vmatpush1.bf16.msra.mxu0 0
    %2769 = vmatprep.subr.bf16.mxu0 0
    %2770 = vmatpush1.bf16.msra.mxu0 0
    %2771 = vmatprep.subr.bf16.mxu0 0
    %2772 = vmatpush1.bf16.msra.mxu0 0
    %2773 = vmatprep.subr.bf16.mxu0 0
    %2774 = vmatpush1.bf16.msra.mxu0 0
    %2775 = vmatprep.mubr.bf16.mxu0 0
    %2776 = vmatmul.mubr.bf16.gmra.mrb[0].mxu0 %v2678
    %v2777 = vpop.f32.mrb[0].mxu0
    %v2778 = vadd.f32 0.0, %v2777
    %v2779 = vpop.f32.mrb[0].mxu0
    %v2780 = vpop.f32.mrb[0].mxu0
    %v2781 = vadd.f32 0.0, %v2780
    %v2782 = vpop.f32.mrb[0].mxu0
    %2783 = vdwg.mxu0
    %v2800 = vunpack.c.l.b16 %v2662
    %v2801 = vunpack.c.l.b16 %v2663
    %v2802 = vunpack.c.l.b16 %v2664
    %v2803 = vunpack.c.l.b16 %v2665
    %v2804 = vunpack.c.l.b16 %v2666
    %v2805 = vunpack.c.l.b16 %v2667
    %v2806 = vunpack.c.l.b16 %v2668
    %v2807 = vunpack.c.l.b16 %v2669
    %v2808 = vunpack.c.l.b16 %v2670
    %v2809 = vunpack.c.l.b16 %v2671
    %v2810 = vunpack.c.l.b16 %v2672
    %v2811 = vunpack.c.l.b16 %v2673
    %v2812 = vunpack.c.l.b16 %v2674
    %v2813 = vunpack.c.l.b16 %v2675
    %v2814 = vunpack.c.l.b16 %v2676
    %v2815 = vunpack.c.l.b16 %v2677
    %v2816 = vpack.c.b16 %v2801, %v2800
    %v2817 = vpack.c.b16 %v2803, %v2802
    %v2818 = vpack.c.b16 %v2805, %v2804
    %v2819 = vpack.c.b16 %v2807, %v2806
    %v2820 = vpack.c.b16 %v2809, %v2808
    %v2821 = vpack.c.b16 %v2811, %v2810
    %v2822 = vpack.c.b16 %v2813, %v2812
    %v2823 = vpack.c.b16 %v2815, %v2814
    %2832 = vmatprep.subr.bf16.mxu0 0
    %2833 = vmatpush1.bf16.msra.mxu0 %v2816
    %2834 = vmatprep.subr.bf16.mxu0 0
    %2835 = vmatpush1.bf16.msra.mxu0 %v2817
    %2836 = vmatprep.subr.bf16.mxu0 0
    %2837 = vmatpush1.bf16.msra.mxu0 %v2818
    %2838 = vmatprep.subr.bf16.mxu0 0
    %2839 = vmatpush1.bf16.msra.mxu0 %v2819
    %2840 = vmatprep.subr.bf16.mxu0 0
    %2841 = vmatpush1.bf16.msra.mxu0 %v2820
    %2842 = vmatprep.subr.bf16.mxu0 0
    %2843 = vmatpush1.bf16.msra.mxu0 %v2821
    %2844 = vmatprep.subr.bf16.mxu0 0
    %2845 = vmatpush1.bf16.msra.mxu0 %v2822
    %2846 = vmatprep.subr.bf16.mxu0 0
    %2847 = vmatpush1.bf16.msra.mxu0 %v2823
    %2848 = vmatprep.subr.bf16.mxu0 0
    %2849 = vmatpush1.bf16.msra.mxu0 0
    %2850 = vmatprep.subr.bf16.mxu0 0
    %2851 = vmatpush1.bf16.msra.mxu0 0
    %2852 = vmatprep.subr.bf16.mxu0 0
    %2853 = vmatpush1.bf16.msra.mxu0 0
    %2854 = vmatprep.subr.bf16.mxu0 0
    %2855 = vmatpush1.bf16.msra.mxu0 0
    %2856 = vmatprep.subr.bf16.mxu0 0
    %2857 = vmatpush1.bf16.msra.mxu0 0
    %2858 = vmatprep.subr.bf16.mxu0 0
    %2859 = vmatpush1.bf16.msra.mxu0 0
    %2860 = vmatprep.subr.bf16.mxu0 0
    %2861 = vmatpush1.bf16.msra.mxu0 0
    %2862 = vmatprep.subr.bf16.mxu0 0
    %2863 = vmatpush1.bf16.msra.mxu0 0
    %2864 = vmatprep.mubr.bf16.mxu0 0
    %2865 = vmatmul.mubr.bf16.gmra.mrb[0].mxu0 %v2661
    %v2866 = vpop.f32.mrb[0].mxu0
    %v2867 = vadd.f32 %v2778, %v2866
    %v2868 = vpop.f32.mrb[0].mxu0
    %v2869 = vpop.f32.mrb[0].mxu0
    %v2870 = vadd.f32 %v2781, %v2869
    %v2871 = vpop.f32.mrb[0].mxu0
    %2872 = vdwg.mxu0
    %v2873 = vld [vmem:[%s10] sm:$0x1]
    %v2875 = vlaneseq
    %v2876 = vshrl.u32 %v2875, 7
    %v2877 = vsub.s32 0, %v2876
    %v2878 = vrot.slane %v2873, %v2877
    %v2880 = vadd.f32 %v2867, %v2878
    %v2881 = vadd.f32 %v2870, %v2878
    %2882 = vst [vmem:[#allocation14] sm:$0xff] %v2880
    %2883 = vst [vmem:[#allocation14 + $0x8] sm:$0xff] %v2881
    // Predicated region
    $region70: #{tpu_custom_call.1} parent=1 // pred_check
      _
    $region71: #{tpu_custom_call.1} parent=1 // pred_check_branch
      %2885 = sbr.rel (0) target = $region73
    $region72: #{tpu_custom_call.1} parent=1 // pred_region
      %s2887 = ssub.s32 256, 256
      %2888 = vsyncadd [#allocation5], %s2887
      %s2889 = sshll.u32 [#allocation14], 4
      %s2890 = int_to_ptr.vmem [resolvable:$true] %s2889
      %2895 = dma.vmem_to_hbm [thread:$0]  %s2890, 256, %s11, [#allocation5], 128, 128, 8
    $region73: #{tpu_custom_call.1} parent=1 // pred_fallthru
      _
    // Predicated region
    $region74: #{tpu_custom_call.1} parent=1 // pred_check
      _
    $region75: #{tpu_custom_call.1} parent=1 // pred_check_branch
      %2897 = sbr.rel (0) target = $region77
    $region76: #{tpu_custom_call.1} parent=1 // pred_region
      %2898 = dma.done [#allocation5], 256
    $region77: #{tpu_custom_call.1} parent=1 // pred_fallthru
      _
    %2899 = vsyncpa [#allocation4], 1
    %2900 = vsyncpa [#allocation7], 1
    %2901 = vsyncpa [#allocation10], 1
    %2902 = vsyncpa [#allocation13], 1
    %2903 = vsyncpa [#allocation5], 1

</llo_original>
